<compile_context>
chip_gen: v6e
topology: v6e:2x2x1
jax: 0.10.0
libtpu: 0.0.40
codegen_flags: <defaults>
</compile_context>

<pallas_src>
import functools

import jax
import jax.numpy as jnp
import numpy as np
from jax.experimental import pallas as pl
from jax.experimental.pallas import tpu as pltpu

HIDDEN = 512  # fixed by the module (nn.Linear(512,512), embedding dim 512, LSTM hidden 512)


def _round_up(x, m):
    return (x + m - 1) // m * m


def _pick_vmem_limit_bytes():
    """Generation-aware VMEM request (v7x: 64 MiB/TC; v5e/v6e: 128 MiB)."""
    cap = None
    try:
        cap = getattr(pltpu.get_tpu_info(), "vmem_capacity_bytes", None)
    except Exception:
        cap = None
    if not cap:
        cap = 64 * 1024 * 1024  # conservative default that exists on every generation
    return int(min(int(cap) - 16 * 1024 * 1024, 100 * 1024 * 1024))


def _decoder_step_kernel(
        # inputs
        img_ref, ws_ref, h0_ref, c0_ref, emb_ref,
        ua_ref, bu_ref, vw_ref, vb_ref, wf_ref, bf_ref, wl_ref, bl_ref,
        # outputs
        h_out_ref, alpha_out_ref,
        # scratch
        h_scr, c_scr,
        *, n_pixels, n_pad, hidden):
    t = pl.program_id(1)

    # get_init_lstm_state result is precomputed in the wrapper; load it once at t == 0.
    @pl.when(t == 0)
    def _init():
        h_scr[...] = h0_ref[...]
        c_scr[...] = c0_ref[...]

    h = h_scr[...]                       # (TB, H)  float32 carry
    c = c_scr[...]                       # (TB, H)
    img = img_ref[...]                   # (TB, N, De)  compute dtype
    dt = img.dtype
    h_d = h.astype(dt)

    # ---- Attention ----  (W_s = img @ Wa + bw is time-invariant -> precomputed, f32)
    u_h = jnp.dot(h_d, ua_ref[...], preferred_element_type=jnp.float32) + bu_ref[...]   # (TB, H)
    att = jnp.tanh(ws_ref[...] + u_h[:, None, :])                                       # (TB, N, H)
    e = jnp.sum(att * vw_ref[...].T, axis=-1) + vb_ref[...]                              # (TB, N)
    e_max = jnp.max(e, axis=-1, keepdims=True)
    p = jnp.exp(e - e_max)
    alpha = p * pl.reciprocal(jnp.sum(p, axis=-1, keepdims=True), approx=True)           # (TB, N)

    # context = sum_n alpha[b,n] * img[b,n,:]  as a batched (1,N)@(N,De) on the MXU
    context = jnp.einsum('bqn,bnd->bqd', alpha[:, None, :].astype(dt), img,
                         preferred_element_type=jnp.float32)[:, 0, :]                    # (TB, De)

    # ---- Gated context ----
    gate = jax.nn.sigmoid(
        jnp.dot(h_d, wf_ref[...], preferred_element_type=jnp.float32) + bf_ref[...])     # (TB, De)
    gated = gate * context                                                               # (TB, De)

    # ---- LSTMCell_un ----  single fused gates matmul over concat([emb_t, gated, h])
    x = jnp.concatenate([emb_ref[0], gated.astype(dt), h_d], axis=-1)                    # (TB, 2H+De)
    gates = jnp.dot(x, wl_ref[...], preferred_element_type=jnp.float32) + bl_ref[...]    # (TB, 4H)
    i_t = jax.nn.sigmoid(gates[:, :hidden])
    f_t = jax.nn.sigmoid(gates[:, hidden:2 * hidden])
    g_t = jnp.tanh(gates[:, 2 * hidden:3 * hidden])
    o_t = jax.nn.sigmoid(gates[:, 3 * hidden:])
    c_new = f_t * c + i_t * g_t
    h_new = o_t * jnp.tanh(c_new)
    h_scr[...] = h_new
    c_scr[...] = c_new

    # deep_output (vocab projection) is applied outside the kernel on the h outputs.
    h_out_ref[0] = h_new
    if n_pad == n_pixels:
        alpha_out_ref[0] = alpha
    else:
        # lane-dense (128-multiple) output block; zero the pad region then store alpha.
        alpha_out_ref[0] = jnp.zeros((alpha.shape[0], n_pad), jnp.float32)
        alpha_out_ref[0, :, :n_pixels] = alpha


def init_params(key, encoder_dim, vocab_size):
    ks = jax.random.split(key, 12)

    def lin(k, fan_in, fan_out):
        k1, k2 = jax.random.split(k)
        bound = 1.0 / np.sqrt(fan_in)
        W = jax.random.uniform(k1, (fan_in, fan_out), jnp.float32, -bound, bound)
        b = jax.random.uniform(k2, (1, fan_out), jnp.float32, -bound, bound)
        return W, b

    p = {}
    p['Wh'], p['bh'] = lin(ks[0], encoder_dim, HIDDEN)     # init_h
    p['Wc'], p['bc'] = lin(ks[1], encoder_dim, HIDDEN)     # init_c
    p['Ua'], p['bu'] = lin(ks[2], HIDDEN, HIDDEN)          # attention.U
    p['Wa'], p['bw'] = lin(ks[3], encoder_dim, HIDDEN)     # attention.W
    p['vw'], p['vb'] = lin(ks[4], HIDDEN, 1)               # attention.v  -> (H,1), (1,1)
    p['Wf'], p['bf'] = lin(ks[5], HIDDEN, encoder_dim)     # f_beta
    stdv = 1.0 / np.sqrt(HIDDEN)
    Wl = jax.random.uniform(ks[6], (HIDDEN + encoder_dim, 4 * HIDDEN), jnp.float32, -stdv, stdv)
    p['Wle'] = Wl[:HIDDEN]                                  # embedding part of LSTM W
    p['Wlc'] = Wl[HIDDEN:]                                  # gated-context part of LSTM W
    p['Ul'] = jax.random.uniform(ks[7], (HIDDEN, 4 * HIDDEN), jnp.float32, -stdv, stdv)
    p['bl'] = jax.random.uniform(ks[8], (1, 4 * HIDDEN), jnp.float32, -stdv, stdv)
    p['Wo'], p['bo'] = lin(ks[9], HIDDEN, vocab_size)       # deep_output
    p['embed'] = jax.random.normal(ks[10], (vocab_size, HIDDEN), jnp.float32)  # nn.Embedding
    return p


def decoder_forward(img_features, captions, params, *,
                    compute_dtype=jnp.bfloat16, batch_block=8):
    """Teacher-forcing (training) forward pass of Decoder. Returns (preds, alphas)."""
    B, N, De = img_features.shape
    T = captions.shape[1] - 1                       # max_timespan
    H = HIDDEN
    cdt = compute_dtype

    # ---- batch padding to sublane multiple (and megacore batch blocks) ----
    TB = batch_block
    assert TB % 8 == 0
    Bp = _round_up(B, TB)
    pad_b = Bp - B
    img_p = jnp.pad(img_features, ((0, pad_b), (0, 0), (0, 0))) if pad_b else img_features
    caps_p = jnp.pad(captions, ((0, pad_b), (0, 0))) if pad_b else captions
    img_c = img_p.astype(cdt)

    # ---- time-invariant work hoisted out of the recurrent loop ----
    # init_h / init_c fused into one (De, 2H) matmul
    w_init = jnp.concatenate([params['Wh'], params['Wc']], axis=1).astype(cdt)
    b_init = jnp.concatenate([params['bh'], params['bc']], axis=1)
    avg = jnp.mean(img_p, axis=1).astype(cdt)
    hc0 = jnp.tanh(jnp.dot(avg, w_init, preferred_element_type=jnp.float32) + b_init)
    h0, c0 = hc0[:, :H], hc0[:, H:]                                          # (Bp, H) f32

    # attention projection of the (time-invariant) image features
    ws = jnp.einsum('bnd,dk->bnk', img_c, params['Wa'].astype(cdt),
                    preferred_element_type=jnp.float32) + params['bw']       # (Bp, N, H) f32

    # teacher-forcing embedding lookup, time-major for lane-dense per-step blocks
    emb = params['embed'][caps_p[:, :T]].astype(cdt)                         # (Bp, T, H)
    emb_tbh = jnp.transpose(emb, (1, 0, 2))                                  # (T, Bp, H)

    # fused LSTM weight: rows ordered to match concat([emb_t, gated_context, h])
    w_lstm = jnp.concatenate([params['Wle'], params['Wlc'], params['Ul']], axis=0).astype(cdt)
    b_lstm = params['bl']
    ua = params['Ua'].astype(cdt)
    wf = params['Wf'].astype(cdt)
    bu, vw, vb, bf = params['bu'], params['vw'], params['vb'], params['bf']

    N_pad = _round_up(N, 128)
    kernel = functools.partial(_decoder_step_kernel, n_pixels=N, n_pad=N_pad, hidden=H)

    def invariant_spec(a):
        nd = a.ndim
        return pl.BlockSpec(a.shape, lambda b, t, _nd=nd: (0,) * _nd)

    grid_spec = pltpu.PrefetchScalarGridSpec(
        num_scalar_prefetch=0,
        grid=(Bp // TB, T),
        in_specs=[
            pl.BlockSpec((TB, N, De), lambda b, t: (b, 0, 0)),     # img (constant over t)
            pl.BlockSpec((TB, N, H), lambda b, t: (b, 0, 0)),      # precomputed W_s
            pl.BlockSpec((TB, H), lambda b, t: (b, 0)),            # h0
            pl.BlockSpec((TB, H), lambda b, t: (b, 0)),            # c0
            pl.BlockSpec((1, TB, H), lambda b, t: (t, b, 0)),      # embedding[t]
            invariant_spec(ua), invariant_spec(bu),
            invariant_spec(vw), invariant_spec(vb),
            invariant_spec(wf), invariant_spec(bf),
            invariant_spec(w_lstm), invariant_spec(b_lstm),
        ],
        out_specs=[
            pl.BlockSpec((1, TB, H), lambda b, t: (t, b, 0)),      # h_t  (f32)
            pl.BlockSpec((1, TB, N_pad), lambda b, t: (t, b, 0)),  # alpha_t (lane-padded)
        ],
        scratch_shapes=[pltpu.VMEM((TB, H), jnp.float32),
                        pltpu.VMEM((TB, H), jnp.float32)],
    )

    h_tbh, alphas_tbn = pl.pallas_call(
        kernel,
        out_shape=(jax.ShapeDtypeStruct((T, Bp, H), jnp.float32),
                   jax.ShapeDtypeStruct((T, Bp, N_pad), jnp.float32)),
        grid_spec=grid_spec,
        compiler_params=pltpu.CompilerParams(
            dimension_semantics=("parallel", "arbitrary"),   # batch blocks parallel, t sequential
            vmem_limit_bytes=_pick_vmem_limit_bytes()),
    )(img_c, ws, h0, c0, emb_tbh, ua, bu, vw, vb, wf, bf, w_lstm, b_lstm)

    # deep_output applied once as a batched (T*Bp, H) @ (H, V) matmul
    # TODO(synk): nn.Dropout treated as identity (eval-mode); training-mode dropout is stochastic.
    preds_tbv = jnp.einsum('tbh,hv->tbv', h_tbh.astype(cdt), params['Wo'].astype(cdt),
                           preferred_element_type=jnp.float32) + params['bo']

    preds = jnp.transpose(preds_tbv, (1, 0, 2))[:B]
    alphas = jnp.transpose(alphas_tbn, (1, 0, 2))[:B, :, :N]
    return preds, alphas


def reference_forward(img, captions, p):
    """Pure-JAX f32 reference matching PyTorch Decoder.forward (tf=True, training, dropout=id)."""
    B, N, De = img.shape
    T = captions.shape[1] - 1
    emb = p['embed'][captions]
    avg = img.mean(axis=1)
    h = jnp.tanh(avg @ p['Wh'] + p['bh'])
    c = jnp.tanh(avg @ p['Wc'] + p['bc'])
    preds, alphas = [], []
    for t in range(T):
        U_h = h @ p['Ua'] + p['bu']
        W_s = jnp.einsum('bnd,dk->bnk', img, p['Wa']) + p['bw']
        att = jnp.tanh(W_s + U_h[:, None, :])
        e = jnp.sum(att * p['vw'].T, axis=-1) + p['vb']
        alpha = jax.nn.softmax(e, axis=1)
        context = (img * alpha[:, :, None]).sum(axis=1)
        gate = jax.nn.sigmoid(h @ p['Wf'] + p['bf'])
        gated = gate * context
        gates = emb[:, t] @ p['Wle'] + gated @ p['Wlc'] + h @ p['Ul'] + p['bl']
        i_t = jax.nn.sigmoid(gates[:, :HIDDEN])
        f_t = jax.nn.sigmoid(gates[:, HIDDEN:2 * HIDDEN])
        g_t = jnp.tanh(gates[:, 2 * HIDDEN:3 * HIDDEN])
        o_t = jax.nn.sigmoid(gates[:, 3 * HIDDEN:])
        c = f_t * c + i_t * g_t
        h = o_t * jnp.tanh(c)
        out = h @ p['Wo'] + p['bo']
        preds.append(out)
        alphas.append(alpha)
    return jnp.stack(preds, axis=1), jnp.stack(alphas, axis=1)


if __name__ == "__main__":
    B, N, ENC_DIM, VOCAB, T_CAP = 2, 16, 128, 256, 8

    key = jax.random.PRNGKey(0)
    k_img, k_cap, k_par = jax.random.split(key, 3)
    img_features = jax.random.normal(k_img, (B, N, ENC_DIM), jnp.float32)
    captions = jax.random.randint(k_cap, (B, T_CAP), 0, VOCAB, dtype=jnp.int32)
    params = init_params(k_par, ENC_DIM, VOCAB)

    preds_ref, alphas_ref = reference_forward(img_features, captions, params)

    # float32 compute path (only deviation from the reference is the EUP approx reciprocal)
    fwd_f32 = jax.jit(functools.partial(decoder_forward, compute_dtype=jnp.float32))
    preds32, alphas32 = fwd_f32(img_features, captions, params)
    preds32 = jax.block_until_ready(preds32)
    alphas32 = jax.block_until_ready(alphas32)
    np.testing.assert_allclose(np.asarray(preds32), np.asarray(preds_ref), rtol=1e-2, atol=1e-2)
    np.testing.assert_allclose(np.asarray(alphas32), np.asarray(alphas_ref), rtol=1e-2, atol=1e-2)

    # bfloat16 compute path (MXU-friendly on v5e/v6e/v7x); looser tolerance vs f32 reference
    fwd_bf16 = jax.jit(functools.partial(decoder_forward, compute_dtype=jnp.bfloat16))
    preds_bf, alphas_bf = fwd_bf16(img_features, captions, params)
    preds_bf = jax.block_until_ready(preds_bf)
    alphas_bf = jax.block_until_ready(alphas_bf)
    np.testing.assert_allclose(np.asarray(preds_bf), np.asarray(preds_ref), rtol=5e-2, atol=5e-2)
    np.testing.assert_allclose(np.asarray(alphas_bf), np.asarray(alphas_ref), rtol=5e-2, atol=5e-2)

    print("KERNEL_OK")
</pallas_src>

<mosaic_0001>
module attributes {stable_mosaic.version = 11 : i64} {
  func.func @_decoder_step_kernel(%arg0: i32, %arg1: i32, %arg2: memref<8x16x128xf32, #tpu.memory_space<vmem>>, %arg3: memref<8x16x512xf32, #tpu.memory_space<vmem>>, %arg4: memref<8x512xf32, #tpu.memory_space<vmem>>, %arg5: memref<8x512xf32, #tpu.memory_space<vmem>>, %arg6: memref<1x8x512xf32, #tpu.memory_space<vmem>>, %arg7: memref<512x512xf32, #tpu.memory_space<vmem>>, %arg8: memref<1x512xf32, #tpu.memory_space<vmem>>, %arg9: memref<512x1xf32, #tpu.memory_space<vmem>>, %arg10: memref<1x1xf32, #tpu.memory_space<vmem>>, %arg11: memref<512x128xf32, #tpu.memory_space<vmem>>, %arg12: memref<1x128xf32, #tpu.memory_space<vmem>>, %arg13: memref<1152x2048xf32, #tpu.memory_space<vmem>>, %arg14: memref<1x2048xf32, #tpu.memory_space<vmem>>, %arg15: memref<1x8x512xf32, #tpu.memory_space<vmem>>, %arg16: memref<1x8x128xf32, #tpu.memory_space<vmem>>, %arg17: memref<8x512xf32, #tpu.memory_space<vmem>>, %arg18: memref<8x512xf32, #tpu.memory_space<vmem>>) attributes {dimension_semantics = [#tpu.dimension_semantics<parallel>, #tpu.dimension_semantics<arbitrary>], iteration_bounds = array<i64: 1, 7>, scalar_prefetch = 0 : i64, scratch_operands = 2 : i64, tpu.core_type = #tpu.core_type<tc>, window_params = [{transform_indices = @transform_0, window_bounds = array<i64: 8, 16, 128>}, {transform_indices = @transform_1, window_bounds = array<i64: 8, 16, 512>}, {transform_indices = @transform_2, window_bounds = array<i64: 8, 512>}, {transform_indices = @transform_3, window_bounds = array<i64: 8, 512>}, {transform_indices = @transform_4, window_bounds = array<i64: 1, 8, 512>}, {pipeline_mode = #tpu.pipeline_mode<synchronous>, transform_indices = @transform_5, window_bounds = array<i64: 512, 512>}, {pipeline_mode = #tpu.pipeline_mode<synchronous>, transform_indices = @transform_6, window_bounds = array<i64: 1, 512>}, {pipeline_mode = #tpu.pipeline_mode<synchronous>, transform_indices = @transform_7, window_bounds = array<i64: 512, 1>}, {pipeline_mode = #tpu.pipeline_mode<synchronous>, transform_indices = @transform_8, window_bounds = array<i64: 1, 1>}, {pipeline_mode = #tpu.pipeline_mode<synchronous>, transform_indices = @transform_9, window_bounds = array<i64: 512, 128>}, {pipeline_mode = #tpu.pipeline_mode<synchronous>, transform_indices = @transform_10, window_bounds = array<i64: 1, 128>}, {pipeline_mode = #tpu.pipeline_mode<synchronous>, transform_indices = @transform_11, window_bounds = array<i64: 1152, 2048>}, {pipeline_mode = #tpu.pipeline_mode<synchronous>, transform_indices = @transform_12, window_bounds = array<i64: 1, 2048>}, {transform_indices = @transform_13, window_bounds = array<i64: 1, 8, 512>}, {transform_indices = @transform_14, window_bounds = array<i64: 1, 8, 128>}]} {
    %c0_i32 = arith.constant 0 : i32
    %0 = arith.cmpi eq, %arg1, %c0_i32 : i32
    %1 = arith.extui %0 : i1 to i32
    %c0_i32_0 = arith.constant 0 : i32
    %2 = arith.cmpi ne, %1, %c0_i32_0 : i32
    scf.if %2 {
      %c0_53 = arith.constant 0 : index
      %c0_54 = arith.constant 0 : index
      %94 = vector.load %arg4[%c0_53, %c0_54] : memref<8x512xf32, #tpu.memory_space<vmem>>, vector<8x512xf32>
      %c0_55 = arith.constant 0 : index
      %c0_56 = arith.constant 0 : index
      %95 = vector.load %arg17[%c0_55, %c0_56] : memref<8x512xf32, #tpu.memory_space<vmem>>, vector<8x512xf32>
      tpu.vector_store %arg17[%c0_55, %c0_56], %94 {strides = array<i32>} : memref<8x512xf32, #tpu.memory_space<vmem>>, vector<8x512xf32>,
      %c0_57 = arith.constant 0 : index
      %c0_58 = arith.constant 0 : index
      %96 = vector.load %arg5[%c0_57, %c0_58] : memref<8x512xf32, #tpu.memory_space<vmem>>, vector<8x512xf32>
      %c0_59 = arith.constant 0 : index
      %c0_60 = arith.constant 0 : index
      %97 = vector.load %arg18[%c0_59, %c0_60] : memref<8x512xf32, #tpu.memory_space<vmem>>, vector<8x512xf32>
      tpu.vector_store %arg18[%c0_59, %c0_60], %96 {strides = array<i32>} : memref<8x512xf32, #tpu.memory_space<vmem>>, vector<8x512xf32>,
    } else {
    }
    %c0 = arith.constant 0 : index
    %c0_1 = arith.constant 0 : index
    %3 = vector.load %arg17[%c0, %c0_1] : memref<8x512xf32, #tpu.memory_space<vmem>>, vector<8x512xf32>
    %c0_2 = arith.constant 0 : index
    %c0_3 = arith.constant 0 : index
    %4 = vector.load %arg18[%c0_2, %c0_3] : memref<8x512xf32, #tpu.memory_space<vmem>>, vector<8x512xf32>
    %c0_4 = arith.constant 0 : index
    %c0_5 = arith.constant 0 : index
    %c0_6 = arith.constant 0 : index
    %5 = vector.load %arg2[%c0_4, %c0_5, %c0_6] : memref<8x16x128xf32, #tpu.memory_space<vmem>>, vector<8x16x128xf32>
    %c0_7 = arith.constant 0 : index
    %c0_8 = arith.constant 0 : index
    %6 = vector.load %arg7[%c0_7, %c0_8] : memref<512x512xf32, #tpu.memory_space<vmem>>, vector<512x512xf32>
    %cst = arith.constant dense<0.000000e+00> : vector<8x512xf32>
    %7 = tpu.matmul %3, %6, %cst {dimension_numbers = #tpu.dot_dimension_numbers<[1], [0], [0], [1], [0, 0, 1, 1], [], []>} : vector<8x512xf32>, vector<512x512xf32>, vector<8x512xf32> -> vector<8x512xf32>
    %c0_9 = arith.constant 0 : index
    %c0_10 = arith.constant 0 : index
    %8 = vector.load %arg8[%c0_9, %c0_10] : memref<1x512xf32, #tpu.memory_space<vmem>>, vector<1x512xf32>
    %9 = vector.broadcast %8 : vector<1x512xf32> to vector<8x512xf32>
    %10 = arith.addf %7, %9 : vector<8x512xf32>
    %c0_11 = arith.constant 0 : index
    %c0_12 = arith.constant 0 : index
    %c0_13 = arith.constant 0 : index
    %11 = vector.load %arg3[%c0_11, %c0_12, %c0_13] : memref<8x16x512xf32, #tpu.memory_space<vmem>>, vector<8x16x512xf32>
    %12 = vector.shape_cast %10 : vector<8x512xf32> to vector<8x1x512xf32>
    %13 = vector.broadcast %12 : vector<8x1x512xf32> to vector<8x16x512xf32>
    %14 = arith.addf %11, %13 : vector<8x16x512xf32>
    %15 = math.tanh %14 : vector<8x16x512xf32>
    %c0_14 = arith.constant 0 : index
    %c0_15 = arith.constant 0 : index
    %16 = vector.load %arg9[%c0_14, %c0_15] : memref<512x1xf32, #tpu.memory_space<vmem>>, vector<512x1xf32>
    %17 = tpu.transpose %16, [1, 0] : vector<512x1xf32> -> vector<1x512xf32>
    %18 = vector.shape_cast %17 : vector<1x512xf32> to vector<1x1x512xf32>
    %19 = vector.broadcast %18 : vector<1x1x512xf32> to vector<8x16x512xf32>
    %20 = arith.mulf %15, %19 : vector<8x16x512xf32>
    %cst_16 = arith.constant dense<0.000000e+00> : vector<8x16xf32>
    %21 = vector.multi_reduction <add>, %20, %cst_16 [2] : vector<8x16x512xf32> to vector<8x16xf32>
    %c0_17 = arith.constant 0 : index
    %c0_18 = arith.constant 0 : index
    %22 = vector.load %arg10[%c0_17, %c0_18] : memref<1x1xf32, #tpu.memory_space<vmem>>, vector<1x1xf32>
    %23 = vector.broadcast %22 : vector<1x1xf32> to vector<8x16xf32>
    %24 = arith.addf %21, %23 : vector<8x16xf32>
    %cst_19 = arith.constant dense<0xFF800000> : vector<8xf32>
    %25 = vector.multi_reduction <maximumf>, %24, %cst_19 [1] : vector<8x16xf32> to vector<8xf32>
    %26 = vector.shape_cast %25 : vector<8xf32> to vector<8x1xf32>
    %27 = vector.broadcast %26 : vector<8x1xf32> to vector<8x16xf32>
    %28 = arith.subf %24, %27 : vector<8x16xf32>
    %29 = math.exp %28 : vector<8x16xf32>
    %cst_20 = arith.constant dense<0.000000e+00> : vector<8xf32>
    %30 = vector.multi_reduction <add>, %29, %cst_20 [1] : vector<8x16xf32> to vector<8xf32>
    %31 = vector.shape_cast %30 : vector<8xf32> to vector<8x1xf32>
    %32 = tpu.reciprocal %31 {approx = true} : vector<8x1xf32> -> vector<8x1xf32>
    %33 = vector.broadcast %32 : vector<8x1xf32> to vector<8x16xf32>
    %34 = arith.mulf %29, %33 : vector<8x16xf32>
    %35 = vector.shape_cast %34 : vector<8x16xf32> to vector<8x1x16xf32>
    "tpu.trace_start"() <{level = 10 : i32, message = "bqn,bnd->bqd"}> : () -> ()
    %cst_21 = arith.constant dense<0.000000e+00> : vector<8x1x128xf32>
    %36 = tpu.matmul %35, %5, %cst_21 {dimension_numbers = #tpu.dot_dimension_numbers<[2], [1], [1], [2], [0, 0, 0, 1, 1, 2], [0], [0]>} : vector<8x1x16xf32>, vector<8x16x128xf32>, vector<8x1x128xf32> -> vector<8x1x128xf32>
    "tpu.trace_stop"() : () -> ()
    %37 = vector.shape_cast %36 : vector<8x1x128xf32> to vector<8x128xf32>
    %c0_22 = arith.constant 0 : index
    %c0_23 = arith.constant 0 : index
    %38 = vector.load %arg11[%c0_22, %c0_23] : memref<512x128xf32, #tpu.memory_space<vmem>>, vector<512x128xf32>
    %cst_24 = arith.constant dense<0.000000e+00> : vector<8x128xf32>
    %39 = tpu.matmul %3, %38, %cst_24 {dimension_numbers = #tpu.dot_dimension_numbers<[1], [0], [0], [1], [0, 0, 1, 1], [], []>} : vector<8x512xf32>, vector<512x128xf32>, vector<8x128xf32> -> vector<8x128xf32>
    %c0_25 = arith.constant 0 : index
    %c0_26 = arith.constant 0 : index
    %40 = vector.load %arg12[%c0_25, %c0_26] : memref<1x128xf32, #tpu.memory_space<vmem>>, vector<1x128xf32>
    %41 = vector.broadcast %40 : vector<1x128xf32> to vector<8x128xf32>
    %42 = arith.addf %39, %41 : vector<8x128xf32>
    %43 = arith.negf %42 : vector<8x128xf32>
    %44 = math.exp %43 : vector<8x128xf32>
    %cst_27 = arith.constant 1.000000e+00 : f32
    %45 = vector.broadcast %cst_27 : f32 to vector<8x128xf32>
    %46 = arith.addf %45, %44 : vector<8x128xf32>
    %47 = arith.divf %45, %46 : vector<8x128xf32>
    %48 = arith.mulf %47, %37 : vector<8x128xf32>
    %c0_28 = arith.constant 0 : index
    %c0_29 = arith.constant 0 : index
    %c0_30 = arith.constant 0 : index
    %49 = vector.load %arg6[%c0_28, %c0_29, %c0_30] : memref<1x8x512xf32, #tpu.memory_space<vmem>>, vector<1x8x512xf32>
    %50 = vector.shape_cast %49 : vector<1x8x512xf32> to vector<8x512xf32>
    %51 = tpu.concatenate %50, %48, %3 in 1 : vector<8x512xf32>, vector<8x128xf32>, vector<8x512xf32> -> vector<8x1152xf32>
    %c0_31 = arith.constant 0 : index
    %c0_32 = arith.constant 0 : index
    %52 = vector.load %arg13[%c0_31, %c0_32] : memref<1152x2048xf32, #tpu.memory_space<vmem>>, vector<1152x2048xf32>
    %cst_33 = arith.constant dense<0.000000e+00> : vector<8x2048xf32>
    %53 = tpu.matmul %51, %52, %cst_33 {dimension_numbers = #tpu.dot_dimension_numbers<[1], [0], [0], [1], [0, 0, 1, 1], [], []>} : vector<8x1152xf32>, vector<1152x2048xf32>, vector<8x2048xf32> -> vector<8x2048xf32>
    %c0_34 = arith.constant 0 : index
    %c0_35 = arith.constant 0 : index
    %54 = vector.load %arg14[%c0_34, %c0_35] : memref<1x2048xf32, #tpu.memory_space<vmem>>, vector<1x2048xf32>
    %55 = vector.broadcast %54 : vector<1x2048xf32> to vector<8x2048xf32>
    %56 = arith.addf %53, %55 : vector<8x2048xf32>
    %57 = vector.extract_strided_slice %56 {offsets = [0, 0], sizes = [8, 512], strides = [1, 1]} : vector<8x2048xf32> to vector<8x512xf32>
    %58 = arith.negf %57 : vector<8x512xf32>
    %59 = math.exp %58 : vector<8x512xf32>
    %cst_36 = arith.constant 1.000000e+00 : f32
    %60 = vector.broadcast %cst_36 : f32 to vector<8x512xf32>
    %61 = arith.addf %60, %59 : vector<8x512xf32>
    %62 = arith.divf %60, %61 : vector<8x512xf32>
    %63 = vector.extract_strided_slice %56 {offsets = [0, 512], sizes = [8, 512], strides = [1, 1]} : vector<8x2048xf32> to vector<8x512xf32>
    %64 = arith.negf %63 : vector<8x512xf32>
    %65 = math.exp %64 : vector<8x512xf32>
    %cst_37 = arith.constant 1.000000e+00 : f32
    %66 = vector.broadcast %cst_37 : f32 to vector<8x512xf32>
    %67 = arith.addf %66, %65 : vector<8x512xf32>
    %68 = arith.divf %66, %67 : vector<8x512xf32>
    %69 = vector.extract_strided_slice %56 {offsets = [0, 1024], sizes = [8, 512], strides = [1, 1]} : vector<8x2048xf32> to vector<8x512xf32>
    %70 = math.tanh %69 : vector<8x512xf32>
    %71 = vector.extract_strided_slice %56 {offsets = [0, 1536], sizes = [8, 512], strides = [1, 1]} : vector<8x2048xf32> to vector<8x512xf32>
    %72 = arith.negf %71 : vector<8x512xf32>
    %73 = math.exp %72 : vector<8x512xf32>
    %cst_38 = arith.constant 1.000000e+00 : f32
    %74 = vector.broadcast %cst_38 : f32 to vector<8x512xf32>
    %75 = arith.addf %74, %73 : vector<8x512xf32>
    %76 = arith.divf %74, %75 : vector<8x512xf32>
    %77 = arith.mulf %68, %4 : vector<8x512xf32>
    %78 = arith.mulf %62, %70 : vector<8x512xf32>
    %79 = arith.addf %77, %78 : vector<8x512xf32>
    %80 = math.tanh %79 : vector<8x512xf32>
    %81 = arith.mulf %76, %80 : vector<8x512xf32>
    %c0_39 = arith.constant 0 : index
    %c0_40 = arith.constant 0 : index
    %82 = vector.load %arg17[%c0_39, %c0_40] : memref<8x512xf32, #tpu.memory_space<vmem>>, vector<8x512xf32>
    tpu.vector_store %arg17[%c0_39, %c0_40], %81 {strides = array<i32>} : memref<8x512xf32, #tpu.memory_space<vmem>>, vector<8x512xf32>,
    %c0_41 = arith.constant 0 : index
    %c0_42 = arith.constant 0 : index
    %83 = vector.load %arg18[%c0_41, %c0_42] : memref<8x512xf32, #tpu.memory_space<vmem>>, vector<8x512xf32>
    tpu.vector_store %arg18[%c0_41, %c0_42], %79 {strides = array<i32>} : memref<8x512xf32, #tpu.memory_space<vmem>>, vector<8x512xf32>,
    %c0_43 = arith.constant 0 : index
    %c0_44 = arith.constant 0 : index
    %c0_45 = arith.constant 0 : index
    %84 = vector.load %arg15[%c0_43, %c0_44, %c0_45] : memref<1x8x512xf32, #tpu.memory_space<vmem>>, vector<1x8x512xf32>
    %85 = vector.shape_cast %84 : vector<1x8x512xf32> to vector<8x512xf32>
    %86 = vector.shape_cast %81 : vector<8x512xf32> to vector<1x8x512xf32>
    tpu.vector_store %arg15[%c0_43, %c0_44, %c0_45], %86 {strides = array<i32>} : memref<1x8x512xf32, #tpu.memory_space<vmem>>, vector<1x8x512xf32>,
    %cst_46 = arith.constant 0.000000e+00 : f32
    %87 = vector.broadcast %cst_46 : f32 to vector<8x128xf32>
    %c0_47 = arith.constant 0 : index
    %c0_48 = arith.constant 0 : index
    %c0_49 = arith.constant 0 : index
    %88 = vector.load %arg16[%c0_47, %c0_48, %c0_49] : memref<1x8x128xf32, #tpu.memory_space<vmem>>, vector<1x8x128xf32>
    %89 = vector.shape_cast %88 : vector<1x8x128xf32> to vector<8x128xf32>
    %90 = vector.shape_cast %87 : vector<8x128xf32> to vector<1x8x128xf32>
    tpu.vector_store %arg16[%c0_47, %c0_48, %c0_49], %90 {strides = array<i32>} : memref<1x8x128xf32, #tpu.memory_space<vmem>>, vector<1x8x128xf32>,
    %c0_50 = arith.constant 0 : index
    %c0_51 = arith.constant 0 : index
    %c0_52 = arith.constant 0 : index
    %91 = vector.load %arg16[%c0_50, %c0_51, %c0_52] : memref<1x8x128xf32, #tpu.memory_space<vmem>>, vector<1x8x16xf32>
    %92 = vector.shape_cast %91 : vector<1x8x16xf32> to vector<8x16xf32>
    %93 = vector.shape_cast %34 : vector<8x16xf32> to vector<1x8x16xf32>
    tpu.vector_store %arg16[%c0_50, %c0_51, %c0_52], %93 {strides = array<i32>} : memref<1x8x128xf32, #tpu.memory_space<vmem>>, vector<1x8x16xf32>,
    return
  }
  func.func @transform_0(%arg0: i32, %arg1: i32) -> (i32, i32, i32) {
    %c0_i32 = arith.constant 0 : i32
    %c0_i32_0 = arith.constant 0 : i32
    %c0_i32_1 = arith.constant 0 : i32
    return %arg0, %c0_i32, %c0_i32_0 : i32, i32, i32
  }
  func.func @transform_1(%arg0: i32, %arg1: i32) -> (i32, i32, i32) {
    %c0_i32 = arith.constant 0 : i32
    %c0_i32_0 = arith.constant 0 : i32
    %c0_i32_1 = arith.constant 0 : i32
    return %arg0, %c0_i32, %c0_i32_0 : i32, i32, i32
  }
  func.func @transform_2(%arg0: i32, %arg1: i32) -> (i32, i32) {
    %c0_i32 = arith.constant 0 : i32
    %c0_i32_0 = arith.constant 0 : i32
    return %arg0, %c0_i32 : i32, i32
  }
  func.func @transform_3(%arg0: i32, %arg1: i32) -> (i32, i32) {
    %c0_i32 = arith.constant 0 : i32
    %c0_i32_0 = arith.constant 0 : i32
    return %arg0, %c0_i32 : i32, i32
  }
  func.func @transform_4(%arg0: i32, %arg1: i32) -> (i32, i32, i32) {
    %c0_i32 = arith.constant 0 : i32
    %c0_i32_0 = arith.constant 0 : i32
    return %arg1, %arg0, %c0_i32 : i32, i32, i32
  }
  func.func @transform_5(%arg0: i32, %arg1: i32) -> (i32, i32) {
    %c0_i32 = arith.constant 0 : i32
    %c0_i32_0 = arith.constant 0 : i32
    %c0_i32_1 = arith.constant 0 : i32
    return %c0_i32, %c0_i32_0 : i32, i32
  }
  func.func @transform_6(%arg0: i32, %arg1: i32) -> (i32, i32) {
    %c0_i32 = arith.constant 0 : i32
    %c0_i32_0 = arith.constant 0 : i32
    %c0_i32_1 = arith.constant 0 : i32
    return %c0_i32, %c0_i32_0 : i32, i32
  }
  func.func @transform_7(%arg0: i32, %arg1: i32) -> (i32, i32) {
    %c0_i32 = arith.constant 0 : i32
    %c0_i32_0 = arith.constant 0 : i32
    %c0_i32_1 = arith.constant 0 : i32
    return %c0_i32, %c0_i32_0 : i32, i32
  }
  func.func @transform_8(%arg0: i32, %arg1: i32) -> (i32, i32) {
    %c0_i32 = arith.constant 0 : i32
    %c0_i32_0 = arith.constant 0 : i32
    %c0_i32_1 = arith.constant 0 : i32
    return %c0_i32, %c0_i32_0 : i32, i32
  }
  func.func @transform_9(%arg0: i32, %arg1: i32) -> (i32, i32) {
    %c0_i32 = arith.constant 0 : i32
    %c0_i32_0 = arith.constant 0 : i32
    %c0_i32_1 = arith.constant 0 : i32
    return %c0_i32, %c0_i32_0 : i32, i32
  }
  func.func @transform_10(%arg0: i32, %arg1: i32) -> (i32, i32) {
    %c0_i32 = arith.constant 0 : i32
    %c0_i32_0 = arith.constant 0 : i32
    %c0_i32_1 = arith.constant 0 : i32
    return %c0_i32, %c0_i32_0 : i32, i32
  }
  func.func @transform_11(%arg0: i32, %arg1: i32) -> (i32, i32) {
    %c0_i32 = arith.constant 0 : i32
    %c0_i32_0 = arith.constant 0 : i32
    %c0_i32_1 = arith.constant 0 : i32
    return %c0_i32, %c0_i32_0 : i32, i32
  }
  func.func @transform_12(%arg0: i32, %arg1: i32) -> (i32, i32) {
    %c0_i32 = arith.constant 0 : i32
    %c0_i32_0 = arith.constant 0 : i32
    %c0_i32_1 = arith.constant 0 : i32
    return %c0_i32, %c0_i32_0 : i32, i32
  }
  func.func @transform_13(%arg0: i32, %arg1: i32) -> (i32, i32, i32) {
    %c0_i32 = arith.constant 0 : i32
    %c0_i32_0 = arith.constant 0 : i32
    return %arg1, %arg0, %c0_i32 : i32, i32, i32
  }
  func.func @transform_14(%arg0: i32, %arg1: i32) -> (i32, i32, i32) {
    %c0_i32 = arith.constant 0 : i32
    %c0_i32_0 = arith.constant 0 : i32
    return %arg1, %arg0, %c0_i32 : i32, i32, i32
  }
}

</mosaic_0001>

<llo_original>
// kernel: decoder_forward.1
$region0: #{decoder_forward.1}
  #allocation0 [shape = 'u32[]', space=smem, size = 0x4, offset = 0x4, fixed_abs, tag = 'smem constant byte address 0x4 - core index']
  #allocation1 [shape = 'u32[144,128]{1,0:T(1,128)}', space=vmem, size = 0x12000, scoped, tag = 'internal scratch']
  #allocation2 [shape = 'f32[8,512]{1,0:T(8,128)}', space=vmem, size = 0x4000, scoped, tag = 'scratch operand']
  #allocation3 [shape = 'f32[8,512]{1,0:T(8,128)}', space=vmem, size = 0x4000, scoped, tag = 'scratch operand']
  #allocation4 [shape = 'f32[1,1]{1,0:T(1,128)S(1)}', space=vmem, size = 0x200, scoped, tag = 'scoped memory for decoder_forward.1']
  %s0 = inlined_call_operand.vmem [shape: f32[8,16,128], index: 0, kind: input, shape index: {}]
  %s1 = inlined_call_operand.vmem [shape: f32[8,16,512], index: 1, kind: input, shape index: {}]
  %s2 = inlined_call_operand.vmem [shape: f32[8,512], index: 2, kind: input, shape index: {}]
  %s3 = inlined_call_operand.vmem [shape: f32[8,512], index: 3, kind: input, shape index: {}]
  %s4 = inlined_call_operand.vmem [shape: f32[7,8,512], index: 4, kind: input, shape index: {}]
  %s5 = inlined_call_operand.vmem [shape: f32[512,512], index: 5, kind: input, shape index: {}]
  %s6 = inlined_call_operand.vmem [shape: f32[1,512], index: 6, kind: input, shape index: {}]
  %s7 = inlined_call_operand.vmem [shape: f32[512,1], index: 7, kind: input, shape index: {}]
  %s8 = inlined_call_operand.<no memory space> [shape: f32[1,1], index: 8, kind: input, shape index: {}]
  %s9 = inlined_call_operand.vmem [shape: f32[512,128], index: 9, kind: input, shape index: {}]
  %s10 = inlined_call_operand.vmem [shape: f32[1,128], index: 10, kind: input, shape index: {}]
  %s11 = inlined_call_operand.vmem [shape: f32[1152,2048], index: 11, kind: input, shape index: {}]
  %s12 = inlined_call_operand.vmem [shape: f32[1,2048], index: 12, kind: input, shape index: {}]
  %s13 = inlined_call_operand.vmem [shape: f32[7,8,512], index: 13, kind: output, shape index: {0}]
  %s14 = inlined_call_operand.vmem [shape: f32[7,8,128], index: 14, kind: output, shape index: {1}]
  %15 = xla_tuple %s13, %s14
  %s16 = sld [smem:[#allocation0]]
  $region97: #{decoder_forward.1} parent=0
    _
  %s18 = ssub.s32 1, %s16
  %s19 = scalar_select 0, %s18, %s16
  %v20 = vstv %s8
  %21 = vst [vmem:[#allocation4] sm:$0x1] %v20
  loop: start=0, step=1, limit=9
  $region2: #{decoder_forward.1} parent=0 // loop_pre_header
    _
  $region3: #{decoder_forward.1} parent=0 // loop_header
    %s23 = sphi 0, %s27
    %p24 = scmp.ge.s32.totalorder %s23, 9
    %s30 = sphi 0, %s42
    %s31 = sphi 0, %s38
    %s32 = sphi 0, %s30
    %s33 = sphi 0, %s31
    %s34 = sphi 0, %s32
    %s35 = sphi 0, %s33
    %s45 = sphi 0, %s47
    %s48 = sphi 0, %s45
    %s49 = sphi 0, %s48
    %s65 = sphi 0, %s49
    %s71 = sphi 0, %s73
    %s74 = sphi 0, %s71
    %s75 = sphi 0, %s74
    %s91 = sphi 0, %s75
    %s97 = sphi 0, %s99
    %s100 = sphi 0, %s97
    %s101 = sphi 0, %s100
    %s117 = sphi 0, %s101
    %s123 = sphi 0, %s125
    %s126 = sphi 0, %s123
    %s127 = sphi 0, %s126
    %s143 = sphi 0, %s127
    %s151 = sphi 0, %s153
    %s154 = sphi 0, %s151
    %s155 = sphi 0, %s154
    %s171 = sphi 0, %s155
    %s175 = sphi 0, %s175
    %s177 = sphi 0, %s175
    %s178 = sphi 0, %s177
    %s192 = sphi 0, %s178
    %s196 = sphi 0, %s196
    %s198 = sphi 0, %s196
    %s199 = sphi 0, %s198
    %s213 = sphi 0, %s199
    %s217 = sphi 0, %s217
    %s219 = sphi 0, %s217
    %s220 = sphi 0, %s219
    %s234 = sphi 0, %s220
    %s238 = sphi 0, %s238
    %s240 = sphi 0, %s238
    %s241 = sphi 0, %s240
    %s255 = sphi 0, %s241
    %s259 = sphi 0, %s259
    %s261 = sphi 0, %s259
    %s262 = sphi 0, %s261
    %s276 = sphi 0, %s262
    %s280 = sphi 0, %s280
    %s282 = sphi 0, %s280
    %s283 = sphi 0, %s282
    %s297 = sphi 0, %s283
    %s301 = sphi 0, %s301
    %s303 = sphi 0, %s301
    %s304 = sphi 0, %s303
    %s318 = sphi 0, %s304
    %s322 = sphi 0, %s322
    %s324 = sphi 0, %s322
    %s325 = sphi 0, %s324
    %s339 = sphi 0, %s325
    %s347 = sphi 0, %s349
    %s350 = sphi 0, %s347
    %s351 = sphi 0, %s350
    %s367 = sphi 0, %s351
    %s375 = sphi 0, %s377
    %s378 = sphi 0, %s375
    %s379 = sphi 0, %s378
    %s395 = sphi 0, %s379
  $region4: #{decoder_forward.1} parent=0 // loop_header_branch
    %26 = sbr.rel (%p24) target = $region8
  $region5: #{decoder_forward.1} parent=0 // loop_body
    %s28 = ssub.s32 %s23, 1
    %s29 = ssub.s32 %s23, 2
    %s36 = sadd.s32 1, %s31
    %p37 = scmp.ge.s32.totalorder %s36, 7
    %s38 = scalar_select %p37, 0, %s36
    %s39 = sadd.s32 1, %s30
    %s40 = scalar_select %p37, %s39, %s30
    %p41 = scmp.ge.s32.totalorder %s40, 1
    %s42 = scalar_select %p41, 0, %s40
    %s43 = ssub.s32 %s30, %s42
    %p44 = scmp.eq.s32.totalorder %s43, 0
    %s46 = sadd.s32 %s45, 1
    %s47 = scalar_select %p44, %s45, %s46
    %p50 = pneg %p44
    %p51 = scmp.eq.s32.totalorder %s23, 6
    %p52 = por %p50, %p51
    %p53 = scmp.ne.s32.totalorder %s45, %s48
    %p54 = scmp.eq.s32.totalorder %s23, 0
    %p55 = por %p53, %p54
    %p56 = scmp.ne.s32.totalorder %s45, %s48
    %p57 = scmp.eq.s32.totalorder %s28, 6
    %p58 = por %p56, %p57
    %p59 = scmp.ne.s32.totalorder %s48, %s49
    %p60 = scmp.eq.s32.totalorder %s28, 0
    %p61 = por %p59, %p60
    %p62 = scmp.ne.s32.totalorder %s48, %s49
    %p63 = scmp.eq.s32.totalorder %s29, 6
    %p64 = por %p62, %p63
    %p66 = scmp.ne.s32.totalorder %s49, %s65
    %p67 = scmp.eq.s32.totalorder %s29, 0
    %p68 = por %p66, %p67
    %s69 = ssub.s32 %s30, %s42
    %p70 = scmp.eq.s32.totalorder %s69, 0
    %s72 = sadd.s32 %s71, 1
    %s73 = scalar_select %p70, %s71, %s72
    %p76 = pneg %p70
    %p77 = scmp.eq.s32.totalorder %s23, 6
    %p78 = por %p76, %p77
    %p79 = scmp.ne.s32.totalorder %s71, %s74
    %p80 = scmp.eq.s32.totalorder %s23, 0
    %p81 = por %p79, %p80
    %p82 = scmp.ne.s32.totalorder %s71, %s74
    %p83 = scmp.eq.s32.totalorder %s28, 6
    %p84 = por %p82, %p83
    %p85 = scmp.ne.s32.totalorder %s74, %s75
    %p86 = scmp.eq.s32.totalorder %s28, 0
    %p87 = por %p85, %p86
    %p88 = scmp.ne.s32.totalorder %s74, %s75
    %p89 = scmp.eq.s32.totalorder %s29, 6
    %p90 = por %p88, %p89
    %p92 = scmp.ne.s32.totalorder %s75, %s91
    %p93 = scmp.eq.s32.totalorder %s29, 0
    %p94 = por %p92, %p93
    %s95 = ssub.s32 %s30, %s42
    %p96 = scmp.eq.s32.totalorder %s95, 0
    %s98 = sadd.s32 %s97, 1
    %s99 = scalar_select %p96, %s97, %s98
    %p102 = pneg %p96
    %p103 = scmp.eq.s32.totalorder %s23, 6
    %p104 = por %p102, %p103
    %p105 = scmp.ne.s32.totalorder %s97, %s100
    %p106 = scmp.eq.s32.totalorder %s23, 0
    %p107 = por %p105, %p106
    %p108 = scmp.ne.s32.totalorder %s97, %s100
    %p109 = scmp.eq.s32.totalorder %s28, 6
    %p110 = por %p108, %p109
    %p111 = scmp.ne.s32.totalorder %s100, %s101
    %p112 = scmp.eq.s32.totalorder %s28, 0
    %p113 = por %p111, %p112
    %p114 = scmp.ne.s32.totalorder %s100, %s101
    %p115 = scmp.eq.s32.totalorder %s29, 6
    %p116 = por %p114, %p115
    %p118 = scmp.ne.s32.totalorder %s101, %s117
    %p119 = scmp.eq.s32.totalorder %s29, 0
    %p120 = por %p118, %p119
    %s121 = ssub.s32 %s30, %s42
    %p122 = scmp.eq.s32.totalorder %s121, 0
    %s124 = sadd.s32 %s123, 1
    %s125 = scalar_select %p122, %s123, %s124
    %p128 = pneg %p122
    %p129 = scmp.eq.s32.totalorder %s23, 6
    %p130 = por %p128, %p129
    %p131 = scmp.ne.s32.totalorder %s123, %s126
    %p132 = scmp.eq.s32.totalorder %s23, 0
    %p133 = por %p131, %p132
    %p134 = scmp.ne.s32.totalorder %s123, %s126
    %p135 = scmp.eq.s32.totalorder %s28, 6
    %p136 = por %p134, %p135
    %p137 = scmp.ne.s32.totalorder %s126, %s127
    %p138 = scmp.eq.s32.totalorder %s28, 0
    %p139 = por %p137, %p138
    %p140 = scmp.ne.s32.totalorder %s126, %s127
    %p141 = scmp.eq.s32.totalorder %s29, 6
    %p142 = por %p140, %p141
    %p144 = scmp.ne.s32.totalorder %s127, %s143
    %p145 = scmp.eq.s32.totalorder %s29, 0
    %p146 = por %p144, %p145
    %s147 = ssub.s32 %s31, %s38
    %s148 = ssub.s32 %s30, %s42
    %s149 = sor.u32 %s147, %s148
    %p150 = scmp.eq.s32.totalorder %s149, 0
    %s152 = sadd.s32 %s151, 1
    %s153 = scalar_select %p150, %s151, %s152
    %p156 = pneg %p150
    %p157 = scmp.eq.s32.totalorder %s23, 6
    %p158 = por %p156, %p157
    %p159 = scmp.ne.s32.totalorder %s151, %s154
    %p160 = scmp.eq.s32.totalorder %s23, 0
    %p161 = por %p159, %p160
    %p162 = scmp.ne.s32.totalorder %s151, %s154
    %p163 = scmp.eq.s32.totalorder %s28, 6
    %p164 = por %p162, %p163
    %p165 = scmp.ne.s32.totalorder %s154, %s155
    %p166 = scmp.eq.s32.totalorder %s28, 0
    %p167 = por %p165, %p166
    %p168 = scmp.ne.s32.totalorder %s154, %s155
    %p169 = scmp.eq.s32.totalorder %s29, 6
    %p170 = por %p168, %p169
    %p172 = scmp.ne.s32.totalorder %s155, %s171
    %p173 = scmp.eq.s32.totalorder %s29, 0
    %p174 = por %p172, %p173
    %s176 = sadd.s32 %s175, 1
    %p179 = scmp.eq.s32.totalorder %s23, 6
    %p180 = scmp.ne.s32.totalorder %s175, %s177
    %p181 = scmp.eq.s32.totalorder %s23, 0
    %p182 = por %p180, %p181
    %p183 = scmp.ne.s32.totalorder %s175, %s177
    %p184 = scmp.eq.s32.totalorder %s28, 6
    %p185 = por %p183, %p184
    %p186 = scmp.ne.s32.totalorder %s177, %s178
    %p187 = scmp.eq.s32.totalorder %s28, 0
    %p188 = por %p186, %p187
    %p189 = scmp.ne.s32.totalorder %s177, %s178
    %p190 = scmp.eq.s32.totalorder %s29, 6
    %p191 = por %p189, %p190
    %p193 = scmp.ne.s32.totalorder %s178, %s192
    %p194 = scmp.eq.s32.totalorder %s29, 0
    %p195 = por %p193, %p194
    %s197 = sadd.s32 %s196, 1
    %p200 = scmp.eq.s32.totalorder %s23, 6
    %p201 = scmp.ne.s32.totalorder %s196, %s198
    %p202 = scmp.eq.s32.totalorder %s23, 0
    %p203 = por %p201, %p202
    %p204 = scmp.ne.s32.totalorder %s196, %s198
    %p205 = scmp.eq.s32.totalorder %s28, 6
    %p206 = por %p204, %p205
    %p207 = scmp.ne.s32.totalorder %s198, %s199
    %p208 = scmp.eq.s32.totalorder %s28, 0
    %p209 = por %p207, %p208
    %p210 = scmp.ne.s32.totalorder %s198, %s199
    %p211 = scmp.eq.s32.totalorder %s29, 6
    %p212 = por %p210, %p211
    %p214 = scmp.ne.s32.totalorder %s199, %s213
    %p215 = scmp.eq.s32.totalorder %s29, 0
    %p216 = por %p214, %p215
    %s218 = sadd.s32 %s217, 1
    %p221 = scmp.eq.s32.totalorder %s23, 6
    %p222 = scmp.ne.s32.totalorder %s217, %s219
    %p223 = scmp.eq.s32.totalorder %s23, 0
    %p224 = por %p222, %p223
    %p225 = scmp.ne.s32.totalorder %s217, %s219
    %p226 = scmp.eq.s32.totalorder %s28, 6
    %p227 = por %p225, %p226
    %p228 = scmp.ne.s32.totalorder %s219, %s220
    %p229 = scmp.eq.s32.totalorder %s28, 0
    %p230 = por %p228, %p229
    %p231 = scmp.ne.s32.totalorder %s219, %s220
    %p232 = scmp.eq.s32.totalorder %s29, 6
    %p233 = por %p231, %p232
    %p235 = scmp.ne.s32.totalorder %s220, %s234
    %p236 = scmp.eq.s32.totalorder %s29, 0
    %p237 = por %p235, %p236
    %s239 = sadd.s32 %s238, 1
    %p242 = scmp.eq.s32.totalorder %s23, 6
    %p243 = scmp.ne.s32.totalorder %s238, %s240
    %p244 = scmp.eq.s32.totalorder %s23, 0
    %p245 = por %p243, %p244
    %p246 = scmp.ne.s32.totalorder %s238, %s240
    %p247 = scmp.eq.s32.totalorder %s28, 6
    %p248 = por %p246, %p247
    %p249 = scmp.ne.s32.totalorder %s240, %s241
    %p250 = scmp.eq.s32.totalorder %s28, 0
    %p251 = por %p249, %p250
    %p252 = scmp.ne.s32.totalorder %s240, %s241
    %p253 = scmp.eq.s32.totalorder %s29, 6
    %p254 = por %p252, %p253
    %p256 = scmp.ne.s32.totalorder %s241, %s255
    %p257 = scmp.eq.s32.totalorder %s29, 0
    %p258 = por %p256, %p257
    %s260 = sadd.s32 %s259, 1
    %p263 = scmp.eq.s32.totalorder %s23, 6
    %p264 = scmp.ne.s32.totalorder %s259, %s261
    %p265 = scmp.eq.s32.totalorder %s23, 0
    %p266 = por %p264, %p265
    %p267 = scmp.ne.s32.totalorder %s259, %s261
    %p268 = scmp.eq.s32.totalorder %s28, 6
    %p269 = por %p267, %p268
    %p270 = scmp.ne.s32.totalorder %s261, %s262
    %p271 = scmp.eq.s32.totalorder %s28, 0
    %p272 = por %p270, %p271
    %p273 = scmp.ne.s32.totalorder %s261, %s262
    %p274 = scmp.eq.s32.totalorder %s29, 6
    %p275 = por %p273, %p274
    %p277 = scmp.ne.s32.totalorder %s262, %s276
    %p278 = scmp.eq.s32.totalorder %s29, 0
    %p279 = por %p277, %p278
    %s281 = sadd.s32 %s280, 1
    %p284 = scmp.eq.s32.totalorder %s23, 6
    %p285 = scmp.ne.s32.totalorder %s280, %s282
    %p286 = scmp.eq.s32.totalorder %s23, 0
    %p287 = por %p285, %p286
    %p288 = scmp.ne.s32.totalorder %s280, %s282
    %p289 = scmp.eq.s32.totalorder %s28, 6
    %p290 = por %p288, %p289
    %p291 = scmp.ne.s32.totalorder %s282, %s283
    %p292 = scmp.eq.s32.totalorder %s28, 0
    %p293 = por %p291, %p292
    %p294 = scmp.ne.s32.totalorder %s282, %s283
    %p295 = scmp.eq.s32.totalorder %s29, 6
    %p296 = por %p294, %p295
    %p298 = scmp.ne.s32.totalorder %s283, %s297
    %p299 = scmp.eq.s32.totalorder %s29, 0
    %p300 = por %p298, %p299
    %s302 = sadd.s32 %s301, 1
    %p305 = scmp.eq.s32.totalorder %s23, 6
    %p306 = scmp.ne.s32.totalorder %s301, %s303
    %p307 = scmp.eq.s32.totalorder %s23, 0
    %p308 = por %p306, %p307
    %p309 = scmp.ne.s32.totalorder %s301, %s303
    %p310 = scmp.eq.s32.totalorder %s28, 6
    %p311 = por %p309, %p310
    %p312 = scmp.ne.s32.totalorder %s303, %s304
    %p313 = scmp.eq.s32.totalorder %s28, 0
    %p314 = por %p312, %p313
    %p315 = scmp.ne.s32.totalorder %s303, %s304
    %p316 = scmp.eq.s32.totalorder %s29, 6
    %p317 = por %p315, %p316
    %p319 = scmp.ne.s32.totalorder %s304, %s318
    %p320 = scmp.eq.s32.totalorder %s29, 0
    %p321 = por %p319, %p320
    %s323 = sadd.s32 %s322, 1
    %p326 = scmp.eq.s32.totalorder %s23, 6
    %p327 = scmp.ne.s32.totalorder %s322, %s324
    %p328 = scmp.eq.s32.totalorder %s23, 0
    %p329 = por %p327, %p328
    %p330 = scmp.ne.s32.totalorder %s322, %s324
    %p331 = scmp.eq.s32.totalorder %s28, 6
    %p332 = por %p330, %p331
    %p333 = scmp.ne.s32.totalorder %s324, %s325
    %p334 = scmp.eq.s32.totalorder %s28, 0
    %p335 = por %p333, %p334
    %p336 = scmp.ne.s32.totalorder %s324, %s325
    %p337 = scmp.eq.s32.totalorder %s29, 6
    %p338 = por %p336, %p337
    %p340 = scmp.ne.s32.totalorder %s325, %s339
    %p341 = scmp.eq.s32.totalorder %s29, 0
    %p342 = por %p340, %p341
    %s343 = ssub.s32 %s31, %s38
    %s344 = ssub.s32 %s30, %s42
    %s345 = sor.u32 %s343, %s344
    %p346 = scmp.eq.s32.totalorder %s345, 0
    %s348 = sadd.s32 %s347, 1
    %s349 = scalar_select %p346, %s347, %s348
    %p352 = pneg %p346
    %p353 = scmp.eq.s32.totalorder %s23, 6
    %p354 = por %p352, %p353
    %p355 = scmp.ne.s32.totalorder %s347, %s350
    %p356 = scmp.eq.s32.totalorder %s23, 0
    %p357 = por %p355, %p356
    %p358 = scmp.ne.s32.totalorder %s347, %s350
    %p359 = scmp.eq.s32.totalorder %s28, 6
    %p360 = por %p358, %p359
    %p361 = scmp.ne.s32.totalorder %s350, %s351
    %p362 = scmp.eq.s32.totalorder %s28, 0
    %p363 = por %p361, %p362
    %p364 = scmp.ne.s32.totalorder %s350, %s351
    %p365 = scmp.eq.s32.totalorder %s29, 6
    %p366 = por %p364, %p365
    %p368 = scmp.ne.s32.totalorder %s351, %s367
    %p369 = scmp.eq.s32.totalorder %s29, 0
    %p370 = por %p368, %p369
    %s371 = ssub.s32 %s31, %s38
    %s372 = ssub.s32 %s30, %s42
    %s373 = sor.u32 %s371, %s372
    %p374 = scmp.eq.s32.totalorder %s373, 0
    %s376 = sadd.s32 %s375, 1
    %s377 = scalar_select %p374, %s375, %s376
    %p380 = pneg %p374
    %p381 = scmp.eq.s32.totalorder %s23, 6
    %p382 = por %p380, %p381
    %p383 = scmp.ne.s32.totalorder %s375, %s378
    %p384 = scmp.eq.s32.totalorder %s23, 0
    %p385 = por %p383, %p384
    %p386 = scmp.ne.s32.totalorder %s375, %s378
    %p387 = scmp.eq.s32.totalorder %s28, 6
    %p388 = por %p386, %p387
    %p389 = scmp.ne.s32.totalorder %s378, %s379
    %p390 = scmp.eq.s32.totalorder %s28, 0
    %p391 = por %p389, %p390
    %p392 = scmp.ne.s32.totalorder %s378, %s379
    %p393 = scmp.eq.s32.totalorder %s29, 6
    %p394 = por %p392, %p393
    %p396 = scmp.ne.s32.totalorder %s379, %s395
    %p397 = scmp.eq.s32.totalorder %s29, 0
    %p398 = por %p396, %p397
    %p399 = scmp.le.s32.totalorder 1, %s23
    %p400 = scmp.lt.s32.totalorder %s23, 8
    %p401 = pnand %p399, %p400
    %p402 = pneg %p401
    // Predicated region
    $region9: #{decoder_forward.1} parent=5 // pred_check
      _
    $region10: #{decoder_forward.1} parent=5 // pred_check_branch
      %404 = sbr.rel (%p401) target = $region12
    $region11: #{decoder_forward.1} parent=5 // pred_region
      %s405 = ssub.s32 %s23, 1
      // Predicated region
      $region13: #{decoder_forward.1} parent=11 // pred_check
        %p406 = pneg %p61
      $region14: #{decoder_forward.1} parent=11 // pred_check_branch
        %408 = sbr.rel (%p406) target = $region16
      $region15: #{decoder_forward.1} parent=11 // pred_region
        %s409 = smul.u32 8, %s32
        %p410 = scmp.lt.s32.totalorder %s409, 7
        %s411 = scalar_select %p410, %s409, 7
        %s412 = smul.addr %s411, 2
        %s413 = smul.addr %s412, 8
        %s414 = scalar_lea.vmem %s0, %s413
        %s415 = smul.u32 8, %s32
      $region16: #{decoder_forward.1} parent=11 // pred_fallthru
        _
      // Predicated region
      $region17: #{decoder_forward.1} parent=11 // pred_check
        %p416 = pneg %p87
      $region18: #{decoder_forward.1} parent=11 // pred_check_branch
        %418 = sbr.rel (%p416) target = $region20
      $region19: #{decoder_forward.1} parent=11 // pred_region
        %s419 = smul.u32 8, %s32
        %p420 = scmp.lt.s32.totalorder %s419, 7
        %s421 = scalar_select %p420, %s419, 7
        %s422 = smul.addr %s421, 8
        %s423 = smul.addr %s422, 8
        %s424 = scalar_lea.vmem %s1, %s423
        %s425 = smul.u32 8, %s32
      $region20: #{decoder_forward.1} parent=11 // pred_fallthru
        _
      // Predicated region
      $region21: #{decoder_forward.1} parent=11 // pred_check
        %p426 = pneg %p113
      $region22: #{decoder_forward.1} parent=11 // pred_check_branch
        %428 = sbr.rel (%p426) target = $region24
      $region23: #{decoder_forward.1} parent=11 // pred_region
        %p429 = scmp.lt.s32.totalorder %s32, 0
        %s430 = scalar_select %p429, %s32, 0
        %s431 = smul.addr %s430, 4
        %s432 = smul.addr %s431, 8
        %s433 = scalar_lea.vmem %s2, %s432
      $region24: #{decoder_forward.1} parent=11 // pred_fallthru
        _
      // Predicated region
      $region25: #{decoder_forward.1} parent=11 // pred_check
        %p434 = pneg %p139
      $region26: #{decoder_forward.1} parent=11 // pred_check_branch
        %436 = sbr.rel (%p434) target = $region28
      $region27: #{decoder_forward.1} parent=11 // pred_region
        %p437 = scmp.lt.s32.totalorder %s32, 0
        %s438 = scalar_select %p437, %s32, 0
        %s439 = smul.addr %s438, 4
        %s440 = smul.addr %s439, 8
        %s441 = scalar_lea.vmem %s3, %s440
      $region28: #{decoder_forward.1} parent=11 // pred_fallthru
        _
      // Predicated region
      $region29: #{decoder_forward.1} parent=11 // pred_check
        %p442 = pneg %p188
      $region30: #{decoder_forward.1} parent=11 // pred_check_branch
        %444 = sbr.rel (%p442) target = $region32
      $region31: #{decoder_forward.1} parent=11 // pred_region
        _
      $region32: #{decoder_forward.1} parent=11 // pred_fallthru
        _
      // Predicated region
      $region33: #{decoder_forward.1} parent=11 // pred_check
        %p445 = pneg %p209
      $region34: #{decoder_forward.1} parent=11 // pred_check_branch
        %447 = sbr.rel (%p445) target = $region36
      $region35: #{decoder_forward.1} parent=11 // pred_region
        _
      $region36: #{decoder_forward.1} parent=11 // pred_fallthru
        _
      // Predicated region
      $region37: #{decoder_forward.1} parent=11 // pred_check
        %p448 = pneg %p230
      $region38: #{decoder_forward.1} parent=11 // pred_check_branch
        %450 = sbr.rel (%p448) target = $region40
      $region39: #{decoder_forward.1} parent=11 // pred_region
        _
      $region40: #{decoder_forward.1} parent=11 // pred_fallthru
        _
      // Predicated region
      $region41: #{decoder_forward.1} parent=11 // pred_check
        %p451 = pneg %p251
      $region42: #{decoder_forward.1} parent=11 // pred_check_branch
        %453 = sbr.rel (%p451) target = $region44
      $region43: #{decoder_forward.1} parent=11 // pred_region
        _
      $region44: #{decoder_forward.1} parent=11 // pred_fallthru
        _
      // Predicated region
      $region45: #{decoder_forward.1} parent=11 // pred_check
        %p454 = pneg %p272
      $region46: #{decoder_forward.1} parent=11 // pred_check_branch
        %456 = sbr.rel (%p454) target = $region48
      $region47: #{decoder_forward.1} parent=11 // pred_region
        _
      $region48: #{decoder_forward.1} parent=11 // pred_fallthru
        _
      // Predicated region
      $region49: #{decoder_forward.1} parent=11 // pred_check
        %p457 = pneg %p293
      $region50: #{decoder_forward.1} parent=11 // pred_check_branch
        %459 = sbr.rel (%p457) target = $region52
      $region51: #{decoder_forward.1} parent=11 // pred_region
        _
      $region52: #{decoder_forward.1} parent=11 // pred_fallthru
        _
      // Predicated region
      $region53: #{decoder_forward.1} parent=11 // pred_check
        %p460 = pneg %p314
      $region54: #{decoder_forward.1} parent=11 // pred_check_branch
        %462 = sbr.rel (%p460) target = $region56
      $region55: #{decoder_forward.1} parent=11 // pred_region
        _
      $region56: #{decoder_forward.1} parent=11 // pred_fallthru
        _
      // Predicated region
      $region57: #{decoder_forward.1} parent=11 // pred_check
        %p463 = pneg %p335
      $region58: #{decoder_forward.1} parent=11 // pred_check_branch
        %465 = sbr.rel (%p463) target = $region60
      $region59: #{decoder_forward.1} parent=11 // pred_region
        _
      $region60: #{decoder_forward.1} parent=11 // pred_fallthru
        _
    $region12: #{decoder_forward.1} parent=5 // pred_fallthru
      _
    %p466 = scmp.lt.s32.totalorder %s23, 7
    // Predicated region
    $region61: #{decoder_forward.1} parent=5 // pred_check
      %p467 = pneg %p466
    $region62: #{decoder_forward.1} parent=5 // pred_check_branch
      %469 = sbr.rel (%p467) target = $region64
    $region63: #{decoder_forward.1} parent=5 // pred_region
      // Predicated region
      $region65: #{decoder_forward.1} parent=63 // pred_check
        %p470 = pneg %p161
      $region66: #{decoder_forward.1} parent=63 // pred_check_branch
        %472 = sbr.rel (%p470) target = $region68
      $region67: #{decoder_forward.1} parent=63 // pred_region
        %p473 = scmp.lt.s32.totalorder %s31, 6
        %s474 = scalar_select %p473, %s31, 6
        %p475 = scmp.lt.s32.totalorder %s30, 0
        %s476 = scalar_select %p475, %s30, 0
        %s477 = smul.addr %s476, 4
        %s478 = smul.addr %s474, 4
        %s479 = sadd.s32 %s477, %s478
        %s480 = smul.addr %s479, 8
        %s481 = scalar_lea.vmem %s4, %s480
      $region68: #{decoder_forward.1} parent=63 // pred_fallthru
        _
    $region64: #{decoder_forward.1} parent=5 // pred_fallthru
      _
    %p482 = scmp.le.s32.totalorder 1, %s23
    %p483 = scmp.lt.s32.totalorder %s23, 8
    %p484 = pnand %p482, %p483
    %p485 = pneg %p484
    // Predicated region
    $region69: #{decoder_forward.1} parent=5 // pred_check
      _
    $region70: #{decoder_forward.1} parent=5 // pred_check_branch
      %487 = sbr.rel (%p484) target = $region72
    $region71: #{decoder_forward.1} parent=5 // pred_region
      %s488 = ssub.s32 %s23, 1
      %s489 = smul.u32 8, %s32
      %p490 = scmp.lt.s32.totalorder %s489, 7
      %s491 = scalar_select %p490, %s489, 7
      %s492 = smul.addr %s491, 2
      %s493 = smul.addr %s492, 8
      %s494 = scalar_lea.vmem %s0, %s493
      %p495 = pneg %p61
      %p496 = pneg %p58
      %s497 = smul.u32 8, %s32
      %p498 = scmp.lt.s32.totalorder %s497, 7
      %s499 = scalar_select %p498, %s497, 7
      %s500 = smul.addr %s499, 8
      %s501 = smul.addr %s500, 8
      %s502 = scalar_lea.vmem %s1, %s501
      %p503 = pneg %p87
      %p504 = pneg %p84
      %p505 = scmp.lt.s32.totalorder %s32, 0
      %s506 = scalar_select %p505, %s32, 0
      %s507 = smul.addr %s506, 4
      %s508 = smul.addr %s507, 8
      %s509 = scalar_lea.vmem %s2, %s508
      %p510 = pneg %p113
      %p511 = pneg %p110
      %p512 = scmp.lt.s32.totalorder %s32, 0
      %s513 = scalar_select %p512, %s32, 0
      %s514 = smul.addr %s513, 4
      %s515 = smul.addr %s514, 8
      %s516 = scalar_lea.vmem %s3, %s515
      %p517 = pneg %p139
      %p518 = pneg %p136
      %p519 = scmp.lt.s32.totalorder %s33, 6
      %s520 = scalar_select %p519, %s33, 6
      %p521 = scmp.lt.s32.totalorder %s32, 0
      %s522 = scalar_select %p521, %s32, 0
      %s523 = smul.addr %s522, 4
      %s524 = smul.addr %s520, 4
      %s525 = sadd.s32 %s523, %s524
      %s526 = smul.addr %s525, 8
      %s527 = scalar_lea.vmem %s4, %s526
      %p528 = pneg %p167
      %p529 = pneg %p164
      %p530 = pneg %p188
      %p531 = pneg %p185
      %p532 = pneg %p209
      %p533 = pneg %p206
      %p534 = pneg %p230
      %p535 = pneg %p227
      %p536 = pneg %p251
      %p537 = pneg %p248
      %p538 = pneg %p272
      %p539 = pneg %p269
      %p540 = pneg %p293
      %p541 = pneg %p290
      %p542 = pneg %p314
      %p543 = pneg %p311
      %p544 = pneg %p335
      %p545 = pneg %p332
      %p546 = pneg %p363
      %p547 = pneg %p360
      %p548 = scmp.lt.s32.totalorder %s33, 6
      %s549 = scalar_select %p548, %s33, 6
      %p550 = scmp.lt.s32.totalorder %s32, 0
      %s551 = scalar_select %p550, %s32, 0
      %s552 = smul.addr %s551, 4
      %s553 = smul.addr %s549, 4
      %s554 = sadd.s32 %s552, %s553
      %s555 = smul.addr %s554, 8
      %s556 = scalar_lea.vmem %s13, %s555
      %p557 = pneg %p391
      %p558 = pneg %p388
      %p559 = scmp.lt.s32.totalorder %s33, 6
      %s560 = scalar_select %p559, %s33, 6
      %p561 = scmp.lt.s32.totalorder %s32, 0
      %s562 = scalar_select %p561, %s32, 0
      %s563 = sadd.s32 %s562, %s560
      %s564 = smul.addr %s563, 8
      %s565 = scalar_lea.vmem %s14, %s564
      %s566 = smul.u32 8, %s32
      %p567 = scmp.lt.s32.totalorder %s566, 7
      %s568 = scalar_select %p567, %s566, 7
      %s569 = smul.addr %s568, 2
      %s570 = smul.addr %s569, 8
      %s571 = scalar_lea.vmem %s0, %s570
      %s572 = smul.u32 8, %s32
      %s573 = smul.u32 8, %s32
      %p574 = scmp.lt.s32.totalorder %s573, 7
      %s575 = scalar_select %p574, %s573, 7
      %s576 = smul.addr %s575, 8
      %s577 = smul.addr %s576, 8
      %s578 = scalar_lea.vmem %s1, %s577
      %s579 = smul.u32 8, %s32
      %p580 = scmp.lt.s32.totalorder %s32, 0
      %s581 = scalar_select %p580, %s32, 0
      %s582 = smul.addr %s581, 4
      %s583 = smul.addr %s582, 8
      %s584 = scalar_lea.vmem %s2, %s583
      %p585 = scmp.lt.s32.totalorder %s32, 0
      %s586 = scalar_select %p585, %s32, 0
      %s587 = smul.addr %s586, 4
      %s588 = smul.addr %s587, 8
      %s589 = scalar_lea.vmem %s3, %s588
      %p590 = scmp.lt.s32.totalorder %s33, 6
      %s591 = scalar_select %p590, %s33, 6
      %p592 = scmp.lt.s32.totalorder %s32, 0
      %s593 = scalar_select %p592, %s32, 0
      %s594 = smul.addr %s593, 4
      %s595 = smul.addr %s591, 4
      %s596 = sadd.s32 %s594, %s595
      %s597 = smul.addr %s596, 8
      %s598 = scalar_lea.vmem %s4, %s597
      %p599 = scmp.lt.s32.totalorder %s33, 6
      %s600 = scalar_select %p599, %s33, 6
      %p601 = scmp.lt.s32.totalorder %s32, 0
      %s602 = scalar_select %p601, %s32, 0
      %s603 = smul.addr %s602, 4
      %s604 = smul.addr %s600, 4
      %s605 = sadd.s32 %s603, %s604
      %s606 = smul.addr %s605, 8
      %s607 = scalar_lea.vmem %s13, %s606
      %p608 = scmp.lt.s32.totalorder %s33, 6
      %s609 = scalar_select %p608, %s33, 6
      %p610 = scmp.lt.s32.totalorder %s32, 0
      %s611 = scalar_select %p610, %s32, 0
      %s612 = sadd.s32 %s611, %s609
      %s613 = smul.addr %s612, 8
      %s614 = scalar_lea.vmem %s14, %s613
      %p615 = scmp.eq.s32.totalorder %s33, 0
      // Predicated region
      $region73: #{decoder_forward.1} parent=71 // pred_check
        %p616 = pneg %p615
      $region74: #{decoder_forward.1} parent=71 // pred_check_branch
        %618 = sbr.rel (%p616) target = $region76
      $region75: #{decoder_forward.1} parent=71 // pred_region
        %v619 = vld [vmem:[%s584] sm:$0xff]
        %v620 = vld [vmem:[%s584 + $0x8] sm:$0xff]
        %v621 = vld [vmem:[%s584 + $0x10] sm:$0xff]
        %v622 = vld [vmem:[%s584 + $0x18] sm:$0xff]
        %623 = vst [vmem:[#allocation2] sm:$0xff] %v619
        %624 = vst [vmem:[#allocation2 + $0x8] sm:$0xff] %v620
        %625 = vst [vmem:[#allocation2 + $0x10] sm:$0xff] %v621
        %626 = vst [vmem:[#allocation2 + $0x18] sm:$0xff] %v622
        %v627 = vld [vmem:[%s589] sm:$0xff]
        %v628 = vld [vmem:[%s589 + $0x8] sm:$0xff]
        %v629 = vld [vmem:[%s589 + $0x10] sm:$0xff]
        %v630 = vld [vmem:[%s589 + $0x18] sm:$0xff]
        %631 = vst [vmem:[#allocation3] sm:$0xff] %v627
        %632 = vst [vmem:[#allocation3 + $0x8] sm:$0xff] %v628
        %633 = vst [vmem:[#allocation3 + $0x10] sm:$0xff] %v629
        %634 = vst [vmem:[#allocation3 + $0x18] sm:$0xff] %v630
      $region76: #{decoder_forward.1} parent=71 // pred_fallthru
        _
      %v635 = vld [vmem:[#allocation2] sm:$0xff]
      %v636 = vld [vmem:[#allocation2 + $0x8] sm:$0xff]
      %v637 = vld [vmem:[#allocation2 + $0x10] sm:$0xff]
      %v638 = vld [vmem:[#allocation2 + $0x18] sm:$0xff]
      %v639 = vld [vmem:[#allocation3] sm:$0xff]
      %v640 = vld [vmem:[#allocation3 + $0x8] sm:$0xff]
      %v641 = vld [vmem:[#allocation3 + $0x10] sm:$0xff]
      %v642 = vld [vmem:[#allocation3 + $0x18] sm:$0xff]
      %v643 = vld [vmem:[%s571] sm:$0xff]
      %v644 = vld [vmem:[%s571 + $0x8] sm:$0xff]
      %v645 = vld [vmem:[%s571 + $0x10] sm:$0xff]
      %v646 = vld [vmem:[%s571 + $0x18] sm:$0xff]
      %v647 = vld [vmem:[%s571 + $0x20] sm:$0xff]
      %v648 = vld [vmem:[%s571 + $0x28] sm:$0xff]
      %v649 = vld [vmem:[%s571 + $0x30] sm:$0xff]
      %v650 = vld [vmem:[%s571 + $0x38] sm:$0xff]
      %v651 = vld [vmem:[%s571 + $0x40] sm:$0xff]
      %v652 = vld [vmem:[%s571 + $0x48] sm:$0xff]
      %v653 = vld [vmem:[%s571 + $0x50] sm:$0xff]
      %v654 = vld [vmem:[%s571 + $0x58] sm:$0xff]
      %v655 = vld [vmem:[%s571 + $0x60] sm:$0xff]
      %v656 = vld [vmem:[%s571 + $0x68] sm:$0xff]
      %v657 = vld [vmem:[%s571 + $0x70] sm:$0xff]
      %v658 = vld [vmem:[%s571 + $0x78] sm:$0xff]
      %v659 = vld [vmem:[%s5] sm:$0xff]
      %v660 = vld [vmem:[%s5 + $0x8] sm:$0xff]
      %v661 = vld [vmem:[%s5 + $0x10] sm:$0xff]
      %v662 = vld [vmem:[%s5 + $0x18] sm:$0xff]
      %v663 = vld [vmem:[%s5 + $0x20] sm:$0xff]
      %v664 = vld [vmem:[%s5 + $0x28] sm:$0xff]
      %v665 = vld [vmem:[%s5 + $0x30] sm:$0xff]
      %v666 = vld [vmem:[%s5 + $0x38] sm:$0xff]
      %v667 = vld [vmem:[%s5 + $0x40] sm:$0xff]
      %v668 = vld [vmem:[%s5 + $0x48] sm:$0xff]
      %v669 = vld [vmem:[%s5 + $0x50] sm:$0xff]
      %v670 = vld [vmem:[%s5 + $0x58] sm:$0xff]
      %v671 = vld [vmem:[%s5 + $0x60] sm:$0xff]
      %v672 = vld [vmem:[%s5 + $0x68] sm:$0xff]
      %v673 = vld [vmem:[%s5 + $0x70] sm:$0xff]
      %v674 = vld [vmem:[%s5 + $0x78] sm:$0xff]
      %v675 = vld [vmem:[%s5 + $0x80] sm:$0xff]
      %v676 = vld [vmem:[%s5 + $0x88] sm:$0xff]
      %v677 = vld [vmem:[%s5 + $0x90] sm:$0xff]
      %v678 = vld [vmem:[%s5 + $0x98] sm:$0xff]
      %v679 = vld [vmem:[%s5 + $0xa0] sm:$0xff]
      %v680 = vld [vmem:[%s5 + $0xa8] sm:$0xff]
      %v681 = vld [vmem:[%s5 + $0xb0] sm:$0xff]
      %v682 = vld [vmem:[%s5 + $0xb8] sm:$0xff]
      %v683 = vld [vmem:[%s5 + $0xc0] sm:$0xff]
      %v684 = vld [vmem:[%s5 + $0xc8] sm:$0xff]
      %v685 = vld [vmem:[%s5 + $0xd0] sm:$0xff]
      %v686 = vld [vmem:[%s5 + $0xd8] sm:$0xff]
      %v687 = vld [vmem:[%s5 + $0xe0] sm:$0xff]
      %v688 = vld [vmem:[%s5 + $0xe8] sm:$0xff]
      %v689 = vld [vmem:[%s5 + $0xf0] sm:$0xff]
      %v690 = vld [vmem:[%s5 + $0xf8] sm:$0xff]
      %v691 = vld [vmem:[%s5 + $0x100] sm:$0xff]
      %v692 = vld [vmem:[%s5 + $0x108] sm:$0xff]
      %v693 = vld [vmem:[%s5 + $0x110] sm:$0xff]
      %v694 = vld [vmem:[%s5 + $0x118] sm:$0xff]
      %v695 = vld [vmem:[%s5 + $0x120] sm:$0xff]
      %v696 = vld [vmem:[%s5 + $0x128] sm:$0xff]
      %v697 = vld [vmem:[%s5 + $0x130] sm:$0xff]
      %v698 = vld [vmem:[%s5 + $0x138] sm:$0xff]
      %v699 = vld [vmem:[%s5 + $0x140] sm:$0xff]
      %v700 = vld [vmem:[%s5 + $0x148] sm:$0xff]
      %v701 = vld [vmem:[%s5 + $0x150] sm:$0xff]
      %v702 = vld [vmem:[%s5 + $0x158] sm:$0xff]
      %v703 = vld [vmem:[%s5 + $0x160] sm:$0xff]
      %v704 = vld [vmem:[%s5 + $0x168] sm:$0xff]
      %v705 = vld [vmem:[%s5 + $0x170] sm:$0xff]
      %v706 = vld [vmem:[%s5 + $0x178] sm:$0xff]
      %v707 = vld [vmem:[%s5 + $0x180] sm:$0xff]
      %v708 = vld [vmem:[%s5 + $0x188] sm:$0xff]
      %v709 = vld [vmem:[%s5 + $0x190] sm:$0xff]
      %v710 = vld [vmem:[%s5 + $0x198] sm:$0xff]
      %v711 = vld [vmem:[%s5 + $0x1a0] sm:$0xff]
      %v712 = vld [vmem:[%s5 + $0x1a8] sm:$0xff]
      %v713 = vld [vmem:[%s5 + $0x1b0] sm:$0xff]
      %v714 = vld [vmem:[%s5 + $0x1b8] sm:$0xff]
      %v715 = vld [vmem:[%s5 + $0x1c0] sm:$0xff]
      %v716 = vld [vmem:[%s5 + $0x1c8] sm:$0xff]
      %v717 = vld [vmem:[%s5 + $0x1d0] sm:$0xff]
      %v718 = vld [vmem:[%s5 + $0x1d8] sm:$0xff]
      %v719 = vld [vmem:[%s5 + $0x1e0] sm:$0xff]
      %v720 = vld [vmem:[%s5 + $0x1e8] sm:$0xff]
      %v721 = vld [vmem:[%s5 + $0x1f0] sm:$0xff]
      %v722 = vld [vmem:[%s5 + $0x1f8] sm:$0xff]
      %v723 = vld [vmem:[%s5 + $0x200] sm:$0xff]
      %v724 = vld [vmem:[%s5 + $0x208] sm:$0xff]
      %v725 = vld [vmem:[%s5 + $0x210] sm:$0xff]
      %v726 = vld [vmem:[%s5 + $0x218] sm:$0xff]
      %v727 = vld [vmem:[%s5 + $0x220] sm:$0xff]
      %v728 = vld [vmem:[%s5 + $0x228] sm:$0xff]
      %v729 = vld [vmem:[%s5 + $0x230] sm:$0xff]
      %v730 = vld [vmem:[%s5 + $0x238] sm:$0xff]
      %v731 = vld [vmem:[%s5 + $0x240] sm:$0xff]
      %v732 = vld [vmem:[%s5 + $0x248] sm:$0xff]
      %v733 = vld [vmem:[%s5 + $0x250] sm:$0xff]
      %v734 = vld [vmem:[%s5 + $0x258] sm:$0xff]
      %v735 = vld [vmem:[%s5 + $0x260] sm:$0xff]
      %v736 = vld [vmem:[%s5 + $0x268] sm:$0xff]
      %v737 = vld [vmem:[%s5 + $0x270] sm:$0xff]
      %v738 = vld [vmem:[%s5 + $0x278] sm:$0xff]
      %v739 = vld [vmem:[%s5 + $0x280] sm:$0xff]
      %v740 = vld [vmem:[%s5 + $0x288] sm:$0xff]
      %v741 = vld [vmem:[%s5 + $0x290] sm:$0xff]
      %v742 = vld [vmem:[%s5 + $0x298] sm:$0xff]
      %v743 = vld [vmem:[%s5 + $0x2a0] sm:$0xff]
      %v744 = vld [vmem:[%s5 + $0x2a8] sm:$0xff]
      %v745 = vld [vmem:[%s5 + $0x2b0] sm:$0xff]
      %v746 = vld [vmem:[%s5 + $0x2b8] sm:$0xff]
      %v747 = vld [vmem:[%s5 + $0x2c0] sm:$0xff]
      %v748 = vld [vmem:[%s5 + $0x2c8] sm:$0xff]
      %v749 = vld [vmem:[%s5 + $0x2d0] sm:$0xff]
      %v750 = vld [vmem:[%s5 + $0x2d8] sm:$0xff]
      %v751 = vld [vmem:[%s5 + $0x2e0] sm:$0xff]
      %v752 = vld [vmem:[%s5 + $0x2e8] sm:$0xff]
      %v753 = vld [vmem:[%s5 + $0x2f0] sm:$0xff]
      %v754 = vld [vmem:[%s5 + $0x2f8] sm:$0xff]
      %v755 = vld [vmem:[%s5 + $0x300] sm:$0xff]
      %v756 = vld [vmem:[%s5 + $0x308] sm:$0xff]
      %v757 = vld [vmem:[%s5 + $0x310] sm:$0xff]
      %v758 = vld [vmem:[%s5 + $0x318] sm:$0xff]
      %v759 = vld [vmem:[%s5 + $0x320] sm:$0xff]
      %v760 = vld [vmem:[%s5 + $0x328] sm:$0xff]
      %v761 = vld [vmem:[%s5 + $0x330] sm:$0xff]
      %v762 = vld [vmem:[%s5 + $0x338] sm:$0xff]
      %v763 = vld [vmem:[%s5 + $0x340] sm:$0xff]
      %v764 = vld [vmem:[%s5 + $0x348] sm:$0xff]
      %v765 = vld [vmem:[%s5 + $0x350] sm:$0xff]
      %v766 = vld [vmem:[%s5 + $0x358] sm:$0xff]
      %v767 = vld [vmem:[%s5 + $0x360] sm:$0xff]
      %v768 = vld [vmem:[%s5 + $0x368] sm:$0xff]
      %v769 = vld [vmem:[%s5 + $0x370] sm:$0xff]
      %v770 = vld [vmem:[%s5 + $0x378] sm:$0xff]
      %v771 = vld [vmem:[%s5 + $0x380] sm:$0xff]
      %v772 = vld [vmem:[%s5 + $0x388] sm:$0xff]
      %v773 = vld [vmem:[%s5 + $0x390] sm:$0xff]
      %v774 = vld [vmem:[%s5 + $0x398] sm:$0xff]
      %v775 = vld [vmem:[%s5 + $0x3a0] sm:$0xff]
      %v776 = vld [vmem:[%s5 + $0x3a8] sm:$0xff]
      %v777 = vld [vmem:[%s5 + $0x3b0] sm:$0xff]
      %v778 = vld [vmem:[%s5 + $0x3b8] sm:$0xff]
      %v779 = vld [vmem:[%s5 + $0x3c0] sm:$0xff]
      %v780 = vld [vmem:[%s5 + $0x3c8] sm:$0xff]
      %v781 = vld [vmem:[%s5 + $0x3d0] sm:$0xff]
      %v782 = vld [vmem:[%s5 + $0x3d8] sm:$0xff]
      %v783 = vld [vmem:[%s5 + $0x3e0] sm:$0xff]
      %v784 = vld [vmem:[%s5 + $0x3e8] sm:$0xff]
      %v785 = vld [vmem:[%s5 + $0x3f0] sm:$0xff]
      %v786 = vld [vmem:[%s5 + $0x3f8] sm:$0xff]
      %v787 = vld [vmem:[%s5 + $0x400] sm:$0xff]
      %v788 = vld [vmem:[%s5 + $0x408] sm:$0xff]
      %v789 = vld [vmem:[%s5 + $0x410] sm:$0xff]
      %v790 = vld [vmem:[%s5 + $0x418] sm:$0xff]
      %v791 = vld [vmem:[%s5 + $0x420] sm:$0xff]
      %v792 = vld [vmem:[%s5 + $0x428] sm:$0xff]
      %v793 = vld [vmem:[%s5 + $0x430] sm:$0xff]
      %v794 = vld [vmem:[%s5 + $0x438] sm:$0xff]
      %v795 = vld [vmem:[%s5 + $0x440] sm:$0xff]
      %v796 = vld [vmem:[%s5 + $0x448] sm:$0xff]
      %v797 = vld [vmem:[%s5 + $0x450] sm:$0xff]
      %v798 = vld [vmem:[%s5 + $0x458] sm:$0xff]
      %v799 = vld [vmem:[%s5 + $0x460] sm:$0xff]
      %v800 = vld [vmem:[%s5 + $0x468] sm:$0xff]
      %v801 = vld [vmem:[%s5 + $0x470] sm:$0xff]
      %v802 = vld [vmem:[%s5 + $0x478] sm:$0xff]
      %v803 = vld [vmem:[%s5 + $0x480] sm:$0xff]
      %v804 = vld [vmem:[%s5 + $0x488] sm:$0xff]
      %v805 = vld [vmem:[%s5 + $0x490] sm:$0xff]
      %v806 = vld [vmem:[%s5 + $0x498] sm:$0xff]
      %v807 = vld [vmem:[%s5 + $0x4a0] sm:$0xff]
      %v808 = vld [vmem:[%s5 + $0x4a8] sm:$0xff]
      %v809 = vld [vmem:[%s5 + $0x4b0] sm:$0xff]
      %v810 = vld [vmem:[%s5 + $0x4b8] sm:$0xff]
      %v811 = vld [vmem:[%s5 + $0x4c0] sm:$0xff]
      %v812 = vld [vmem:[%s5 + $0x4c8] sm:$0xff]
      %v813 = vld [vmem:[%s5 + $0x4d0] sm:$0xff]
      %v814 = vld [vmem:[%s5 + $0x4d8] sm:$0xff]
      %v815 = vld [vmem:[%s5 + $0x4e0] sm:$0xff]
      %v816 = vld [vmem:[%s5 + $0x4e8] sm:$0xff]
      %v817 = vld [vmem:[%s5 + $0x4f0] sm:$0xff]
      %v818 = vld [vmem:[%s5 + $0x4f8] sm:$0xff]
      %v819 = vld [vmem:[%s5 + $0x500] sm:$0xff]
      %v820 = vld [vmem:[%s5 + $0x508] sm:$0xff]
      %v821 = vld [vmem:[%s5 + $0x510] sm:$0xff]
      %v822 = vld [vmem:[%s5 + $0x518] sm:$0xff]
      %v823 = vld [vmem:[%s5 + $0x520] sm:$0xff]
      %v824 = vld [vmem:[%s5 + $0x528] sm:$0xff]
      %v825 = vld [vmem:[%s5 + $0x530] sm:$0xff]
      %v826 = vld [vmem:[%s5 + $0x538] sm:$0xff]
      %v827 = vld [vmem:[%s5 + $0x540] sm:$0xff]
      %v828 = vld [vmem:[%s5 + $0x548] sm:$0xff]
      %v829 = vld [vmem:[%s5 + $0x550] sm:$0xff]
      %v830 = vld [vmem:[%s5 + $0x558] sm:$0xff]
      %v831 = vld [vmem:[%s5 + $0x560] sm:$0xff]
      %v832 = vld [vmem:[%s5 + $0x568] sm:$0xff]
      %v833 = vld [vmem:[%s5 + $0x570] sm:$0xff]
      %v834 = vld [vmem:[%s5 + $0x578] sm:$0xff]
      %v835 = vld [vmem:[%s5 + $0x580] sm:$0xff]
      %v836 = vld [vmem:[%s5 + $0x588] sm:$0xff]
      %v837 = vld [vmem:[%s5 + $0x590] sm:$0xff]
      %v838 = vld [vmem:[%s5 + $0x598] sm:$0xff]
      %v839 = vld [vmem:[%s5 + $0x5a0] sm:$0xff]
      %v840 = vld [vmem:[%s5 + $0x5a8] sm:$0xff]
      %v841 = vld [vmem:[%s5 + $0x5b0] sm:$0xff]
      %v842 = vld [vmem:[%s5 + $0x5b8] sm:$0xff]
      %v843 = vld [vmem:[%s5 + $0x5c0] sm:$0xff]
      %v844 = vld [vmem:[%s5 + $0x5c8] sm:$0xff]
      %v845 = vld [vmem:[%s5 + $0x5d0] sm:$0xff]
      %v846 = vld [vmem:[%s5 + $0x5d8] sm:$0xff]
      %v847 = vld [vmem:[%s5 + $0x5e0] sm:$0xff]
      %v848 = vld [vmem:[%s5 + $0x5e8] sm:$0xff]
      %v849 = vld [vmem:[%s5 + $0x5f0] sm:$0xff]
      %v850 = vld [vmem:[%s5 + $0x5f8] sm:$0xff]
      %v851 = vld [vmem:[%s5 + $0x600] sm:$0xff]
      %v852 = vld [vmem:[%s5 + $0x608] sm:$0xff]
      %v853 = vld [vmem:[%s5 + $0x610] sm:$0xff]
      %v854 = vld [vmem:[%s5 + $0x618] sm:$0xff]
      %v855 = vld [vmem:[%s5 + $0x620] sm:$0xff]
      %v856 = vld [vmem:[%s5 + $0x628] sm:$0xff]
      %v857 = vld [vmem:[%s5 + $0x630] sm:$0xff]
      %v858 = vld [vmem:[%s5 + $0x638] sm:$0xff]
      %v859 = vld [vmem:[%s5 + $0x640] sm:$0xff]
      %v860 = vld [vmem:[%s5 + $0x648] sm:$0xff]
      %v861 = vld [vmem:[%s5 + $0x650] sm:$0xff]
      %v862 = vld [vmem:[%s5 + $0x658] sm:$0xff]
      %v863 = vld [vmem:[%s5 + $0x660] sm:$0xff]
      %v864 = vld [vmem:[%s5 + $0x668] sm:$0xff]
      %v865 = vld [vmem:[%s5 + $0x670] sm:$0xff]
      %v866 = vld [vmem:[%s5 + $0x678] sm:$0xff]
      %v867 = vld [vmem:[%s5 + $0x680] sm:$0xff]
      %v868 = vld [vmem:[%s5 + $0x688] sm:$0xff]
      %v869 = vld [vmem:[%s5 + $0x690] sm:$0xff]
      %v870 = vld [vmem:[%s5 + $0x698] sm:$0xff]
      %v871 = vld [vmem:[%s5 + $0x6a0] sm:$0xff]
      %v872 = vld [vmem:[%s5 + $0x6a8] sm:$0xff]
      %v873 = vld [vmem:[%s5 + $0x6b0] sm:$0xff]
      %v874 = vld [vmem:[%s5 + $0x6b8] sm:$0xff]
      %v875 = vld [vmem:[%s5 + $0x6c0] sm:$0xff]
      %v876 = vld [vmem:[%s5 + $0x6c8] sm:$0xff]
      %v877 = vld [vmem:[%s5 + $0x6d0] sm:$0xff]
      %v878 = vld [vmem:[%s5 + $0x6d8] sm:$0xff]
      %v879 = vld [vmem:[%s5 + $0x6e0] sm:$0xff]
      %v880 = vld [vmem:[%s5 + $0x6e8] sm:$0xff]
      %v881 = vld [vmem:[%s5 + $0x6f0] sm:$0xff]
      %v882 = vld [vmem:[%s5 + $0x6f8] sm:$0xff]
      %v883 = vld [vmem:[%s5 + $0x700] sm:$0xff]
      %v884 = vld [vmem:[%s5 + $0x708] sm:$0xff]
      %v885 = vld [vmem:[%s5 + $0x710] sm:$0xff]
      %v886 = vld [vmem:[%s5 + $0x718] sm:$0xff]
      %v887 = vld [vmem:[%s5 + $0x720] sm:$0xff]
      %v888 = vld [vmem:[%s5 + $0x728] sm:$0xff]
      %v889 = vld [vmem:[%s5 + $0x730] sm:$0xff]
      %v890 = vld [vmem:[%s5 + $0x738] sm:$0xff]
      %v891 = vld [vmem:[%s5 + $0x740] sm:$0xff]
      %v892 = vld [vmem:[%s5 + $0x748] sm:$0xff]
      %v893 = vld [vmem:[%s5 + $0x750] sm:$0xff]
      %v894 = vld [vmem:[%s5 + $0x758] sm:$0xff]
      %v895 = vld [vmem:[%s5 + $0x760] sm:$0xff]
      %v896 = vld [vmem:[%s5 + $0x768] sm:$0xff]
      %v897 = vld [vmem:[%s5 + $0x770] sm:$0xff]
      %v898 = vld [vmem:[%s5 + $0x778] sm:$0xff]
      %v899 = vld [vmem:[%s5 + $0x780] sm:$0xff]
      %v900 = vld [vmem:[%s5 + $0x788] sm:$0xff]
      %v901 = vld [vmem:[%s5 + $0x790] sm:$0xff]
      %v902 = vld [vmem:[%s5 + $0x798] sm:$0xff]
      %v903 = vld [vmem:[%s5 + $0x7a0] sm:$0xff]
      %v904 = vld [vmem:[%s5 + $0x7a8] sm:$0xff]
      %v905 = vld [vmem:[%s5 + $0x7b0] sm:$0xff]
      %v906 = vld [vmem:[%s5 + $0x7b8] sm:$0xff]
      %v907 = vld [vmem:[%s5 + $0x7c0] sm:$0xff]
      %v908 = vld [vmem:[%s5 + $0x7c8] sm:$0xff]
      %v909 = vld [vmem:[%s5 + $0x7d0] sm:$0xff]
      %v910 = vld [vmem:[%s5 + $0x7d8] sm:$0xff]
      %v911 = vld [vmem:[%s5 + $0x7e0] sm:$0xff]
      %v912 = vld [vmem:[%s5 + $0x7e8] sm:$0xff]
      %v913 = vld [vmem:[%s5 + $0x7f0] sm:$0xff]
      %v914 = vld [vmem:[%s5 + $0x7f8] sm:$0xff]
      %v915 = vld [vmem:[%s6] sm:$0xf]
      %v917 = vlaneseq
      %v918 = vshrl.u32 %v917, 7
      %v919 = vsub.s32 0, %v918
      %v920 = vrot.slane %v915, %v919
      %v921 = vlaneseq
      %v922 = vshrl.u32 %v921, 7
      %v923 = vsub.s32 1, %v922
      %v924 = vrot.slane %v915, %v923
      %v925 = vlaneseq
      %v926 = vshrl.u32 %v925, 7
      %v927 = vsub.s32 2, %v926
      %v928 = vrot.slane %v915, %v927
      %v929 = vlaneseq
      %v930 = vshrl.u32 %v929, 7
      %v931 = vsub.s32 3, %v930
      %v932 = vrot.slane %v915, %v931
      %937 = vmatprep.subr.mxu0 %v720
      %938 = vmatpush1.msra.mxu0 %v719
      %939 = vmatprep.subr.mxu0 %v716
      %940 = vmatpush1.msra.mxu0 %v715
      %941 = vmatprep.subr.mxu0 %v712
      %942 = vmatpush1.msra.mxu0 %v711
      %943 = vmatprep.subr.mxu0 %v708
      %944 = vmatpush1.msra.mxu0 %v707
      %945 = vmatprep.subr.mxu0 %v704
      %946 = vmatpush1.msra.mxu0 %v703
      %947 = vmatprep.subr.mxu0 %v700
      %948 = vmatpush1.msra.mxu0 %v699
      %949 = vmatprep.subr.mxu0 %v696
      %950 = vmatpush1.msra.mxu0 %v695
      %951 = vmatprep.subr.mxu0 %v692
      %952 = vmatpush1.msra.mxu0 %v691
      %953 = vmatprep.subr.mxu0 %v688
      %954 = vmatpush1.msra.mxu0 %v687
      %955 = vmatprep.subr.mxu0 %v684
      %956 = vmatpush1.msra.mxu0 %v683
      %957 = vmatprep.subr.mxu0 %v680
      %958 = vmatpush1.msra.mxu0 %v679
      %959 = vmatprep.subr.mxu0 %v676
      %960 = vmatpush1.msra.mxu0 %v675
      %961 = vmatprep.subr.mxu0 %v672
      %962 = vmatpush1.msra.mxu0 %v671
      %963 = vmatprep.subr.mxu0 %v668
      %964 = vmatpush1.msra.mxu0 %v667
      %965 = vmatprep.subr.mxu0 %v664
      %966 = vmatpush1.msra.mxu0 %v663
      %967 = vmatprep.subr.mxu0 %v660
      %968 = vmatpush1.msra.mxu0 %v659
      %969 = vmatprep.subr.mxu0 %v784
      %970 = vmatpush2.msra.mxu0 %v783
      %971 = vmatprep.subr.mxu0 %v780
      %972 = vmatpush2.msra.mxu0 %v779
      %973 = vmatprep.subr.mxu0 %v776
      %974 = vmatpush2.msra.mxu0 %v775
      %975 = vmatprep.subr.mxu0 %v772
      %976 = vmatpush2.msra.mxu0 %v771
      %977 = vmatprep.subr.mxu0 %v768
      %978 = vmatpush2.msra.mxu0 %v767
      %979 = vmatprep.subr.mxu0 %v764
      %980 = vmatpush2.msra.mxu0 %v763
      %981 = vmatprep.subr.mxu0 %v760
      %982 = vmatpush2.msra.mxu0 %v759
      %983 = vmatprep.subr.mxu0 %v756
      %984 = vmatpush2.msra.mxu0 %v755
      %985 = vmatprep.subr.mxu0 %v752
      %986 = vmatpush2.msra.mxu0 %v751
      %987 = vmatprep.subr.mxu0 %v748
      %988 = vmatpush2.msra.mxu0 %v747
      %989 = vmatprep.subr.mxu0 %v744
      %990 = vmatpush2.msra.mxu0 %v743
      %991 = vmatprep.subr.mxu0 %v740
      %992 = vmatpush2.msra.mxu0 %v739
      %993 = vmatprep.subr.mxu0 %v736
      %994 = vmatpush2.msra.mxu0 %v735
      %995 = vmatprep.subr.mxu0 %v732
      %996 = vmatpush2.msra.mxu0 %v731
      %997 = vmatprep.subr.mxu0 %v728
      %998 = vmatpush2.msra.mxu0 %v727
      %999 = vmatprep.subr.mxu0 %v724
      %1000 = vmatpush2.msra.mxu0 %v723
      %1001 = vmatprep.mubr.f32.mxu0 %v636
      %1002 = vmatmul.mubr.f32.gmra.mxu0 %v635
      %v1003 = vpop.f32.mrf.mxu0
      %v1004 = vadd.f32 %v920, %v1003
      %v1005 = vpop.f32.mrf.mxu0
      %v1006 = vadd.f32 %v924, %v1005
      %1007 = vdwg.mxu0
      %1008 = vmatprep.subr.mxu0 %v848
      %1009 = vmatpush1.msra.mxu0 %v847
      %1010 = vmatprep.subr.mxu0 %v844
      %1011 = vmatpush1.msra.mxu0 %v843
      %1012 = vmatprep.subr.mxu0 %v840
      %1013 = vmatpush1.msra.mxu0 %v839
      %1014 = vmatprep.subr.mxu0 %v836
      %1015 = vmatpush1.msra.mxu0 %v835
      %1016 = vmatprep.subr.mxu0 %v832
      %1017 = vmatpush1.msra.mxu0 %v831
      %1018 = vmatprep.subr.mxu0 %v828
      %1019 = vmatpush1.msra.mxu0 %v827
      %1020 = vmatprep.subr.mxu0 %v824
      %1021 = vmatpush1.msra.mxu0 %v823
      %1022 = vmatprep.subr.mxu0 %v820
      %1023 = vmatpush1.msra.mxu0 %v819
      %1024 = vmatprep.subr.mxu0 %v816
      %1025 = vmatpush1.msra.mxu0 %v815
      %1026 = vmatprep.subr.mxu0 %v812
      %1027 = vmatpush1.msra.mxu0 %v811
      %1028 = vmatprep.subr.mxu0 %v808
      %1029 = vmatpush1.msra.mxu0 %v807
      %1030 = vmatprep.subr.mxu0 %v804
      %1031 = vmatpush1.msra.mxu0 %v803
      %1032 = vmatprep.subr.mxu0 %v800
      %1033 = vmatpush1.msra.mxu0 %v799
      %1034 = vmatprep.subr.mxu0 %v796
      %1035 = vmatpush1.msra.mxu0 %v795
      %1036 = vmatprep.subr.mxu0 %v792
      %1037 = vmatpush1.msra.mxu0 %v791
      %1038 = vmatprep.subr.mxu0 %v788
      %1039 = vmatpush1.msra.mxu0 %v787
      %1040 = vmatprep.subr.mxu0 %v912
      %1041 = vmatpush2.msra.mxu0 %v911
      %1042 = vmatprep.subr.mxu0 %v908
      %1043 = vmatpush2.msra.mxu0 %v907
      %1044 = vmatprep.subr.mxu0 %v904
      %1045 = vmatpush2.msra.mxu0 %v903
      %1046 = vmatprep.subr.mxu0 %v900
      %1047 = vmatpush2.msra.mxu0 %v899
      %1048 = vmatprep.subr.mxu0 %v896
      %1049 = vmatpush2.msra.mxu0 %v895
      %1050 = vmatprep.subr.mxu0 %v892
      %1051 = vmatpush2.msra.mxu0 %v891
      %1052 = vmatprep.subr.mxu0 %v888
      %1053 = vmatpush2.msra.mxu0 %v887
      %1054 = vmatprep.subr.mxu0 %v884
      %1055 = vmatpush2.msra.mxu0 %v883
      %1056 = vmatprep.subr.mxu0 %v880
      %1057 = vmatpush2.msra.mxu0 %v879
      %1058 = vmatprep.subr.mxu0 %v876
      %1059 = vmatpush2.msra.mxu0 %v875
      %1060 = vmatprep.subr.mxu0 %v872
      %1061 = vmatpush2.msra.mxu0 %v871
      %1062 = vmatprep.subr.mxu0 %v868
      %1063 = vmatpush2.msra.mxu0 %v867
      %1064 = vmatprep.subr.mxu0 %v864
      %1065 = vmatpush2.msra.mxu0 %v863
      %1066 = vmatprep.subr.mxu0 %v860
      %1067 = vmatpush2.msra.mxu0 %v859
      %1068 = vmatprep.subr.mxu0 %v856
      %1069 = vmatpush2.msra.mxu0 %v855
      %1070 = vmatprep.subr.mxu0 %v852
      %1071 = vmatpush2.msra.mxu0 %v851
      %1072 = vmatprep.mubr.f32.mxu0 %v638
      %1073 = vmatmul.mubr.f32.gmra.mxu0 %v637
      %v1074 = vpop.f32.mrf.mxu0
      %v1075 = vadd.f32 %v1004, %v1074
      %v1076 = vpop.f32.mrf.mxu0
      %v1077 = vadd.f32 %v1006, %v1076
      %1078 = vdwg.mxu0
      %1079 = vmatprep.subr.mxu0 %v722
      %1080 = vmatpush1.msra.mxu0 %v721
      %1081 = vmatprep.subr.mxu0 %v718
      %1082 = vmatpush1.msra.mxu0 %v717
      %1083 = vmatprep.subr.mxu0 %v714
      %1084 = vmatpush1.msra.mxu0 %v713
      %1085 = vmatprep.subr.mxu0 %v710
      %1086 = vmatpush1.msra.mxu0 %v709
      %1087 = vmatprep.subr.mxu0 %v706
      %1088 = vmatpush1.msra.mxu0 %v705
      %1089 = vmatprep.subr.mxu0 %v702
      %1090 = vmatpush1.msra.mxu0 %v701
      %1091 = vmatprep.subr.mxu0 %v698
      %1092 = vmatpush1.msra.mxu0 %v697
      %1093 = vmatprep.subr.mxu0 %v694
      %1094 = vmatpush1.msra.mxu0 %v693
      %1095 = vmatprep.subr.mxu0 %v690
      %1096 = vmatpush1.msra.mxu0 %v689
      %1097 = vmatprep.subr.mxu0 %v686
      %1098 = vmatpush1.msra.mxu0 %v685
      %1099 = vmatprep.subr.mxu0 %v682
      %1100 = vmatpush1.msra.mxu0 %v681
      %1101 = vmatprep.subr.mxu0 %v678
      %1102 = vmatpush1.msra.mxu0 %v677
      %1103 = vmatprep.subr.mxu0 %v674
      %1104 = vmatpush1.msra.mxu0 %v673
      %1105 = vmatprep.subr.mxu0 %v670
      %1106 = vmatpush1.msra.mxu0 %v669
      %1107 = vmatprep.subr.mxu0 %v666
      %1108 = vmatpush1.msra.mxu0 %v665
      %1109 = vmatprep.subr.mxu0 %v662
      %1110 = vmatpush1.msra.mxu0 %v661
      %1111 = vmatprep.subr.mxu0 %v786
      %1112 = vmatpush2.msra.mxu0 %v785
      %1113 = vmatprep.subr.mxu0 %v782
      %1114 = vmatpush2.msra.mxu0 %v781
      %1115 = vmatprep.subr.mxu0 %v778
      %1116 = vmatpush2.msra.mxu0 %v777
      %1117 = vmatprep.subr.mxu0 %v774
      %1118 = vmatpush2.msra.mxu0 %v773
      %1119 = vmatprep.subr.mxu0 %v770
      %1120 = vmatpush2.msra.mxu0 %v769
      %1121 = vmatprep.subr.mxu0 %v766
      %1122 = vmatpush2.msra.mxu0 %v765
      %1123 = vmatprep.subr.mxu0 %v762
      %1124 = vmatpush2.msra.mxu0 %v761
      %1125 = vmatprep.subr.mxu0 %v758
      %1126 = vmatpush2.msra.mxu0 %v757
      %1127 = vmatprep.subr.mxu0 %v754
      %1128 = vmatpush2.msra.mxu0 %v753
      %1129 = vmatprep.subr.mxu0 %v750
      %1130 = vmatpush2.msra.mxu0 %v749
      %1131 = vmatprep.subr.mxu0 %v746
      %1132 = vmatpush2.msra.mxu0 %v745
      %1133 = vmatprep.subr.mxu0 %v742
      %1134 = vmatpush2.msra.mxu0 %v741
      %1135 = vmatprep.subr.mxu0 %v738
      %1136 = vmatpush2.msra.mxu0 %v737
      %1137 = vmatprep.subr.mxu0 %v734
      %1138 = vmatpush2.msra.mxu0 %v733
      %1139 = vmatprep.subr.mxu0 %v730
      %1140 = vmatpush2.msra.mxu0 %v729
      %1141 = vmatprep.subr.mxu0 %v726
      %1142 = vmatpush2.msra.mxu0 %v725
      %1143 = vmatprep.mubr.f32.mxu0 %v636
      %1144 = vmatmul.mubr.f32.gmra.mxu0 %v635
      %v1145 = vpop.f32.mrf.mxu0
      %v1146 = vadd.f32 %v928, %v1145
      %v1147 = vpop.f32.mrf.mxu0
      %v1148 = vadd.f32 %v932, %v1147
      %1149 = vdwg.mxu0
      %1150 = vmatprep.subr.mxu0 %v850
      %1151 = vmatpush1.msra.mxu0 %v849
      %1152 = vmatprep.subr.mxu0 %v846
      %1153 = vmatpush1.msra.mxu0 %v845
      %1154 = vmatprep.subr.mxu0 %v842
      %1155 = vmatpush1.msra.mxu0 %v841
      %1156 = vmatprep.subr.mxu0 %v838
      %1157 = vmatpush1.msra.mxu0 %v837
      %1158 = vmatprep.subr.mxu0 %v834
      %1159 = vmatpush1.msra.mxu0 %v833
      %1160 = vmatprep.subr.mxu0 %v830
      %1161 = vmatpush1.msra.mxu0 %v829
      %1162 = vmatprep.subr.mxu0 %v826
      %1163 = vmatpush1.msra.mxu0 %v825
      %1164 = vmatprep.subr.mxu0 %v822
      %1165 = vmatpush1.msra.mxu0 %v821
      %1166 = vmatprep.subr.mxu0 %v818
      %1167 = vmatpush1.msra.mxu0 %v817
      %1168 = vmatprep.subr.mxu0 %v814
      %1169 = vmatpush1.msra.mxu0 %v813
      %1170 = vmatprep.subr.mxu0 %v810
      %1171 = vmatpush1.msra.mxu0 %v809
      %1172 = vmatprep.subr.mxu0 %v806
      %1173 = vmatpush1.msra.mxu0 %v805
      %1174 = vmatprep.subr.mxu0 %v802
      %1175 = vmatpush1.msra.mxu0 %v801
      %1176 = vmatprep.subr.mxu0 %v798
      %1177 = vmatpush1.msra.mxu0 %v797
      %1178 = vmatprep.subr.mxu0 %v794
      %1179 = vmatpush1.msra.mxu0 %v793
      %1180 = vmatprep.subr.mxu0 %v790
      %1181 = vmatpush1.msra.mxu0 %v789
      %1182 = vmatprep.subr.mxu0 %v914
      %1183 = vmatpush2.msra.mxu0 %v913
      %1184 = vmatprep.subr.mxu0 %v910
      %1185 = vmatpush2.msra.mxu0 %v909
      %1186 = vmatprep.subr.mxu0 %v906
      %1187 = vmatpush2.msra.mxu0 %v905
      %1188 = vmatprep.subr.mxu0 %v902
      %1189 = vmatpush2.msra.mxu0 %v901
      %1190 = vmatprep.subr.mxu0 %v898
      %1191 = vmatpush2.msra.mxu0 %v897
      %1192 = vmatprep.subr.mxu0 %v894
      %1193 = vmatpush2.msra.mxu0 %v893
      %1194 = vmatprep.subr.mxu0 %v890
      %1195 = vmatpush2.msra.mxu0 %v889
      %1196 = vmatprep.subr.mxu0 %v886
      %1197 = vmatpush2.msra.mxu0 %v885
      %1198 = vmatprep.subr.mxu0 %v882
      %1199 = vmatpush2.msra.mxu0 %v881
      %1200 = vmatprep.subr.mxu0 %v878
      %1201 = vmatpush2.msra.mxu0 %v877
      %1202 = vmatprep.subr.mxu0 %v874
      %1203 = vmatpush2.msra.mxu0 %v873
      %1204 = vmatprep.subr.mxu0 %v870
      %1205 = vmatpush2.msra.mxu0 %v869
      %1206 = vmatprep.subr.mxu0 %v866
      %1207 = vmatpush2.msra.mxu0 %v865
      %1208 = vmatprep.subr.mxu0 %v862
      %1209 = vmatpush2.msra.mxu0 %v861
      %1210 = vmatprep.subr.mxu0 %v858
      %1211 = vmatpush2.msra.mxu0 %v857
      %1212 = vmatprep.subr.mxu0 %v854
      %1213 = vmatpush2.msra.mxu0 %v853
      %1214 = vmatprep.mubr.f32.mxu0 %v638
      %1215 = vmatmul.mubr.f32.gmra.mxu0 %v637
      %v1216 = vpop.f32.mrf.mxu0
      %v1217 = vadd.f32 %v1146, %v1216
      %v1218 = vpop.f32.mrf.mxu0
      %v1219 = vadd.f32 %v1148, %v1218
      %1220 = vdwg.mxu0
      %v1221 = vld [vmem:[%s578] sm:$0xff]
      %v1222 = vld [vmem:[%s578 + $0x8] sm:$0xff]
      %v1223 = vld [vmem:[%s578 + $0x10] sm:$0xff]
      %v1224 = vld [vmem:[%s578 + $0x18] sm:$0xff]
      %v1225 = vld [vmem:[%s578 + $0x20] sm:$0xff]
      %v1226 = vld [vmem:[%s578 + $0x28] sm:$0xff]
      %v1227 = vld [vmem:[%s578 + $0x30] sm:$0xff]
      %v1228 = vld [vmem:[%s578 + $0x38] sm:$0xff]
      %v1229 = vld [vmem:[%s578 + $0x40] sm:$0xff]
      %v1230 = vld [vmem:[%s578 + $0x48] sm:$0xff]
      %v1231 = vld [vmem:[%s578 + $0x50] sm:$0xff]
      %v1232 = vld [vmem:[%s578 + $0x58] sm:$0xff]
      %v1233 = vld [vmem:[%s578 + $0x60] sm:$0xff]
      %v1234 = vld [vmem:[%s578 + $0x68] sm:$0xff]
      %v1235 = vld [vmem:[%s578 + $0x70] sm:$0xff]
      %v1236 = vld [vmem:[%s578 + $0x78] sm:$0xff]
      %v1237 = vld [vmem:[%s578 + $0x80] sm:$0xff]
      %v1238 = vld [vmem:[%s578 + $0x88] sm:$0xff]
      %v1239 = vld [vmem:[%s578 + $0x90] sm:$0xff]
      %v1240 = vld [vmem:[%s578 + $0x98] sm:$0xff]
      %v1241 = vld [vmem:[%s578 + $0xa0] sm:$0xff]
      %v1242 = vld [vmem:[%s578 + $0xa8] sm:$0xff]
      %v1243 = vld [vmem:[%s578 + $0xb0] sm:$0xff]
      %v1244 = vld [vmem:[%s578 + $0xb8] sm:$0xff]
      %v1245 = vld [vmem:[%s578 + $0xc0] sm:$0xff]
      %v1246 = vld [vmem:[%s578 + $0xc8] sm:$0xff]
      %v1247 = vld [vmem:[%s578 + $0xd0] sm:$0xff]
      %v1248 = vld [vmem:[%s578 + $0xd8] sm:$0xff]
      %v1249 = vld [vmem:[%s578 + $0xe0] sm:$0xff]
      %v1250 = vld [vmem:[%s578 + $0xe8] sm:$0xff]
      %v1251 = vld [vmem:[%s578 + $0xf0] sm:$0xff]
      %v1252 = vld [vmem:[%s578 + $0xf8] sm:$0xff]
      %v1253 = vld [vmem:[%s578 + $0x100] sm:$0xff]
      %v1254 = vld [vmem:[%s578 + $0x108] sm:$0xff]
      %v1255 = vld [vmem:[%s578 + $0x110] sm:$0xff]
      %v1256 = vld [vmem:[%s578 + $0x118] sm:$0xff]
      %v1257 = vld [vmem:[%s578 + $0x120] sm:$0xff]
      %v1258 = vld [vmem:[%s578 + $0x128] sm:$0xff]
      %v1259 = vld [vmem:[%s578 + $0x130] sm:$0xff]
      %v1260 = vld [vmem:[%s578 + $0x138] sm:$0xff]
      %v1261 = vld [vmem:[%s578 + $0x140] sm:$0xff]
      %v1262 = vld [vmem:[%s578 + $0x148] sm:$0xff]
      %v1263 = vld [vmem:[%s578 + $0x150] sm:$0xff]
      %v1264 = vld [vmem:[%s578 + $0x158] sm:$0xff]
      %v1265 = vld [vmem:[%s578 + $0x160] sm:$0xff]
      %v1266 = vld [vmem:[%s578 + $0x168] sm:$0xff]
      %v1267 = vld [vmem:[%s578 + $0x170] sm:$0xff]
      %v1268 = vld [vmem:[%s578 + $0x178] sm:$0xff]
      %v1269 = vld [vmem:[%s578 + $0x180] sm:$0xff]
      %v1270 = vld [vmem:[%s578 + $0x188] sm:$0xff]
      %v1271 = vld [vmem:[%s578 + $0x190] sm:$0xff]
      %v1272 = vld [vmem:[%s578 + $0x198] sm:$0xff]
      %v1273 = vld [vmem:[%s578 + $0x1a0] sm:$0xff]
      %v1274 = vld [vmem:[%s578 + $0x1a8] sm:$0xff]
      %v1275 = vld [vmem:[%s578 + $0x1b0] sm:$0xff]
      %v1276 = vld [vmem:[%s578 + $0x1b8] sm:$0xff]
      %v1277 = vld [vmem:[%s578 + $0x1c0] sm:$0xff]
      %v1278 = vld [vmem:[%s578 + $0x1c8] sm:$0xff]
      %v1279 = vld [vmem:[%s578 + $0x1d0] sm:$0xff]
      %v1280 = vld [vmem:[%s578 + $0x1d8] sm:$0xff]
      %v1281 = vld [vmem:[%s578 + $0x1e0] sm:$0xff]
      %v1282 = vld [vmem:[%s578 + $0x1e8] sm:$0xff]
      %v1283 = vld [vmem:[%s578 + $0x1f0] sm:$0xff]
      %v1284 = vld [vmem:[%s578 + $0x1f8] sm:$0xff]
      %v1289 = vcombine.low %v1075, %v1077
      %v1290 = vcombine.high %v1075, %v1077
      %v1291 = vcombine.low %v1217, %v1219
      %v1292 = vcombine.high %v1217, %v1219
      %v1294 = vunpack.c.l.s4 1966171168
      %v1295 = vunpack.c.0.s8 %v1294
      %v1296 = vlaneseq
      %v1297 = vshrl.u32 %v1296, 7
      %v1298 = vsub.s32 %v1295, %v1297
      %v1299 = vrot.slane %v1289, %v1298
      %v1301 = vunpack.c.l.s4 1966171168
      %v1302 = vunpack.c.0.s8 %v1301
      %v1303 = vlaneseq
      %v1304 = vshrl.u32 %v1303, 7
      %v1305 = vsub.s32 %v1302, %v1304
      %v1306 = vrot.slane %v1290, %v1305
      %v1308 = vunpack.c.l.s4 1966171168
      %v1309 = vunpack.c.0.s8 %v1308
      %v1310 = vlaneseq
      %v1311 = vshrl.u32 %v1310, 7
      %v1312 = vsub.s32 %v1309, %v1311
      %v1313 = vrot.slane %v1291, %v1312
      %v1315 = vunpack.c.l.s4 1966171168
      %v1316 = vunpack.c.0.s8 %v1315
      %v1317 = vlaneseq
      %v1318 = vshrl.u32 %v1317, 7
      %v1319 = vsub.s32 %v1316, %v1318
      %v1320 = vrot.slane %v1292, %v1319
      %v1321 = vcombine.low %v1299, %v1313
      %v1322 = vcombine.high %v1299, %v1313
      %v1323 = vcombine.low %v1306, %v1320
      %v1324 = vcombine.high %v1306, %v1320
      %v1326 = vunpack.c.l.s4 1966171168
      %v1327 = vunpack.c.0.s8 %v1326
      %v1328 = vlaneseq
      %v1329 = vshrl.u32 %v1328, 7
      %v1330 = vsub.s32 %v1327, %v1329
      %v1331 = vrot.slane %v1321, %v1330
      %v1333 = vunpack.c.l.s4 1966171168
      %v1334 = vunpack.c.0.s8 %v1333
      %v1335 = vlaneseq
      %v1336 = vshrl.u32 %v1335, 7
      %v1337 = vsub.s32 %v1334, %v1336
      %v1338 = vrot.slane %v1323, %v1337
      %v1340 = vunpack.c.l.s4 1966171168
      %v1341 = vunpack.c.0.s8 %v1340
      %v1342 = vlaneseq
      %v1343 = vshrl.u32 %v1342, 7
      %v1344 = vsub.s32 %v1341, %v1343
      %v1345 = vrot.slane %v1322, %v1344
      %v1347 = vunpack.c.l.s4 1966171168
      %v1348 = vunpack.c.0.s8 %v1347
      %v1349 = vlaneseq
      %v1350 = vshrl.u32 %v1349, 7
      %v1351 = vsub.s32 %v1348, %v1350
      %v1352 = vrot.slane %v1324, %v1351
      %v1353 = vcombine.high %v1331, %v1331
      %v1354 = vcombine.high %v1338, %v1338
      %v1355 = vcombine.high %v1345, %v1345
      %v1356 = vcombine.high %v1352, %v1352
      %v1357 = vlaneseq
      %v1358 = vshrl.u32 %v1357, 7
      %v1359 = vsub.s32 0, %v1358
      %v1360 = vrot.slane %v1331, %v1359
      %v1361 = vlaneseq
      %v1362 = vshrl.u32 %v1361, 7
      %v1363 = vsub.s32 1, %v1362
      %v1364 = vrot.slane %v1331, %v1363
      %v1365 = vlaneseq
      %v1366 = vshrl.u32 %v1365, 7
      %v1367 = vsub.s32 2, %v1366
      %v1368 = vrot.slane %v1331, %v1367
      %v1369 = vlaneseq
      %v1370 = vshrl.u32 %v1369, 7
      %v1371 = vsub.s32 3, %v1370
      %v1372 = vrot.slane %v1331, %v1371
      %v1373 = vlaneseq
      %v1374 = vshrl.u32 %v1373, 7
      %v1375 = vsub.s32 0, %v1374
      %v1376 = vrot.slane %v1345, %v1375
      %v1377 = vlaneseq
      %v1378 = vshrl.u32 %v1377, 7
      %v1379 = vsub.s32 1, %v1378
      %v1380 = vrot.slane %v1345, %v1379
      %v1381 = vlaneseq
      %v1382 = vshrl.u32 %v1381, 7
      %v1383 = vsub.s32 2, %v1382
      %v1384 = vrot.slane %v1345, %v1383
      %v1385 = vlaneseq
      %v1386 = vshrl.u32 %v1385, 7
      %v1387 = vsub.s32 3, %v1386
      %v1388 = vrot.slane %v1345, %v1387
      %v1389 = vlaneseq
      %v1390 = vshrl.u32 %v1389, 7
      %v1391 = vsub.s32 0, %v1390
      %v1392 = vrot.slane %v1353, %v1391
      %v1393 = vlaneseq
      %v1394 = vshrl.u32 %v1393, 7
      %v1395 = vsub.s32 1, %v1394
      %v1396 = vrot.slane %v1353, %v1395
      %v1397 = vlaneseq
      %v1398 = vshrl.u32 %v1397, 7
      %v1399 = vsub.s32 2, %v1398
      %v1400 = vrot.slane %v1353, %v1399
      %v1401 = vlaneseq
      %v1402 = vshrl.u32 %v1401, 7
      %v1403 = vsub.s32 3, %v1402
      %v1404 = vrot.slane %v1353, %v1403
      %v1405 = vlaneseq
      %v1406 = vshrl.u32 %v1405, 7
      %v1407 = vsub.s32 0, %v1406
      %v1408 = vrot.slane %v1355, %v1407
      %v1409 = vlaneseq
      %v1410 = vshrl.u32 %v1409, 7
      %v1411 = vsub.s32 1, %v1410
      %v1412 = vrot.slane %v1355, %v1411
      %v1413 = vlaneseq
      %v1414 = vshrl.u32 %v1413, 7
      %v1415 = vsub.s32 2, %v1414
      %v1416 = vrot.slane %v1355, %v1415
      %v1417 = vlaneseq
      %v1418 = vshrl.u32 %v1417, 7
      %v1419 = vsub.s32 3, %v1418
      %v1420 = vrot.slane %v1355, %v1419
      %v1421 = vlaneseq
      %v1422 = vshrl.u32 %v1421, 7
      %v1423 = vsub.s32 0, %v1422
      %v1424 = vrot.slane %v1338, %v1423
      %v1425 = vlaneseq
      %v1426 = vshrl.u32 %v1425, 7
      %v1427 = vsub.s32 1, %v1426
      %v1428 = vrot.slane %v1338, %v1427
      %v1429 = vlaneseq
      %v1430 = vshrl.u32 %v1429, 7
      %v1431 = vsub.s32 2, %v1430
      %v1432 = vrot.slane %v1338, %v1431
      %v1433 = vlaneseq
      %v1434 = vshrl.u32 %v1433, 7
      %v1435 = vsub.s32 3, %v1434
      %v1436 = vrot.slane %v1338, %v1435
      %v1437 = vlaneseq
      %v1438 = vshrl.u32 %v1437, 7
      %v1439 = vsub.s32 0, %v1438
      %v1440 = vrot.slane %v1352, %v1439
      %v1441 = vlaneseq
      %v1442 = vshrl.u32 %v1441, 7
      %v1443 = vsub.s32 1, %v1442
      %v1444 = vrot.slane %v1352, %v1443
      %v1445 = vlaneseq
      %v1446 = vshrl.u32 %v1445, 7
      %v1447 = vsub.s32 2, %v1446
      %v1448 = vrot.slane %v1352, %v1447
      %v1449 = vlaneseq
      %v1450 = vshrl.u32 %v1449, 7
      %v1451 = vsub.s32 3, %v1450
      %v1452 = vrot.slane %v1352, %v1451
      %v1453 = vlaneseq
      %v1454 = vshrl.u32 %v1453, 7
      %v1455 = vsub.s32 0, %v1454
      %v1456 = vrot.slane %v1354, %v1455
      %v1457 = vlaneseq
      %v1458 = vshrl.u32 %v1457, 7
      %v1459 = vsub.s32 1, %v1458
      %v1460 = vrot.slane %v1354, %v1459
      %v1461 = vlaneseq
      %v1462 = vshrl.u32 %v1461, 7
      %v1463 = vsub.s32 2, %v1462
      %v1464 = vrot.slane %v1354, %v1463
      %v1465 = vlaneseq
      %v1466 = vshrl.u32 %v1465, 7
      %v1467 = vsub.s32 3, %v1466
      %v1468 = vrot.slane %v1354, %v1467
      %v1469 = vlaneseq
      %v1470 = vshrl.u32 %v1469, 7
      %v1471 = vsub.s32 0, %v1470
      %v1472 = vrot.slane %v1356, %v1471
      %v1473 = vlaneseq
      %v1474 = vshrl.u32 %v1473, 7
      %v1475 = vsub.s32 1, %v1474
      %v1476 = vrot.slane %v1356, %v1475
      %v1477 = vlaneseq
      %v1478 = vshrl.u32 %v1477, 7
      %v1479 = vsub.s32 2, %v1478
      %v1480 = vrot.slane %v1356, %v1479
      %v1481 = vlaneseq
      %v1482 = vshrl.u32 %v1481, 7
      %v1483 = vsub.s32 3, %v1482
      %v1484 = vrot.slane %v1356, %v1483
      %v1517 = vadd.f32 %v1221, %v1360
      %v1518 = vadd.f32 %v1222, %v1364
      %v1519 = vadd.f32 %v1223, %v1368
      %v1520 = vadd.f32 %v1224, %v1372
      %v1521 = vadd.f32 %v1225, %v1360
      %v1522 = vadd.f32 %v1226, %v1364
      %v1523 = vadd.f32 %v1227, %v1368
      %v1524 = vadd.f32 %v1228, %v1372
      %v1525 = vadd.f32 %v1229, %v1376
      %v1526 = vadd.f32 %v1230, %v1380
      %v1527 = vadd.f32 %v1231, %v1384
      %v1528 = vadd.f32 %v1232, %v1388
      %v1529 = vadd.f32 %v1233, %v1376
      %v1530 = vadd.f32 %v1234, %v1380
      %v1531 = vadd.f32 %v1235, %v1384
      %v1532 = vadd.f32 %v1236, %v1388
      %v1533 = vadd.f32 %v1237, %v1392
      %v1534 = vadd.f32 %v1238, %v1396
      %v1535 = vadd.f32 %v1239, %v1400
      %v1536 = vadd.f32 %v1240, %v1404
      %v1537 = vadd.f32 %v1241, %v1392
      %v1538 = vadd.f32 %v1242, %v1396
      %v1539 = vadd.f32 %v1243, %v1400
      %v1540 = vadd.f32 %v1244, %v1404
      %v1541 = vadd.f32 %v1245, %v1408
      %v1542 = vadd.f32 %v1246, %v1412
      %v1543 = vadd.f32 %v1247, %v1416
      %v1544 = vadd.f32 %v1248, %v1420
      %v1545 = vadd.f32 %v1249, %v1408
      %v1546 = vadd.f32 %v1250, %v1412
      %v1547 = vadd.f32 %v1251, %v1416
      %v1548 = vadd.f32 %v1252, %v1420
      %v1549 = vadd.f32 %v1253, %v1424
      %v1550 = vadd.f32 %v1254, %v1428
      %v1551 = vadd.f32 %v1255, %v1432
      %v1552 = vadd.f32 %v1256, %v1436
      %v1553 = vadd.f32 %v1257, %v1424
      %v1554 = vadd.f32 %v1258, %v1428
      %v1555 = vadd.f32 %v1259, %v1432
      %v1556 = vadd.f32 %v1260, %v1436
      %v1557 = vadd.f32 %v1261, %v1440
      %v1558 = vadd.f32 %v1262, %v1444
      %v1559 = vadd.f32 %v1263, %v1448
      %v1560 = vadd.f32 %v1264, %v1452
      %v1561 = vadd.f32 %v1265, %v1440
      %v1562 = vadd.f32 %v1266, %v1444
      %v1563 = vadd.f32 %v1267, %v1448
      %v1564 = vadd.f32 %v1268, %v1452
      %v1565 = vadd.f32 %v1269, %v1456
      %v1566 = vadd.f32 %v1270, %v1460
      %v1567 = vadd.f32 %v1271, %v1464
      %v1568 = vadd.f32 %v1272, %v1468
      %v1569 = vadd.f32 %v1273, %v1456
      %v1570 = vadd.f32 %v1274, %v1460
      %v1571 = vadd.f32 %v1275, %v1464
      %v1572 = vadd.f32 %v1276, %v1468
      %v1573 = vadd.f32 %v1277, %v1472
      %v1574 = vadd.f32 %v1278, %v1476
      %v1575 = vadd.f32 %v1279, %v1480
      %v1576 = vadd.f32 %v1280, %v1484
      %v1577 = vadd.f32 %v1281, %v1472
      %v1578 = vadd.f32 %v1282, %v1476
      %v1579 = vadd.f32 %v1283, %v1480
      %v1580 = vadd.f32 %v1284, %v1484
      %v1581 = vtanh.pop %v1517
      %v1582 = vtanh.pop %v1518
      %v1583 = vtanh.pop %v1519
      %v1584 = vtanh.pop %v1520
      %v1585 = vtanh.pop %v1521
      %v1586 = vtanh.pop %v1522
      %v1587 = vtanh.pop %v1523
      %v1588 = vtanh.pop %v1524
      %v1589 = vtanh.pop %v1525
      %v1590 = vtanh.pop %v1526
      %v1591 = vtanh.pop %v1527
      %v1592 = vtanh.pop %v1528
      %v1593 = vtanh.pop %v1529
      %v1594 = vtanh.pop %v1530
      %v1595 = vtanh.pop %v1531
      %v1596 = vtanh.pop %v1532
      %v1597 = vtanh.pop %v1533
      %v1598 = vtanh.pop %v1534
      %v1599 = vtanh.pop %v1535
      %v1600 = vtanh.pop %v1536
      %v1601 = vtanh.pop %v1537
      %v1602 = vtanh.pop %v1538
      %v1603 = vtanh.pop %v1539
      %v1604 = vtanh.pop %v1540
      %v1605 = vtanh.pop %v1541
      %v1606 = vtanh.pop %v1542
      %v1607 = vtanh.pop %v1543
      %v1608 = vtanh.pop %v1544
      %v1609 = vtanh.pop %v1545
      %v1610 = vtanh.pop %v1546
      %v1611 = vtanh.pop %v1547
      %v1612 = vtanh.pop %v1548
      %v1613 = vtanh.pop %v1549
      %v1614 = vtanh.pop %v1550
      %v1615 = vtanh.pop %v1551
      %v1616 = vtanh.pop %v1552
      %v1617 = vtanh.pop %v1553
      %v1618 = vtanh.pop %v1554
      %v1619 = vtanh.pop %v1555
      %v1620 = vtanh.pop %v1556
      %v1621 = vtanh.pop %v1557
      %v1622 = vtanh.pop %v1558
      %v1623 = vtanh.pop %v1559
      %v1624 = vtanh.pop %v1560
      %v1625 = vtanh.pop %v1561
      %v1626 = vtanh.pop %v1562
      %v1627 = vtanh.pop %v1563
      %v1628 = vtanh.pop %v1564
      %v1629 = vtanh.pop %v1565
      %v1630 = vtanh.pop %v1566
      %v1631 = vtanh.pop %v1567
      %v1632 = vtanh.pop %v1568
      %v1633 = vtanh.pop %v1569
      %v1634 = vtanh.pop %v1570
      %v1635 = vtanh.pop %v1571
      %v1636 = vtanh.pop %v1572
      %v1637 = vtanh.pop %v1573
      %v1638 = vtanh.pop %v1574
      %v1639 = vtanh.pop %v1575
      %v1640 = vtanh.pop %v1576
      %v1641 = vtanh.pop %v1577
      %v1642 = vtanh.pop %v1578
      %v1643 = vtanh.pop %v1579
      %v1644 = vtanh.pop %v1580
      %v1645 = vld [vmem:[%s7] sm:$0xff]
      %v1646 = vld [vmem:[%s7 + $0x8] sm:$0xff]
      %v1647 = vld [vmem:[%s7 + $0x10] sm:$0xff]
      %v1648 = vld [vmem:[%s7 + $0x18] sm:$0xff]
      %v1649 = vld [vmem:[%s7 + $0x20] sm:$0xff]
      %v1650 = vld [vmem:[%s7 + $0x28] sm:$0xff]
      %v1651 = vld [vmem:[%s7 + $0x30] sm:$0xff]
      %v1652 = vld [vmem:[%s7 + $0x38] sm:$0xff]
      %v1653 = vld [vmem:[%s7 + $0x40] sm:$0xff]
      %v1654 = vld [vmem:[%s7 + $0x48] sm:$0xff]
      %v1655 = vld [vmem:[%s7 + $0x50] sm:$0xff]
      %v1656 = vld [vmem:[%s7 + $0x58] sm:$0xff]
      %v1657 = vld [vmem:[%s7 + $0x60] sm:$0xff]
      %v1658 = vld [vmem:[%s7 + $0x68] sm:$0xff]
      %v1659 = vld [vmem:[%s7 + $0x70] sm:$0xff]
      %v1660 = vld [vmem:[%s7 + $0x78] sm:$0xff]
      %v1661 = vld [vmem:[%s7 + $0x80] sm:$0xff]
      %v1662 = vld [vmem:[%s7 + $0x88] sm:$0xff]
      %v1663 = vld [vmem:[%s7 + $0x90] sm:$0xff]
      %v1664 = vld [vmem:[%s7 + $0x98] sm:$0xff]
      %v1665 = vld [vmem:[%s7 + $0xa0] sm:$0xff]
      %v1666 = vld [vmem:[%s7 + $0xa8] sm:$0xff]
      %v1667 = vld [vmem:[%s7 + $0xb0] sm:$0xff]
      %v1668 = vld [vmem:[%s7 + $0xb8] sm:$0xff]
      %v1669 = vld [vmem:[%s7 + $0xc0] sm:$0xff]
      %v1670 = vld [vmem:[%s7 + $0xc8] sm:$0xff]
      %v1671 = vld [vmem:[%s7 + $0xd0] sm:$0xff]
      %v1672 = vld [vmem:[%s7 + $0xd8] sm:$0xff]
      %v1673 = vld [vmem:[%s7 + $0xe0] sm:$0xff]
      %v1674 = vld [vmem:[%s7 + $0xe8] sm:$0xff]
      %v1675 = vld [vmem:[%s7 + $0xf0] sm:$0xff]
      %v1676 = vld [vmem:[%s7 + $0xf8] sm:$0xff]
      %v1677 = vld [vmem:[%s7 + $0x100] sm:$0xff]
      %v1678 = vld [vmem:[%s7 + $0x108] sm:$0xff]
      %v1679 = vld [vmem:[%s7 + $0x110] sm:$0xff]
      %v1680 = vld [vmem:[%s7 + $0x118] sm:$0xff]
      %v1681 = vld [vmem:[%s7 + $0x120] sm:$0xff]
      %v1682 = vld [vmem:[%s7 + $0x128] sm:$0xff]
      %v1683 = vld [vmem:[%s7 + $0x130] sm:$0xff]
      %v1684 = vld [vmem:[%s7 + $0x138] sm:$0xff]
      %v1685 = vld [vmem:[%s7 + $0x140] sm:$0xff]
      %v1686 = vld [vmem:[%s7 + $0x148] sm:$0xff]
      %v1687 = vld [vmem:[%s7 + $0x150] sm:$0xff]
      %v1688 = vld [vmem:[%s7 + $0x158] sm:$0xff]
      %v1689 = vld [vmem:[%s7 + $0x160] sm:$0xff]
      %v1690 = vld [vmem:[%s7 + $0x168] sm:$0xff]
      %v1691 = vld [vmem:[%s7 + $0x170] sm:$0xff]
      %v1692 = vld [vmem:[%s7 + $0x178] sm:$0xff]
      %v1693 = vld [vmem:[%s7 + $0x180] sm:$0xff]
      %v1694 = vld [vmem:[%s7 + $0x188] sm:$0xff]
      %v1695 = vld [vmem:[%s7 + $0x190] sm:$0xff]
      %v1696 = vld [vmem:[%s7 + $0x198] sm:$0xff]
      %v1697 = vld [vmem:[%s7 + $0x1a0] sm:$0xff]
      %v1698 = vld [vmem:[%s7 + $0x1a8] sm:$0xff]
      %v1699 = vld [vmem:[%s7 + $0x1b0] sm:$0xff]
      %v1700 = vld [vmem:[%s7 + $0x1b8] sm:$0xff]
      %v1701 = vld [vmem:[%s7 + $0x1c0] sm:$0xff]
      %v1702 = vld [vmem:[%s7 + $0x1c8] sm:$0xff]
      %v1703 = vld [vmem:[%s7 + $0x1d0] sm:$0xff]
      %v1704 = vld [vmem:[%s7 + $0x1d8] sm:$0xff]
      %v1705 = vld [vmem:[%s7 + $0x1e0] sm:$0xff]
      %v1706 = vld [vmem:[%s7 + $0x1e8] sm:$0xff]
      %v1707 = vld [vmem:[%s7 + $0x1f0] sm:$0xff]
      %v1708 = vld [vmem:[%s7 + $0x1f8] sm:$0xff]
      %1709 = vxpose.xlu0.b32.start [1/16] %v1645, 128
      %1710 = vxpose.xlu0.b32.cont [2/16] %v1646, 128
      %1711 = vxpose.xlu0.b32.cont [3/16] %v1647, 128
      %1712 = vxpose.xlu0.b32.cont [4/16] %v1648, 128
      %1713 = vxpose.xlu0.b32.cont [5/16] %v1649, 128
      %1714 = vxpose.xlu0.b32.cont [6/16] %v1650, 128
      %1715 = vxpose.xlu0.b32.cont [7/16] %v1651, 128
      %1716 = vxpose.xlu0.b32.cont [8/16] %v1652, 128
      %1717 = vxpose.xlu0.b32.cont [9/16] %v1653, 128
      %1718 = vxpose.xlu0.b32.cont [10/16] %v1654, 128
      %1719 = vxpose.xlu0.b32.cont [11/16] %v1655, 128
      %1720 = vxpose.xlu0.b32.cont [12/16] %v1656, 128
      %1721 = vxpose.xlu0.b32.cont [13/16] %v1657, 128
      %1722 = vxpose.xlu0.b32.cont [14/16] %v1658, 128
      %1723 = vxpose.xlu0.b32.cont [15/16] %v1659, 128
      %1724 = vxpose.xlu0.b32.end [16/16] %v1660, 128
      %v1725 = vpop.trf.xlu0
      %v1726 = vpop.trf.xlu0
      %v1727 = vpop.trf.xlu0
      %v1728 = vpop.trf.xlu0
      %v1729 = vpop.trf.xlu0
      %v1730 = vpop.trf.xlu0
      %v1731 = vpop.trf.xlu0
      %v1732 = vpop.trf.xlu0
      %v1733 = vpop.trf.xlu0
      %v1734 = vpop.trf.xlu0
      %v1735 = vpop.trf.xlu0
      %v1736 = vpop.trf.xlu0
      %v1737 = vpop.trf.xlu0
      %v1738 = vpop.trf.xlu0
      %v1739 = vpop.trf.xlu0
      %v1740 = vpop.trf.xlu0
      %1741 = vxpose.xlu0.b32.start [1/16] %v1661, 128
      %1742 = vxpose.xlu0.b32.cont [2/16] %v1662, 128
      %1743 = vxpose.xlu0.b32.cont [3/16] %v1663, 128
      %1744 = vxpose.xlu0.b32.cont [4/16] %v1664, 128
      %1745 = vxpose.xlu0.b32.cont [5/16] %v1665, 128
      %1746 = vxpose.xlu0.b32.cont [6/16] %v1666, 128
      %1747 = vxpose.xlu0.b32.cont [7/16] %v1667, 128
      %1748 = vxpose.xlu0.b32.cont [8/16] %v1668, 128
      %1749 = vxpose.xlu0.b32.cont [9/16] %v1669, 128
      %1750 = vxpose.xlu0.b32.cont [10/16] %v1670, 128
      %1751 = vxpose.xlu0.b32.cont [11/16] %v1671, 128
      %1752 = vxpose.xlu0.b32.cont [12/16] %v1672, 128
      %1753 = vxpose.xlu0.b32.cont [13/16] %v1673, 128
      %1754 = vxpose.xlu0.b32.cont [14/16] %v1674, 128
      %1755 = vxpose.xlu0.b32.cont [15/16] %v1675, 128
      %1756 = vxpose.xlu0.b32.end [16/16] %v1676, 128
      %v1757 = vpop.trf.xlu0
      %v1758 = vpop.trf.xlu0
      %v1759 = vpop.trf.xlu0
      %v1760 = vpop.trf.xlu0
      %v1761 = vpop.trf.xlu0
      %v1762 = vpop.trf.xlu0
      %v1763 = vpop.trf.xlu0
      %v1764 = vpop.trf.xlu0
      %v1765 = vpop.trf.xlu0
      %v1766 = vpop.trf.xlu0
      %v1767 = vpop.trf.xlu0
      %v1768 = vpop.trf.xlu0
      %v1769 = vpop.trf.xlu0
      %v1770 = vpop.trf.xlu0
      %v1771 = vpop.trf.xlu0
      %v1772 = vpop.trf.xlu0
      %1773 = vxpose.xlu0.b32.start [1/16] %v1677, 128
      %1774 = vxpose.xlu0.b32.cont [2/16] %v1678, 128
      %1775 = vxpose.xlu0.b32.cont [3/16] %v1679, 128
      %1776 = vxpose.xlu0.b32.cont [4/16] %v1680, 128
      %1777 = vxpose.xlu0.b32.cont [5/16] %v1681, 128
      %1778 = vxpose.xlu0.b32.cont [6/16] %v1682, 128
      %1779 = vxpose.xlu0.b32.cont [7/16] %v1683, 128
      %1780 = vxpose.xlu0.b32.cont [8/16] %v1684, 128
      %1781 = vxpose.xlu0.b32.cont [9/16] %v1685, 128
      %1782 = vxpose.xlu0.b32.cont [10/16] %v1686, 128
      %1783 = vxpose.xlu0.b32.cont [11/16] %v1687, 128
      %1784 = vxpose.xlu0.b32.cont [12/16] %v1688, 128
      %1785 = vxpose.xlu0.b32.cont [13/16] %v1689, 128
      %1786 = vxpose.xlu0.b32.cont [14/16] %v1690, 128
      %1787 = vxpose.xlu0.b32.cont [15/16] %v1691, 128
      %1788 = vxpose.xlu0.b32.end [16/16] %v1692, 128
      %v1789 = vpop.trf.xlu0
      %v1790 = vpop.trf.xlu0
      %v1791 = vpop.trf.xlu0
      %v1792 = vpop.trf.xlu0
      %v1793 = vpop.trf.xlu0
      %v1794 = vpop.trf.xlu0
      %v1795 = vpop.trf.xlu0
      %v1796 = vpop.trf.xlu0
      %v1797 = vpop.trf.xlu0
      %v1798 = vpop.trf.xlu0
      %v1799 = vpop.trf.xlu0
      %v1800 = vpop.trf.xlu0
      %v1801 = vpop.trf.xlu0
      %v1802 = vpop.trf.xlu0
      %v1803 = vpop.trf.xlu0
      %v1804 = vpop.trf.xlu0
      %1805 = vxpose.xlu0.b32.start [1/16] %v1693, 128
      %1806 = vxpose.xlu0.b32.cont [2/16] %v1694, 128
      %1807 = vxpose.xlu0.b32.cont [3/16] %v1695, 128
      %1808 = vxpose.xlu0.b32.cont [4/16] %v1696, 128
      %1809 = vxpose.xlu0.b32.cont [5/16] %v1697, 128
      %1810 = vxpose.xlu0.b32.cont [6/16] %v1698, 128
      %1811 = vxpose.xlu0.b32.cont [7/16] %v1699, 128
      %1812 = vxpose.xlu0.b32.cont [8/16] %v1700, 128
      %1813 = vxpose.xlu0.b32.cont [9/16] %v1701, 128
      %1814 = vxpose.xlu0.b32.cont [10/16] %v1702, 128
      %1815 = vxpose.xlu0.b32.cont [11/16] %v1703, 128
      %1816 = vxpose.xlu0.b32.cont [12/16] %v1704, 128
      %1817 = vxpose.xlu0.b32.cont [13/16] %v1705, 128
      %1818 = vxpose.xlu0.b32.cont [14/16] %v1706, 128
      %1819 = vxpose.xlu0.b32.cont [15/16] %v1707, 128
      %1820 = vxpose.xlu0.b32.end [16/16] %v1708, 128
      %v1821 = vpop.trf.xlu0
      %v1822 = vpop.trf.xlu0
      %v1823 = vpop.trf.xlu0
      %v1824 = vpop.trf.xlu0
      %v1825 = vpop.trf.xlu0
      %v1826 = vpop.trf.xlu0
      %v1827 = vpop.trf.xlu0
      %v1828 = vpop.trf.xlu0
      %v1829 = vpop.trf.xlu0
      %v1830 = vpop.trf.xlu0
      %v1831 = vpop.trf.xlu0
      %v1832 = vpop.trf.xlu0
      %v1833 = vpop.trf.xlu0
      %v1834 = vpop.trf.xlu0
      %v1835 = vpop.trf.xlu0
      %v1836 = vpop.trf.xlu0
      %v1837 = vlaneseq
      %v1838 = vshrl.u32 %v1837, 7
      %v1839 = vsub.s32 0, %v1838
      %v1840 = vrot.slane %v1725, %v1839
      %v1841 = vlaneseq
      %v1842 = vshrl.u32 %v1841, 7
      %v1843 = vsub.s32 0, %v1842
      %v1844 = vrot.slane %v1757, %v1843
      %v1845 = vlaneseq
      %v1846 = vshrl.u32 %v1845, 7
      %v1847 = vsub.s32 0, %v1846
      %v1848 = vrot.slane %v1789, %v1847
      %v1849 = vlaneseq
      %v1850 = vshrl.u32 %v1849, 7
      %v1851 = vsub.s32 0, %v1850
      %v1852 = vrot.slane %v1821, %v1851
      %v1853 = vmul.f32 %v1581, %v1840
      %v1854 = vmul.f32 %v1582, %v1844
      %v1855 = vmul.f32 %v1583, %v1848
      %v1856 = vmul.f32 %v1584, %v1852
      %v1857 = vmul.f32 %v1585, %v1840
      %v1858 = vmul.f32 %v1586, %v1844
      %v1859 = vmul.f32 %v1587, %v1848
      %v1860 = vmul.f32 %v1588, %v1852
      %v1861 = vmul.f32 %v1589, %v1840
      %v1862 = vmul.f32 %v1590, %v1844
      %v1863 = vmul.f32 %v1591, %v1848
      %v1864 = vmul.f32 %v1592, %v1852
      %v1865 = vmul.f32 %v1593, %v1840
      %v1866 = vmul.f32 %v1594, %v1844
      %v1867 = vmul.f32 %v1595, %v1848
      %v1868 = vmul.f32 %v1596, %v1852
      %v1869 = vmul.f32 %v1597, %v1840
      %v1870 = vmul.f32 %v1598, %v1844
      %v1871 = vmul.f32 %v1599, %v1848
      %v1872 = vmul.f32 %v1600, %v1852
      %v1873 = vmul.f32 %v1601, %v1840
      %v1874 = vmul.f32 %v1602, %v1844
      %v1875 = vmul.f32 %v1603, %v1848
      %v1876 = vmul.f32 %v1604, %v1852
      %v1877 = vmul.f32 %v1605, %v1840
      %v1878 = vmul.f32 %v1606, %v1844
      %v1879 = vmul.f32 %v1607, %v1848
      %v1880 = vmul.f32 %v1608, %v1852
      %v1881 = vmul.f32 %v1609, %v1840
      %v1882 = vmul.f32 %v1610, %v1844
      %v1883 = vmul.f32 %v1611, %v1848
      %v1884 = vmul.f32 %v1612, %v1852
      %v1885 = vmul.f32 %v1613, %v1840
      %v1886 = vmul.f32 %v1614, %v1844
      %v1887 = vmul.f32 %v1615, %v1848
      %v1888 = vmul.f32 %v1616, %v1852
      %v1889 = vmul.f32 %v1617, %v1840
      %v1890 = vmul.f32 %v1618, %v1844
      %v1891 = vmul.f32 %v1619, %v1848
      %v1892 = vmul.f32 %v1620, %v1852
      %v1893 = vmul.f32 %v1621, %v1840
      %v1894 = vmul.f32 %v1622, %v1844
      %v1895 = vmul.f32 %v1623, %v1848
      %v1896 = vmul.f32 %v1624, %v1852
      %v1897 = vmul.f32 %v1625, %v1840
      %v1898 = vmul.f32 %v1626, %v1844
      %v1899 = vmul.f32 %v1627, %v1848
      %v1900 = vmul.f32 %v1628, %v1852
      %v1901 = vmul.f32 %v1629, %v1840
      %v1902 = vmul.f32 %v1630, %v1844
      %v1903 = vmul.f32 %v1631, %v1848
      %v1904 = vmul.f32 %v1632, %v1852
      %v1905 = vmul.f32 %v1633, %v1840
      %v1906 = vmul.f32 %v1634, %v1844
      %v1907 = vmul.f32 %v1635, %v1848
      %v1908 = vmul.f32 %v1636, %v1852
      %v1909 = vmul.f32 %v1637, %v1840
      %v1910 = vmul.f32 %v1638, %v1844
      %v1911 = vmul.f32 %v1639, %v1848
      %v1912 = vmul.f32 %v1640, %v1852
      %v1913 = vmul.f32 %v1641, %v1840
      %v1914 = vmul.f32 %v1642, %v1844
      %v1915 = vmul.f32 %v1643, %v1848
      %v1916 = vmul.f32 %v1644, %v1852
      %v1917 = vadd.f32 %v1853, %v1854
      %v1918 = vadd.f32 %v1917, %v1855
      %v1919 = vadd.f32 %v1918, %v1856
      %1920 = vadd.xlane.f32.xlu0 %v1919
      %v1921 = vpop.xlane.xlu0 %1920
      %v1922 = vadd.f32 %v1857, %v1858
      %v1923 = vadd.f32 %v1922, %v1859
      %v1924 = vadd.f32 %v1923, %v1860
      %1925 = vadd.xlane.f32.xlu0 %v1924
      %v1926 = vpop.xlane.xlu0 %1925
      %v1927 = vadd.f32 %v1861, %v1862
      %v1928 = vadd.f32 %v1927, %v1863
      %v1929 = vadd.f32 %v1928, %v1864
      %1930 = vadd.xlane.f32.xlu0 %v1929
      %v1931 = vpop.xlane.xlu0 %1930
      %v1932 = vadd.f32 %v1865, %v1866
      %v1933 = vadd.f32 %v1932, %v1867
      %v1934 = vadd.f32 %v1933, %v1868
      %1935 = vadd.xlane.f32.xlu0 %v1934
      %v1936 = vpop.xlane.xlu0 %1935
      %v1937 = vadd.f32 %v1869, %v1870
      %v1938 = vadd.f32 %v1937, %v1871
      %v1939 = vadd.f32 %v1938, %v1872
      %1940 = vadd.xlane.f32.xlu0 %v1939
      %v1941 = vpop.xlane.xlu0 %1940
      %v1942 = vadd.f32 %v1873, %v1874
      %v1943 = vadd.f32 %v1942, %v1875
      %v1944 = vadd.f32 %v1943, %v1876
      %1945 = vadd.xlane.f32.xlu0 %v1944
      %v1946 = vpop.xlane.xlu0 %1945
      %v1947 = vadd.f32 %v1877, %v1878
      %v1948 = vadd.f32 %v1947, %v1879
      %v1949 = vadd.f32 %v1948, %v1880
      %1950 = vadd.xlane.f32.xlu0 %v1949
      %v1951 = vpop.xlane.xlu0 %1950
      %v1952 = vadd.f32 %v1881, %v1882
      %v1953 = vadd.f32 %v1952, %v1883
      %v1954 = vadd.f32 %v1953, %v1884
      %1955 = vadd.xlane.f32.xlu0 %v1954
      %v1956 = vpop.xlane.xlu0 %1955
      %v1957 = vadd.f32 %v1885, %v1886
      %v1958 = vadd.f32 %v1957, %v1887
      %v1959 = vadd.f32 %v1958, %v1888
      %1960 = vadd.xlane.f32.xlu0 %v1959
      %v1961 = vpop.xlane.xlu0 %1960
      %v1962 = vadd.f32 %v1889, %v1890
      %v1963 = vadd.f32 %v1962, %v1891
      %v1964 = vadd.f32 %v1963, %v1892
      %1965 = vadd.xlane.f32.xlu0 %v1964
      %v1966 = vpop.xlane.xlu0 %1965
      %v1967 = vadd.f32 %v1893, %v1894
      %v1968 = vadd.f32 %v1967, %v1895
      %v1969 = vadd.f32 %v1968, %v1896
      %1970 = vadd.xlane.f32.xlu0 %v1969
      %v1971 = vpop.xlane.xlu0 %1970
      %v1972 = vadd.f32 %v1897, %v1898
      %v1973 = vadd.f32 %v1972, %v1899
      %v1974 = vadd.f32 %v1973, %v1900
      %1975 = vadd.xlane.f32.xlu0 %v1974
      %v1976 = vpop.xlane.xlu0 %1975
      %v1977 = vadd.f32 %v1901, %v1902
      %v1978 = vadd.f32 %v1977, %v1903
      %v1979 = vadd.f32 %v1978, %v1904
      %1980 = vadd.xlane.f32.xlu0 %v1979
      %v1981 = vpop.xlane.xlu0 %1980
      %v1982 = vadd.f32 %v1905, %v1906
      %v1983 = vadd.f32 %v1982, %v1907
      %v1984 = vadd.f32 %v1983, %v1908
      %1985 = vadd.xlane.f32.xlu0 %v1984
      %v1986 = vpop.xlane.xlu0 %1985
      %v1987 = vadd.f32 %v1909, %v1910
      %v1988 = vadd.f32 %v1987, %v1911
      %v1989 = vadd.f32 %v1988, %v1912
      %1990 = vadd.xlane.f32.xlu0 %v1989
      %v1991 = vpop.xlane.xlu0 %1990
      %v1992 = vadd.f32 %v1913, %v1914
      %v1993 = vadd.f32 %v1992, %v1915
      %v1994 = vadd.f32 %v1993, %v1916
      %1995 = vadd.xlane.f32.xlu0 %v1994
      %v1996 = vpop.xlane.xlu0 %1995
      %v1997 = vld [vmem:[#allocation4] sm:$0x1]
      %v1999 = vlaneseq
      %v2000 = vshrl.u32 %v1999, 7
      %v2001 = vsub.s32 0, %v2000
      %v2002 = vrot.slane %v1997, %v2001
      %2003 = vset.pattern.permute.xlu0 0
      %2004 = vperm.xlu0 %2003, %v2002
      %v2005 = vpop.permute.xlu0 %2004
      %v2007 = vadd.f32 %v1921, %v2005
      %v2008 = vadd.f32 %v1926, %v2005
      %v2009 = vadd.f32 %v1931, %v2005
      %v2010 = vadd.f32 %v1936, %v2005
      %v2011 = vadd.f32 %v1941, %v2005
      %v2012 = vadd.f32 %v1946, %v2005
      %v2013 = vadd.f32 %v1951, %v2005
      %v2014 = vadd.f32 %v1956, %v2005
      %v2015 = vadd.f32 %v1961, %v2005
      %v2016 = vadd.f32 %v1966, %v2005
      %v2017 = vadd.f32 %v1971, %v2005
      %v2018 = vadd.f32 %v1976, %v2005
      %v2019 = vadd.f32 %v1981, %v2005
      %v2020 = vadd.f32 %v1986, %v2005
      %v2021 = vadd.f32 %v1991, %v2005
      %v2022 = vadd.f32 %v1996, %v2005
      %v2039 = vlaneseq
      %v2040 = vand.u32 %v2039, 127
      %v2041 = vlaneseq
      %v2042 = vshrl.u32 %v2041, 7
      %v2043 = vsub.s32 %v2040, %v2042
      %v2044 = vrot.slane %v2007, %v2043
      %v2045 = vadd.s32 %v2040, 4294967288
      %v2046 = vlaneseq
      %v2047 = vshrl.u32 %v2046, 7
      %v2048 = vsub.s32 %v2045, %v2047
      %v2049 = vrot.slane %v2008, %v2048
      %vm2050 = vcmask 130112
      %v2051 = vsel %vm2050, %v2049, %v2044
      %v2052 = vlaneseq
      %v2053 = vshrl.u32 %v2052, 7
      %v2054 = vsub.s32 %v2040, %v2053
      %v2055 = vrot.slane %v2009, %v2054
      %v2056 = vlaneseq
      %v2057 = vshrl.u32 %v2056, 7
      %v2058 = vsub.s32 %v2045, %v2057
      %v2059 = vrot.slane %v2010, %v2058
      %v2060 = vsel %vm2050, %v2059, %v2055
      %v2061 = vlaneseq
      %v2062 = vshrl.u32 %v2061, 7
      %v2063 = vsub.s32 %v2040, %v2062
      %v2064 = vrot.slane %v2011, %v2063
      %v2065 = vlaneseq
      %v2066 = vshrl.u32 %v2065, 7
      %v2067 = vsub.s32 %v2045, %v2066
      %v2068 = vrot.slane %v2012, %v2067
      %v2069 = vsel %vm2050, %v2068, %v2064
      %v2070 = vlaneseq
      %v2071 = vshrl.u32 %v2070, 7
      %v2072 = vsub.s32 %v2040, %v2071
      %v2073 = vrot.slane %v2013, %v2072
      %v2074 = vlaneseq
      %v2075 = vshrl.u32 %v2074, 7
      %v2076 = vsub.s32 %v2045, %v2075
      %v2077 = vrot.slane %v2014, %v2076
      %v2078 = vsel %vm2050, %v2077, %v2073
      %v2079 = vlaneseq
      %v2080 = vshrl.u32 %v2079, 7
      %v2081 = vsub.s32 %v2040, %v2080
      %v2082 = vrot.slane %v2015, %v2081
      %v2083 = vlaneseq
      %v2084 = vshrl.u32 %v2083, 7
      %v2085 = vsub.s32 %v2045, %v2084
      %v2086 = vrot.slane %v2016, %v2085
      %v2087 = vsel %vm2050, %v2086, %v2082
      %v2088 = vlaneseq
      %v2089 = vshrl.u32 %v2088, 7
      %v2090 = vsub.s32 %v2040, %v2089
      %v2091 = vrot.slane %v2017, %v2090
      %v2092 = vlaneseq
      %v2093 = vshrl.u32 %v2092, 7
      %v2094 = vsub.s32 %v2045, %v2093
      %v2095 = vrot.slane %v2018, %v2094
      %v2096 = vsel %vm2050, %v2095, %v2091
      %v2097 = vlaneseq
      %v2098 = vshrl.u32 %v2097, 7
      %v2099 = vsub.s32 %v2040, %v2098
      %v2100 = vrot.slane %v2019, %v2099
      %v2101 = vlaneseq
      %v2102 = vshrl.u32 %v2101, 7
      %v2103 = vsub.s32 %v2045, %v2102
      %v2104 = vrot.slane %v2020, %v2103
      %v2105 = vsel %vm2050, %v2104, %v2100
      %v2106 = vlaneseq
      %v2107 = vshrl.u32 %v2106, 7
      %v2108 = vsub.s32 %v2040, %v2107
      %v2109 = vrot.slane %v2021, %v2108
      %v2110 = vlaneseq
      %v2111 = vshrl.u32 %v2110, 7
      %v2112 = vsub.s32 %v2045, %v2111
      %v2113 = vrot.slane %v2022, %v2112
      %v2114 = vsel %vm2050, %v2113, %v2109
      %vm2115 = vcmask 1041409
      %v2116 = vsel %vm2115, %v2060, %v2051
      %vm2117 = vcmask 1042434
      %v2118 = vsel %vm2117, %v2069, %v2116
      %vm2119 = vcmask 1043459
      %v2120 = vsel %vm2119, %v2078, %v2118
      %vm2121 = vcmask 1044484
      %v2122 = vsel %vm2121, %v2087, %v2120
      %vm2123 = vcmask 1045509
      %v2124 = vsel %vm2123, %v2096, %v2122
      %vm2125 = vcmask 1046534
      %v2126 = vsel %vm2125, %v2105, %v2124
      %vm2127 = vcmask 1047559
      %v2128 = vsel %vm2127, %v2114, %v2126
      %vm2130 = vcmask 130048
      %v2131 = vsel %vm2130, %v2128, -inf
      %2132 = vmax.xlane.f32.xlu0 %v2131
      %v2133 = vpop.xlane.xlu0 %2132
      %v2135 = vlaneseq
      %v2136 = vshrl.u32 %v2135, 7
      %v2137 = vsub.s32 0, %v2136
      %v2138 = vrot.slane %v2133, %v2137
      %v2139 = vlaneseq
      %v2140 = vshrl.u32 %v2139, 7
      %v2141 = vsub.s32 1, %v2140
      %v2142 = vrot.slane %v2133, %v2141
      %v2143 = vlaneseq
      %v2144 = vshrl.u32 %v2143, 7
      %v2145 = vsub.s32 2, %v2144
      %v2146 = vrot.slane %v2133, %v2145
      %v2147 = vlaneseq
      %v2148 = vshrl.u32 %v2147, 7
      %v2149 = vsub.s32 3, %v2148
      %v2150 = vrot.slane %v2133, %v2149
      %v2151 = vlaneseq
      %v2152 = vshrl.u32 %v2151, 7
      %v2153 = vsub.s32 4, %v2152
      %v2154 = vrot.slane %v2133, %v2153
      %v2155 = vlaneseq
      %v2156 = vshrl.u32 %v2155, 7
      %v2157 = vsub.s32 5, %v2156
      %v2158 = vrot.slane %v2133, %v2157
      %v2159 = vlaneseq
      %v2160 = vshrl.u32 %v2159, 7
      %v2161 = vsub.s32 6, %v2160
      %v2162 = vrot.slane %v2133, %v2161
      %v2163 = vlaneseq
      %v2164 = vshrl.u32 %v2163, 7
      %v2165 = vsub.s32 7, %v2164
      %v2166 = vrot.slane %v2133, %v2165
      %v2175 = vsub.f32 %v2007, %v2138
      %v2176 = vsub.f32 %v2008, %v2138
      %v2177 = vsub.f32 %v2009, %v2142
      %v2178 = vsub.f32 %v2010, %v2142
      %v2179 = vsub.f32 %v2011, %v2146
      %v2180 = vsub.f32 %v2012, %v2146
      %v2181 = vsub.f32 %v2013, %v2150
      %v2182 = vsub.f32 %v2014, %v2150
      %v2183 = vsub.f32 %v2015, %v2154
      %v2184 = vsub.f32 %v2016, %v2154
      %v2185 = vsub.f32 %v2017, %v2158
      %v2186 = vsub.f32 %v2018, %v2158
      %v2187 = vsub.f32 %v2019, %v2162
      %v2188 = vsub.f32 %v2020, %v2162
      %v2189 = vsub.f32 %v2021, %v2166
      %v2190 = vsub.f32 %v2022, %v2166
      %v2191 = vmul.f32 %v2175, 1.442695
      %v2192 = vpow.pop %v2191
      %v2193 = vmul.f32 %v2176, 1.442695
      %v2194 = vpow.pop %v2193
      %v2195 = vmul.f32 %v2177, 1.442695
      %v2196 = vpow.pop %v2195
      %v2197 = vmul.f32 %v2178, 1.442695
      %v2198 = vpow.pop %v2197
      %v2199 = vmul.f32 %v2179, 1.442695
      %v2200 = vpow.pop %v2199
      %v2201 = vmul.f32 %v2180, 1.442695
      %v2202 = vpow.pop %v2201
      %v2203 = vmul.f32 %v2181, 1.442695
      %v2204 = vpow.pop %v2203
      %v2205 = vmul.f32 %v2182, 1.442695
      %v2206 = vpow.pop %v2205
      %v2207 = vmul.f32 %v2183, 1.442695
      %v2208 = vpow.pop %v2207
      %v2209 = vmul.f32 %v2184, 1.442695
      %v2210 = vpow.pop %v2209
      %v2211 = vmul.f32 %v2185, 1.442695
      %v2212 = vpow.pop %v2211
      %v2213 = vmul.f32 %v2186, 1.442695
      %v2214 = vpow.pop %v2213
      %v2215 = vmul.f32 %v2187, 1.442695
      %v2216 = vpow.pop %v2215
      %v2217 = vmul.f32 %v2188, 1.442695
      %v2218 = vpow.pop %v2217
      %v2219 = vmul.f32 %v2189, 1.442695
      %v2220 = vpow.pop %v2219
      %v2221 = vmul.f32 %v2190, 1.442695
      %v2222 = vpow.pop %v2221
      %2239 = vset.pattern.permute.xlu0 0
      %2240 = vperm.xlu0 %2239, %v2192
      %v2241 = vpop.permute.xlu0 %2240
      %2242 = vset.pattern.permute.xlu0 0
      %2243 = vperm.xlu0 %2242, %v2194
      %v2244 = vpop.permute.xlu0 %2243
      %2245 = vset.pattern.permute.xlu0 0
      %2246 = vperm.xlu0 %2245, %v2196
      %v2247 = vpop.permute.xlu0 %2246
      %2248 = vset.pattern.permute.xlu0 0
      %2249 = vperm.xlu0 %2248, %v2198
      %v2250 = vpop.permute.xlu0 %2249
      %2251 = vset.pattern.permute.xlu0 0
      %2252 = vperm.xlu0 %2251, %v2200
      %v2253 = vpop.permute.xlu0 %2252
      %2254 = vset.pattern.permute.xlu0 0
      %2255 = vperm.xlu0 %2254, %v2202
      %v2256 = vpop.permute.xlu0 %2255
      %2257 = vset.pattern.permute.xlu0 0
      %2258 = vperm.xlu0 %2257, %v2204
      %v2259 = vpop.permute.xlu0 %2258
      %2260 = vset.pattern.permute.xlu0 0
      %2261 = vperm.xlu0 %2260, %v2206
      %v2262 = vpop.permute.xlu0 %2261
      %2263 = vset.pattern.permute.xlu0 0
      %2264 = vperm.xlu0 %2263, %v2208
      %v2265 = vpop.permute.xlu0 %2264
      %2266 = vset.pattern.permute.xlu0 0
      %2267 = vperm.xlu0 %2266, %v2210
      %v2268 = vpop.permute.xlu0 %2267
      %2269 = vset.pattern.permute.xlu0 0
      %2270 = vperm.xlu0 %2269, %v2212
      %v2271 = vpop.permute.xlu0 %2270
      %2272 = vset.pattern.permute.xlu0 0
      %2273 = vperm.xlu0 %2272, %v2214
      %v2274 = vpop.permute.xlu0 %2273
      %2275 = vset.pattern.permute.xlu0 0
      %2276 = vperm.xlu0 %2275, %v2216
      %v2277 = vpop.permute.xlu0 %2276
      %2278 = vset.pattern.permute.xlu0 0
      %2279 = vperm.xlu0 %2278, %v2218
      %v2280 = vpop.permute.xlu0 %2279
      %2281 = vset.pattern.permute.xlu0 0
      %2282 = vperm.xlu0 %2281, %v2220
      %v2283 = vpop.permute.xlu0 %2282
      %2284 = vset.pattern.permute.xlu0 0
      %2285 = vperm.xlu0 %2284, %v2222
      %v2286 = vpop.permute.xlu0 %2285
      %v2287 = vlaneseq
      %v2288 = vshrl.u32 %v2287, 7
      %v2289 = vsub.s32 %v2040, %v2288
      %v2290 = vrot.slane %v2241, %v2289
      %v2291 = vlaneseq
      %v2292 = vshrl.u32 %v2291, 7
      %v2293 = vsub.s32 %v2045, %v2292
      %v2294 = vrot.slane %v2244, %v2293
      %v2295 = vsel %vm2050, %v2294, %v2290
      %v2296 = vlaneseq
      %v2297 = vshrl.u32 %v2296, 7
      %v2298 = vsub.s32 %v2040, %v2297
      %v2299 = vrot.slane %v2247, %v2298
      %v2300 = vlaneseq
      %v2301 = vshrl.u32 %v2300, 7
      %v2302 = vsub.s32 %v2045, %v2301
      %v2303 = vrot.slane %v2250, %v2302
      %v2304 = vsel %vm2050, %v2303, %v2299
      %v2305 = vlaneseq
      %v2306 = vshrl.u32 %v2305, 7
      %v2307 = vsub.s32 %v2040, %v2306
      %v2308 = vrot.slane %v2253, %v2307
      %v2309 = vlaneseq
      %v2310 = vshrl.u32 %v2309, 7
      %v2311 = vsub.s32 %v2045, %v2310
      %v2312 = vrot.slane %v2256, %v2311
      %v2313 = vsel %vm2050, %v2312, %v2308
      %v2314 = vlaneseq
      %v2315 = vshrl.u32 %v2314, 7
      %v2316 = vsub.s32 %v2040, %v2315
      %v2317 = vrot.slane %v2259, %v2316
      %v2318 = vlaneseq
      %v2319 = vshrl.u32 %v2318, 7
      %v2320 = vsub.s32 %v2045, %v2319
      %v2321 = vrot.slane %v2262, %v2320
      %v2322 = vsel %vm2050, %v2321, %v2317
      %v2323 = vlaneseq
      %v2324 = vshrl.u32 %v2323, 7
      %v2325 = vsub.s32 %v2040, %v2324
      %v2326 = vrot.slane %v2265, %v2325
      %v2327 = vlaneseq
      %v2328 = vshrl.u32 %v2327, 7
      %v2329 = vsub.s32 %v2045, %v2328
      %v2330 = vrot.slane %v2268, %v2329
      %v2331 = vsel %vm2050, %v2330, %v2326
      %v2332 = vlaneseq
      %v2333 = vshrl.u32 %v2332, 7
      %v2334 = vsub.s32 %v2040, %v2333
      %v2335 = vrot.slane %v2271, %v2334
      %v2336 = vlaneseq
      %v2337 = vshrl.u32 %v2336, 7
      %v2338 = vsub.s32 %v2045, %v2337
      %v2339 = vrot.slane %v2274, %v2338
      %v2340 = vsel %vm2050, %v2339, %v2335
      %v2341 = vlaneseq
      %v2342 = vshrl.u32 %v2341, 7
      %v2343 = vsub.s32 %v2040, %v2342
      %v2344 = vrot.slane %v2277, %v2343
      %v2345 = vlaneseq
      %v2346 = vshrl.u32 %v2345, 7
      %v2347 = vsub.s32 %v2045, %v2346
      %v2348 = vrot.slane %v2280, %v2347
      %v2349 = vsel %vm2050, %v2348, %v2344
      %v2350 = vlaneseq
      %v2351 = vshrl.u32 %v2350, 7
      %v2352 = vsub.s32 %v2040, %v2351
      %v2353 = vrot.slane %v2283, %v2352
      %v2354 = vlaneseq
      %v2355 = vshrl.u32 %v2354, 7
      %v2356 = vsub.s32 %v2045, %v2355
      %v2357 = vrot.slane %v2286, %v2356
      %v2358 = vsel %vm2050, %v2357, %v2353
      %v2359 = vsel %vm2115, %v2304, %v2295
      %v2360 = vsel %vm2117, %v2313, %v2359
      %v2361 = vsel %vm2119, %v2322, %v2360
      %v2362 = vsel %vm2121, %v2331, %v2361
      %v2363 = vsel %vm2123, %v2340, %v2362
      %v2364 = vsel %vm2125, %v2349, %v2363
      %v2365 = vsel %vm2127, %v2358, %v2364
      %v2367 = vsel %vm2130, %v2365, 0.0
      %2368 = vadd.xlane.f32.xlu0 %v2367
      %v2369 = vpop.xlane.xlu0 %2368
      %v2370 = vrcp.pop %v2369
      %v2372 = vlaneseq
      %v2373 = vshrl.u32 %v2372, 7
      %v2374 = vsub.s32 0, %v2373
      %v2375 = vrot.slane %v2370, %v2374
      %v2376 = vlaneseq
      %v2377 = vshrl.u32 %v2376, 7
      %v2378 = vsub.s32 1, %v2377
      %v2379 = vrot.slane %v2370, %v2378
      %v2380 = vlaneseq
      %v2381 = vshrl.u32 %v2380, 7
      %v2382 = vsub.s32 2, %v2381
      %v2383 = vrot.slane %v2370, %v2382
      %v2384 = vlaneseq
      %v2385 = vshrl.u32 %v2384, 7
      %v2386 = vsub.s32 3, %v2385
      %v2387 = vrot.slane %v2370, %v2386
      %v2388 = vlaneseq
      %v2389 = vshrl.u32 %v2388, 7
      %v2390 = vsub.s32 4, %v2389
      %v2391 = vrot.slane %v2370, %v2390
      %v2392 = vlaneseq
      %v2393 = vshrl.u32 %v2392, 7
      %v2394 = vsub.s32 5, %v2393
      %v2395 = vrot.slane %v2370, %v2394
      %v2396 = vlaneseq
      %v2397 = vshrl.u32 %v2396, 7
      %v2398 = vsub.s32 6, %v2397
      %v2399 = vrot.slane %v2370, %v2398
      %v2400 = vlaneseq
      %v2401 = vshrl.u32 %v2400, 7
      %v2402 = vsub.s32 7, %v2401
      %v2403 = vrot.slane %v2370, %v2402
      %v2412 = vmul.f32 %v2192, %v2375
      %v2413 = vmul.f32 %v2194, %v2375
      %v2414 = vmul.f32 %v2196, %v2379
      %v2415 = vmul.f32 %v2198, %v2379
      %v2416 = vmul.f32 %v2200, %v2383
      %v2417 = vmul.f32 %v2202, %v2383
      %v2418 = vmul.f32 %v2204, %v2387
      %v2419 = vmul.f32 %v2206, %v2387
      %v2420 = vmul.f32 %v2208, %v2391
      %v2421 = vmul.f32 %v2210, %v2391
      %v2422 = vmul.f32 %v2212, %v2395
      %v2423 = vmul.f32 %v2214, %v2395
      %v2424 = vmul.f32 %v2216, %v2399
      %v2425 = vmul.f32 %v2218, %v2399
      %v2426 = vmul.f32 %v2220, %v2403
      %v2427 = vmul.f32 %v2222, %v2403
      %2430 = vset.pattern.permute.xlu0 0
      %2431 = vperm.xlu0 %2430, %v2412
      %v2432 = vpop.permute.xlu0 %2431
      %2433 = vset.pattern.permute.xlu0 0
      %2434 = vperm.xlu0 %2433, %v2413
      %v2435 = vpop.permute.xlu0 %2434
      %v2436 = vlaneseq
      %v2437 = vshrl.u32 %v2436, 7
      %v2438 = vsub.s32 %v2040, %v2437
      %v2439 = vrot.slane %v2432, %v2438
      %v2440 = vlaneseq
      %v2441 = vshrl.u32 %v2440, 7
      %v2442 = vsub.s32 %v2045, %v2441
      %v2443 = vrot.slane %v2435, %v2442
      %v2444 = vsel %vm2050, %v2443, %v2439
      %v2445 = vsel %vm2130, %v2444, 0
      %2447 = vmatprep.subr.mxu0 0.0
      %2448 = vmatpush1.msra.mxu0 0.0
      %2449 = vmatprep.subr.mxu0 0.0
      %2450 = vmatpush1.msra.mxu0 0.0
      %2451 = vmatprep.subr.mxu0 0.0
      %2452 = vmatpush1.msra.mxu0 0.0
      %2453 = vmatprep.subr.mxu0 0.0
      %2454 = vmatpush1.msra.mxu0 0.0
      %2455 = vmatprep.subr.mxu0 0.0
      %2456 = vmatpush1.msra.mxu0 0.0
      %2457 = vmatprep.subr.mxu0 0.0
      %2458 = vmatpush1.msra.mxu0 0.0
      %2459 = vmatprep.subr.mxu0 0.0
      %2460 = vmatpush1.msra.mxu0 0.0
      %2461 = vmatprep.subr.mxu0 0.0
      %2462 = vmatpush1.msra.mxu0 0.0
      %2463 = vmatprep.subr.mxu0 0.0
      %2464 = vmatpush1.msra.mxu0 0.0
      %2465 = vmatprep.subr.mxu0 0.0
      %2466 = vmatpush1.msra.mxu0 0.0
      %2467 = vmatprep.subr.mxu0 0.0
      %2468 = vmatpush1.msra.mxu0 0.0
      %2469 = vmatprep.subr.mxu0 0.0
      %2470 = vmatpush1.msra.mxu0 0.0
      %2471 = vmatprep.subr.mxu0 0.0
      %2472 = vmatpush1.msra.mxu0 0.0
      %2473 = vmatprep.subr.mxu0 0.0
      %2474 = vmatpush1.msra.mxu0 0.0
      %2475 = vmatprep.subr.mxu0 0.0
      %2476 = vmatpush1.msra.mxu0 %v644
      %2477 = vmatprep.subr.mxu0 0.0
      %2478 = vmatpush1.msra.mxu0 %v643
      %2479 = vmatprep.subr.mxu0 0.0
      %2480 = vmatpush2.msra.mxu0 0.0
      %2481 = vmatprep.subr.mxu0 0.0
      %2482 = vmatpush2.msra.mxu0 0.0
      %2483 = vmatprep.subr.mxu0 0.0
      %2484 = vmatpush2.msra.mxu0 0.0
      %2485 = vmatprep.subr.mxu0 0.0
      %2486 = vmatpush2.msra.mxu0 0.0
      %2487 = vmatprep.subr.mxu0 0.0
      %2488 = vmatpush2.msra.mxu0 0.0
      %2489 = vmatprep.subr.mxu0 0.0
      %2490 = vmatpush2.msra.mxu0 0.0
      %2491 = vmatprep.subr.mxu0 0.0
      %2492 = vmatpush2.msra.mxu0 0.0
      %2493 = vmatprep.subr.mxu0 0.0
      %2494 = vmatpush2.msra.mxu0 0.0
      %2495 = vmatprep.subr.mxu0 0.0
      %2496 = vmatpush2.msra.mxu0 0.0
      %2497 = vmatprep.subr.mxu0 0.0
      %2498 = vmatpush2.msra.mxu0 0.0
      %2499 = vmatprep.subr.mxu0 0.0
      %2500 = vmatpush2.msra.mxu0 0.0
      %2501 = vmatprep.subr.mxu0 0.0
      %2502 = vmatpush2.msra.mxu0 0.0
      %2503 = vmatprep.subr.mxu0 0.0
      %2504 = vmatpush2.msra.mxu0 0.0
      %2505 = vmatprep.subr.mxu0 0.0
      %2506 = vmatpush2.msra.mxu0 0.0
      %2507 = vmatprep.subr.mxu0 0.0
      %2508 = vmatpush2.msra.mxu0 0.0
      %2509 = vmatprep.subr.mxu0 0.0
      %2510 = vmatpush2.msra.mxu0 0.0
      %2511 = vmatprep.mubr.f32.mxu0 0.0
      %2512 = vmatmul.mubr.f32.gmra.mxu0 %v2445
      %v2513 = vpop.f32.mrf.mxu0
      %v2514 = vadd.f32 0.0, %v2513
      %v2515 = vpop.f32.mrf.mxu0
      %2516 = vdwg.mxu0
      %2519 = vset.pattern.permute.xlu0 0
      %2520 = vperm.xlu0 %2519, %v2414
      %v2521 = vpop.permute.xlu0 %2520
      %2522 = vset.pattern.permute.xlu0 0
      %2523 = vperm.xlu0 %2522, %v2415
      %v2524 = vpop.permute.xlu0 %2523
      %v2525 = vlaneseq
      %v2526 = vshrl.u32 %v2525, 7
      %v2527 = vsub.s32 %v2040, %v2526
      %v2528 = vrot.slane %v2521, %v2527
      %v2529 = vlaneseq
      %v2530 = vshrl.u32 %v2529, 7
      %v2531 = vsub.s32 %v2045, %v2530
      %v2532 = vrot.slane %v2524, %v2531
      %v2533 = vsel %vm2050, %v2532, %v2528
      %v2534 = vsel %vm2130, %v2533, 0
      %2536 = vmatprep.subr.mxu0 0.0
      %2537 = vmatpush1.msra.mxu0 0.0
      %2538 = vmatprep.subr.mxu0 0.0
      %2539 = vmatpush1.msra.mxu0 0.0
      %2540 = vmatprep.subr.mxu0 0.0
      %2541 = vmatpush1.msra.mxu0 0.0
      %2542 = vmatprep.subr.mxu0 0.0
      %2543 = vmatpush1.msra.mxu0 0.0
      %2544 = vmatprep.subr.mxu0 0.0
      %2545 = vmatpush1.msra.mxu0 0.0
      %2546 = vmatprep.subr.mxu0 0.0
      %2547 = vmatpush1.msra.mxu0 0.0
      %2548 = vmatprep.subr.mxu0 0.0
      %2549 = vmatpush1.msra.mxu0 0.0
      %2550 = vmatprep.subr.mxu0 0.0
      %2551 = vmatpush1.msra.mxu0 0.0
      %2552 = vmatprep.subr.mxu0 0.0
      %2553 = vmatpush1.msra.mxu0 0.0
      %2554 = vmatprep.subr.mxu0 0.0
      %2555 = vmatpush1.msra.mxu0 0.0
      %2556 = vmatprep.subr.mxu0 0.0
      %2557 = vmatpush1.msra.mxu0 0.0
      %2558 = vmatprep.subr.mxu0 0.0
      %2559 = vmatpush1.msra.mxu0 0.0
      %2560 = vmatprep.subr.mxu0 0.0
      %2561 = vmatpush1.msra.mxu0 0.0
      %2562 = vmatprep.subr.mxu0 0.0
      %2563 = vmatpush1.msra.mxu0 0.0
      %2564 = vmatprep.subr.mxu0 0.0
      %2565 = vmatpush1.msra.mxu0 %v646
      %2566 = vmatprep.subr.mxu0 0.0
      %2567 = vmatpush1.msra.mxu0 %v645
      %2568 = vmatprep.subr.mxu0 0.0
      %2569 = vmatpush2.msra.mxu0 0.0
      %2570 = vmatprep.subr.mxu0 0.0
      %2571 = vmatpush2.msra.mxu0 0.0
      %2572 = vmatprep.subr.mxu0 0.0
      %2573 = vmatpush2.msra.mxu0 0.0
      %2574 = vmatprep.subr.mxu0 0.0
      %2575 = vmatpush2.msra.mxu0 0.0
      %2576 = vmatprep.subr.mxu0 0.0
      %2577 = vmatpush2.msra.mxu0 0.0
      %2578 = vmatprep.subr.mxu0 0.0
      %2579 = vmatpush2.msra.mxu0 0.0
      %2580 = vmatprep.subr.mxu0 0.0
      %2581 = vmatpush2.msra.mxu0 0.0
      %2582 = vmatprep.subr.mxu0 0.0
      %2583 = vmatpush2.msra.mxu0 0.0
      %2584 = vmatprep.subr.mxu0 0.0
      %2585 = vmatpush2.msra.mxu0 0.0
      %2586 = vmatprep.subr.mxu0 0.0
      %2587 = vmatpush2.msra.mxu0 0.0
      %2588 = vmatprep.subr.mxu0 0.0
      %2589 = vmatpush2.msra.mxu0 0.0
      %2590 = vmatprep.subr.mxu0 0.0
      %2591 = vmatpush2.msra.mxu0 0.0
      %2592 = vmatprep.subr.mxu0 0.0
      %2593 = vmatpush2.msra.mxu0 0.0
      %2594 = vmatprep.subr.mxu0 0.0
      %2595 = vmatpush2.msra.mxu0 0.0
      %2596 = vmatprep.subr.mxu0 0.0
      %2597 = vmatpush2.msra.mxu0 0.0
      %2598 = vmatprep.subr.mxu0 0.0
      %2599 = vmatpush2.msra.mxu0 0.0
      %2600 = vmatprep.mubr.f32.mxu0 0.0
      %2601 = vmatmul.mubr.f32.gmra.mxu0 %v2534
      %v2602 = vpop.f32.mrf.mxu0
      %v2603 = vadd.f32 0.0, %v2602
      %v2604 = vpop.f32.mrf.mxu0
      %2605 = vdwg.mxu0
      %2608 = vset.pattern.permute.xlu0 0
      %2609 = vperm.xlu0 %2608, %v2416
      %v2610 = vpop.permute.xlu0 %2609
      %2611 = vset.pattern.permute.xlu0 0
      %2612 = vperm.xlu0 %2611, %v2417
      %v2613 = vpop.permute.xlu0 %2612
      %v2614 = vlaneseq
      %v2615 = vshrl.u32 %v2614, 7
      %v2616 = vsub.s32 %v2040, %v2615
      %v2617 = vrot.slane %v2610, %v2616
      %v2618 = vlaneseq
      %v2619 = vshrl.u32 %v2618, 7
      %v2620 = vsub.s32 %v2045, %v2619
      %v2621 = vrot.slane %v2613, %v2620
      %v2622 = vsel %vm2050, %v2621, %v2617
      %v2623 = vsel %vm2130, %v2622, 0
      %2625 = vmatprep.subr.mxu0 0.0
      %2626 = vmatpush1.msra.mxu0 0.0
      %2627 = vmatprep.subr.mxu0 0.0
      %2628 = vmatpush1.msra.mxu0 0.0
      %2629 = vmatprep.subr.mxu0 0.0
      %2630 = vmatpush1.msra.mxu0 0.0
      %2631 = vmatprep.subr.mxu0 0.0
      %2632 = vmatpush1.msra.mxu0 0.0
      %2633 = vmatprep.subr.mxu0 0.0
      %2634 = vmatpush1.msra.mxu0 0.0
      %2635 = vmatprep.subr.mxu0 0.0
      %2636 = vmatpush1.msra.mxu0 0.0
      %2637 = vmatprep.subr.mxu0 0.0
      %2638 = vmatpush1.msra.mxu0 0.0
      %2639 = vmatprep.subr.mxu0 0.0
      %2640 = vmatpush1.msra.mxu0 0.0
      %2641 = vmatprep.subr.mxu0 0.0
      %2642 = vmatpush1.msra.mxu0 0.0
      %2643 = vmatprep.subr.mxu0 0.0
      %2644 = vmatpush1.msra.mxu0 0.0
      %2645 = vmatprep.subr.mxu0 0.0
      %2646 = vmatpush1.msra.mxu0 0.0
      %2647 = vmatprep.subr.mxu0 0.0
      %2648 = vmatpush1.msra.mxu0 0.0
      %2649 = vmatprep.subr.mxu0 0.0
      %2650 = vmatpush1.msra.mxu0 0.0
      %2651 = vmatprep.subr.mxu0 0.0
      %2652 = vmatpush1.msra.mxu0 0.0
      %2653 = vmatprep.subr.mxu0 0.0
      %2654 = vmatpush1.msra.mxu0 %v648
      %2655 = vmatprep.subr.mxu0 0.0
      %2656 = vmatpush1.msra.mxu0 %v647
      %2657 = vmatprep.subr.mxu0 0.0
      %2658 = vmatpush2.msra.mxu0 0.0
      %2659 = vmatprep.subr.mxu0 0.0
      %2660 = vmatpush2.msra.mxu0 0.0
      %2661 = vmatprep.subr.mxu0 0.0
      %2662 = vmatpush2.msra.mxu0 0.0
      %2663 = vmatprep.subr.mxu0 0.0
      %2664 = vmatpush2.msra.mxu0 0.0
      %2665 = vmatprep.subr.mxu0 0.0
      %2666 = vmatpush2.msra.mxu0 0.0
      %2667 = vmatprep.subr.mxu0 0.0
      %2668 = vmatpush2.msra.mxu0 0.0
      %2669 = vmatprep.subr.mxu0 0.0
      %2670 = vmatpush2.msra.mxu0 0.0
      %2671 = vmatprep.subr.mxu0 0.0
      %2672 = vmatpush2.msra.mxu0 0.0
      %2673 = vmatprep.subr.mxu0 0.0
      %2674 = vmatpush2.msra.mxu0 0.0
      %2675 = vmatprep.subr.mxu0 0.0
      %2676 = vmatpush2.msra.mxu0 0.0
      %2677 = vmatprep.subr.mxu0 0.0
      %2678 = vmatpush2.msra.mxu0 0.0
      %2679 = vmatprep.subr.mxu0 0.0
      %2680 = vmatpush2.msra.mxu0 0.0
      %2681 = vmatprep.subr.mxu0 0.0
      %2682 = vmatpush2.msra.mxu0 0.0
      %2683 = vmatprep.subr.mxu0 0.0
      %2684 = vmatpush2.msra.mxu0 0.0
      %2685 = vmatprep.subr.mxu0 0.0
      %2686 = vmatpush2.msra.mxu0 0.0
      %2687 = vmatprep.subr.mxu0 0.0
      %2688 = vmatpush2.msra.mxu0 0.0
      %2689 = vmatprep.mubr.f32.mxu0 0.0
      %2690 = vmatmul.mubr.f32.gmra.mxu0 %v2623
      %v2691 = vpop.f32.mrf.mxu0
      %v2692 = vadd.f32 0.0, %v2691
      %v2693 = vpop.f32.mrf.mxu0
      %2694 = vdwg.mxu0
      %2697 = vset.pattern.permute.xlu0 0
      %2698 = vperm.xlu0 %2697, %v2418
      %v2699 = vpop.permute.xlu0 %2698
      %2700 = vset.pattern.permute.xlu0 0
      %2701 = vperm.xlu0 %2700, %v2419
      %v2702 = vpop.permute.xlu0 %2701
      %v2703 = vlaneseq
      %v2704 = vshrl.u32 %v2703, 7
      %v2705 = vsub.s32 %v2040, %v2704
      %v2706 = vrot.slane %v2699, %v2705
      %v2707 = vlaneseq
      %v2708 = vshrl.u32 %v2707, 7
      %v2709 = vsub.s32 %v2045, %v2708
      %v2710 = vrot.slane %v2702, %v2709
      %v2711 = vsel %vm2050, %v2710, %v2706
      %v2712 = vsel %vm2130, %v2711, 0
      %2714 = vmatprep.subr.mxu0 0.0
      %2715 = vmatpush1.msra.mxu0 0.0
      %2716 = vmatprep.subr.mxu0 0.0
      %2717 = vmatpush1.msra.mxu0 0.0
      %2718 = vmatprep.subr.mxu0 0.0
      %2719 = vmatpush1.msra.mxu0 0.0
      %2720 = vmatprep.subr.mxu0 0.0
      %2721 = vmatpush1.msra.mxu0 0.0
      %2722 = vmatprep.subr.mxu0 0.0
      %2723 = vmatpush1.msra.mxu0 0.0
      %2724 = vmatprep.subr.mxu0 0.0
      %2725 = vmatpush1.msra.mxu0 0.0
      %2726 = vmatprep.subr.mxu0 0.0
      %2727 = vmatpush1.msra.mxu0 0.0
      %2728 = vmatprep.subr.mxu0 0.0
      %2729 = vmatpush1.msra.mxu0 0.0
      %2730 = vmatprep.subr.mxu0 0.0
      %2731 = vmatpush1.msra.mxu0 0.0
      %2732 = vmatprep.subr.mxu0 0.0
      %2733 = vmatpush1.msra.mxu0 0.0
      %2734 = vmatprep.subr.mxu0 0.0
      %2735 = vmatpush1.msra.mxu0 0.0
      %2736 = vmatprep.subr.mxu0 0.0
      %2737 = vmatpush1.msra.mxu0 0.0
      %2738 = vmatprep.subr.mxu0 0.0
      %2739 = vmatpush1.msra.mxu0 0.0
      %2740 = vmatprep.subr.mxu0 0.0
      %2741 = vmatpush1.msra.mxu0 0.0
      %2742 = vmatprep.subr.mxu0 0.0
      %2743 = vmatpush1.msra.mxu0 %v650
      %2744 = vmatprep.subr.mxu0 0.0
      %2745 = vmatpush1.msra.mxu0 %v649
      %2746 = vmatprep.subr.mxu0 0.0
      %2747 = vmatpush2.msra.mxu0 0.0
      %2748 = vmatprep.subr.mxu0 0.0
      %2749 = vmatpush2.msra.mxu0 0.0
      %2750 = vmatprep.subr.mxu0 0.0
      %2751 = vmatpush2.msra.mxu0 0.0
      %2752 = vmatprep.subr.mxu0 0.0
      %2753 = vmatpush2.msra.mxu0 0.0
      %2754 = vmatprep.subr.mxu0 0.0
      %2755 = vmatpush2.msra.mxu0 0.0
      %2756 = vmatprep.subr.mxu0 0.0
      %2757 = vmatpush2.msra.mxu0 0.0
      %2758 = vmatprep.subr.mxu0 0.0
      %2759 = vmatpush2.msra.mxu0 0.0
      %2760 = vmatprep.subr.mxu0 0.0
      %2761 = vmatpush2.msra.mxu0 0.0
      %2762 = vmatprep.subr.mxu0 0.0
      %2763 = vmatpush2.msra.mxu0 0.0
      %2764 = vmatprep.subr.mxu0 0.0
      %2765 = vmatpush2.msra.mxu0 0.0
      %2766 = vmatprep.subr.mxu0 0.0
      %2767 = vmatpush2.msra.mxu0 0.0
      %2768 = vmatprep.subr.mxu0 0.0
      %2769 = vmatpush2.msra.mxu0 0.0
      %2770 = vmatprep.subr.mxu0 0.0
      %2771 = vmatpush2.msra.mxu0 0.0
      %2772 = vmatprep.subr.mxu0 0.0
      %2773 = vmatpush2.msra.mxu0 0.0
      %2774 = vmatprep.subr.mxu0 0.0
      %2775 = vmatpush2.msra.mxu0 0.0
      %2776 = vmatprep.subr.mxu0 0.0
      %2777 = vmatpush2.msra.mxu0 0.0
      %2778 = vmatprep.mubr.f32.mxu0 0.0
      %2779 = vmatmul.mubr.f32.gmra.mxu0 %v2712
      %v2780 = vpop.f32.mrf.mxu0
      %v2781 = vadd.f32 0.0, %v2780
      %v2782 = vpop.f32.mrf.mxu0
      %2783 = vdwg.mxu0
      %2786 = vset.pattern.permute.xlu0 0
      %2787 = vperm.xlu0 %2786, %v2420
      %v2788 = vpop.permute.xlu0 %2787
      %2789 = vset.pattern.permute.xlu0 0
      %2790 = vperm.xlu0 %2789, %v2421
      %v2791 = vpop.permute.xlu0 %2790
      %v2792 = vlaneseq
      %v2793 = vshrl.u32 %v2792, 7
      %v2794 = vsub.s32 %v2040, %v2793
      %v2795 = vrot.slane %v2788, %v2794
      %v2796 = vlaneseq
      %v2797 = vshrl.u32 %v2796, 7
      %v2798 = vsub.s32 %v2045, %v2797
      %v2799 = vrot.slane %v2791, %v2798
      %v2800 = vsel %vm2050, %v2799, %v2795
      %v2801 = vsel %vm2130, %v2800, 0
      %2803 = vmatprep.subr.mxu0 0.0
      %2804 = vmatpush1.msra.mxu0 0.0
      %2805 = vmatprep.subr.mxu0 0.0
      %2806 = vmatpush1.msra.mxu0 0.0
      %2807 = vmatprep.subr.mxu0 0.0
      %2808 = vmatpush1.msra.mxu0 0.0
      %2809 = vmatprep.subr.mxu0 0.0
      %2810 = vmatpush1.msra.mxu0 0.0
      %2811 = vmatprep.subr.mxu0 0.0
      %2812 = vmatpush1.msra.mxu0 0.0
      %2813 = vmatprep.subr.mxu0 0.0
      %2814 = vmatpush1.msra.mxu0 0.0
      %2815 = vmatprep.subr.mxu0 0.0
      %2816 = vmatpush1.msra.mxu0 0.0
      %2817 = vmatprep.subr.mxu0 0.0
      %2818 = vmatpush1.msra.mxu0 0.0
      %2819 = vmatprep.subr.mxu0 0.0
      %2820 = vmatpush1.msra.mxu0 0.0
      %2821 = vmatprep.subr.mxu0 0.0
      %2822 = vmatpush1.msra.mxu0 0.0
      %2823 = vmatprep.subr.mxu0 0.0
      %2824 = vmatpush1.msra.mxu0 0.0
      %2825 = vmatprep.subr.mxu0 0.0
      %2826 = vmatpush1.msra.mxu0 0.0
      %2827 = vmatprep.subr.mxu0 0.0
      %2828 = vmatpush1.msra.mxu0 0.0
      %2829 = vmatprep.subr.mxu0 0.0
      %2830 = vmatpush1.msra.mxu0 0.0
      %2831 = vmatprep.subr.mxu0 0.0
      %2832 = vmatpush1.msra.mxu0 %v652
      %2833 = vmatprep.subr.mxu0 0.0
      %2834 = vmatpush1.msra.mxu0 %v651
      %2835 = vmatprep.subr.mxu0 0.0
      %2836 = vmatpush2.msra.mxu0 0.0
      %2837 = vmatprep.subr.mxu0 0.0
      %2838 = vmatpush2.msra.mxu0 0.0
      %2839 = vmatprep.subr.mxu0 0.0
      %2840 = vmatpush2.msra.mxu0 0.0
      %2841 = vmatprep.subr.mxu0 0.0
      %2842 = vmatpush2.msra.mxu0 0.0
      %2843 = vmatprep.subr.mxu0 0.0
      %2844 = vmatpush2.msra.mxu0 0.0
      %2845 = vmatprep.subr.mxu0 0.0
      %2846 = vmatpush2.msra.mxu0 0.0
      %2847 = vmatprep.subr.mxu0 0.0
      %2848 = vmatpush2.msra.mxu0 0.0
      %2849 = vmatprep.subr.mxu0 0.0
      %2850 = vmatpush2.msra.mxu0 0.0
      %2851 = vmatprep.subr.mxu0 0.0
      %2852 = vmatpush2.msra.mxu0 0.0
      %2853 = vmatprep.subr.mxu0 0.0
      %2854 = vmatpush2.msra.mxu0 0.0
      %2855 = vmatprep.subr.mxu0 0.0
      %2856 = vmatpush2.msra.mxu0 0.0
      %2857 = vmatprep.subr.mxu0 0.0
      %2858 = vmatpush2.msra.mxu0 0.0
      %2859 = vmatprep.subr.mxu0 0.0
      %2860 = vmatpush2.msra.mxu0 0.0
      %2861 = vmatprep.subr.mxu0 0.0
      %2862 = vmatpush2.msra.mxu0 0.0
      %2863 = vmatprep.subr.mxu0 0.0
      %2864 = vmatpush2.msra.mxu0 0.0
      %2865 = vmatprep.subr.mxu0 0.0
      %2866 = vmatpush2.msra.mxu0 0.0
      %2867 = vmatprep.mubr.f32.mxu0 0.0
      %2868 = vmatmul.mubr.f32.gmra.mxu0 %v2801
      %v2869 = vpop.f32.mrf.mxu0
      %v2870 = vadd.f32 0.0, %v2869
      %v2871 = vpop.f32.mrf.mxu0
      %2872 = vdwg.mxu0
      %2875 = vset.pattern.permute.xlu0 0
      %2876 = vperm.xlu0 %2875, %v2422
      %v2877 = vpop.permute.xlu0 %2876
      %2878 = vset.pattern.permute.xlu0 0
      %2879 = vperm.xlu0 %2878, %v2423
      %v2880 = vpop.permute.xlu0 %2879
      %v2881 = vlaneseq
      %v2882 = vshrl.u32 %v2881, 7
      %v2883 = vsub.s32 %v2040, %v2882
      %v2884 = vrot.slane %v2877, %v2883
      %v2885 = vlaneseq
      %v2886 = vshrl.u32 %v2885, 7
      %v2887 = vsub.s32 %v2045, %v2886
      %v2888 = vrot.slane %v2880, %v2887
      %v2889 = vsel %vm2050, %v2888, %v2884
      %v2890 = vsel %vm2130, %v2889, 0
      %2892 = vmatprep.subr.mxu0 0.0
      %2893 = vmatpush1.msra.mxu0 0.0
      %2894 = vmatprep.subr.mxu0 0.0
      %2895 = vmatpush1.msra.mxu0 0.0
      %2896 = vmatprep.subr.mxu0 0.0
      %2897 = vmatpush1.msra.mxu0 0.0
      %2898 = vmatprep.subr.mxu0 0.0
      %2899 = vmatpush1.msra.mxu0 0.0
      %2900 = vmatprep.subr.mxu0 0.0
      %2901 = vmatpush1.msra.mxu0 0.0
      %2902 = vmatprep.subr.mxu0 0.0
      %2903 = vmatpush1.msra.mxu0 0.0
      %2904 = vmatprep.subr.mxu0 0.0
      %2905 = vmatpush1.msra.mxu0 0.0
      %2906 = vmatprep.subr.mxu0 0.0
      %2907 = vmatpush1.msra.mxu0 0.0
      %2908 = vmatprep.subr.mxu0 0.0
      %2909 = vmatpush1.msra.mxu0 0.0
      %2910 = vmatprep.subr.mxu0 0.0
      %2911 = vmatpush1.msra.mxu0 0.0
      %2912 = vmatprep.subr.mxu0 0.0
      %2913 = vmatpush1.msra.mxu0 0.0
      %2914 = vmatprep.subr.mxu0 0.0
      %2915 = vmatpush1.msra.mxu0 0.0
      %2916 = vmatprep.subr.mxu0 0.0
      %2917 = vmatpush1.msra.mxu0 0.0
      %2918 = vmatprep.subr.mxu0 0.0
      %2919 = vmatpush1.msra.mxu0 0.0
      %2920 = vmatprep.subr.mxu0 0.0
      %2921 = vmatpush1.msra.mxu0 %v654
      %2922 = vmatprep.subr.mxu0 0.0
      %2923 = vmatpush1.msra.mxu0 %v653
      %2924 = vmatprep.subr.mxu0 0.0
      %2925 = vmatpush2.msra.mxu0 0.0
      %2926 = vmatprep.subr.mxu0 0.0
      %2927 = vmatpush2.msra.mxu0 0.0
      %2928 = vmatprep.subr.mxu0 0.0
      %2929 = vmatpush2.msra.mxu0 0.0
      %2930 = vmatprep.subr.mxu0 0.0
      %2931 = vmatpush2.msra.mxu0 0.0
      %2932 = vmatprep.subr.mxu0 0.0
      %2933 = vmatpush2.msra.mxu0 0.0
      %2934 = vmatprep.subr.mxu0 0.0
      %2935 = vmatpush2.msra.mxu0 0.0
      %2936 = vmatprep.subr.mxu0 0.0
      %2937 = vmatpush2.msra.mxu0 0.0
      %2938 = vmatprep.subr.mxu0 0.0
      %2939 = vmatpush2.msra.mxu0 0.0
      %2940 = vmatprep.subr.mxu0 0.0
      %2941 = vmatpush2.msra.mxu0 0.0
      %2942 = vmatprep.subr.mxu0 0.0
      %2943 = vmatpush2.msra.mxu0 0.0
      %2944 = vmatprep.subr.mxu0 0.0
      %2945 = vmatpush2.msra.mxu0 0.0
      %2946 = vmatprep.subr.mxu0 0.0
      %2947 = vmatpush2.msra.mxu0 0.0
      %2948 = vmatprep.subr.mxu0 0.0
      %2949 = vmatpush2.msra.mxu0 0.0
      %2950 = vmatprep.subr.mxu0 0.0
      %2951 = vmatpush2.msra.mxu0 0.0
      %2952 = vmatprep.subr.mxu0 0.0
      %2953 = vmatpush2.msra.mxu0 0.0
      %2954 = vmatprep.subr.mxu0 0.0
      %2955 = vmatpush2.msra.mxu0 0.0
      %2956 = vmatprep.mubr.f32.mxu0 0.0
      %2957 = vmatmul.mubr.f32.gmra.mxu0 %v2890
      %v2958 = vpop.f32.mrf.mxu0
      %v2959 = vadd.f32 0.0, %v2958
      %v2960 = vpop.f32.mrf.mxu0
      %2961 = vdwg.mxu0
      %2964 = vset.pattern.permute.xlu0 0
      %2965 = vperm.xlu0 %2964, %v2424
      %v2966 = vpop.permute.xlu0 %2965
      %2967 = vset.pattern.permute.xlu0 0
      %2968 = vperm.xlu0 %2967, %v2425
      %v2969 = vpop.permute.xlu0 %2968
      %v2970 = vlaneseq
      %v2971 = vshrl.u32 %v2970, 7
      %v2972 = vsub.s32 %v2040, %v2971
      %v2973 = vrot.slane %v2966, %v2972
      %v2974 = vlaneseq
      %v2975 = vshrl.u32 %v2974, 7
      %v2976 = vsub.s32 %v2045, %v2975
      %v2977 = vrot.slane %v2969, %v2976
      %v2978 = vsel %vm2050, %v2977, %v2973
      %v2979 = vsel %vm2130, %v2978, 0
      %2981 = vmatprep.subr.mxu0 0.0
      %2982 = vmatpush1.msra.mxu0 0.0
      %2983 = vmatprep.subr.mxu0 0.0
      %2984 = vmatpush1.msra.mxu0 0.0
      %2985 = vmatprep.subr.mxu0 0.0
      %2986 = vmatpush1.msra.mxu0 0.0
      %2987 = vmatprep.subr.mxu0 0.0
      %2988 = vmatpush1.msra.mxu0 0.0
      %2989 = vmatprep.subr.mxu0 0.0
      %2990 = vmatpush1.msra.mxu0 0.0
      %2991 = vmatprep.subr.mxu0 0.0
      %2992 = vmatpush1.msra.mxu0 0.0
      %2993 = vmatprep.subr.mxu0 0.0
      %2994 = vmatpush1.msra.mxu0 0.0
      %2995 = vmatprep.subr.mxu0 0.0
      %2996 = vmatpush1.msra.mxu0 0.0
      %2997 = vmatprep.subr.mxu0 0.0
      %2998 = vmatpush1.msra.mxu0 0.0
      %2999 = vmatprep.subr.mxu0 0.0
      %3000 = vmatpush1.msra.mxu0 0.0
      %3001 = vmatprep.subr.mxu0 0.0
      %3002 = vmatpush1.msra.mxu0 0.0
      %3003 = vmatprep.subr.mxu0 0.0
      %3004 = vmatpush1.msra.mxu0 0.0
      %3005 = vmatprep.subr.mxu0 0.0
      %3006 = vmatpush1.msra.mxu0 0.0
      %3007 = vmatprep.subr.mxu0 0.0
      %3008 = vmatpush1.msra.mxu0 0.0
      %3009 = vmatprep.subr.mxu0 0.0
      %3010 = vmatpush1.msra.mxu0 %v656
      %3011 = vmatprep.subr.mxu0 0.0
      %3012 = vmatpush1.msra.mxu0 %v655
      %3013 = vmatprep.subr.mxu0 0.0
      %3014 = vmatpush2.msra.mxu0 0.0
      %3015 = vmatprep.subr.mxu0 0.0
      %3016 = vmatpush2.msra.mxu0 0.0
      %3017 = vmatprep.subr.mxu0 0.0
      %3018 = vmatpush2.msra.mxu0 0.0
      %3019 = vmatprep.subr.mxu0 0.0
      %3020 = vmatpush2.msra.mxu0 0.0
      %3021 = vmatprep.subr.mxu0 0.0
      %3022 = vmatpush2.msra.mxu0 0.0
      %3023 = vmatprep.subr.mxu0 0.0
      %3024 = vmatpush2.msra.mxu0 0.0
      %3025 = vmatprep.subr.mxu0 0.0
      %3026 = vmatpush2.msra.mxu0 0.0
      %3027 = vmatprep.subr.mxu0 0.0
      %3028 = vmatpush2.msra.mxu0 0.0
      %3029 = vmatprep.subr.mxu0 0.0
      %3030 = vmatpush2.msra.mxu0 0.0
      %3031 = vmatprep.subr.mxu0 0.0
      %3032 = vmatpush2.msra.mxu0 0.0
      %3033 = vmatprep.subr.mxu0 0.0
      %3034 = vmatpush2.msra.mxu0 0.0
      %3035 = vmatprep.subr.mxu0 0.0
      %3036 = vmatpush2.msra.mxu0 0.0
      %3037 = vmatprep.subr.mxu0 0.0
      %3038 = vmatpush2.msra.mxu0 0.0
      %3039 = vmatprep.subr.mxu0 0.0
      %3040 = vmatpush2.msra.mxu0 0.0
      %3041 = vmatprep.subr.mxu0 0.0
      %3042 = vmatpush2.msra.mxu0 0.0
      %3043 = vmatprep.subr.mxu0 0.0
      %3044 = vmatpush2.msra.mxu0 0.0
      %3045 = vmatprep.mubr.f32.mxu0 0.0
      %3046 = vmatmul.mubr.f32.gmra.mxu0 %v2979
      %v3047 = vpop.f32.mrf.mxu0
      %v3048 = vadd.f32 0.0, %v3047
      %v3049 = vpop.f32.mrf.mxu0
      %3050 = vdwg.mxu0
      %3053 = vset.pattern.permute.xlu0 0
      %3054 = vperm.xlu0 %3053, %v2426
      %v3055 = vpop.permute.xlu0 %3054
      %3056 = vset.pattern.permute.xlu0 0
      %3057 = vperm.xlu0 %3056, %v2427
      %v3058 = vpop.permute.xlu0 %3057
      %v3059 = vlaneseq
      %v3060 = vshrl.u32 %v3059, 7
      %v3061 = vsub.s32 %v2040, %v3060
      %v3062 = vrot.slane %v3055, %v3061
      %v3063 = vlaneseq
      %v3064 = vshrl.u32 %v3063, 7
      %v3065 = vsub.s32 %v2045, %v3064
      %v3066 = vrot.slane %v3058, %v3065
      %v3067 = vsel %vm2050, %v3066, %v3062
      %v3068 = vsel %vm2130, %v3067, 0
      %3070 = vmatprep.subr.mxu0 0.0
      %3071 = vmatpush1.msra.mxu0 0.0
      %3072 = vmatprep.subr.mxu0 0.0
      %3073 = vmatpush1.msra.mxu0 0.0
      %3074 = vmatprep.subr.mxu0 0.0
      %3075 = vmatpush1.msra.mxu0 0.0
      %3076 = vmatprep.subr.mxu0 0.0
      %3077 = vmatpush1.msra.mxu0 0.0
      %3078 = vmatprep.subr.mxu0 0.0
      %3079 = vmatpush1.msra.mxu0 0.0
      %3080 = vmatprep.subr.mxu0 0.0
      %3081 = vmatpush1.msra.mxu0 0.0
      %3082 = vmatprep.subr.mxu0 0.0
      %3083 = vmatpush1.msra.mxu0 0.0
      %3084 = vmatprep.subr.mxu0 0.0
      %3085 = vmatpush1.msra.mxu0 0.0
      %3086 = vmatprep.subr.mxu0 0.0
      %3087 = vmatpush1.msra.mxu0 0.0
      %3088 = vmatprep.subr.mxu0 0.0
      %3089 = vmatpush1.msra.mxu0 0.0
      %3090 = vmatprep.subr.mxu0 0.0
      %3091 = vmatpush1.msra.mxu0 0.0
      %3092 = vmatprep.subr.mxu0 0.0
      %3093 = vmatpush1.msra.mxu0 0.0
      %3094 = vmatprep.subr.mxu0 0.0
      %3095 = vmatpush1.msra.mxu0 0.0
      %3096 = vmatprep.subr.mxu0 0.0
      %3097 = vmatpush1.msra.mxu0 0.0
      %3098 = vmatprep.subr.mxu0 0.0
      %3099 = vmatpush1.msra.mxu0 %v658
      %3100 = vmatprep.subr.mxu0 0.0
      %3101 = vmatpush1.msra.mxu0 %v657
      %3102 = vmatprep.subr.mxu0 0.0
      %3103 = vmatpush2.msra.mxu0 0.0
      %3104 = vmatprep.subr.mxu0 0.0
      %3105 = vmatpush2.msra.mxu0 0.0
      %3106 = vmatprep.subr.mxu0 0.0
      %3107 = vmatpush2.msra.mxu0 0.0
      %3108 = vmatprep.subr.mxu0 0.0
      %3109 = vmatpush2.msra.mxu0 0.0
      %3110 = vmatprep.subr.mxu0 0.0
      %3111 = vmatpush2.msra.mxu0 0.0
      %3112 = vmatprep.subr.mxu0 0.0
      %3113 = vmatpush2.msra.mxu0 0.0
      %3114 = vmatprep.subr.mxu0 0.0
      %3115 = vmatpush2.msra.mxu0 0.0
      %3116 = vmatprep.subr.mxu0 0.0
      %3117 = vmatpush2.msra.mxu0 0.0
      %3118 = vmatprep.subr.mxu0 0.0
      %3119 = vmatpush2.msra.mxu0 0.0
      %3120 = vmatprep.subr.mxu0 0.0
      %3121 = vmatpush2.msra.mxu0 0.0
      %3122 = vmatprep.subr.mxu0 0.0
      %3123 = vmatpush2.msra.mxu0 0.0
      %3124 = vmatprep.subr.mxu0 0.0
      %3125 = vmatpush2.msra.mxu0 0.0
      %3126 = vmatprep.subr.mxu0 0.0
      %3127 = vmatpush2.msra.mxu0 0.0
      %3128 = vmatprep.subr.mxu0 0.0
      %3129 = vmatpush2.msra.mxu0 0.0
      %3130 = vmatprep.subr.mxu0 0.0
      %3131 = vmatpush2.msra.mxu0 0.0
      %3132 = vmatprep.subr.mxu0 0.0
      %3133 = vmatpush2.msra.mxu0 0.0
      %3134 = vmatprep.mubr.f32.mxu0 0.0
      %3135 = vmatmul.mubr.f32.gmra.mxu0 %v3068
      %v3136 = vpop.f32.mrf.mxu0
      %v3137 = vadd.f32 0.0, %v3136
      %v3138 = vpop.f32.mrf.mxu0
      %3139 = vdwg.mxu0
      %v3140 = vld [vmem:[%s9] sm:$0xff]
      %v3141 = vld [vmem:[%s9 + $0x8] sm:$0xff]
      %v3142 = vld [vmem:[%s9 + $0x10] sm:$0xff]
      %v3143 = vld [vmem:[%s9 + $0x18] sm:$0xff]
      %v3144 = vld [vmem:[%s9 + $0x20] sm:$0xff]
      %v3145 = vld [vmem:[%s9 + $0x28] sm:$0xff]
      %v3146 = vld [vmem:[%s9 + $0x30] sm:$0xff]
      %v3147 = vld [vmem:[%s9 + $0x38] sm:$0xff]
      %v3148 = vld [vmem:[%s9 + $0x40] sm:$0xff]
      %v3149 = vld [vmem:[%s9 + $0x48] sm:$0xff]
      %v3150 = vld [vmem:[%s9 + $0x50] sm:$0xff]
      %v3151 = vld [vmem:[%s9 + $0x58] sm:$0xff]
      %v3152 = vld [vmem:[%s9 + $0x60] sm:$0xff]
      %v3153 = vld [vmem:[%s9 + $0x68] sm:$0xff]
      %v3154 = vld [vmem:[%s9 + $0x70] sm:$0xff]
      %v3155 = vld [vmem:[%s9 + $0x78] sm:$0xff]
      %v3156 = vld [vmem:[%s9 + $0x80] sm:$0xff]
      %v3157 = vld [vmem:[%s9 + $0x88] sm:$0xff]
      %v3158 = vld [vmem:[%s9 + $0x90] sm:$0xff]
      %v3159 = vld [vmem:[%s9 + $0x98] sm:$0xff]
      %v3160 = vld [vmem:[%s9 + $0xa0] sm:$0xff]
      %v3161 = vld [vmem:[%s9 + $0xa8] sm:$0xff]
      %v3162 = vld [vmem:[%s9 + $0xb0] sm:$0xff]
      %v3163 = vld [vmem:[%s9 + $0xb8] sm:$0xff]
      %v3164 = vld [vmem:[%s9 + $0xc0] sm:$0xff]
      %v3165 = vld [vmem:[%s9 + $0xc8] sm:$0xff]
      %v3166 = vld [vmem:[%s9 + $0xd0] sm:$0xff]
      %v3167 = vld [vmem:[%s9 + $0xd8] sm:$0xff]
      %v3168 = vld [vmem:[%s9 + $0xe0] sm:$0xff]
      %v3169 = vld [vmem:[%s9 + $0xe8] sm:$0xff]
      %v3170 = vld [vmem:[%s9 + $0xf0] sm:$0xff]
      %v3171 = vld [vmem:[%s9 + $0xf8] sm:$0xff]
      %v3172 = vld [vmem:[%s9 + $0x100] sm:$0xff]
      %v3173 = vld [vmem:[%s9 + $0x108] sm:$0xff]
      %v3174 = vld [vmem:[%s9 + $0x110] sm:$0xff]
      %v3175 = vld [vmem:[%s9 + $0x118] sm:$0xff]
      %v3176 = vld [vmem:[%s9 + $0x120] sm:$0xff]
      %v3177 = vld [vmem:[%s9 + $0x128] sm:$0xff]
      %v3178 = vld [vmem:[%s9 + $0x130] sm:$0xff]
      %v3179 = vld [vmem:[%s9 + $0x138] sm:$0xff]
      %v3180 = vld [vmem:[%s9 + $0x140] sm:$0xff]
      %v3181 = vld [vmem:[%s9 + $0x148] sm:$0xff]
      %v3182 = vld [vmem:[%s9 + $0x150] sm:$0xff]
      %v3183 = vld [vmem:[%s9 + $0x158] sm:$0xff]
      %v3184 = vld [vmem:[%s9 + $0x160] sm:$0xff]
      %v3185 = vld [vmem:[%s9 + $0x168] sm:$0xff]
      %v3186 = vld [vmem:[%s9 + $0x170] sm:$0xff]
      %v3187 = vld [vmem:[%s9 + $0x178] sm:$0xff]
      %v3188 = vld [vmem:[%s9 + $0x180] sm:$0xff]
      %v3189 = vld [vmem:[%s9 + $0x188] sm:$0xff]
      %v3190 = vld [vmem:[%s9 + $0x190] sm:$0xff]
      %v3191 = vld [vmem:[%s9 + $0x198] sm:$0xff]
      %v3192 = vld [vmem:[%s9 + $0x1a0] sm:$0xff]
      %v3193 = vld [vmem:[%s9 + $0x1a8] sm:$0xff]
      %v3194 = vld [vmem:[%s9 + $0x1b0] sm:$0xff]
      %v3195 = vld [vmem:[%s9 + $0x1b8] sm:$0xff]
      %v3196 = vld [vmem:[%s9 + $0x1c0] sm:$0xff]
      %v3197 = vld [vmem:[%s9 + $0x1c8] sm:$0xff]
      %v3198 = vld [vmem:[%s9 + $0x1d0] sm:$0xff]
      %v3199 = vld [vmem:[%s9 + $0x1d8] sm:$0xff]
      %v3200 = vld [vmem:[%s9 + $0x1e0] sm:$0xff]
      %v3201 = vld [vmem:[%s9 + $0x1e8] sm:$0xff]
      %v3202 = vld [vmem:[%s9 + $0x1f0] sm:$0xff]
      %v3203 = vld [vmem:[%s9 + $0x1f8] sm:$0xff]
      %v3204 = vld [vmem:[%s10] sm:$0x1]
      %v3206 = vlaneseq
      %v3207 = vshrl.u32 %v3206, 7
      %v3208 = vsub.s32 0, %v3207
      %v3209 = vrot.slane %v3204, %v3208
      %3211 = vmatprep.subr.mxu0 0.0
      %3212 = vmatpush1.msra.mxu0 %v3155
      %3213 = vmatprep.subr.mxu0 0.0
      %3214 = vmatpush1.msra.mxu0 %v3154
      %3215 = vmatprep.subr.mxu0 0.0
      %3216 = vmatpush1.msra.mxu0 %v3153
      %3217 = vmatprep.subr.mxu0 0.0
      %3218 = vmatpush1.msra.mxu0 %v3152
      %3219 = vmatprep.subr.mxu0 0.0
      %3220 = vmatpush1.msra.mxu0 %v3151
      %3221 = vmatprep.subr.mxu0 0.0
      %3222 = vmatpush1.msra.mxu0 %v3150
      %3223 = vmatprep.subr.mxu0 0.0
      %3224 = vmatpush1.msra.mxu0 %v3149
      %3225 = vmatprep.subr.mxu0 0.0
      %3226 = vmatpush1.msra.mxu0 %v3148
      %3227 = vmatprep.subr.mxu0 0.0
      %3228 = vmatpush1.msra.mxu0 %v3147
      %3229 = vmatprep.subr.mxu0 0.0
      %3230 = vmatpush1.msra.mxu0 %v3146
      %3231 = vmatprep.subr.mxu0 0.0
      %3232 = vmatpush1.msra.mxu0 %v3145
      %3233 = vmatprep.subr.mxu0 0.0
      %3234 = vmatpush1.msra.mxu0 %v3144
      %3235 = vmatprep.subr.mxu0 0.0
      %3236 = vmatpush1.msra.mxu0 %v3143
      %3237 = vmatprep.subr.mxu0 0.0
      %3238 = vmatpush1.msra.mxu0 %v3142
      %3239 = vmatprep.subr.mxu0 0.0
      %3240 = vmatpush1.msra.mxu0 %v3141
      %3241 = vmatprep.subr.mxu0 0.0
      %3242 = vmatpush1.msra.mxu0 %v3140
      %3243 = vmatprep.subr.mxu0 0.0
      %3244 = vmatpush2.msra.mxu0 %v3171
      %3245 = vmatprep.subr.mxu0 0.0
      %3246 = vmatpush2.msra.mxu0 %v3170
      %3247 = vmatprep.subr.mxu0 0.0
      %3248 = vmatpush2.msra.mxu0 %v3169
      %3249 = vmatprep.subr.mxu0 0.0
      %3250 = vmatpush2.msra.mxu0 %v3168
      %3251 = vmatprep.subr.mxu0 0.0
      %3252 = vmatpush2.msra.mxu0 %v3167
      %3253 = vmatprep.subr.mxu0 0.0
      %3254 = vmatpush2.msra.mxu0 %v3166
      %3255 = vmatprep.subr.mxu0 0.0
      %3256 = vmatpush2.msra.mxu0 %v3165
      %3257 = vmatprep.subr.mxu0 0.0
      %3258 = vmatpush2.msra.mxu0 %v3164
      %3259 = vmatprep.subr.mxu0 0.0
      %3260 = vmatpush2.msra.mxu0 %v3163
      %3261 = vmatprep.subr.mxu0 0.0
      %3262 = vmatpush2.msra.mxu0 %v3162
      %3263 = vmatprep.subr.mxu0 0.0
      %3264 = vmatpush2.msra.mxu0 %v3161
      %3265 = vmatprep.subr.mxu0 0.0
      %3266 = vmatpush2.msra.mxu0 %v3160
      %3267 = vmatprep.subr.mxu0 0.0
      %3268 = vmatpush2.msra.mxu0 %v3159
      %3269 = vmatprep.subr.mxu0 0.0
      %3270 = vmatpush2.msra.mxu0 %v3158
      %3271 = vmatprep.subr.mxu0 0.0
      %3272 = vmatpush2.msra.mxu0 %v3157
      %3273 = vmatprep.subr.mxu0 0.0
      %3274 = vmatpush2.msra.mxu0 %v3156
      %3275 = vmatprep.mubr.f32.mxu0 %v636
      %3276 = vmatmul.mubr.f32.gmra.mxu0 %v635
      %v3277 = vpop.f32.mrf.mxu0
      %v3278 = vadd.f32 %v3209, %v3277
      %v3279 = vpop.f32.mrf.mxu0
      %3280 = vdwg.mxu0
      %3281 = vmatprep.subr.mxu0 0.0
      %3282 = vmatpush1.msra.mxu0 %v3187
      %3283 = vmatprep.subr.mxu0 0.0
      %3284 = vmatpush1.msra.mxu0 %v3186
      %3285 = vmatprep.subr.mxu0 0.0
      %3286 = vmatpush1.msra.mxu0 %v3185
      %3287 = vmatprep.subr.mxu0 0.0
      %3288 = vmatpush1.msra.mxu0 %v3184
      %3289 = vmatprep.subr.mxu0 0.0
      %3290 = vmatpush1.msra.mxu0 %v3183
      %3291 = vmatprep.subr.mxu0 0.0
      %3292 = vmatpush1.msra.mxu0 %v3182
      %3293 = vmatprep.subr.mxu0 0.0
      %3294 = vmatpush1.msra.mxu0 %v3181
      %3295 = vmatprep.subr.mxu0 0.0
      %3296 = vmatpush1.msra.mxu0 %v3180
      %3297 = vmatprep.subr.mxu0 0.0
      %3298 = vmatpush1.msra.mxu0 %v3179
      %3299 = vmatprep.subr.mxu0 0.0
      %3300 = vmatpush1.msra.mxu0 %v3178
      %3301 = vmatprep.subr.mxu0 0.0
      %3302 = vmatpush1.msra.mxu0 %v3177
      %3303 = vmatprep.subr.mxu0 0.0
      %3304 = vmatpush1.msra.mxu0 %v3176
      %3305 = vmatprep.subr.mxu0 0.0
      %3306 = vmatpush1.msra.mxu0 %v3175
      %3307 = vmatprep.subr.mxu0 0.0
      %3308 = vmatpush1.msra.mxu0 %v3174
      %3309 = vmatprep.subr.mxu0 0.0
      %3310 = vmatpush1.msra.mxu0 %v3173
      %3311 = vmatprep.subr.mxu0 0.0
      %3312 = vmatpush1.msra.mxu0 %v3172
      %3313 = vmatprep.subr.mxu0 0.0
      %3314 = vmatpush2.msra.mxu0 %v3203
      %3315 = vmatprep.subr.mxu0 0.0
      %3316 = vmatpush2.msra.mxu0 %v3202
      %3317 = vmatprep.subr.mxu0 0.0
      %3318 = vmatpush2.msra.mxu0 %v3201
      %3319 = vmatprep.subr.mxu0 0.0
      %3320 = vmatpush2.msra.mxu0 %v3200
      %3321 = vmatprep.subr.mxu0 0.0
      %3322 = vmatpush2.msra.mxu0 %v3199
      %3323 = vmatprep.subr.mxu0 0.0
      %3324 = vmatpush2.msra.mxu0 %v3198
      %3325 = vmatprep.subr.mxu0 0.0
      %3326 = vmatpush2.msra.mxu0 %v3197
      %3327 = vmatprep.subr.mxu0 0.0
      %3328 = vmatpush2.msra.mxu0 %v3196
      %3329 = vmatprep.subr.mxu0 0.0
      %3330 = vmatpush2.msra.mxu0 %v3195
      %3331 = vmatprep.subr.mxu0 0.0
      %3332 = vmatpush2.msra.mxu0 %v3194
      %3333 = vmatprep.subr.mxu0 0.0
      %3334 = vmatpush2.msra.mxu0 %v3193
      %3335 = vmatprep.subr.mxu0 0.0
      %3336 = vmatpush2.msra.mxu0 %v3192
      %3337 = vmatprep.subr.mxu0 0.0
      %3338 = vmatpush2.msra.mxu0 %v3191
      %3339 = vmatprep.subr.mxu0 0.0
      %3340 = vmatpush2.msra.mxu0 %v3190
      %3341 = vmatprep.subr.mxu0 0.0
      %3342 = vmatpush2.msra.mxu0 %v3189
      %3343 = vmatprep.subr.mxu0 0.0
      %3344 = vmatpush2.msra.mxu0 %v3188
      %3345 = vmatprep.mubr.f32.mxu0 %v638
      %3346 = vmatmul.mubr.f32.gmra.mxu0 %v637
      %v3347 = vpop.f32.mrf.mxu0
      %v3348 = vadd.f32 %v3278, %v3347
      %v3349 = vpop.f32.mrf.mxu0
      %3350 = vdwg.mxu0
      %v3351 = vxor.u32 %v3348, 2147483648
      %v3352 = vmul.f32 %v3351, 1.442695
      %v3353 = vpow.pop %v3352
      %v3354 = vadd.f32 %v3353, 1.0
      %v3355 = vrcp.pop %v3354
      %v3356 = vmul.f32 1.0, %v3355
      %v3365 = vrot.slane %v2603, 7
      %v3366 = vsel %vm2115, %v3365, %v2514
      %v3367 = vrot.slane %v2692, 6
      %v3368 = vsel %vm2117, %v3367, %v3366
      %v3369 = vrot.slane %v2781, 5
      %v3370 = vsel %vm2119, %v3369, %v3368
      %v3371 = vrot.slane %v2870, 4
      %v3372 = vsel %vm2121, %v3371, %v3370
      %v3373 = vrot.slane %v2959, 3
      %v3374 = vsel %vm2123, %v3373, %v3372
      %v3375 = vrot.slane %v3048, 2
      %v3376 = vsel %vm2125, %v3375, %v3374
      %v3377 = vrot.slane %v3137, 1
      %v3378 = vsel %vm2127, %v3377, %v3376
      %v3380 = vmul.f32 %v3356, %v3378
      %v3381 = vld [vmem:[%s598] sm:$0xff]
      %v3382 = vld [vmem:[%s598 + $0x8] sm:$0xff]
      %v3383 = vld [vmem:[%s598 + $0x10] sm:$0xff]
      %v3384 = vld [vmem:[%s598 + $0x18] sm:$0xff]
      %v3385 = vld [vmem:[%s11] sm:$0xff]
      %v3386 = vld [vmem:[%s11 + $0x8] sm:$0xff]
      %v3387 = vld [vmem:[%s11 + $0x10] sm:$0xff]
      %v3388 = vld [vmem:[%s11 + $0x18] sm:$0xff]
      %v3389 = vld [vmem:[%s11 + $0x20] sm:$0xff]
      %v3390 = vld [vmem:[%s11 + $0x28] sm:$0xff]
      %v3391 = vld [vmem:[%s11 + $0x30] sm:$0xff]
      %v3392 = vld [vmem:[%s11 + $0x38] sm:$0xff]
      %v3393 = vld [vmem:[%s11 + $0x40] sm:$0xff]
      %v3394 = vld [vmem:[%s11 + $0x48] sm:$0xff]
      %v3395 = vld [vmem:[%s11 + $0x50] sm:$0xff]
      %v3396 = vld [vmem:[%s11 + $0x58] sm:$0xff]
      %v3397 = vld [vmem:[%s11 + $0x60] sm:$0xff]
      %v3398 = vld [vmem:[%s11 + $0x68] sm:$0xff]
      %v3399 = vld [vmem:[%s11 + $0x70] sm:$0xff]
      %v3400 = vld [vmem:[%s11 + $0x78] sm:$0xff]
      %v3401 = vld [vmem:[%s11 + $0x80] sm:$0xff]
      %v3402 = vld [vmem:[%s11 + $0x88] sm:$0xff]
      %v3403 = vld [vmem:[%s11 + $0x90] sm:$0xff]
      %v3404 = vld [vmem:[%s11 + $0x98] sm:$0xff]
      %v3405 = vld [vmem:[%s11 + $0xa0] sm:$0xff]
      %v3406 = vld [vmem:[%s11 + $0xa8] sm:$0xff]
      %v3407 = vld [vmem:[%s11 + $0xb0] sm:$0xff]
      %v3408 = vld [vmem:[%s11 + $0xb8] sm:$0xff]
      %v3409 = vld [vmem:[%s11 + $0xc0] sm:$0xff]
      %v3410 = vld [vmem:[%s11 + $0xc8] sm:$0xff]
      %v3411 = vld [vmem:[%s11 + $0xd0] sm:$0xff]
      %v3412 = vld [vmem:[%s11 + $0xd8] sm:$0xff]
      %v3413 = vld [vmem:[%s11 + $0xe0] sm:$0xff]
      %v3414 = vld [vmem:[%s11 + $0xe8] sm:$0xff]
      %v3415 = vld [vmem:[%s11 + $0xf0] sm:$0xff]
      %v3416 = vld [vmem:[%s11 + $0xf8] sm:$0xff]
      %v3417 = vld [vmem:[%s11 + $0x100] sm:$0xff]
      %v3418 = vld [vmem:[%s11 + $0x108] sm:$0xff]
      %v3419 = vld [vmem:[%s11 + $0x110] sm:$0xff]
      %v3420 = vld [vmem:[%s11 + $0x118] sm:$0xff]
      %v3421 = vld [vmem:[%s11 + $0x120] sm:$0xff]
      %v3422 = vld [vmem:[%s11 + $0x128] sm:$0xff]
      %v3423 = vld [vmem:[%s11 + $0x130] sm:$0xff]
      %v3424 = vld [vmem:[%s11 + $0x138] sm:$0xff]
      %v3425 = vld [vmem:[%s11 + $0x140] sm:$0xff]
      %v3426 = vld [vmem:[%s11 + $0x148] sm:$0xff]
      %v3427 = vld [vmem:[%s11 + $0x150] sm:$0xff]
      %v3428 = vld [vmem:[%s11 + $0x158] sm:$0xff]
      %v3429 = vld [vmem:[%s11 + $0x160] sm:$0xff]
      %v3430 = vld [vmem:[%s11 + $0x168] sm:$0xff]
      %v3431 = vld [vmem:[%s11 + $0x170] sm:$0xff]
      %v3432 = vld [vmem:[%s11 + $0x178] sm:$0xff]
      %v3433 = vld [vmem:[%s11 + $0x180] sm:$0xff]
      %v3434 = vld [vmem:[%s11 + $0x188] sm:$0xff]
      %v3435 = vld [vmem:[%s11 + $0x190] sm:$0xff]
      %v3436 = vld [vmem:[%s11 + $0x198] sm:$0xff]
      %v3437 = vld [vmem:[%s11 + $0x1a0] sm:$0xff]
      %v3438 = vld [vmem:[%s11 + $0x1a8] sm:$0xff]
      %v3439 = vld [vmem:[%s11 + $0x1b0] sm:$0xff]
      %v3440 = vld [vmem:[%s11 + $0x1b8] sm:$0xff]
      %v3441 = vld [vmem:[%s11 + $0x1c0] sm:$0xff]
      %v3442 = vld [vmem:[%s11 + $0x1c8] sm:$0xff]
      %v3443 = vld [vmem:[%s11 + $0x1d0] sm:$0xff]
      %v3444 = vld [vmem:[%s11 + $0x1d8] sm:$0xff]
      %v3445 = vld [vmem:[%s11 + $0x1e0] sm:$0xff]
      %v3446 = vld [vmem:[%s11 + $0x1e8] sm:$0xff]
      %v3447 = vld [vmem:[%s11 + $0x1f0] sm:$0xff]
      %v3448 = vld [vmem:[%s11 + $0x1f8] sm:$0xff]
      %v3449 = vld [vmem:[%s11 + $0x200] sm:$0xff]
      %v3450 = vld [vmem:[%s11 + $0x208] sm:$0xff]
      %v3451 = vld [vmem:[%s11 + $0x210] sm:$0xff]
      %v3452 = vld [vmem:[%s11 + $0x218] sm:$0xff]
      %v3453 = vld [vmem:[%s11 + $0x220] sm:$0xff]
      %v3454 = vld [vmem:[%s11 + $0x228] sm:$0xff]
      %v3455 = vld [vmem:[%s11 + $0x230] sm:$0xff]
      %v3456 = vld [vmem:[%s11 + $0x238] sm:$0xff]
      %v3457 = vld [vmem:[%s11 + $0x240] sm:$0xff]
      %v3458 = vld [vmem:[%s11 + $0x248] sm:$0xff]
      %v3459 = vld [vmem:[%s11 + $0x250] sm:$0xff]
      %v3460 = vld [vmem:[%s11 + $0x258] sm:$0xff]
      %v3461 = vld [vmem:[%s11 + $0x260] sm:$0xff]
      %v3462 = vld [vmem:[%s11 + $0x268] sm:$0xff]
      %v3463 = vld [vmem:[%s11 + $0x270] sm:$0xff]
      %v3464 = vld [vmem:[%s11 + $0x278] sm:$0xff]
      %v3465 = vld [vmem:[%s11 + $0x280] sm:$0xff]
      %v3466 = vld [vmem:[%s11 + $0x288] sm:$0xff]
      %v3467 = vld [vmem:[%s11 + $0x290] sm:$0xff]
      %v3468 = vld [vmem:[%s11 + $0x298] sm:$0xff]
      %v3469 = vld [vmem:[%s11 + $0x2a0] sm:$0xff]
      %v3470 = vld [vmem:[%s11 + $0x2a8] sm:$0xff]
      %v3471 = vld [vmem:[%s11 + $0x2b0] sm:$0xff]
      %v3472 = vld [vmem:[%s11 + $0x2b8] sm:$0xff]
      %v3473 = vld [vmem:[%s11 + $0x2c0] sm:$0xff]
      %v3474 = vld [vmem:[%s11 + $0x2c8] sm:$0xff]
      %v3475 = vld [vmem:[%s11 + $0x2d0] sm:$0xff]
      %v3476 = vld [vmem:[%s11 + $0x2d8] sm:$0xff]
      %v3477 = vld [vmem:[%s11 + $0x2e0] sm:$0xff]
      %v3478 = vld [vmem:[%s11 + $0x2e8] sm:$0xff]
      %v3479 = vld [vmem:[%s11 + $0x2f0] sm:$0xff]
      %v3480 = vld [vmem:[%s11 + $0x2f8] sm:$0xff]
      %v3481 = vld [vmem:[%s11 + $0x300] sm:$0xff]
      %v3482 = vld [vmem:[%s11 + $0x308] sm:$0xff]
      %v3483 = vld [vmem:[%s11 + $0x310] sm:$0xff]
      %v3484 = vld [vmem:[%s11 + $0x318] sm:$0xff]
      %v3485 = vld [vmem:[%s11 + $0x320] sm:$0xff]
      %v3486 = vld [vmem:[%s11 + $0x328] sm:$0xff]
      %v3487 = vld [vmem:[%s11 + $0x330] sm:$0xff]
      %v3488 = vld [vmem:[%s11 + $0x338] sm:$0xff]
      %v3489 = vld [vmem:[%s11 + $0x340] sm:$0xff]
      %v3490 = vld [vmem:[%s11 + $0x348] sm:$0xff]
      %v3491 = vld [vmem:[%s11 + $0x350] sm:$0xff]
      %v3492 = vld [vmem:[%s11 + $0x358] sm:$0xff]
      %v3493 = vld [vmem:[%s11 + $0x360] sm:$0xff]
      %v3494 = vld [vmem:[%s11 + $0x368] sm:$0xff]
      %v3495 = vld [vmem:[%s11 + $0x370] sm:$0xff]
      %v3496 = vld [vmem:[%s11 + $0x378] sm:$0xff]
      %v3497 = vld [vmem:[%s11 + $0x380] sm:$0xff]
      %v3498 = vld [vmem:[%s11 + $0x388] sm:$0xff]
      %v3499 = vld [vmem:[%s11 + $0x390] sm:$0xff]
      %v3500 = vld [vmem:[%s11 + $0x398] sm:$0xff]
      %v3501 = vld [vmem:[%s11 + $0x3a0] sm:$0xff]
      %v3502 = vld [vmem:[%s11 + $0x3a8] sm:$0xff]
      %v3503 = vld [vmem:[%s11 + $0x3b0] sm:$0xff]
      %v3504 = vld [vmem:[%s11 + $0x3b8] sm:$0xff]
      %v3505 = vld [vmem:[%s11 + $0x3c0] sm:$0xff]
      %v3506 = vld [vmem:[%s11 + $0x3c8] sm:$0xff]
      %v3507 = vld [vmem:[%s11 + $0x3d0] sm:$0xff]
      %v3508 = vld [vmem:[%s11 + $0x3d8] sm:$0xff]
      %v3509 = vld [vmem:[%s11 + $0x3e0] sm:$0xff]
      %v3510 = vld [vmem:[%s11 + $0x3e8] sm:$0xff]
      %v3511 = vld [vmem:[%s11 + $0x3f0] sm:$0xff]
      %v3512 = vld [vmem:[%s11 + $0x3f8] sm:$0xff]
      %v3513 = vld [vmem:[%s11 + $0x400] sm:$0xff]
      %v3514 = vld [vmem:[%s11 + $0x408] sm:$0xff]
      %v3515 = vld [vmem:[%s11 + $0x410] sm:$0xff]
      %v3516 = vld [vmem:[%s11 + $0x418] sm:$0xff]
      %v3517 = vld [vmem:[%s11 + $0x420] sm:$0xff]
      %v3518 = vld [vmem:[%s11 + $0x428] sm:$0xff]
      %v3519 = vld [vmem:[%s11 + $0x430] sm:$0xff]
      %v3520 = vld [vmem:[%s11 + $0x438] sm:$0xff]
      %v3521 = vld [vmem:[%s11 + $0x440] sm:$0xff]
      %v3522 = vld [vmem:[%s11 + $0x448] sm:$0xff]
      %v3523 = vld [vmem:[%s11 + $0x450] sm:$0xff]
      %v3524 = vld [vmem:[%s11 + $0x458] sm:$0xff]
      %v3525 = vld [vmem:[%s11 + $0x460] sm:$0xff]
      %v3526 = vld [vmem:[%s11 + $0x468] sm:$0xff]
      %v3527 = vld [vmem:[%s11 + $0x470] sm:$0xff]
      %v3528 = vld [vmem:[%s11 + $0x478] sm:$0xff]
      %v3529 = vld [vmem:[%s11 + $0x480] sm:$0xff]
      %v3530 = vld [vmem:[%s11 + $0x488] sm:$0xff]
      %v3531 = vld [vmem:[%s11 + $0x490] sm:$0xff]
      %v3532 = vld [vmem:[%s11 + $0x498] sm:$0xff]
      %v3533 = vld [vmem:[%s11 + $0x4a0] sm:$0xff]
      %v3534 = vld [vmem:[%s11 + $0x4a8] sm:$0xff]
      %v3535 = vld [vmem:[%s11 + $0x4b0] sm:$0xff]
      %v3536 = vld [vmem:[%s11 + $0x4b8] sm:$0xff]
      %v3537 = vld [vmem:[%s11 + $0x4c0] sm:$0xff]
      %v3538 = vld [vmem:[%s11 + $0x4c8] sm:$0xff]
      %v3539 = vld [vmem:[%s11 + $0x4d0] sm:$0xff]
      %v3540 = vld [vmem:[%s11 + $0x4d8] sm:$0xff]
      %v3541 = vld [vmem:[%s11 + $0x4e0] sm:$0xff]
      %v3542 = vld [vmem:[%s11 + $0x4e8] sm:$0xff]
      %v3543 = vld [vmem:[%s11 + $0x4f0] sm:$0xff]
      %v3544 = vld [vmem:[%s11 + $0x4f8] sm:$0xff]
      %v3545 = vld [vmem:[%s11 + $0x500] sm:$0xff]
      %v3546 = vld [vmem:[%s11 + $0x508] sm:$0xff]
      %v3547 = vld [vmem:[%s11 + $0x510] sm:$0xff]
      %v3548 = vld [vmem:[%s11 + $0x518] sm:$0xff]
      %v3549 = vld [vmem:[%s11 + $0x520] sm:$0xff]
      %v3550 = vld [vmem:[%s11 + $0x528] sm:$0xff]
      %v3551 = vld [vmem:[%s11 + $0x530] sm:$0xff]
      %v3552 = vld [vmem:[%s11 + $0x538] sm:$0xff]
      %v3553 = vld [vmem:[%s11 + $0x540] sm:$0xff]
      %v3554 = vld [vmem:[%s11 + $0x548] sm:$0xff]
      %v3555 = vld [vmem:[%s11 + $0x550] sm:$0xff]
      %v3556 = vld [vmem:[%s11 + $0x558] sm:$0xff]
      %v3557 = vld [vmem:[%s11 + $0x560] sm:$0xff]
      %v3558 = vld [vmem:[%s11 + $0x568] sm:$0xff]
      %v3559 = vld [vmem:[%s11 + $0x570] sm:$0xff]
      %v3560 = vld [vmem:[%s11 + $0x578] sm:$0xff]
      %v3561 = vld [vmem:[%s11 + $0x580] sm:$0xff]
      %v3562 = vld [vmem:[%s11 + $0x588] sm:$0xff]
      %v3563 = vld [vmem:[%s11 + $0x590] sm:$0xff]
      %v3564 = vld [vmem:[%s11 + $0x598] sm:$0xff]
      %v3565 = vld [vmem:[%s11 + $0x5a0] sm:$0xff]
      %v3566 = vld [vmem:[%s11 + $0x5a8] sm:$0xff]
      %v3567 = vld [vmem:[%s11 + $0x5b0] sm:$0xff]
      %v3568 = vld [vmem:[%s11 + $0x5b8] sm:$0xff]
      %v3569 = vld [vmem:[%s11 + $0x5c0] sm:$0xff]
      %v3570 = vld [vmem:[%s11 + $0x5c8] sm:$0xff]
      %v3571 = vld [vmem:[%s11 + $0x5d0] sm:$0xff]
      %v3572 = vld [vmem:[%s11 + $0x5d8] sm:$0xff]
      %v3573 = vld [vmem:[%s11 + $0x5e0] sm:$0xff]
      %v3574 = vld [vmem:[%s11 + $0x5e8] sm:$0xff]
      %v3575 = vld [vmem:[%s11 + $0x5f0] sm:$0xff]
      %v3576 = vld [vmem:[%s11 + $0x5f8] sm:$0xff]
      %v3577 = vld [vmem:[%s11 + $0x600] sm:$0xff]
      %v3578 = vld [vmem:[%s11 + $0x608] sm:$0xff]
      %v3579 = vld [vmem:[%s11 + $0x610] sm:$0xff]
      %v3580 = vld [vmem:[%s11 + $0x618] sm:$0xff]
      %v3581 = vld [vmem:[%s11 + $0x620] sm:$0xff]
      %v3582 = vld [vmem:[%s11 + $0x628] sm:$0xff]
      %v3583 = vld [vmem:[%s11 + $0x630] sm:$0xff]
      %v3584 = vld [vmem:[%s11 + $0x638] sm:$0xff]
      %v3585 = vld [vmem:[%s11 + $0x640] sm:$0xff]
      %v3586 = vld [vmem:[%s11 + $0x648] sm:$0xff]
      %v3587 = vld [vmem:[%s11 + $0x650] sm:$0xff]
      %v3588 = vld [vmem:[%s11 + $0x658] sm:$0xff]
      %v3589 = vld [vmem:[%s11 + $0x660] sm:$0xff]
      %v3590 = vld [vmem:[%s11 + $0x668] sm:$0xff]
      %v3591 = vld [vmem:[%s11 + $0x670] sm:$0xff]
      %v3592 = vld [vmem:[%s11 + $0x678] sm:$0xff]
      %v3593 = vld [vmem:[%s11 + $0x680] sm:$0xff]
      %v3594 = vld [vmem:[%s11 + $0x688] sm:$0xff]
      %v3595 = vld [vmem:[%s11 + $0x690] sm:$0xff]
      %v3596 = vld [vmem:[%s11 + $0x698] sm:$0xff]
      %v3597 = vld [vmem:[%s11 + $0x6a0] sm:$0xff]
      %v3598 = vld [vmem:[%s11 + $0x6a8] sm:$0xff]
      %v3599 = vld [vmem:[%s11 + $0x6b0] sm:$0xff]
      %v3600 = vld [vmem:[%s11 + $0x6b8] sm:$0xff]
      %v3601 = vld [vmem:[%s11 + $0x6c0] sm:$0xff]
      %v3602 = vld [vmem:[%s11 + $0x6c8] sm:$0xff]
      %v3603 = vld [vmem:[%s11 + $0x6d0] sm:$0xff]
      %v3604 = vld [vmem:[%s11 + $0x6d8] sm:$0xff]
      %v3605 = vld [vmem:[%s11 + $0x6e0] sm:$0xff]
      %v3606 = vld [vmem:[%s11 + $0x6e8] sm:$0xff]
      %v3607 = vld [vmem:[%s11 + $0x6f0] sm:$0xff]
      %v3608 = vld [vmem:[%s11 + $0x6f8] sm:$0xff]
      %v3609 = vld [vmem:[%s11 + $0x700] sm:$0xff]
      %v3610 = vld [vmem:[%s11 + $0x708] sm:$0xff]
      %v3611 = vld [vmem:[%s11 + $0x710] sm:$0xff]
      %v3612 = vld [vmem:[%s11 + $0x718] sm:$0xff]
      %v3613 = vld [vmem:[%s11 + $0x720] sm:$0xff]
      %v3614 = vld [vmem:[%s11 + $0x728] sm:$0xff]
      %v3615 = vld [vmem:[%s11 + $0x730] sm:$0xff]
      %v3616 = vld [vmem:[%s11 + $0x738] sm:$0xff]
      %v3617 = vld [vmem:[%s11 + $0x740] sm:$0xff]
      %v3618 = vld [vmem:[%s11 + $0x748] sm:$0xff]
      %v3619 = vld [vmem:[%s11 + $0x750] sm:$0xff]
      %v3620 = vld [vmem:[%s11 + $0x758] sm:$0xff]
      %v3621 = vld [vmem:[%s11 + $0x760] sm:$0xff]
      %v3622 = vld [vmem:[%s11 + $0x768] sm:$0xff]
      %v3623 = vld [vmem:[%s11 + $0x770] sm:$0xff]
      %v3624 = vld [vmem:[%s11 + $0x778] sm:$0xff]
      %v3625 = vld [vmem:[%s11 + $0x780] sm:$0xff]
      %v3626 = vld [vmem:[%s11 + $0x788] sm:$0xff]
      %v3627 = vld [vmem:[%s11 + $0x790] sm:$0xff]
      %v3628 = vld [vmem:[%s11 + $0x798] sm:$0xff]
      %v3629 = vld [vmem:[%s11 + $0x7a0] sm:$0xff]
      %v3630 = vld [vmem:[%s11 + $0x7a8] sm:$0xff]
      %v3631 = vld [vmem:[%s11 + $0x7b0] sm:$0xff]
      %v3632 = vld [vmem:[%s11 + $0x7b8] sm:$0xff]
      %v3633 = vld [vmem:[%s11 + $0x7c0] sm:$0xff]
      %v3634 = vld [vmem:[%s11 + $0x7c8] sm:$0xff]
      %v3635 = vld [vmem:[%s11 + $0x7d0] sm:$0xff]
      %v3636 = vld [vmem:[%s11 + $0x7d8] sm:$0xff]
      %v3637 = vld [vmem:[%s11 + $0x7e0] sm:$0xff]
      %v3638 = vld [vmem:[%s11 + $0x7e8] sm:$0xff]
      %v3639 = vld [vmem:[%s11 + $0x7f0] sm:$0xff]
      %v3640 = vld [vmem:[%s11 + $0x7f8] sm:$0xff]
      %v3641 = vld [vmem:[%s11 + $0x800] sm:$0xff]
      %v3642 = vld [vmem:[%s11 + $0x808] sm:$0xff]
      %v3643 = vld [vmem:[%s11 + $0x810] sm:$0xff]
      %v3644 = vld [vmem:[%s11 + $0x818] sm:$0xff]
      %v3645 = vld [vmem:[%s11 + $0x820] sm:$0xff]
      %v3646 = vld [vmem:[%s11 + $0x828] sm:$0xff]
      %v3647 = vld [vmem:[%s11 + $0x830] sm:$0xff]
      %v3648 = vld [vmem:[%s11 + $0x838] sm:$0xff]
      %v3649 = vld [vmem:[%s11 + $0x840] sm:$0xff]
      %v3650 = vld [vmem:[%s11 + $0x848] sm:$0xff]
      %v3651 = vld [vmem:[%s11 + $0x850] sm:$0xff]
      %v3652 = vld [vmem:[%s11 + $0x858] sm:$0xff]
      %v3653 = vld [vmem:[%s11 + $0x860] sm:$0xff]
      %v3654 = vld [vmem:[%s11 + $0x868] sm:$0xff]
      %v3655 = vld [vmem:[%s11 + $0x870] sm:$0xff]
      %v3656 = vld [vmem:[%s11 + $0x878] sm:$0xff]
      %v3657 = vld [vmem:[%s11 + $0x880] sm:$0xff]
      %v3658 = vld [vmem:[%s11 + $0x888] sm:$0xff]
      %v3659 = vld [vmem:[%s11 + $0x890] sm:$0xff]
      %v3660 = vld [vmem:[%s11 + $0x898] sm:$0xff]
      %v3661 = vld [vmem:[%s11 + $0x8a0] sm:$0xff]
      %v3662 = vld [vmem:[%s11 + $0x8a8] sm:$0xff]
      %v3663 = vld [vmem:[%s11 + $0x8b0] sm:$0xff]
      %v3664 = vld [vmem:[%s11 + $0x8b8] sm:$0xff]
      %v3665 = vld [vmem:[%s11 + $0x8c0] sm:$0xff]
      %v3666 = vld [vmem:[%s11 + $0x8c8] sm:$0xff]
      %v3667 = vld [vmem:[%s11 + $0x8d0] sm:$0xff]
      %v3668 = vld [vmem:[%s11 + $0x8d8] sm:$0xff]
      %v3669 = vld [vmem:[%s11 + $0x8e0] sm:$0xff]
      %v3670 = vld [vmem:[%s11 + $0x8e8] sm:$0xff]
      %v3671 = vld [vmem:[%s11 + $0x8f0] sm:$0xff]
      %v3672 = vld [vmem:[%s11 + $0x8f8] sm:$0xff]
      %v3673 = vld [vmem:[%s11 + $0x900] sm:$0xff]
      %v3674 = vld [vmem:[%s11 + $0x908] sm:$0xff]
      %v3675 = vld [vmem:[%s11 + $0x910] sm:$0xff]
      %v3676 = vld [vmem:[%s11 + $0x918] sm:$0xff]
      %v3677 = vld [vmem:[%s11 + $0x920] sm:$0xff]
      %v3678 = vld [vmem:[%s11 + $0x928] sm:$0xff]
      %v3679 = vld [vmem:[%s11 + $0x930] sm:$0xff]
      %v3680 = vld [vmem:[%s11 + $0x938] sm:$0xff]
      %v3681 = vld [vmem:[%s11 + $0x940] sm:$0xff]
      %v3682 = vld [vmem:[%s11 + $0x948] sm:$0xff]
      %v3683 = vld [vmem:[%s11 + $0x950] sm:$0xff]
      %v3684 = vld [vmem:[%s11 + $0x958] sm:$0xff]
      %v3685 = vld [vmem:[%s11 + $0x960] sm:$0xff]
      %v3686 = vld [vmem:[%s11 + $0x968] sm:$0xff]
      %v3687 = vld [vmem:[%s11 + $0x970] sm:$0xff]
      %v3688 = vld [vmem:[%s11 + $0x978] sm:$0xff]
      %v3689 = vld [vmem:[%s11 + $0x980] sm:$0xff]
      %v3690 = vld [vmem:[%s11 + $0x988] sm:$0xff]
      %v3691 = vld [vmem:[%s11 + $0x990] sm:$0xff]
      %v3692 = vld [vmem:[%s11 + $0x998] sm:$0xff]
      %v3693 = vld [vmem:[%s11 + $0x9a0] sm:$0xff]
      %v3694 = vld [vmem:[%s11 + $0x9a8] sm:$0xff]
      %v3695 = vld [vmem:[%s11 + $0x9b0] sm:$0xff]
      %v3696 = vld [vmem:[%s11 + $0x9b8] sm:$0xff]
      %v3697 = vld [vmem:[%s11 + $0x9c0] sm:$0xff]
      %v3698 = vld [vmem:[%s11 + $0x9c8] sm:$0xff]
      %v3699 = vld [vmem:[%s11 + $0x9d0] sm:$0xff]
      %v3700 = vld [vmem:[%s11 + $0x9d8] sm:$0xff]
      %v3701 = vld [vmem:[%s11 + $0x9e0] sm:$0xff]
      %v3702 = vld [vmem:[%s11 + $0x9e8] sm:$0xff]
      %v3703 = vld [vmem:[%s11 + $0x9f0] sm:$0xff]
      %v3704 = vld [vmem:[%s11 + $0x9f8] sm:$0xff]
      %v3705 = vld [vmem:[%s11 + $0xa00] sm:$0xff]
      %v3706 = vld [vmem:[%s11 + $0xa08] sm:$0xff]
      %v3707 = vld [vmem:[%s11 + $0xa10] sm:$0xff]
      %v3708 = vld [vmem:[%s11 + $0xa18] sm:$0xff]
      %v3709 = vld [vmem:[%s11 + $0xa20] sm:$0xff]
      %v3710 = vld [vmem:[%s11 + $0xa28] sm:$0xff]
      %v3711 = vld [vmem:[%s11 + $0xa30] sm:$0xff]
      %v3712 = vld [vmem:[%s11 + $0xa38] sm:$0xff]
      %v3713 = vld [vmem:[%s11 + $0xa40] sm:$0xff]
      %v3714 = vld [vmem:[%s11 + $0xa48] sm:$0xff]
      %v3715 = vld [vmem:[%s11 + $0xa50] sm:$0xff]
      %v3716 = vld [vmem:[%s11 + $0xa58] sm:$0xff]
      %v3717 = vld [vmem:[%s11 + $0xa60] sm:$0xff]
      %v3718 = vld [vmem:[%s11 + $0xa68] sm:$0xff]
      %v3719 = vld [vmem:[%s11 + $0xa70] sm:$0xff]
      %v3720 = vld [vmem:[%s11 + $0xa78] sm:$0xff]
      %v3721 = vld [vmem:[%s11 + $0xa80] sm:$0xff]
      %v3722 = vld [vmem:[%s11 + $0xa88] sm:$0xff]
      %v3723 = vld [vmem:[%s11 + $0xa90] sm:$0xff]
      %v3724 = vld [vmem:[%s11 + $0xa98] sm:$0xff]
      %v3725 = vld [vmem:[%s11 + $0xaa0] sm:$0xff]
      %v3726 = vld [vmem:[%s11 + $0xaa8] sm:$0xff]
      %v3727 = vld [vmem:[%s11 + $0xab0] sm:$0xff]
      %v3728 = vld [vmem:[%s11 + $0xab8] sm:$0xff]
      %v3729 = vld [vmem:[%s11 + $0xac0] sm:$0xff]
      %v3730 = vld [vmem:[%s11 + $0xac8] sm:$0xff]
      %v3731 = vld [vmem:[%s11 + $0xad0] sm:$0xff]
      %v3732 = vld [vmem:[%s11 + $0xad8] sm:$0xff]
      %v3733 = vld [vmem:[%s11 + $0xae0] sm:$0xff]
      %v3734 = vld [vmem:[%s11 + $0xae8] sm:$0xff]
      %v3735 = vld [vmem:[%s11 + $0xaf0] sm:$0xff]
      %v3736 = vld [vmem:[%s11 + $0xaf8] sm:$0xff]
      %v3737 = vld [vmem:[%s11 + $0xb00] sm:$0xff]
      %v3738 = vld [vmem:[%s11 + $0xb08] sm:$0xff]
      %v3739 = vld [vmem:[%s11 + $0xb10] sm:$0xff]
      %v3740 = vld [vmem:[%s11 + $0xb18] sm:$0xff]
      %v3741 = vld [vmem:[%s11 + $0xb20] sm:$0xff]
      %v3742 = vld [vmem:[%s11 + $0xb28] sm:$0xff]
      %v3743 = vld [vmem:[%s11 + $0xb30] sm:$0xff]
      %v3744 = vld [vmem:[%s11 + $0xb38] sm:$0xff]
      %v3745 = vld [vmem:[%s11 + $0xb40] sm:$0xff]
      %v3746 = vld [vmem:[%s11 + $0xb48] sm:$0xff]
      %v3747 = vld [vmem:[%s11 + $0xb50] sm:$0xff]
      %v3748 = vld [vmem:[%s11 + $0xb58] sm:$0xff]
      %v3749 = vld [vmem:[%s11 + $0xb60] sm:$0xff]
      %v3750 = vld [vmem:[%s11 + $0xb68] sm:$0xff]
      %v3751 = vld [vmem:[%s11 + $0xb70] sm:$0xff]
      %v3752 = vld [vmem:[%s11 + $0xb78] sm:$0xff]
      %v3753 = vld [vmem:[%s11 + $0xb80] sm:$0xff]
      %v3754 = vld [vmem:[%s11 + $0xb88] sm:$0xff]
      %v3755 = vld [vmem:[%s11 + $0xb90] sm:$0xff]
      %v3756 = vld [vmem:[%s11 + $0xb98] sm:$0xff]
      %v3757 = vld [vmem:[%s11 + $0xba0] sm:$0xff]
      %v3758 = vld [vmem:[%s11 + $0xba8] sm:$0xff]
      %v3759 = vld [vmem:[%s11 + $0xbb0] sm:$0xff]
      %v3760 = vld [vmem:[%s11 + $0xbb8] sm:$0xff]
      %v3761 = vld [vmem:[%s11 + $0xbc0] sm:$0xff]
      %v3762 = vld [vmem:[%s11 + $0xbc8] sm:$0xff]
      %v3763 = vld [vmem:[%s11 + $0xbd0] sm:$0xff]
      %v3764 = vld [vmem:[%s11 + $0xbd8] sm:$0xff]
      %v3765 = vld [vmem:[%s11 + $0xbe0] sm:$0xff]
      %v3766 = vld [vmem:[%s11 + $0xbe8] sm:$0xff]
      %v3767 = vld [vmem:[%s11 + $0xbf0] sm:$0xff]
      %v3768 = vld [vmem:[%s11 + $0xbf8] sm:$0xff]
      %v3769 = vld [vmem:[%s11 + $0xc00] sm:$0xff]
      %v3770 = vld [vmem:[%s11 + $0xc08] sm:$0xff]
      %v3771 = vld [vmem:[%s11 + $0xc10] sm:$0xff]
      %v3772 = vld [vmem:[%s11 + $0xc18] sm:$0xff]
      %v3773 = vld [vmem:[%s11 + $0xc20] sm:$0xff]
      %v3774 = vld [vmem:[%s11 + $0xc28] sm:$0xff]
      %v3775 = vld [vmem:[%s11 + $0xc30] sm:$0xff]
      %v3776 = vld [vmem:[%s11 + $0xc38] sm:$0xff]
      %v3777 = vld [vmem:[%s11 + $0xc40] sm:$0xff]
      %v3778 = vld [vmem:[%s11 + $0xc48] sm:$0xff]
      %v3779 = vld [vmem:[%s11 + $0xc50] sm:$0xff]
      %v3780 = vld [vmem:[%s11 + $0xc58] sm:$0xff]
      %v3781 = vld [vmem:[%s11 + $0xc60] sm:$0xff]
      %v3782 = vld [vmem:[%s11 + $0xc68] sm:$0xff]
      %v3783 = vld [vmem:[%s11 + $0xc70] sm:$0xff]
      %v3784 = vld [vmem:[%s11 + $0xc78] sm:$0xff]
      %v3785 = vld [vmem:[%s11 + $0xc80] sm:$0xff]
      %v3786 = vld [vmem:[%s11 + $0xc88] sm:$0xff]
      %v3787 = vld [vmem:[%s11 + $0xc90] sm:$0xff]
      %v3788 = vld [vmem:[%s11 + $0xc98] sm:$0xff]
      %v3789 = vld [vmem:[%s11 + $0xca0] sm:$0xff]
      %v3790 = vld [vmem:[%s11 + $0xca8] sm:$0xff]
      %v3791 = vld [vmem:[%s11 + $0xcb0] sm:$0xff]
      %v3792 = vld [vmem:[%s11 + $0xcb8] sm:$0xff]
      %v3793 = vld [vmem:[%s11 + $0xcc0] sm:$0xff]
      %v3794 = vld [vmem:[%s11 + $0xcc8] sm:$0xff]
      %v3795 = vld [vmem:[%s11 + $0xcd0] sm:$0xff]
      %v3796 = vld [vmem:[%s11 + $0xcd8] sm:$0xff]
      %v3797 = vld [vmem:[%s11 + $0xce0] sm:$0xff]
      %v3798 = vld [vmem:[%s11 + $0xce8] sm:$0xff]
      %v3799 = vld [vmem:[%s11 + $0xcf0] sm:$0xff]
      %v3800 = vld [vmem:[%s11 + $0xcf8] sm:$0xff]
      %v3801 = vld [vmem:[%s11 + $0xd00] sm:$0xff]
      %v3802 = vld [vmem:[%s11 + $0xd08] sm:$0xff]
      %v3803 = vld [vmem:[%s11 + $0xd10] sm:$0xff]
      %v3804 = vld [vmem:[%s11 + $0xd18] sm:$0xff]
      %v3805 = vld [vmem:[%s11 + $0xd20] sm:$0xff]
      %v3806 = vld [vmem:[%s11 + $0xd28] sm:$0xff]
      %v3807 = vld [vmem:[%s11 + $0xd30] sm:$0xff]
      %v3808 = vld [vmem:[%s11 + $0xd38] sm:$0xff]
      %v3809 = vld [vmem:[%s11 + $0xd40] sm:$0xff]
      %v3810 = vld [vmem:[%s11 + $0xd48] sm:$0xff]
      %v3811 = vld [vmem:[%s11 + $0xd50] sm:$0xff]
      %v3812 = vld [vmem:[%s11 + $0xd58] sm:$0xff]
      %v3813 = vld [vmem:[%s11 + $0xd60] sm:$0xff]
      %v3814 = vld [vmem:[%s11 + $0xd68] sm:$0xff]
      %v3815 = vld [vmem:[%s11 + $0xd70] sm:$0xff]
      %v3816 = vld [vmem:[%s11 + $0xd78] sm:$0xff]
      %v3817 = vld [vmem:[%s11 + $0xd80] sm:$0xff]
      %v3818 = vld [vmem:[%s11 + $0xd88] sm:$0xff]
      %v3819 = vld [vmem:[%s11 + $0xd90] sm:$0xff]
      %v3820 = vld [vmem:[%s11 + $0xd98] sm:$0xff]
      %v3821 = vld [vmem:[%s11 + $0xda0] sm:$0xff]
      %v3822 = vld [vmem:[%s11 + $0xda8] sm:$0xff]
      %v3823 = vld [vmem:[%s11 + $0xdb0] sm:$0xff]
      %v3824 = vld [vmem:[%s11 + $0xdb8] sm:$0xff]
      %v3825 = vld [vmem:[%s11 + $0xdc0] sm:$0xff]
      %v3826 = vld [vmem:[%s11 + $0xdc8] sm:$0xff]
      %v3827 = vld [vmem:[%s11 + $0xdd0] sm:$0xff]
      %v3828 = vld [vmem:[%s11 + $0xdd8] sm:$0xff]
      %v3829 = vld [vmem:[%s11 + $0xde0] sm:$0xff]
      %v3830 = vld [vmem:[%s11 + $0xde8] sm:$0xff]
      %v3831 = vld [vmem:[%s11 + $0xdf0] sm:$0xff]
      %v3832 = vld [vmem:[%s11 + $0xdf8] sm:$0xff]
      %v3833 = vld [vmem:[%s11 + $0xe00] sm:$0xff]
      %v3834 = vld [vmem:[%s11 + $0xe08] sm:$0xff]
      %v3835 = vld [vmem:[%s11 + $0xe10] sm:$0xff]
      %v3836 = vld [vmem:[%s11 + $0xe18] sm:$0xff]
      %v3837 = vld [vmem:[%s11 + $0xe20] sm:$0xff]
      %v3838 = vld [vmem:[%s11 + $0xe28] sm:$0xff]
      %v3839 = vld [vmem:[%s11 + $0xe30] sm:$0xff]
      %v3840 = vld [vmem:[%s11 + $0xe38] sm:$0xff]
      %v3841 = vld [vmem:[%s11 + $0xe40] sm:$0xff]
      %v3842 = vld [vmem:[%s11 + $0xe48] sm:$0xff]
      %v3843 = vld [vmem:[%s11 + $0xe50] sm:$0xff]
      %v3844 = vld [vmem:[%s11 + $0xe58] sm:$0xff]
      %v3845 = vld [vmem:[%s11 + $0xe60] sm:$0xff]
      %v3846 = vld [vmem:[%s11 + $0xe68] sm:$0xff]
      %v3847 = vld [vmem:[%s11 + $0xe70] sm:$0xff]
      %v3848 = vld [vmem:[%s11 + $0xe78] sm:$0xff]
      %v3849 = vld [vmem:[%s11 + $0xe80] sm:$0xff]
      %v3850 = vld [vmem:[%s11 + $0xe88] sm:$0xff]
      %v3851 = vld [vmem:[%s11 + $0xe90] sm:$0xff]
      %v3852 = vld [vmem:[%s11 + $0xe98] sm:$0xff]
      %v3853 = vld [vmem:[%s11 + $0xea0] sm:$0xff]
      %v3854 = vld [vmem:[%s11 + $0xea8] sm:$0xff]
      %v3855 = vld [vmem:[%s11 + $0xeb0] sm:$0xff]
      %v3856 = vld [vmem:[%s11 + $0xeb8] sm:$0xff]
      %v3857 = vld [vmem:[%s11 + $0xec0] sm:$0xff]
      %v3858 = vld [vmem:[%s11 + $0xec8] sm:$0xff]
      %v3859 = vld [vmem:[%s11 + $0xed0] sm:$0xff]
      %v3860 = vld [vmem:[%s11 + $0xed8] sm:$0xff]
      %v3861 = vld [vmem:[%s11 + $0xee0] sm:$0xff]
      %v3862 = vld [vmem:[%s11 + $0xee8] sm:$0xff]
      %v3863 = vld [vmem:[%s11 + $0xef0] sm:$0xff]
      %v3864 = vld [vmem:[%s11 + $0xef8] sm:$0xff]
      %v3865 = vld [vmem:[%s11 + $0xf00] sm:$0xff]
      %v3866 = vld [vmem:[%s11 + $0xf08] sm:$0xff]
      %v3867 = vld [vmem:[%s11 + $0xf10] sm:$0xff]
      %v3868 = vld [vmem:[%s11 + $0xf18] sm:$0xff]
      %v3869 = vld [vmem:[%s11 + $0xf20] sm:$0xff]
      %v3870 = vld [vmem:[%s11 + $0xf28] sm:$0xff]
      %v3871 = vld [vmem:[%s11 + $0xf30] sm:$0xff]
      %v3872 = vld [vmem:[%s11 + $0xf38] sm:$0xff]
      %v3873 = vld [vmem:[%s11 + $0xf40] sm:$0xff]
      %v3874 = vld [vmem:[%s11 + $0xf48] sm:$0xff]
      %v3875 = vld [vmem:[%s11 + $0xf50] sm:$0xff]
      %v3876 = vld [vmem:[%s11 + $0xf58] sm:$0xff]
      %v3877 = vld [vmem:[%s11 + $0xf60] sm:$0xff]
      %v3878 = vld [vmem:[%s11 + $0xf68] sm:$0xff]
      %v3879 = vld [vmem:[%s11 + $0xf70] sm:$0xff]
      %v3880 = vld [vmem:[%s11 + $0xf78] sm:$0xff]
      %v3881 = vld [vmem:[%s11 + $0xf80] sm:$0xff]
      %v3882 = vld [vmem:[%s11 + $0xf88] sm:$0xff]
      %v3883 = vld [vmem:[%s11 + $0xf90] sm:$0xff]
      %v3884 = vld [vmem:[%s11 + $0xf98] sm:$0xff]
      %v3885 = vld [vmem:[%s11 + $0xfa0] sm:$0xff]
      %v3886 = vld [vmem:[%s11 + $0xfa8] sm:$0xff]
      %v3887 = vld [vmem:[%s11 + $0xfb0] sm:$0xff]
      %v3888 = vld [vmem:[%s11 + $0xfb8] sm:$0xff]
      %v3889 = vld [vmem:[%s11 + $0xfc0] sm:$0xff]
      %v3890 = vld [vmem:[%s11 + $0xfc8] sm:$0xff]
      %v3891 = vld [vmem:[%s11 + $0xfd0] sm:$0xff]
      %v3892 = vld [vmem:[%s11 + $0xfd8] sm:$0xff]
      %v3893 = vld [vmem:[%s11 + $0xfe0] sm:$0xff]
      %v3894 = vld [vmem:[%s11 + $0xfe8] sm:$0xff]
      %v3895 = vld [vmem:[%s11 + $0xff0] sm:$0xff]
      %v3896 = vld [vmem:[%s11 + $0xff8] sm:$0xff]
      %v3897 = vld [vmem:[%s11 + $0x1000] sm:$0xff]
      %v3898 = vld [vmem:[%s11 + $0x1008] sm:$0xff]
      %v3899 = vld [vmem:[%s11 + $0x1010] sm:$0xff]
      %v3900 = vld [vmem:[%s11 + $0x1018] sm:$0xff]
      %v3901 = vld [vmem:[%s11 + $0x1020] sm:$0xff]
      %v3902 = vld [vmem:[%s11 + $0x1028] sm:$0xff]
      %v3903 = vld [vmem:[%s11 + $0x1030] sm:$0xff]
      %v3904 = vld [vmem:[%s11 + $0x1038] sm:$0xff]
      %v3905 = vld [vmem:[%s11 + $0x1040] sm:$0xff]
      %v3906 = vld [vmem:[%s11 + $0x1048] sm:$0xff]
      %v3907 = vld [vmem:[%s11 + $0x1050] sm:$0xff]
      %v3908 = vld [vmem:[%s11 + $0x1058] sm:$0xff]
      %v3909 = vld [vmem:[%s11 + $0x1060] sm:$0xff]
      %v3910 = vld [vmem:[%s11 + $0x1068] sm:$0xff]
      %v3911 = vld [vmem:[%s11 + $0x1070] sm:$0xff]
      %v3912 = vld [vmem:[%s11 + $0x1078] sm:$0xff]
      %v3913 = vld [vmem:[%s11 + $0x1080] sm:$0xff]
      %v3914 = vld [vmem:[%s11 + $0x1088] sm:$0xff]
      %v3915 = vld [vmem:[%s11 + $0x1090] sm:$0xff]
      %v3916 = vld [vmem:[%s11 + $0x1098] sm:$0xff]
      %v3917 = vld [vmem:[%s11 + $0x10a0] sm:$0xff]
      %v3918 = vld [vmem:[%s11 + $0x10a8] sm:$0xff]
      %v3919 = vld [vmem:[%s11 + $0x10b0] sm:$0xff]
      %v3920 = vld [vmem:[%s11 + $0x10b8] sm:$0xff]
      %v3921 = vld [vmem:[%s11 + $0x10c0] sm:$0xff]
      %v3922 = vld [vmem:[%s11 + $0x10c8] sm:$0xff]
      %v3923 = vld [vmem:[%s11 + $0x10d0] sm:$0xff]
      %v3924 = vld [vmem:[%s11 + $0x10d8] sm:$0xff]
      %v3925 = vld [vmem:[%s11 + $0x10e0] sm:$0xff]
      %v3926 = vld [vmem:[%s11 + $0x10e8] sm:$0xff]
      %v3927 = vld [vmem:[%s11 + $0x10f0] sm:$0xff]
      %v3928 = vld [vmem:[%s11 + $0x10f8] sm:$0xff]
      %v3929 = vld [vmem:[%s11 + $0x1100] sm:$0xff]
      %v3930 = vld [vmem:[%s11 + $0x1108] sm:$0xff]
      %v3931 = vld [vmem:[%s11 + $0x1110] sm:$0xff]
      %v3932 = vld [vmem:[%s11 + $0x1118] sm:$0xff]
      %v3933 = vld [vmem:[%s11 + $0x1120] sm:$0xff]
      %v3934 = vld [vmem:[%s11 + $0x1128] sm:$0xff]
      %v3935 = vld [vmem:[%s11 + $0x1130] sm:$0xff]
      %v3936 = vld [vmem:[%s11 + $0x1138] sm:$0xff]
      %v3937 = vld [vmem:[%s11 + $0x1140] sm:$0xff]
      %v3938 = vld [vmem:[%s11 + $0x1148] sm:$0xff]
      %v3939 = vld [vmem:[%s11 + $0x1150] sm:$0xff]
      %v3940 = vld [vmem:[%s11 + $0x1158] sm:$0xff]
      %v3941 = vld [vmem:[%s11 + $0x1160] sm:$0xff]
      %v3942 = vld [vmem:[%s11 + $0x1168] sm:$0xff]
      %v3943 = vld [vmem:[%s11 + $0x1170] sm:$0xff]
      %v3944 = vld [vmem:[%s11 + $0x1178] sm:$0xff]
      %v3945 = vld [vmem:[%s11 + $0x1180] sm:$0xff]
      %v3946 = vld [vmem:[%s11 + $0x1188] sm:$0xff]
      %v3947 = vld [vmem:[%s11 + $0x1190] sm:$0xff]
      %v3948 = vld [vmem:[%s11 + $0x1198] sm:$0xff]
      %v3949 = vld [vmem:[%s11 + $0x11a0] sm:$0xff]
      %v3950 = vld [vmem:[%s11 + $0x11a8] sm:$0xff]
      %v3951 = vld [vmem:[%s11 + $0x11b0] sm:$0xff]
      %v3952 = vld [vmem:[%s11 + $0x11b8] sm:$0xff]
      %v3953 = vld [vmem:[%s11 + $0x11c0] sm:$0xff]
      %v3954 = vld [vmem:[%s11 + $0x11c8] sm:$0xff]
      %v3955 = vld [vmem:[%s11 + $0x11d0] sm:$0xff]
      %v3956 = vld [vmem:[%s11 + $0x11d8] sm:$0xff]
      %v3957 = vld [vmem:[%s11 + $0x11e0] sm:$0xff]
      %v3958 = vld [vmem:[%s11 + $0x11e8] sm:$0xff]
      %v3959 = vld [vmem:[%s11 + $0x11f0] sm:$0xff]
      %v3960 = vld [vmem:[%s11 + $0x11f8] sm:$0xff]
      %v3961 = vld [vmem:[%s11 + $0x1200] sm:$0xff]
      %v3962 = vld [vmem:[%s11 + $0x1208] sm:$0xff]
      %v3963 = vld [vmem:[%s11 + $0x1210] sm:$0xff]
      %v3964 = vld [vmem:[%s11 + $0x1218] sm:$0xff]
      %v3965 = vld [vmem:[%s11 + $0x1220] sm:$0xff]
      %v3966 = vld [vmem:[%s11 + $0x1228] sm:$0xff]
      %v3967 = vld [vmem:[%s11 + $0x1230] sm:$0xff]
      %v3968 = vld [vmem:[%s11 + $0x1238] sm:$0xff]
      %v3969 = vld [vmem:[%s11 + $0x1240] sm:$0xff]
      %v3970 = vld [vmem:[%s11 + $0x1248] sm:$0xff]
      %v3971 = vld [vmem:[%s11 + $0x1250] sm:$0xff]
      %v3972 = vld [vmem:[%s11 + $0x1258] sm:$0xff]
      %v3973 = vld [vmem:[%s11 + $0x1260] sm:$0xff]
      %v3974 = vld [vmem:[%s11 + $0x1268] sm:$0xff]
      %v3975 = vld [vmem:[%s11 + $0x1270] sm:$0xff]
      %v3976 = vld [vmem:[%s11 + $0x1278] sm:$0xff]
      %v3977 = vld [vmem:[%s11 + $0x1280] sm:$0xff]
      %v3978 = vld [vmem:[%s11 + $0x1288] sm:$0xff]
      %v3979 = vld [vmem:[%s11 + $0x1290] sm:$0xff]
      %v3980 = vld [vmem:[%s11 + $0x1298] sm:$0xff]
      %v3981 = vld [vmem:[%s11 + $0x12a0] sm:$0xff]
      %v3982 = vld [vmem:[%s11 + $0x12a8] sm:$0xff]
      %v3983 = vld [vmem:[%s11 + $0x12b0] sm:$0xff]
      %v3984 = vld [vmem:[%s11 + $0x12b8] sm:$0xff]
      %v3985 = vld [vmem:[%s11 + $0x12c0] sm:$0xff]
      %v3986 = vld [vmem:[%s11 + $0x12c8] sm:$0xff]
      %v3987 = vld [vmem:[%s11 + $0x12d0] sm:$0xff]
      %v3988 = vld [vmem:[%s11 + $0x12d8] sm:$0xff]
      %v3989 = vld [vmem:[%s11 + $0x12e0] sm:$0xff]
      %v3990 = vld [vmem:[%s11 + $0x12e8] sm:$0xff]
      %v3991 = vld [vmem:[%s11 + $0x12f0] sm:$0xff]
      %v3992 = vld [vmem:[%s11 + $0x12f8] sm:$0xff]
      %v3993 = vld [vmem:[%s11 + $0x1300] sm:$0xff]
      %v3994 = vld [vmem:[%s11 + $0x1308] sm:$0xff]
      %v3995 = vld [vmem:[%s11 + $0x1310] sm:$0xff]
      %v3996 = vld [vmem:[%s11 + $0x1318] sm:$0xff]
      %v3997 = vld [vmem:[%s11 + $0x1320] sm:$0xff]
      %v3998 = vld [vmem:[%s11 + $0x1328] sm:$0xff]
      %v3999 = vld [vmem:[%s11 + $0x1330] sm:$0xff]
      %v4000 = vld [vmem:[%s11 + $0x1338] sm:$0xff]
      %v4001 = vld [vmem:[%s11 + $0x1340] sm:$0xff]
      %v4002 = vld [vmem:[%s11 + $0x1348] sm:$0xff]
      %v4003 = vld [vmem:[%s11 + $0x1350] sm:$0xff]
      %v4004 = vld [vmem:[%s11 + $0x1358] sm:$0xff]
      %v4005 = vld [vmem:[%s11 + $0x1360] sm:$0xff]
      %v4006 = vld [vmem:[%s11 + $0x1368] sm:$0xff]
      %v4007 = vld [vmem:[%s11 + $0x1370] sm:$0xff]
      %v4008 = vld [vmem:[%s11 + $0x1378] sm:$0xff]
      %v4009 = vld [vmem:[%s11 + $0x1380] sm:$0xff]
      %v4010 = vld [vmem:[%s11 + $0x1388] sm:$0xff]
      %v4011 = vld [vmem:[%s11 + $0x1390] sm:$0xff]
      %v4012 = vld [vmem:[%s11 + $0x1398] sm:$0xff]
      %v4013 = vld [vmem:[%s11 + $0x13a0] sm:$0xff]
      %v4014 = vld [vmem:[%s11 + $0x13a8] sm:$0xff]
      %v4015 = vld [vmem:[%s11 + $0x13b0] sm:$0xff]
      %v4016 = vld [vmem:[%s11 + $0x13b8] sm:$0xff]
      %v4017 = vld [vmem:[%s11 + $0x13c0] sm:$0xff]
      %v4018 = vld [vmem:[%s11 + $0x13c8] sm:$0xff]
      %v4019 = vld [vmem:[%s11 + $0x13d0] sm:$0xff]
      %v4020 = vld [vmem:[%s11 + $0x13d8] sm:$0xff]
      %v4021 = vld [vmem:[%s11 + $0x13e0] sm:$0xff]
      %v4022 = vld [vmem:[%s11 + $0x13e8] sm:$0xff]
      %v4023 = vld [vmem:[%s11 + $0x13f0] sm:$0xff]
      %v4024 = vld [vmem:[%s11 + $0x13f8] sm:$0xff]
      %v4025 = vld [vmem:[%s11 + $0x1400] sm:$0xff]
      %v4026 = vld [vmem:[%s11 + $0x1408] sm:$0xff]
      %v4027 = vld [vmem:[%s11 + $0x1410] sm:$0xff]
      %v4028 = vld [vmem:[%s11 + $0x1418] sm:$0xff]
      %v4029 = vld [vmem:[%s11 + $0x1420] sm:$0xff]
      %v4030 = vld [vmem:[%s11 + $0x1428] sm:$0xff]
      %v4031 = vld [vmem:[%s11 + $0x1430] sm:$0xff]
      %v4032 = vld [vmem:[%s11 + $0x1438] sm:$0xff]
      %v4033 = vld [vmem:[%s11 + $0x1440] sm:$0xff]
      %v4034 = vld [vmem:[%s11 + $0x1448] sm:$0xff]
      %v4035 = vld [vmem:[%s11 + $0x1450] sm:$0xff]
      %v4036 = vld [vmem:[%s11 + $0x1458] sm:$0xff]
      %v4037 = vld [vmem:[%s11 + $0x1460] sm:$0xff]
      %v4038 = vld [vmem:[%s11 + $0x1468] sm:$0xff]
      %v4039 = vld [vmem:[%s11 + $0x1470] sm:$0xff]
      %v4040 = vld [vmem:[%s11 + $0x1478] sm:$0xff]
      %v4041 = vld [vmem:[%s11 + $0x1480] sm:$0xff]
      %v4042 = vld [vmem:[%s11 + $0x1488] sm:$0xff]
      %v4043 = vld [vmem:[%s11 + $0x1490] sm:$0xff]
      %v4044 = vld [vmem:[%s11 + $0x1498] sm:$0xff]
      %v4045 = vld [vmem:[%s11 + $0x14a0] sm:$0xff]
      %v4046 = vld [vmem:[%s11 + $0x14a8] sm:$0xff]
      %v4047 = vld [vmem:[%s11 + $0x14b0] sm:$0xff]
      %v4048 = vld [vmem:[%s11 + $0x14b8] sm:$0xff]
      %v4049 = vld [vmem:[%s11 + $0x14c0] sm:$0xff]
      %v4050 = vld [vmem:[%s11 + $0x14c8] sm:$0xff]
      %v4051 = vld [vmem:[%s11 + $0x14d0] sm:$0xff]
      %v4052 = vld [vmem:[%s11 + $0x14d8] sm:$0xff]
      %v4053 = vld [vmem:[%s11 + $0x14e0] sm:$0xff]
      %v4054 = vld [vmem:[%s11 + $0x14e8] sm:$0xff]
      %v4055 = vld [vmem:[%s11 + $0x14f0] sm:$0xff]
      %v4056 = vld [vmem:[%s11 + $0x14f8] sm:$0xff]
      %v4057 = vld [vmem:[%s11 + $0x1500] sm:$0xff]
      %v4058 = vld [vmem:[%s11 + $0x1508] sm:$0xff]
      %v4059 = vld [vmem:[%s11 + $0x1510] sm:$0xff]
      %v4060 = vld [vmem:[%s11 + $0x1518] sm:$0xff]
      %v4061 = vld [vmem:[%s11 + $0x1520] sm:$0xff]
      %v4062 = vld [vmem:[%s11 + $0x1528] sm:$0xff]
      %v4063 = vld [vmem:[%s11 + $0x1530] sm:$0xff]
      %v4064 = vld [vmem:[%s11 + $0x1538] sm:$0xff]
      %v4065 = vld [vmem:[%s11 + $0x1540] sm:$0xff]
      %v4066 = vld [vmem:[%s11 + $0x1548] sm:$0xff]
      %v4067 = vld [vmem:[%s11 + $0x1550] sm:$0xff]
      %v4068 = vld [vmem:[%s11 + $0x1558] sm:$0xff]
      %v4069 = vld [vmem:[%s11 + $0x1560] sm:$0xff]
      %v4070 = vld [vmem:[%s11 + $0x1568] sm:$0xff]
      %v4071 = vld [vmem:[%s11 + $0x1570] sm:$0xff]
      %v4072 = vld [vmem:[%s11 + $0x1578] sm:$0xff]
      %v4073 = vld [vmem:[%s11 + $0x1580] sm:$0xff]
      %v4074 = vld [vmem:[%s11 + $0x1588] sm:$0xff]
      %v4075 = vld [vmem:[%s11 + $0x1590] sm:$0xff]
      %v4076 = vld [vmem:[%s11 + $0x1598] sm:$0xff]
      %v4077 = vld [vmem:[%s11 + $0x15a0] sm:$0xff]
      %v4078 = vld [vmem:[%s11 + $0x15a8] sm:$0xff]
      %v4079 = vld [vmem:[%s11 + $0x15b0] sm:$0xff]
      %v4080 = vld [vmem:[%s11 + $0x15b8] sm:$0xff]
      %v4081 = vld [vmem:[%s11 + $0x15c0] sm:$0xff]
      %v4082 = vld [vmem:[%s11 + $0x15c8] sm:$0xff]
      %v4083 = vld [vmem:[%s11 + $0x15d0] sm:$0xff]
      %v4084 = vld [vmem:[%s11 + $0x15d8] sm:$0xff]
      %v4085 = vld [vmem:[%s11 + $0x15e0] sm:$0xff]
      %v4086 = vld [vmem:[%s11 + $0x15e8] sm:$0xff]
      %v4087 = vld [vmem:[%s11 + $0x15f0] sm:$0xff]
      %v4088 = vld [vmem:[%s11 + $0x15f8] sm:$0xff]
      %v4089 = vld [vmem:[%s11 + $0x1600] sm:$0xff]
      %v4090 = vld [vmem:[%s11 + $0x1608] sm:$0xff]
      %v4091 = vld [vmem:[%s11 + $0x1610] sm:$0xff]
      %v4092 = vld [vmem:[%s11 + $0x1618] sm:$0xff]
      %v4093 = vld [vmem:[%s11 + $0x1620] sm:$0xff]
      %v4094 = vld [vmem:[%s11 + $0x1628] sm:$0xff]
      %v4095 = vld [vmem:[%s11 + $0x1630] sm:$0xff]
      %v4096 = vld [vmem:[%s11 + $0x1638] sm:$0xff]
      %v4097 = vld [vmem:[%s11 + $0x1640] sm:$0xff]
      %v4098 = vld [vmem:[%s11 + $0x1648] sm:$0xff]
      %v4099 = vld [vmem:[%s11 + $0x1650] sm:$0xff]
      %v4100 = vld [vmem:[%s11 + $0x1658] sm:$0xff]
      %v4101 = vld [vmem:[%s11 + $0x1660] sm:$0xff]
      %v4102 = vld [vmem:[%s11 + $0x1668] sm:$0xff]
      %v4103 = vld [vmem:[%s11 + $0x1670] sm:$0xff]
      %v4104 = vld [vmem:[%s11 + $0x1678] sm:$0xff]
      %v4105 = vld [vmem:[%s11 + $0x1680] sm:$0xff]
      %v4106 = vld [vmem:[%s11 + $0x1688] sm:$0xff]
      %v4107 = vld [vmem:[%s11 + $0x1690] sm:$0xff]
      %v4108 = vld [vmem:[%s11 + $0x1698] sm:$0xff]
      %v4109 = vld [vmem:[%s11 + $0x16a0] sm:$0xff]
      %v4110 = vld [vmem:[%s11 + $0x16a8] sm:$0xff]
      %v4111 = vld [vmem:[%s11 + $0x16b0] sm:$0xff]
      %v4112 = vld [vmem:[%s11 + $0x16b8] sm:$0xff]
      %v4113 = vld [vmem:[%s11 + $0x16c0] sm:$0xff]
      %v4114 = vld [vmem:[%s11 + $0x16c8] sm:$0xff]
      %v4115 = vld [vmem:[%s11 + $0x16d0] sm:$0xff]
      %v4116 = vld [vmem:[%s11 + $0x16d8] sm:$0xff]
      %v4117 = vld [vmem:[%s11 + $0x16e0] sm:$0xff]
      %v4118 = vld [vmem:[%s11 + $0x16e8] sm:$0xff]
      %v4119 = vld [vmem:[%s11 + $0x16f0] sm:$0xff]
      %v4120 = vld [vmem:[%s11 + $0x16f8] sm:$0xff]
      %v4121 = vld [vmem:[%s11 + $0x1700] sm:$0xff]
      %v4122 = vld [vmem:[%s11 + $0x1708] sm:$0xff]
      %v4123 = vld [vmem:[%s11 + $0x1710] sm:$0xff]
      %v4124 = vld [vmem:[%s11 + $0x1718] sm:$0xff]
      %v4125 = vld [vmem:[%s11 + $0x1720] sm:$0xff]
      %v4126 = vld [vmem:[%s11 + $0x1728] sm:$0xff]
      %v4127 = vld [vmem:[%s11 + $0x1730] sm:$0xff]
      %v4128 = vld [vmem:[%s11 + $0x1738] sm:$0xff]
      %v4129 = vld [vmem:[%s11 + $0x1740] sm:$0xff]
      %v4130 = vld [vmem:[%s11 + $0x1748] sm:$0xff]
      %v4131 = vld [vmem:[%s11 + $0x1750] sm:$0xff]
      %v4132 = vld [vmem:[%s11 + $0x1758] sm:$0xff]
      %v4133 = vld [vmem:[%s11 + $0x1760] sm:$0xff]
      %v4134 = vld [vmem:[%s11 + $0x1768] sm:$0xff]
      %v4135 = vld [vmem:[%s11 + $0x1770] sm:$0xff]
      %v4136 = vld [vmem:[%s11 + $0x1778] sm:$0xff]
      %v4137 = vld [vmem:[%s11 + $0x1780] sm:$0xff]
      %v4138 = vld [vmem:[%s11 + $0x1788] sm:$0xff]
      %v4139 = vld [vmem:[%s11 + $0x1790] sm:$0xff]
      %v4140 = vld [vmem:[%s11 + $0x1798] sm:$0xff]
      %v4141 = vld [vmem:[%s11 + $0x17a0] sm:$0xff]
      %v4142 = vld [vmem:[%s11 + $0x17a8] sm:$0xff]
      %v4143 = vld [vmem:[%s11 + $0x17b0] sm:$0xff]
      %v4144 = vld [vmem:[%s11 + $0x17b8] sm:$0xff]
      %v4145 = vld [vmem:[%s11 + $0x17c0] sm:$0xff]
      %v4146 = vld [vmem:[%s11 + $0x17c8] sm:$0xff]
      %v4147 = vld [vmem:[%s11 + $0x17d0] sm:$0xff]
      %v4148 = vld [vmem:[%s11 + $0x17d8] sm:$0xff]
      %v4149 = vld [vmem:[%s11 + $0x17e0] sm:$0xff]
      %v4150 = vld [vmem:[%s11 + $0x17e8] sm:$0xff]
      %v4151 = vld [vmem:[%s11 + $0x17f0] sm:$0xff]
      %v4152 = vld [vmem:[%s11 + $0x17f8] sm:$0xff]
      %v4153 = vld [vmem:[%s11 + $0x1800] sm:$0xff]
      %v4154 = vld [vmem:[%s11 + $0x1808] sm:$0xff]
      %v4155 = vld [vmem:[%s11 + $0x1810] sm:$0xff]
      %v4156 = vld [vmem:[%s11 + $0x1818] sm:$0xff]
      %v4157 = vld [vmem:[%s11 + $0x1820] sm:$0xff]
      %v4158 = vld [vmem:[%s11 + $0x1828] sm:$0xff]
      %v4159 = vld [vmem:[%s11 + $0x1830] sm:$0xff]
      %v4160 = vld [vmem:[%s11 + $0x1838] sm:$0xff]
      %v4161 = vld [vmem:[%s11 + $0x1840] sm:$0xff]
      %v4162 = vld [vmem:[%s11 + $0x1848] sm:$0xff]
      %v4163 = vld [vmem:[%s11 + $0x1850] sm:$0xff]
      %v4164 = vld [vmem:[%s11 + $0x1858] sm:$0xff]
      %v4165 = vld [vmem:[%s11 + $0x1860] sm:$0xff]
      %v4166 = vld [vmem:[%s11 + $0x1868] sm:$0xff]
      %v4167 = vld [vmem:[%s11 + $0x1870] sm:$0xff]
      %v4168 = vld [vmem:[%s11 + $0x1878] sm:$0xff]
      %v4169 = vld [vmem:[%s11 + $0x1880] sm:$0xff]
      %v4170 = vld [vmem:[%s11 + $0x1888] sm:$0xff]
      %v4171 = vld [vmem:[%s11 + $0x1890] sm:$0xff]
      %v4172 = vld [vmem:[%s11 + $0x1898] sm:$0xff]
      %v4173 = vld [vmem:[%s11 + $0x18a0] sm:$0xff]
      %v4174 = vld [vmem:[%s11 + $0x18a8] sm:$0xff]
      %v4175 = vld [vmem:[%s11 + $0x18b0] sm:$0xff]
      %v4176 = vld [vmem:[%s11 + $0x18b8] sm:$0xff]
      %v4177 = vld [vmem:[%s11 + $0x18c0] sm:$0xff]
      %v4178 = vld [vmem:[%s11 + $0x18c8] sm:$0xff]
      %v4179 = vld [vmem:[%s11 + $0x18d0] sm:$0xff]
      %v4180 = vld [vmem:[%s11 + $0x18d8] sm:$0xff]
      %v4181 = vld [vmem:[%s11 + $0x18e0] sm:$0xff]
      %v4182 = vld [vmem:[%s11 + $0x18e8] sm:$0xff]
      %v4183 = vld [vmem:[%s11 + $0x18f0] sm:$0xff]
      %v4184 = vld [vmem:[%s11 + $0x18f8] sm:$0xff]
      %v4185 = vld [vmem:[%s11 + $0x1900] sm:$0xff]
      %v4186 = vld [vmem:[%s11 + $0x1908] sm:$0xff]
      %v4187 = vld [vmem:[%s11 + $0x1910] sm:$0xff]
      %v4188 = vld [vmem:[%s11 + $0x1918] sm:$0xff]
      %v4189 = vld [vmem:[%s11 + $0x1920] sm:$0xff]
      %v4190 = vld [vmem:[%s11 + $0x1928] sm:$0xff]
      %v4191 = vld [vmem:[%s11 + $0x1930] sm:$0xff]
      %v4192 = vld [vmem:[%s11 + $0x1938] sm:$0xff]
      %v4193 = vld [vmem:[%s11 + $0x1940] sm:$0xff]
      %v4194 = vld [vmem:[%s11 + $0x1948] sm:$0xff]
      %v4195 = vld [vmem:[%s11 + $0x1950] sm:$0xff]
      %v4196 = vld [vmem:[%s11 + $0x1958] sm:$0xff]
      %v4197 = vld [vmem:[%s11 + $0x1960] sm:$0xff]
      %v4198 = vld [vmem:[%s11 + $0x1968] sm:$0xff]
      %v4199 = vld [vmem:[%s11 + $0x1970] sm:$0xff]
      %v4200 = vld [vmem:[%s11 + $0x1978] sm:$0xff]
      %v4201 = vld [vmem:[%s11 + $0x1980] sm:$0xff]
      %v4202 = vld [vmem:[%s11 + $0x1988] sm:$0xff]
      %v4203 = vld [vmem:[%s11 + $0x1990] sm:$0xff]
      %v4204 = vld [vmem:[%s11 + $0x1998] sm:$0xff]
      %v4205 = vld [vmem:[%s11 + $0x19a0] sm:$0xff]
      %v4206 = vld [vmem:[%s11 + $0x19a8] sm:$0xff]
      %v4207 = vld [vmem:[%s11 + $0x19b0] sm:$0xff]
      %v4208 = vld [vmem:[%s11 + $0x19b8] sm:$0xff]
      %v4209 = vld [vmem:[%s11 + $0x19c0] sm:$0xff]
      %v4210 = vld [vmem:[%s11 + $0x19c8] sm:$0xff]
      %v4211 = vld [vmem:[%s11 + $0x19d0] sm:$0xff]
      %v4212 = vld [vmem:[%s11 + $0x19d8] sm:$0xff]
      %v4213 = vld [vmem:[%s11 + $0x19e0] sm:$0xff]
      %v4214 = vld [vmem:[%s11 + $0x19e8] sm:$0xff]
      %v4215 = vld [vmem:[%s11 + $0x19f0] sm:$0xff]
      %v4216 = vld [vmem:[%s11 + $0x19f8] sm:$0xff]
      %v4217 = vld [vmem:[%s11 + $0x1a00] sm:$0xff]
      %v4218 = vld [vmem:[%s11 + $0x1a08] sm:$0xff]
      %v4219 = vld [vmem:[%s11 + $0x1a10] sm:$0xff]
      %v4220 = vld [vmem:[%s11 + $0x1a18] sm:$0xff]
      %v4221 = vld [vmem:[%s11 + $0x1a20] sm:$0xff]
      %v4222 = vld [vmem:[%s11 + $0x1a28] sm:$0xff]
      %v4223 = vld [vmem:[%s11 + $0x1a30] sm:$0xff]
      %v4224 = vld [vmem:[%s11 + $0x1a38] sm:$0xff]
      %v4225 = vld [vmem:[%s11 + $0x1a40] sm:$0xff]
      %v4226 = vld [vmem:[%s11 + $0x1a48] sm:$0xff]
      %v4227 = vld [vmem:[%s11 + $0x1a50] sm:$0xff]
      %v4228 = vld [vmem:[%s11 + $0x1a58] sm:$0xff]
      %v4229 = vld [vmem:[%s11 + $0x1a60] sm:$0xff]
      %v4230 = vld [vmem:[%s11 + $0x1a68] sm:$0xff]
      %v4231 = vld [vmem:[%s11 + $0x1a70] sm:$0xff]
      %v4232 = vld [vmem:[%s11 + $0x1a78] sm:$0xff]
      %v4233 = vld [vmem:[%s11 + $0x1a80] sm:$0xff]
      %v4234 = vld [vmem:[%s11 + $0x1a88] sm:$0xff]
      %v4235 = vld [vmem:[%s11 + $0x1a90] sm:$0xff]
      %v4236 = vld [vmem:[%s11 + $0x1a98] sm:$0xff]
      %v4237 = vld [vmem:[%s11 + $0x1aa0] sm:$0xff]
      %v4238 = vld [vmem:[%s11 + $0x1aa8] sm:$0xff]
      %v4239 = vld [vmem:[%s11 + $0x1ab0] sm:$0xff]
      %v4240 = vld [vmem:[%s11 + $0x1ab8] sm:$0xff]
      %v4241 = vld [vmem:[%s11 + $0x1ac0] sm:$0xff]
      %v4242 = vld [vmem:[%s11 + $0x1ac8] sm:$0xff]
      %v4243 = vld [vmem:[%s11 + $0x1ad0] sm:$0xff]
      %v4244 = vld [vmem:[%s11 + $0x1ad8] sm:$0xff]
      %v4245 = vld [vmem:[%s11 + $0x1ae0] sm:$0xff]
      %v4246 = vld [vmem:[%s11 + $0x1ae8] sm:$0xff]
      %v4247 = vld [vmem:[%s11 + $0x1af0] sm:$0xff]
      %v4248 = vld [vmem:[%s11 + $0x1af8] sm:$0xff]
      %v4249 = vld [vmem:[%s11 + $0x1b00] sm:$0xff]
      %v4250 = vld [vmem:[%s11 + $0x1b08] sm:$0xff]
      %v4251 = vld [vmem:[%s11 + $0x1b10] sm:$0xff]
      %v4252 = vld [vmem:[%s11 + $0x1b18] sm:$0xff]
      %v4253 = vld [vmem:[%s11 + $0x1b20] sm:$0xff]
      %v4254 = vld [vmem:[%s11 + $0x1b28] sm:$0xff]
      %v4255 = vld [vmem:[%s11 + $0x1b30] sm:$0xff]
      %v4256 = vld [vmem:[%s11 + $0x1b38] sm:$0xff]
      %v4257 = vld [vmem:[%s11 + $0x1b40] sm:$0xff]
      %v4258 = vld [vmem:[%s11 + $0x1b48] sm:$0xff]
      %v4259 = vld [vmem:[%s11 + $0x1b50] sm:$0xff]
      %v4260 = vld [vmem:[%s11 + $0x1b58] sm:$0xff]
      %v4261 = vld [vmem:[%s11 + $0x1b60] sm:$0xff]
      %v4262 = vld [vmem:[%s11 + $0x1b68] sm:$0xff]
      %v4263 = vld [vmem:[%s11 + $0x1b70] sm:$0xff]
      %v4264 = vld [vmem:[%s11 + $0x1b78] sm:$0xff]
      %v4265 = vld [vmem:[%s11 + $0x1b80] sm:$0xff]
      %v4266 = vld [vmem:[%s11 + $0x1b88] sm:$0xff]
      %v4267 = vld [vmem:[%s11 + $0x1b90] sm:$0xff]
      %v4268 = vld [vmem:[%s11 + $0x1b98] sm:$0xff]
      %v4269 = vld [vmem:[%s11 + $0x1ba0] sm:$0xff]
      %v4270 = vld [vmem:[%s11 + $0x1ba8] sm:$0xff]
      %v4271 = vld [vmem:[%s11 + $0x1bb0] sm:$0xff]
      %v4272 = vld [vmem:[%s11 + $0x1bb8] sm:$0xff]
      %v4273 = vld [vmem:[%s11 + $0x1bc0] sm:$0xff]
      %v4274 = vld [vmem:[%s11 + $0x1bc8] sm:$0xff]
      %v4275 = vld [vmem:[%s11 + $0x1bd0] sm:$0xff]
      %v4276 = vld [vmem:[%s11 + $0x1bd8] sm:$0xff]
      %v4277 = vld [vmem:[%s11 + $0x1be0] sm:$0xff]
      %v4278 = vld [vmem:[%s11 + $0x1be8] sm:$0xff]
      %v4279 = vld [vmem:[%s11 + $0x1bf0] sm:$0xff]
      %v4280 = vld [vmem:[%s11 + $0x1bf8] sm:$0xff]
      %v4281 = vld [vmem:[%s11 + $0x1c00] sm:$0xff]
      %v4282 = vld [vmem:[%s11 + $0x1c08] sm:$0xff]
      %v4283 = vld [vmem:[%s11 + $0x1c10] sm:$0xff]
      %v4284 = vld [vmem:[%s11 + $0x1c18] sm:$0xff]
      %v4285 = vld [vmem:[%s11 + $0x1c20] sm:$0xff]
      %v4286 = vld [vmem:[%s11 + $0x1c28] sm:$0xff]
      %v4287 = vld [vmem:[%s11 + $0x1c30] sm:$0xff]
      %v4288 = vld [vmem:[%s11 + $0x1c38] sm:$0xff]
      %v4289 = vld [vmem:[%s11 + $0x1c40] sm:$0xff]
      %v4290 = vld [vmem:[%s11 + $0x1c48] sm:$0xff]
      %v4291 = vld [vmem:[%s11 + $0x1c50] sm:$0xff]
      %v4292 = vld [vmem:[%s11 + $0x1c58] sm:$0xff]
      %v4293 = vld [vmem:[%s11 + $0x1c60] sm:$0xff]
      %v4294 = vld [vmem:[%s11 + $0x1c68] sm:$0xff]
      %v4295 = vld [vmem:[%s11 + $0x1c70] sm:$0xff]
      %v4296 = vld [vmem:[%s11 + $0x1c78] sm:$0xff]
      %v4297 = vld [vmem:[%s11 + $0x1c80] sm:$0xff]
      %v4298 = vld [vmem:[%s11 + $0x1c88] sm:$0xff]
      %v4299 = vld [vmem:[%s11 + $0x1c90] sm:$0xff]
      %v4300 = vld [vmem:[%s11 + $0x1c98] sm:$0xff]
      %v4301 = vld [vmem:[%s11 + $0x1ca0] sm:$0xff]
      %v4302 = vld [vmem:[%s11 + $0x1ca8] sm:$0xff]
      %v4303 = vld [vmem:[%s11 + $0x1cb0] sm:$0xff]
      %v4304 = vld [vmem:[%s11 + $0x1cb8] sm:$0xff]
      %v4305 = vld [vmem:[%s11 + $0x1cc0] sm:$0xff]
      %v4306 = vld [vmem:[%s11 + $0x1cc8] sm:$0xff]
      %v4307 = vld [vmem:[%s11 + $0x1cd0] sm:$0xff]
      %v4308 = vld [vmem:[%s11 + $0x1cd8] sm:$0xff]
      %v4309 = vld [vmem:[%s11 + $0x1ce0] sm:$0xff]
      %v4310 = vld [vmem:[%s11 + $0x1ce8] sm:$0xff]
      %v4311 = vld [vmem:[%s11 + $0x1cf0] sm:$0xff]
      %v4312 = vld [vmem:[%s11 + $0x1cf8] sm:$0xff]
      %v4313 = vld [vmem:[%s11 + $0x1d00] sm:$0xff]
      %v4314 = vld [vmem:[%s11 + $0x1d08] sm:$0xff]
      %v4315 = vld [vmem:[%s11 + $0x1d10] sm:$0xff]
      %v4316 = vld [vmem:[%s11 + $0x1d18] sm:$0xff]
      %v4317 = vld [vmem:[%s11 + $0x1d20] sm:$0xff]
      %v4318 = vld [vmem:[%s11 + $0x1d28] sm:$0xff]
      %v4319 = vld [vmem:[%s11 + $0x1d30] sm:$0xff]
      %v4320 = vld [vmem:[%s11 + $0x1d38] sm:$0xff]
      %v4321 = vld [vmem:[%s11 + $0x1d40] sm:$0xff]
      %v4322 = vld [vmem:[%s11 + $0x1d48] sm:$0xff]
      %v4323 = vld [vmem:[%s11 + $0x1d50] sm:$0xff]
      %v4324 = vld [vmem:[%s11 + $0x1d58] sm:$0xff]
      %v4325 = vld [vmem:[%s11 + $0x1d60] sm:$0xff]
      %v4326 = vld [vmem:[%s11 + $0x1d68] sm:$0xff]
      %v4327 = vld [vmem:[%s11 + $0x1d70] sm:$0xff]
      %v4328 = vld [vmem:[%s11 + $0x1d78] sm:$0xff]
      %v4329 = vld [vmem:[%s11 + $0x1d80] sm:$0xff]
      %v4330 = vld [vmem:[%s11 + $0x1d88] sm:$0xff]
      %v4331 = vld [vmem:[%s11 + $0x1d90] sm:$0xff]
      %v4332 = vld [vmem:[%s11 + $0x1d98] sm:$0xff]
      %v4333 = vld [vmem:[%s11 + $0x1da0] sm:$0xff]
      %v4334 = vld [vmem:[%s11 + $0x1da8] sm:$0xff]
      %v4335 = vld [vmem:[%s11 + $0x1db0] sm:$0xff]
      %v4336 = vld [vmem:[%s11 + $0x1db8] sm:$0xff]
      %v4337 = vld [vmem:[%s11 + $0x1dc0] sm:$0xff]
      %v4338 = vld [vmem:[%s11 + $0x1dc8] sm:$0xff]
      %v4339 = vld [vmem:[%s11 + $0x1dd0] sm:$0xff]
      %v4340 = vld [vmem:[%s11 + $0x1dd8] sm:$0xff]
      %v4341 = vld [vmem:[%s11 + $0x1de0] sm:$0xff]
      %v4342 = vld [vmem:[%s11 + $0x1de8] sm:$0xff]
      %v4343 = vld [vmem:[%s11 + $0x1df0] sm:$0xff]
      %v4344 = vld [vmem:[%s11 + $0x1df8] sm:$0xff]
      %v4345 = vld [vmem:[%s11 + $0x1e00] sm:$0xff]
      %v4346 = vld [vmem:[%s11 + $0x1e08] sm:$0xff]
      %v4347 = vld [vmem:[%s11 + $0x1e10] sm:$0xff]
      %v4348 = vld [vmem:[%s11 + $0x1e18] sm:$0xff]
      %v4349 = vld [vmem:[%s11 + $0x1e20] sm:$0xff]
      %v4350 = vld [vmem:[%s11 + $0x1e28] sm:$0xff]
      %v4351 = vld [vmem:[%s11 + $0x1e30] sm:$0xff]
      %v4352 = vld [vmem:[%s11 + $0x1e38] sm:$0xff]
      %v4353 = vld [vmem:[%s11 + $0x1e40] sm:$0xff]
      %v4354 = vld [vmem:[%s11 + $0x1e48] sm:$0xff]
      %v4355 = vld [vmem:[%s11 + $0x1e50] sm:$0xff]
      %v4356 = vld [vmem:[%s11 + $0x1e58] sm:$0xff]
      %v4357 = vld [vmem:[%s11 + $0x1e60] sm:$0xff]
      %v4358 = vld [vmem:[%s11 + $0x1e68] sm:$0xff]
      %v4359 = vld [vmem:[%s11 + $0x1e70] sm:$0xff]
      %v4360 = vld [vmem:[%s11 + $0x1e78] sm:$0xff]
      %v4361 = vld [vmem:[%s11 + $0x1e80] sm:$0xff]
      %v4362 = vld [vmem:[%s11 + $0x1e88] sm:$0xff]
      %v4363 = vld [vmem:[%s11 + $0x1e90] sm:$0xff]
      %v4364 = vld [vmem:[%s11 + $0x1e98] sm:$0xff]
      %v4365 = vld [vmem:[%s11 + $0x1ea0] sm:$0xff]
      %v4366 = vld [vmem:[%s11 + $0x1ea8] sm:$0xff]
      %v4367 = vld [vmem:[%s11 + $0x1eb0] sm:$0xff]
      %v4368 = vld [vmem:[%s11 + $0x1eb8] sm:$0xff]
      %v4369 = vld [vmem:[%s11 + $0x1ec0] sm:$0xff]
      %v4370 = vld [vmem:[%s11 + $0x1ec8] sm:$0xff]
      %v4371 = vld [vmem:[%s11 + $0x1ed0] sm:$0xff]
      %v4372 = vld [vmem:[%s11 + $0x1ed8] sm:$0xff]
      %v4373 = vld [vmem:[%s11 + $0x1ee0] sm:$0xff]
      %v4374 = vld [vmem:[%s11 + $0x1ee8] sm:$0xff]
      %v4375 = vld [vmem:[%s11 + $0x1ef0] sm:$0xff]
      %v4376 = vld [vmem:[%s11 + $0x1ef8] sm:$0xff]
      %v4377 = vld [vmem:[%s11 + $0x1f00] sm:$0xff]
      %v4378 = vld [vmem:[%s11 + $0x1f08] sm:$0xff]
      %v4379 = vld [vmem:[%s11 + $0x1f10] sm:$0xff]
      %v4380 = vld [vmem:[%s11 + $0x1f18] sm:$0xff]
      %v4381 = vld [vmem:[%s11 + $0x1f20] sm:$0xff]
      %v4382 = vld [vmem:[%s11 + $0x1f28] sm:$0xff]
      %v4383 = vld [vmem:[%s11 + $0x1f30] sm:$0xff]
      %v4384 = vld [vmem:[%s11 + $0x1f38] sm:$0xff]
      %v4385 = vld [vmem:[%s11 + $0x1f40] sm:$0xff]
      %v4386 = vld [vmem:[%s11 + $0x1f48] sm:$0xff]
      %v4387 = vld [vmem:[%s11 + $0x1f50] sm:$0xff]
      %v4388 = vld [vmem:[%s11 + $0x1f58] sm:$0xff]
      %v4389 = vld [vmem:[%s11 + $0x1f60] sm:$0xff]
      %v4390 = vld [vmem:[%s11 + $0x1f68] sm:$0xff]
      %v4391 = vld [vmem:[%s11 + $0x1f70] sm:$0xff]
      %v4392 = vld [vmem:[%s11 + $0x1f78] sm:$0xff]
      %v4393 = vld [vmem:[%s11 + $0x1f80] sm:$0xff]
      %v4394 = vld [vmem:[%s11 + $0x1f88] sm:$0xff]
      %v4395 = vld [vmem:[%s11 + $0x1f90] sm:$0xff]
      %v4396 = vld [vmem:[%s11 + $0x1f98] sm:$0xff]
      %v4397 = vld [vmem:[%s11 + $0x1fa0] sm:$0xff]
      %v4398 = vld [vmem:[%s11 + $0x1fa8] sm:$0xff]
      %v4399 = vld [vmem:[%s11 + $0x1fb0] sm:$0xff]
      %v4400 = vld [vmem:[%s11 + $0x1fb8] sm:$0xff]
      %v4401 = vld [vmem:[%s11 + $0x1fc0] sm:$0xff]
      %v4402 = vld [vmem:[%s11 + $0x1fc8] sm:$0xff]
      %v4403 = vld [vmem:[%s11 + $0x1fd0] sm:$0xff]
      %v4404 = vld [vmem:[%s11 + $0x1fd8] sm:$0xff]
      %v4405 = vld [vmem:[%s11 + $0x1fe0] sm:$0xff]
      %v4406 = vld [vmem:[%s11 + $0x1fe8] sm:$0xff]
      %v4407 = vld [vmem:[%s11 + $0x1ff0] sm:$0xff]
      %v4408 = vld [vmem:[%s11 + $0x1ff8] sm:$0xff]
      %v4409 = vld [vmem:[%s11 + $0x2000] sm:$0xff]
      %v4410 = vld [vmem:[%s11 + $0x2008] sm:$0xff]
      %v4411 = vld [vmem:[%s11 + $0x2010] sm:$0xff]
      %v4412 = vld [vmem:[%s11 + $0x2018] sm:$0xff]
      %v4413 = vld [vmem:[%s11 + $0x2020] sm:$0xff]
      %v4414 = vld [vmem:[%s11 + $0x2028] sm:$0xff]
      %v4415 = vld [vmem:[%s11 + $0x2030] sm:$0xff]
      %v4416 = vld [vmem:[%s11 + $0x2038] sm:$0xff]
      %v4417 = vld [vmem:[%s11 + $0x2040] sm:$0xff]
      %v4418 = vld [vmem:[%s11 + $0x2048] sm:$0xff]
      %v4419 = vld [vmem:[%s11 + $0x2050] sm:$0xff]
      %v4420 = vld [vmem:[%s11 + $0x2058] sm:$0xff]
      %v4421 = vld [vmem:[%s11 + $0x2060] sm:$0xff]
      %v4422 = vld [vmem:[%s11 + $0x2068] sm:$0xff]
      %v4423 = vld [vmem:[%s11 + $0x2070] sm:$0xff]
      %v4424 = vld [vmem:[%s11 + $0x2078] sm:$0xff]
      %v4425 = vld [vmem:[%s11 + $0x2080] sm:$0xff]
      %v4426 = vld [vmem:[%s11 + $0x2088] sm:$0xff]
      %v4427 = vld [vmem:[%s11 + $0x2090] sm:$0xff]
      %v4428 = vld [vmem:[%s11 + $0x2098] sm:$0xff]
      %v4429 = vld [vmem:[%s11 + $0x20a0] sm:$0xff]
      %v4430 = vld [vmem:[%s11 + $0x20a8] sm:$0xff]
      %v4431 = vld [vmem:[%s11 + $0x20b0] sm:$0xff]
      %v4432 = vld [vmem:[%s11 + $0x20b8] sm:$0xff]
      %v4433 = vld [vmem:[%s11 + $0x20c0] sm:$0xff]
      %v4434 = vld [vmem:[%s11 + $0x20c8] sm:$0xff]
      %v4435 = vld [vmem:[%s11 + $0x20d0] sm:$0xff]
      %v4436 = vld [vmem:[%s11 + $0x20d8] sm:$0xff]
      %v4437 = vld [vmem:[%s11 + $0x20e0] sm:$0xff]
      %v4438 = vld [vmem:[%s11 + $0x20e8] sm:$0xff]
      %v4439 = vld [vmem:[%s11 + $0x20f0] sm:$0xff]
      %v4440 = vld [vmem:[%s11 + $0x20f8] sm:$0xff]
      %v4441 = vld [vmem:[%s11 + $0x2100] sm:$0xff]
      %v4442 = vld [vmem:[%s11 + $0x2108] sm:$0xff]
      %v4443 = vld [vmem:[%s11 + $0x2110] sm:$0xff]
      %v4444 = vld [vmem:[%s11 + $0x2118] sm:$0xff]
      %v4445 = vld [vmem:[%s11 + $0x2120] sm:$0xff]
      %v4446 = vld [vmem:[%s11 + $0x2128] sm:$0xff]
      %v4447 = vld [vmem:[%s11 + $0x2130] sm:$0xff]
      %v4448 = vld [vmem:[%s11 + $0x2138] sm:$0xff]
      %v4449 = vld [vmem:[%s11 + $0x2140] sm:$0xff]
      %v4450 = vld [vmem:[%s11 + $0x2148] sm:$0xff]
      %v4451 = vld [vmem:[%s11 + $0x2150] sm:$0xff]
      %v4452 = vld [vmem:[%s11 + $0x2158] sm:$0xff]
      %v4453 = vld [vmem:[%s11 + $0x2160] sm:$0xff]
      %v4454 = vld [vmem:[%s11 + $0x2168] sm:$0xff]
      %v4455 = vld [vmem:[%s11 + $0x2170] sm:$0xff]
      %v4456 = vld [vmem:[%s11 + $0x2178] sm:$0xff]
      %v4457 = vld [vmem:[%s11 + $0x2180] sm:$0xff]
      %v4458 = vld [vmem:[%s11 + $0x2188] sm:$0xff]
      %v4459 = vld [vmem:[%s11 + $0x2190] sm:$0xff]
      %v4460 = vld [vmem:[%s11 + $0x2198] sm:$0xff]
      %v4461 = vld [vmem:[%s11 + $0x21a0] sm:$0xff]
      %v4462 = vld [vmem:[%s11 + $0x21a8] sm:$0xff]
      %v4463 = vld [vmem:[%s11 + $0x21b0] sm:$0xff]
      %v4464 = vld [vmem:[%s11 + $0x21b8] sm:$0xff]
      %v4465 = vld [vmem:[%s11 + $0x21c0] sm:$0xff]
      %v4466 = vld [vmem:[%s11 + $0x21c8] sm:$0xff]
      %v4467 = vld [vmem:[%s11 + $0x21d0] sm:$0xff]
      %v4468 = vld [vmem:[%s11 + $0x21d8] sm:$0xff]
      %v4469 = vld [vmem:[%s11 + $0x21e0] sm:$0xff]
      %v4470 = vld [vmem:[%s11 + $0x21e8] sm:$0xff]
      %v4471 = vld [vmem:[%s11 + $0x21f0] sm:$0xff]
      %v4472 = vld [vmem:[%s11 + $0x21f8] sm:$0xff]
      %v4473 = vld [vmem:[%s11 + $0x2200] sm:$0xff]
      %v4474 = vld [vmem:[%s11 + $0x2208] sm:$0xff]
      %v4475 = vld [vmem:[%s11 + $0x2210] sm:$0xff]
      %v4476 = vld [vmem:[%s11 + $0x2218] sm:$0xff]
      %v4477 = vld [vmem:[%s11 + $0x2220] sm:$0xff]
      %v4478 = vld [vmem:[%s11 + $0x2228] sm:$0xff]
      %v4479 = vld [vmem:[%s11 + $0x2230] sm:$0xff]
      %v4480 = vld [vmem:[%s11 + $0x2238] sm:$0xff]
      %v4481 = vld [vmem:[%s11 + $0x2240] sm:$0xff]
      %v4482 = vld [vmem:[%s11 + $0x2248] sm:$0xff]
      %v4483 = vld [vmem:[%s11 + $0x2250] sm:$0xff]
      %v4484 = vld [vmem:[%s11 + $0x2258] sm:$0xff]
      %v4485 = vld [vmem:[%s11 + $0x2260] sm:$0xff]
      %v4486 = vld [vmem:[%s11 + $0x2268] sm:$0xff]
      %v4487 = vld [vmem:[%s11 + $0x2270] sm:$0xff]
      %v4488 = vld [vmem:[%s11 + $0x2278] sm:$0xff]
      %v4489 = vld [vmem:[%s11 + $0x2280] sm:$0xff]
      %v4490 = vld [vmem:[%s11 + $0x2288] sm:$0xff]
      %v4491 = vld [vmem:[%s11 + $0x2290] sm:$0xff]
      %v4492 = vld [vmem:[%s11 + $0x2298] sm:$0xff]
      %v4493 = vld [vmem:[%s11 + $0x22a0] sm:$0xff]
      %v4494 = vld [vmem:[%s11 + $0x22a8] sm:$0xff]
      %v4495 = vld [vmem:[%s11 + $0x22b0] sm:$0xff]
      %v4496 = vld [vmem:[%s11 + $0x22b8] sm:$0xff]
      %v4497 = vld [vmem:[%s11 + $0x22c0] sm:$0xff]
      %v4498 = vld [vmem:[%s11 + $0x22c8] sm:$0xff]
      %v4499 = vld [vmem:[%s11 + $0x22d0] sm:$0xff]
      %v4500 = vld [vmem:[%s11 + $0x22d8] sm:$0xff]
      %v4501 = vld [vmem:[%s11 + $0x22e0] sm:$0xff]
      %v4502 = vld [vmem:[%s11 + $0x22e8] sm:$0xff]
      %v4503 = vld [vmem:[%s11 + $0x22f0] sm:$0xff]
      %v4504 = vld [vmem:[%s11 + $0x22f8] sm:$0xff]
      %v4505 = vld [vmem:[%s11 + $0x2300] sm:$0xff]
      %v4506 = vld [vmem:[%s11 + $0x2308] sm:$0xff]
      %v4507 = vld [vmem:[%s11 + $0x2310] sm:$0xff]
      %v4508 = vld [vmem:[%s11 + $0x2318] sm:$0xff]
      %v4509 = vld [vmem:[%s11 + $0x2320] sm:$0xff]
      %v4510 = vld [vmem:[%s11 + $0x2328] sm:$0xff]
      %v4511 = vld [vmem:[%s11 + $0x2330] sm:$0xff]
      %v4512 = vld [vmem:[%s11 + $0x2338] sm:$0xff]
      %v4513 = vld [vmem:[%s11 + $0x2340] sm:$0xff]
      %v4514 = vld [vmem:[%s11 + $0x2348] sm:$0xff]
      %v4515 = vld [vmem:[%s11 + $0x2350] sm:$0xff]
      %v4516 = vld [vmem:[%s11 + $0x2358] sm:$0xff]
      %v4517 = vld [vmem:[%s11 + $0x2360] sm:$0xff]
      %v4518 = vld [vmem:[%s11 + $0x2368] sm:$0xff]
      %v4519 = vld [vmem:[%s11 + $0x2370] sm:$0xff]
      %v4520 = vld [vmem:[%s11 + $0x2378] sm:$0xff]
      %v4521 = vld [vmem:[%s11 + $0x2380] sm:$0xff]
      %v4522 = vld [vmem:[%s11 + $0x2388] sm:$0xff]
      %v4523 = vld [vmem:[%s11 + $0x2390] sm:$0xff]
      %v4524 = vld [vmem:[%s11 + $0x2398] sm:$0xff]
      %v4525 = vld [vmem:[%s11 + $0x23a0] sm:$0xff]
      %v4526 = vld [vmem:[%s11 + $0x23a8] sm:$0xff]
      %v4527 = vld [vmem:[%s11 + $0x23b0] sm:$0xff]
      %v4528 = vld [vmem:[%s11 + $0x23b8] sm:$0xff]
      %v4529 = vld [vmem:[%s11 + $0x23c0] sm:$0xff]
      %v4530 = vld [vmem:[%s11 + $0x23c8] sm:$0xff]
      %v4531 = vld [vmem:[%s11 + $0x23d0] sm:$0xff]
      %v4532 = vld [vmem:[%s11 + $0x23d8] sm:$0xff]
      %v4533 = vld [vmem:[%s11 + $0x23e0] sm:$0xff]
      %v4534 = vld [vmem:[%s11 + $0x23e8] sm:$0xff]
      %v4535 = vld [vmem:[%s11 + $0x23f0] sm:$0xff]
      %v4536 = vld [vmem:[%s11 + $0x23f8] sm:$0xff]
      %v4537 = vld [vmem:[%s11 + $0x2400] sm:$0xff]
      %v4538 = vld [vmem:[%s11 + $0x2408] sm:$0xff]
      %v4539 = vld [vmem:[%s11 + $0x2410] sm:$0xff]
      %v4540 = vld [vmem:[%s11 + $0x2418] sm:$0xff]
      %v4541 = vld [vmem:[%s11 + $0x2420] sm:$0xff]
      %v4542 = vld [vmem:[%s11 + $0x2428] sm:$0xff]
      %v4543 = vld [vmem:[%s11 + $0x2430] sm:$0xff]
      %v4544 = vld [vmem:[%s11 + $0x2438] sm:$0xff]
      %v4545 = vld [vmem:[%s11 + $0x2440] sm:$0xff]
      %v4546 = vld [vmem:[%s11 + $0x2448] sm:$0xff]
      %v4547 = vld [vmem:[%s11 + $0x2450] sm:$0xff]
      %v4548 = vld [vmem:[%s11 + $0x2458] sm:$0xff]
      %v4549 = vld [vmem:[%s11 + $0x2460] sm:$0xff]
      %v4550 = vld [vmem:[%s11 + $0x2468] sm:$0xff]
      %v4551 = vld [vmem:[%s11 + $0x2470] sm:$0xff]
      %v4552 = vld [vmem:[%s11 + $0x2478] sm:$0xff]
      %v4553 = vld [vmem:[%s11 + $0x2480] sm:$0xff]
      %v4554 = vld [vmem:[%s11 + $0x2488] sm:$0xff]
      %v4555 = vld [vmem:[%s11 + $0x2490] sm:$0xff]
      %v4556 = vld [vmem:[%s11 + $0x2498] sm:$0xff]
      %v4557 = vld [vmem:[%s11 + $0x24a0] sm:$0xff]
      %v4558 = vld [vmem:[%s11 + $0x24a8] sm:$0xff]
      %v4559 = vld [vmem:[%s11 + $0x24b0] sm:$0xff]
      %v4560 = vld [vmem:[%s11 + $0x24b8] sm:$0xff]
      %v4561 = vld [vmem:[%s11 + $0x24c0] sm:$0xff]
      %v4562 = vld [vmem:[%s11 + $0x24c8] sm:$0xff]
      %v4563 = vld [vmem:[%s11 + $0x24d0] sm:$0xff]
      %v4564 = vld [vmem:[%s11 + $0x24d8] sm:$0xff]
      %v4565 = vld [vmem:[%s11 + $0x24e0] sm:$0xff]
      %v4566 = vld [vmem:[%s11 + $0x24e8] sm:$0xff]
      %v4567 = vld [vmem:[%s11 + $0x24f0] sm:$0xff]
      %v4568 = vld [vmem:[%s11 + $0x24f8] sm:$0xff]
      %v4569 = vld [vmem:[%s11 + $0x2500] sm:$0xff]
      %v4570 = vld [vmem:[%s11 + $0x2508] sm:$0xff]
      %v4571 = vld [vmem:[%s11 + $0x2510] sm:$0xff]
      %v4572 = vld [vmem:[%s11 + $0x2518] sm:$0xff]
      %v4573 = vld [vmem:[%s11 + $0x2520] sm:$0xff]
      %v4574 = vld [vmem:[%s11 + $0x2528] sm:$0xff]
      %v4575 = vld [vmem:[%s11 + $0x2530] sm:$0xff]
      %v4576 = vld [vmem:[%s11 + $0x2538] sm:$0xff]
      %v4577 = vld [vmem:[%s11 + $0x2540] sm:$0xff]
      %v4578 = vld [vmem:[%s11 + $0x2548] sm:$0xff]
      %v4579 = vld [vmem:[%s11 + $0x2550] sm:$0xff]
      %v4580 = vld [vmem:[%s11 + $0x2558] sm:$0xff]
      %v4581 = vld [vmem:[%s11 + $0x2560] sm:$0xff]
      %v4582 = vld [vmem:[%s11 + $0x2568] sm:$0xff]
      %v4583 = vld [vmem:[%s11 + $0x2570] sm:$0xff]
      %v4584 = vld [vmem:[%s11 + $0x2578] sm:$0xff]
      %v4585 = vld [vmem:[%s11 + $0x2580] sm:$0xff]
      %v4586 = vld [vmem:[%s11 + $0x2588] sm:$0xff]
      %v4587 = vld [vmem:[%s11 + $0x2590] sm:$0xff]
      %v4588 = vld [vmem:[%s11 + $0x2598] sm:$0xff]
      %v4589 = vld [vmem:[%s11 + $0x25a0] sm:$0xff]
      %v4590 = vld [vmem:[%s11 + $0x25a8] sm:$0xff]
      %v4591 = vld [vmem:[%s11 + $0x25b0] sm:$0xff]
      %v4592 = vld [vmem:[%s11 + $0x25b8] sm:$0xff]
      %v4593 = vld [vmem:[%s11 + $0x25c0] sm:$0xff]
      %v4594 = vld [vmem:[%s11 + $0x25c8] sm:$0xff]
      %v4595 = vld [vmem:[%s11 + $0x25d0] sm:$0xff]
      %v4596 = vld [vmem:[%s11 + $0x25d8] sm:$0xff]
      %v4597 = vld [vmem:[%s11 + $0x25e0] sm:$0xff]
      %v4598 = vld [vmem:[%s11 + $0x25e8] sm:$0xff]
      %v4599 = vld [vmem:[%s11 + $0x25f0] sm:$0xff]
      %v4600 = vld [vmem:[%s11 + $0x25f8] sm:$0xff]
      %v4601 = vld [vmem:[%s11 + $0x2600] sm:$0xff]
      %v4602 = vld [vmem:[%s11 + $0x2608] sm:$0xff]
      %v4603 = vld [vmem:[%s11 + $0x2610] sm:$0xff]
      %v4604 = vld [vmem:[%s11 + $0x2618] sm:$0xff]
      %v4605 = vld [vmem:[%s11 + $0x2620] sm:$0xff]
      %v4606 = vld [vmem:[%s11 + $0x2628] sm:$0xff]
      %v4607 = vld [vmem:[%s11 + $0x2630] sm:$0xff]
      %v4608 = vld [vmem:[%s11 + $0x2638] sm:$0xff]
      %v4609 = vld [vmem:[%s11 + $0x2640] sm:$0xff]
      %v4610 = vld [vmem:[%s11 + $0x2648] sm:$0xff]
      %v4611 = vld [vmem:[%s11 + $0x2650] sm:$0xff]
      %v4612 = vld [vmem:[%s11 + $0x2658] sm:$0xff]
      %v4613 = vld [vmem:[%s11 + $0x2660] sm:$0xff]
      %v4614 = vld [vmem:[%s11 + $0x2668] sm:$0xff]
      %v4615 = vld [vmem:[%s11 + $0x2670] sm:$0xff]
      %v4616 = vld [vmem:[%s11 + $0x2678] sm:$0xff]
      %v4617 = vld [vmem:[%s11 + $0x2680] sm:$0xff]
      %v4618 = vld [vmem:[%s11 + $0x2688] sm:$0xff]
      %v4619 = vld [vmem:[%s11 + $0x2690] sm:$0xff]
      %v4620 = vld [vmem:[%s11 + $0x2698] sm:$0xff]
      %v4621 = vld [vmem:[%s11 + $0x26a0] sm:$0xff]
      %v4622 = vld [vmem:[%s11 + $0x26a8] sm:$0xff]
      %v4623 = vld [vmem:[%s11 + $0x26b0] sm:$0xff]
      %v4624 = vld [vmem:[%s11 + $0x26b8] sm:$0xff]
      %v4625 = vld [vmem:[%s11 + $0x26c0] sm:$0xff]
      %v4626 = vld [vmem:[%s11 + $0x26c8] sm:$0xff]
      %v4627 = vld [vmem:[%s11 + $0x26d0] sm:$0xff]
      %v4628 = vld [vmem:[%s11 + $0x26d8] sm:$0xff]
      %v4629 = vld [vmem:[%s11 + $0x26e0] sm:$0xff]
      %v4630 = vld [vmem:[%s11 + $0x26e8] sm:$0xff]
      %v4631 = vld [vmem:[%s11 + $0x26f0] sm:$0xff]
      %v4632 = vld [vmem:[%s11 + $0x26f8] sm:$0xff]
      %v4633 = vld [vmem:[%s11 + $0x2700] sm:$0xff]
      %v4634 = vld [vmem:[%s11 + $0x2708] sm:$0xff]
      %v4635 = vld [vmem:[%s11 + $0x2710] sm:$0xff]
      %v4636 = vld [vmem:[%s11 + $0x2718] sm:$0xff]
      %v4637 = vld [vmem:[%s11 + $0x2720] sm:$0xff]
      %v4638 = vld [vmem:[%s11 + $0x2728] sm:$0xff]
      %v4639 = vld [vmem:[%s11 + $0x2730] sm:$0xff]
      %v4640 = vld [vmem:[%s11 + $0x2738] sm:$0xff]
      %v4641 = vld [vmem:[%s11 + $0x2740] sm:$0xff]
      %v4642 = vld [vmem:[%s11 + $0x2748] sm:$0xff]
      %v4643 = vld [vmem:[%s11 + $0x2750] sm:$0xff]
      %v4644 = vld [vmem:[%s11 + $0x2758] sm:$0xff]
      %v4645 = vld [vmem:[%s11 + $0x2760] sm:$0xff]
      %v4646 = vld [vmem:[%s11 + $0x2768] sm:$0xff]
      %v4647 = vld [vmem:[%s11 + $0x2770] sm:$0xff]
      %v4648 = vld [vmem:[%s11 + $0x2778] sm:$0xff]
      %v4649 = vld [vmem:[%s11 + $0x2780] sm:$0xff]
      %v4650 = vld [vmem:[%s11 + $0x2788] sm:$0xff]
      %v4651 = vld [vmem:[%s11 + $0x2790] sm:$0xff]
      %v4652 = vld [vmem:[%s11 + $0x2798] sm:$0xff]
      %v4653 = vld [vmem:[%s11 + $0x27a0] sm:$0xff]
      %v4654 = vld [vmem:[%s11 + $0x27a8] sm:$0xff]
      %v4655 = vld [vmem:[%s11 + $0x27b0] sm:$0xff]
      %v4656 = vld [vmem:[%s11 + $0x27b8] sm:$0xff]
      %v4657 = vld [vmem:[%s11 + $0x27c0] sm:$0xff]
      %v4658 = vld [vmem:[%s11 + $0x27c8] sm:$0xff]
      %v4659 = vld [vmem:[%s11 + $0x27d0] sm:$0xff]
      %v4660 = vld [vmem:[%s11 + $0x27d8] sm:$0xff]
      %v4661 = vld [vmem:[%s11 + $0x27e0] sm:$0xff]
      %v4662 = vld [vmem:[%s11 + $0x27e8] sm:$0xff]
      %v4663 = vld [vmem:[%s11 + $0x27f0] sm:$0xff]
      %v4664 = vld [vmem:[%s11 + $0x27f8] sm:$0xff]
      %v4665 = vld [vmem:[%s11 + $0x2800] sm:$0xff]
      %v4666 = vld [vmem:[%s11 + $0x2808] sm:$0xff]
      %v4667 = vld [vmem:[%s11 + $0x2810] sm:$0xff]
      %v4668 = vld [vmem:[%s11 + $0x2818] sm:$0xff]
      %v4669 = vld [vmem:[%s11 + $0x2820] sm:$0xff]
      %v4670 = vld [vmem:[%s11 + $0x2828] sm:$0xff]
      %v4671 = vld [vmem:[%s11 + $0x2830] sm:$0xff]
      %v4672 = vld [vmem:[%s11 + $0x2838] sm:$0xff]
      %v4673 = vld [vmem:[%s11 + $0x2840] sm:$0xff]
      %v4674 = vld [vmem:[%s11 + $0x2848] sm:$0xff]
      %v4675 = vld [vmem:[%s11 + $0x2850] sm:$0xff]
      %v4676 = vld [vmem:[%s11 + $0x2858] sm:$0xff]
      %v4677 = vld [vmem:[%s11 + $0x2860] sm:$0xff]
      %v4678 = vld [vmem:[%s11 + $0x2868] sm:$0xff]
      %v4679 = vld [vmem:[%s11 + $0x2870] sm:$0xff]
      %v4680 = vld [vmem:[%s11 + $0x2878] sm:$0xff]
      %v4681 = vld [vmem:[%s11 + $0x2880] sm:$0xff]
      %v4682 = vld [vmem:[%s11 + $0x2888] sm:$0xff]
      %v4683 = vld [vmem:[%s11 + $0x2890] sm:$0xff]
      %v4684 = vld [vmem:[%s11 + $0x2898] sm:$0xff]
      %v4685 = vld [vmem:[%s11 + $0x28a0] sm:$0xff]
      %v4686 = vld [vmem:[%s11 + $0x28a8] sm:$0xff]
      %v4687 = vld [vmem:[%s11 + $0x28b0] sm:$0xff]
      %v4688 = vld [vmem:[%s11 + $0x28b8] sm:$0xff]
      %v4689 = vld [vmem:[%s11 + $0x28c0] sm:$0xff]
      %v4690 = vld [vmem:[%s11 + $0x28c8] sm:$0xff]
      %v4691 = vld [vmem:[%s11 + $0x28d0] sm:$0xff]
      %v4692 = vld [vmem:[%s11 + $0x28d8] sm:$0xff]
      %v4693 = vld [vmem:[%s11 + $0x28e0] sm:$0xff]
      %v4694 = vld [vmem:[%s11 + $0x28e8] sm:$0xff]
      %v4695 = vld [vmem:[%s11 + $0x28f0] sm:$0xff]
      %v4696 = vld [vmem:[%s11 + $0x28f8] sm:$0xff]
      %v4697 = vld [vmem:[%s11 + $0x2900] sm:$0xff]
      %v4698 = vld [vmem:[%s11 + $0x2908] sm:$0xff]
      %v4699 = vld [vmem:[%s11 + $0x2910] sm:$0xff]
      %v4700 = vld [vmem:[%s11 + $0x2918] sm:$0xff]
      %v4701 = vld [vmem:[%s11 + $0x2920] sm:$0xff]
      %v4702 = vld [vmem:[%s11 + $0x2928] sm:$0xff]
      %v4703 = vld [vmem:[%s11 + $0x2930] sm:$0xff]
      %v4704 = vld [vmem:[%s11 + $0x2938] sm:$0xff]
      %v4705 = vld [vmem:[%s11 + $0x2940] sm:$0xff]
      %v4706 = vld [vmem:[%s11 + $0x2948] sm:$0xff]
      %v4707 = vld [vmem:[%s11 + $0x2950] sm:$0xff]
      %v4708 = vld [vmem:[%s11 + $0x2958] sm:$0xff]
      %v4709 = vld [vmem:[%s11 + $0x2960] sm:$0xff]
      %v4710 = vld [vmem:[%s11 + $0x2968] sm:$0xff]
      %v4711 = vld [vmem:[%s11 + $0x2970] sm:$0xff]
      %v4712 = vld [vmem:[%s11 + $0x2978] sm:$0xff]
      %v4713 = vld [vmem:[%s11 + $0x2980] sm:$0xff]
      %v4714 = vld [vmem:[%s11 + $0x2988] sm:$0xff]
      %v4715 = vld [vmem:[%s11 + $0x2990] sm:$0xff]
      %v4716 = vld [vmem:[%s11 + $0x2998] sm:$0xff]
      %v4717 = vld [vmem:[%s11 + $0x29a0] sm:$0xff]
      %v4718 = vld [vmem:[%s11 + $0x29a8] sm:$0xff]
      %v4719 = vld [vmem:[%s11 + $0x29b0] sm:$0xff]
      %v4720 = vld [vmem:[%s11 + $0x29b8] sm:$0xff]
      %v4721 = vld [vmem:[%s11 + $0x29c0] sm:$0xff]
      %v4722 = vld [vmem:[%s11 + $0x29c8] sm:$0xff]
      %v4723 = vld [vmem:[%s11 + $0x29d0] sm:$0xff]
      %v4724 = vld [vmem:[%s11 + $0x29d8] sm:$0xff]
      %v4725 = vld [vmem:[%s11 + $0x29e0] sm:$0xff]
      %v4726 = vld [vmem:[%s11 + $0x29e8] sm:$0xff]
      %v4727 = vld [vmem:[%s11 + $0x29f0] sm:$0xff]
      %v4728 = vld [vmem:[%s11 + $0x29f8] sm:$0xff]
      %v4729 = vld [vmem:[%s11 + $0x2a00] sm:$0xff]
      %v4730 = vld [vmem:[%s11 + $0x2a08] sm:$0xff]
      %v4731 = vld [vmem:[%s11 + $0x2a10] sm:$0xff]
      %v4732 = vld [vmem:[%s11 + $0x2a18] sm:$0xff]
      %v4733 = vld [vmem:[%s11 + $0x2a20] sm:$0xff]
      %v4734 = vld [vmem:[%s11 + $0x2a28] sm:$0xff]
      %v4735 = vld [vmem:[%s11 + $0x2a30] sm:$0xff]
      %v4736 = vld [vmem:[%s11 + $0x2a38] sm:$0xff]
      %v4737 = vld [vmem:[%s11 + $0x2a40] sm:$0xff]
      %v4738 = vld [vmem:[%s11 + $0x2a48] sm:$0xff]
      %v4739 = vld [vmem:[%s11 + $0x2a50] sm:$0xff]
      %v4740 = vld [vmem:[%s11 + $0x2a58] sm:$0xff]
      %v4741 = vld [vmem:[%s11 + $0x2a60] sm:$0xff]
      %v4742 = vld [vmem:[%s11 + $0x2a68] sm:$0xff]
      %v4743 = vld [vmem:[%s11 + $0x2a70] sm:$0xff]
      %v4744 = vld [vmem:[%s11 + $0x2a78] sm:$0xff]
      %v4745 = vld [vmem:[%s11 + $0x2a80] sm:$0xff]
      %v4746 = vld [vmem:[%s11 + $0x2a88] sm:$0xff]
      %v4747 = vld [vmem:[%s11 + $0x2a90] sm:$0xff]
      %v4748 = vld [vmem:[%s11 + $0x2a98] sm:$0xff]
      %v4749 = vld [vmem:[%s11 + $0x2aa0] sm:$0xff]
      %v4750 = vld [vmem:[%s11 + $0x2aa8] sm:$0xff]
      %v4751 = vld [vmem:[%s11 + $0x2ab0] sm:$0xff]
      %v4752 = vld [vmem:[%s11 + $0x2ab8] sm:$0xff]
      %v4753 = vld [vmem:[%s11 + $0x2ac0] sm:$0xff]
      %v4754 = vld [vmem:[%s11 + $0x2ac8] sm:$0xff]
      %v4755 = vld [vmem:[%s11 + $0x2ad0] sm:$0xff]
      %v4756 = vld [vmem:[%s11 + $0x2ad8] sm:$0xff]
      %v4757 = vld [vmem:[%s11 + $0x2ae0] sm:$0xff]
      %v4758 = vld [vmem:[%s11 + $0x2ae8] sm:$0xff]
      %v4759 = vld [vmem:[%s11 + $0x2af0] sm:$0xff]
      %v4760 = vld [vmem:[%s11 + $0x2af8] sm:$0xff]
      %v4761 = vld [vmem:[%s11 + $0x2b00] sm:$0xff]
      %v4762 = vld [vmem:[%s11 + $0x2b08] sm:$0xff]
      %v4763 = vld [vmem:[%s11 + $0x2b10] sm:$0xff]
      %v4764 = vld [vmem:[%s11 + $0x2b18] sm:$0xff]
      %v4765 = vld [vmem:[%s11 + $0x2b20] sm:$0xff]
      %v4766 = vld [vmem:[%s11 + $0x2b28] sm:$0xff]
      %v4767 = vld [vmem:[%s11 + $0x2b30] sm:$0xff]
      %v4768 = vld [vmem:[%s11 + $0x2b38] sm:$0xff]
      %v4769 = vld [vmem:[%s11 + $0x2b40] sm:$0xff]
      %v4770 = vld [vmem:[%s11 + $0x2b48] sm:$0xff]
      %v4771 = vld [vmem:[%s11 + $0x2b50] sm:$0xff]
      %v4772 = vld [vmem:[%s11 + $0x2b58] sm:$0xff]
      %v4773 = vld [vmem:[%s11 + $0x2b60] sm:$0xff]
      %v4774 = vld [vmem:[%s11 + $0x2b68] sm:$0xff]
      %v4775 = vld [vmem:[%s11 + $0x2b70] sm:$0xff]
      %v4776 = vld [vmem:[%s11 + $0x2b78] sm:$0xff]
      %v4777 = vld [vmem:[%s11 + $0x2b80] sm:$0xff]
      %v4778 = vld [vmem:[%s11 + $0x2b88] sm:$0xff]
      %v4779 = vld [vmem:[%s11 + $0x2b90] sm:$0xff]
      %v4780 = vld [vmem:[%s11 + $0x2b98] sm:$0xff]
      %v4781 = vld [vmem:[%s11 + $0x2ba0] sm:$0xff]
      %v4782 = vld [vmem:[%s11 + $0x2ba8] sm:$0xff]
      %v4783 = vld [vmem:[%s11 + $0x2bb0] sm:$0xff]
      %v4784 = vld [vmem:[%s11 + $0x2bb8] sm:$0xff]
      %v4785 = vld [vmem:[%s11 + $0x2bc0] sm:$0xff]
      %v4786 = vld [vmem:[%s11 + $0x2bc8] sm:$0xff]
      %v4787 = vld [vmem:[%s11 + $0x2bd0] sm:$0xff]
      %v4788 = vld [vmem:[%s11 + $0x2bd8] sm:$0xff]
      %v4789 = vld [vmem:[%s11 + $0x2be0] sm:$0xff]
      %v4790 = vld [vmem:[%s11 + $0x2be8] sm:$0xff]
      %v4791 = vld [vmem:[%s11 + $0x2bf0] sm:$0xff]
      %v4792 = vld [vmem:[%s11 + $0x2bf8] sm:$0xff]
      %v4793 = vld [vmem:[%s11 + $0x2c00] sm:$0xff]
      %v4794 = vld [vmem:[%s11 + $0x2c08] sm:$0xff]
      %v4795 = vld [vmem:[%s11 + $0x2c10] sm:$0xff]
      %v4796 = vld [vmem:[%s11 + $0x2c18] sm:$0xff]
      %v4797 = vld [vmem:[%s11 + $0x2c20] sm:$0xff]
      %v4798 = vld [vmem:[%s11 + $0x2c28] sm:$0xff]
      %v4799 = vld [vmem:[%s11 + $0x2c30] sm:$0xff]
      %v4800 = vld [vmem:[%s11 + $0x2c38] sm:$0xff]
      %v4801 = vld [vmem:[%s11 + $0x2c40] sm:$0xff]
      %v4802 = vld [vmem:[%s11 + $0x2c48] sm:$0xff]
      %v4803 = vld [vmem:[%s11 + $0x2c50] sm:$0xff]
      %v4804 = vld [vmem:[%s11 + $0x2c58] sm:$0xff]
      %v4805 = vld [vmem:[%s11 + $0x2c60] sm:$0xff]
      %v4806 = vld [vmem:[%s11 + $0x2c68] sm:$0xff]
      %v4807 = vld [vmem:[%s11 + $0x2c70] sm:$0xff]
      %v4808 = vld [vmem:[%s11 + $0x2c78] sm:$0xff]
      %v4809 = vld [vmem:[%s11 + $0x2c80] sm:$0xff]
      %v4810 = vld [vmem:[%s11 + $0x2c88] sm:$0xff]
      %v4811 = vld [vmem:[%s11 + $0x2c90] sm:$0xff]
      %v4812 = vld [vmem:[%s11 + $0x2c98] sm:$0xff]
      %v4813 = vld [vmem:[%s11 + $0x2ca0] sm:$0xff]
      %v4814 = vld [vmem:[%s11 + $0x2ca8] sm:$0xff]
      %v4815 = vld [vmem:[%s11 + $0x2cb0] sm:$0xff]
      %v4816 = vld [vmem:[%s11 + $0x2cb8] sm:$0xff]
      %v4817 = vld [vmem:[%s11 + $0x2cc0] sm:$0xff]
      %v4818 = vld [vmem:[%s11 + $0x2cc8] sm:$0xff]
      %v4819 = vld [vmem:[%s11 + $0x2cd0] sm:$0xff]
      %v4820 = vld [vmem:[%s11 + $0x2cd8] sm:$0xff]
      %v4821 = vld [vmem:[%s11 + $0x2ce0] sm:$0xff]
      %v4822 = vld [vmem:[%s11 + $0x2ce8] sm:$0xff]
      %v4823 = vld [vmem:[%s11 + $0x2cf0] sm:$0xff]
      %v4824 = vld [vmem:[%s11 + $0x2cf8] sm:$0xff]
      %v4825 = vld [vmem:[%s11 + $0x2d00] sm:$0xff]
      %v4826 = vld [vmem:[%s11 + $0x2d08] sm:$0xff]
      %v4827 = vld [vmem:[%s11 + $0x2d10] sm:$0xff]
      %v4828 = vld [vmem:[%s11 + $0x2d18] sm:$0xff]
      %v4829 = vld [vmem:[%s11 + $0x2d20] sm:$0xff]
      %v4830 = vld [vmem:[%s11 + $0x2d28] sm:$0xff]
      %v4831 = vld [vmem:[%s11 + $0x2d30] sm:$0xff]
      %v4832 = vld [vmem:[%s11 + $0x2d38] sm:$0xff]
      %v4833 = vld [vmem:[%s11 + $0x2d40] sm:$0xff]
      %v4834 = vld [vmem:[%s11 + $0x2d48] sm:$0xff]
      %v4835 = vld [vmem:[%s11 + $0x2d50] sm:$0xff]
      %v4836 = vld [vmem:[%s11 + $0x2d58] sm:$0xff]
      %v4837 = vld [vmem:[%s11 + $0x2d60] sm:$0xff]
      %v4838 = vld [vmem:[%s11 + $0x2d68] sm:$0xff]
      %v4839 = vld [vmem:[%s11 + $0x2d70] sm:$0xff]
      %v4840 = vld [vmem:[%s11 + $0x2d78] sm:$0xff]
      %v4841 = vld [vmem:[%s11 + $0x2d80] sm:$0xff]
      %v4842 = vld [vmem:[%s11 + $0x2d88] sm:$0xff]
      %v4843 = vld [vmem:[%s11 + $0x2d90] sm:$0xff]
      %v4844 = vld [vmem:[%s11 + $0x2d98] sm:$0xff]
      %v4845 = vld [vmem:[%s11 + $0x2da0] sm:$0xff]
      %v4846 = vld [vmem:[%s11 + $0x2da8] sm:$0xff]
      %v4847 = vld [vmem:[%s11 + $0x2db0] sm:$0xff]
      %v4848 = vld [vmem:[%s11 + $0x2db8] sm:$0xff]
      %v4849 = vld [vmem:[%s11 + $0x2dc0] sm:$0xff]
      %v4850 = vld [vmem:[%s11 + $0x2dc8] sm:$0xff]
      %v4851 = vld [vmem:[%s11 + $0x2dd0] sm:$0xff]
      %v4852 = vld [vmem:[%s11 + $0x2dd8] sm:$0xff]
      %v4853 = vld [vmem:[%s11 + $0x2de0] sm:$0xff]
      %v4854 = vld [vmem:[%s11 + $0x2de8] sm:$0xff]
      %v4855 = vld [vmem:[%s11 + $0x2df0] sm:$0xff]
      %v4856 = vld [vmem:[%s11 + $0x2df8] sm:$0xff]
      %v4857 = vld [vmem:[%s11 + $0x2e00] sm:$0xff]
      %v4858 = vld [vmem:[%s11 + $0x2e08] sm:$0xff]
      %v4859 = vld [vmem:[%s11 + $0x2e10] sm:$0xff]
      %v4860 = vld [vmem:[%s11 + $0x2e18] sm:$0xff]
      %v4861 = vld [vmem:[%s11 + $0x2e20] sm:$0xff]
      %v4862 = vld [vmem:[%s11 + $0x2e28] sm:$0xff]
      %v4863 = vld [vmem:[%s11 + $0x2e30] sm:$0xff]
      %v4864 = vld [vmem:[%s11 + $0x2e38] sm:$0xff]
      %v4865 = vld [vmem:[%s11 + $0x2e40] sm:$0xff]
      %v4866 = vld [vmem:[%s11 + $0x2e48] sm:$0xff]
      %v4867 = vld [vmem:[%s11 + $0x2e50] sm:$0xff]
      %v4868 = vld [vmem:[%s11 + $0x2e58] sm:$0xff]
      %v4869 = vld [vmem:[%s11 + $0x2e60] sm:$0xff]
      %v4870 = vld [vmem:[%s11 + $0x2e68] sm:$0xff]
      %v4871 = vld [vmem:[%s11 + $0x2e70] sm:$0xff]
      %v4872 = vld [vmem:[%s11 + $0x2e78] sm:$0xff]
      %v4873 = vld [vmem:[%s11 + $0x2e80] sm:$0xff]
      %v4874 = vld [vmem:[%s11 + $0x2e88] sm:$0xff]
      %v4875 = vld [vmem:[%s11 + $0x2e90] sm:$0xff]
      %v4876 = vld [vmem:[%s11 + $0x2e98] sm:$0xff]
      %v4877 = vld [vmem:[%s11 + $0x2ea0] sm:$0xff]
      %v4878 = vld [vmem:[%s11 + $0x2ea8] sm:$0xff]
      %v4879 = vld [vmem:[%s11 + $0x2eb0] sm:$0xff]
      %v4880 = vld [vmem:[%s11 + $0x2eb8] sm:$0xff]
      %v4881 = vld [vmem:[%s11 + $0x2ec0] sm:$0xff]
      %v4882 = vld [vmem:[%s11 + $0x2ec8] sm:$0xff]
      %v4883 = vld [vmem:[%s11 + $0x2ed0] sm:$0xff]
      %v4884 = vld [vmem:[%s11 + $0x2ed8] sm:$0xff]
      %v4885 = vld [vmem:[%s11 + $0x2ee0] sm:$0xff]
      %v4886 = vld [vmem:[%s11 + $0x2ee8] sm:$0xff]
      %v4887 = vld [vmem:[%s11 + $0x2ef0] sm:$0xff]
      %v4888 = vld [vmem:[%s11 + $0x2ef8] sm:$0xff]
      %v4889 = vld [vmem:[%s11 + $0x2f00] sm:$0xff]
      %v4890 = vld [vmem:[%s11 + $0x2f08] sm:$0xff]
      %v4891 = vld [vmem:[%s11 + $0x2f10] sm:$0xff]
      %v4892 = vld [vmem:[%s11 + $0x2f18] sm:$0xff]
      %v4893 = vld [vmem:[%s11 + $0x2f20] sm:$0xff]
      %v4894 = vld [vmem:[%s11 + $0x2f28] sm:$0xff]
      %v4895 = vld [vmem:[%s11 + $0x2f30] sm:$0xff]
      %v4896 = vld [vmem:[%s11 + $0x2f38] sm:$0xff]
      %v4897 = vld [vmem:[%s11 + $0x2f40] sm:$0xff]
      %v4898 = vld [vmem:[%s11 + $0x2f48] sm:$0xff]
      %v4899 = vld [vmem:[%s11 + $0x2f50] sm:$0xff]
      %v4900 = vld [vmem:[%s11 + $0x2f58] sm:$0xff]
      %v4901 = vld [vmem:[%s11 + $0x2f60] sm:$0xff]
      %v4902 = vld [vmem:[%s11 + $0x2f68] sm:$0xff]
      %v4903 = vld [vmem:[%s11 + $0x2f70] sm:$0xff]
      %v4904 = vld [vmem:[%s11 + $0x2f78] sm:$0xff]
      %v4905 = vld [vmem:[%s11 + $0x2f80] sm:$0xff]
      %v4906 = vld [vmem:[%s11 + $0x2f88] sm:$0xff]
      %v4907 = vld [vmem:[%s11 + $0x2f90] sm:$0xff]
      %v4908 = vld [vmem:[%s11 + $0x2f98] sm:$0xff]
      %v4909 = vld [vmem:[%s11 + $0x2fa0] sm:$0xff]
      %v4910 = vld [vmem:[%s11 + $0x2fa8] sm:$0xff]
      %v4911 = vld [vmem:[%s11 + $0x2fb0] sm:$0xff]
      %v4912 = vld [vmem:[%s11 + $0x2fb8] sm:$0xff]
      %v4913 = vld [vmem:[%s11 + $0x2fc0] sm:$0xff]
      %v4914 = vld [vmem:[%s11 + $0x2fc8] sm:$0xff]
      %v4915 = vld [vmem:[%s11 + $0x2fd0] sm:$0xff]
      %v4916 = vld [vmem:[%s11 + $0x2fd8] sm:$0xff]
      %v4917 = vld [vmem:[%s11 + $0x2fe0] sm:$0xff]
      %v4918 = vld [vmem:[%s11 + $0x2fe8] sm:$0xff]
      %v4919 = vld [vmem:[%s11 + $0x2ff0] sm:$0xff]
      %v4920 = vld [vmem:[%s11 + $0x2ff8] sm:$0xff]
      %v4921 = vld [vmem:[%s11 + $0x3000] sm:$0xff]
      %v4922 = vld [vmem:[%s11 + $0x3008] sm:$0xff]
      %v4923 = vld [vmem:[%s11 + $0x3010] sm:$0xff]
      %v4924 = vld [vmem:[%s11 + $0x3018] sm:$0xff]
      %v4925 = vld [vmem:[%s11 + $0x3020] sm:$0xff]
      %v4926 = vld [vmem:[%s11 + $0x3028] sm:$0xff]
      %v4927 = vld [vmem:[%s11 + $0x3030] sm:$0xff]
      %v4928 = vld [vmem:[%s11 + $0x3038] sm:$0xff]
      %v4929 = vld [vmem:[%s11 + $0x3040] sm:$0xff]
      %v4930 = vld [vmem:[%s11 + $0x3048] sm:$0xff]
      %v4931 = vld [vmem:[%s11 + $0x3050] sm:$0xff]
      %v4932 = vld [vmem:[%s11 + $0x3058] sm:$0xff]
      %v4933 = vld [vmem:[%s11 + $0x3060] sm:$0xff]
      %v4934 = vld [vmem:[%s11 + $0x3068] sm:$0xff]
      %v4935 = vld [vmem:[%s11 + $0x3070] sm:$0xff]
      %v4936 = vld [vmem:[%s11 + $0x3078] sm:$0xff]
      %v4937 = vld [vmem:[%s11 + $0x3080] sm:$0xff]
      %v4938 = vld [vmem:[%s11 + $0x3088] sm:$0xff]
      %v4939 = vld [vmem:[%s11 + $0x3090] sm:$0xff]
      %v4940 = vld [vmem:[%s11 + $0x3098] sm:$0xff]
      %v4941 = vld [vmem:[%s11 + $0x30a0] sm:$0xff]
      %v4942 = vld [vmem:[%s11 + $0x30a8] sm:$0xff]
      %v4943 = vld [vmem:[%s11 + $0x30b0] sm:$0xff]
      %v4944 = vld [vmem:[%s11 + $0x30b8] sm:$0xff]
      %v4945 = vld [vmem:[%s11 + $0x30c0] sm:$0xff]
      %v4946 = vld [vmem:[%s11 + $0x30c8] sm:$0xff]
      %v4947 = vld [vmem:[%s11 + $0x30d0] sm:$0xff]
      %v4948 = vld [vmem:[%s11 + $0x30d8] sm:$0xff]
      %v4949 = vld [vmem:[%s11 + $0x30e0] sm:$0xff]
      %v4950 = vld [vmem:[%s11 + $0x30e8] sm:$0xff]
      %v4951 = vld [vmem:[%s11 + $0x30f0] sm:$0xff]
      %v4952 = vld [vmem:[%s11 + $0x30f8] sm:$0xff]
      %v4953 = vld [vmem:[%s11 + $0x3100] sm:$0xff]
      %v4954 = vld [vmem:[%s11 + $0x3108] sm:$0xff]
      %v4955 = vld [vmem:[%s11 + $0x3110] sm:$0xff]
      %v4956 = vld [vmem:[%s11 + $0x3118] sm:$0xff]
      %v4957 = vld [vmem:[%s11 + $0x3120] sm:$0xff]
      %v4958 = vld [vmem:[%s11 + $0x3128] sm:$0xff]
      %v4959 = vld [vmem:[%s11 + $0x3130] sm:$0xff]
      %v4960 = vld [vmem:[%s11 + $0x3138] sm:$0xff]
      %v4961 = vld [vmem:[%s11 + $0x3140] sm:$0xff]
      %v4962 = vld [vmem:[%s11 + $0x3148] sm:$0xff]
      %v4963 = vld [vmem:[%s11 + $0x3150] sm:$0xff]
      %v4964 = vld [vmem:[%s11 + $0x3158] sm:$0xff]
      %v4965 = vld [vmem:[%s11 + $0x3160] sm:$0xff]
      %v4966 = vld [vmem:[%s11 + $0x3168] sm:$0xff]
      %v4967 = vld [vmem:[%s11 + $0x3170] sm:$0xff]
      %v4968 = vld [vmem:[%s11 + $0x3178] sm:$0xff]
      %v4969 = vld [vmem:[%s11 + $0x3180] sm:$0xff]
      %v4970 = vld [vmem:[%s11 + $0x3188] sm:$0xff]
      %v4971 = vld [vmem:[%s11 + $0x3190] sm:$0xff]
      %v4972 = vld [vmem:[%s11 + $0x3198] sm:$0xff]
      %v4973 = vld [vmem:[%s11 + $0x31a0] sm:$0xff]
      %v4974 = vld [vmem:[%s11 + $0x31a8] sm:$0xff]
      %v4975 = vld [vmem:[%s11 + $0x31b0] sm:$0xff]
      %v4976 = vld [vmem:[%s11 + $0x31b8] sm:$0xff]
      %v4977 = vld [vmem:[%s11 + $0x31c0] sm:$0xff]
      %v4978 = vld [vmem:[%s11 + $0x31c8] sm:$0xff]
      %v4979 = vld [vmem:[%s11 + $0x31d0] sm:$0xff]
      %v4980 = vld [vmem:[%s11 + $0x31d8] sm:$0xff]
      %v4981 = vld [vmem:[%s11 + $0x31e0] sm:$0xff]
      %v4982 = vld [vmem:[%s11 + $0x31e8] sm:$0xff]
      %v4983 = vld [vmem:[%s11 + $0x31f0] sm:$0xff]
      %v4984 = vld [vmem:[%s11 + $0x31f8] sm:$0xff]
      %v4985 = vld [vmem:[%s11 + $0x3200] sm:$0xff]
      %v4986 = vld [vmem:[%s11 + $0x3208] sm:$0xff]
      %v4987 = vld [vmem:[%s11 + $0x3210] sm:$0xff]
      %v4988 = vld [vmem:[%s11 + $0x3218] sm:$0xff]
      %v4989 = vld [vmem:[%s11 + $0x3220] sm:$0xff]
      %v4990 = vld [vmem:[%s11 + $0x3228] sm:$0xff]
      %v4991 = vld [vmem:[%s11 + $0x3230] sm:$0xff]
      %v4992 = vld [vmem:[%s11 + $0x3238] sm:$0xff]
      %v4993 = vld [vmem:[%s11 + $0x3240] sm:$0xff]
      %v4994 = vld [vmem:[%s11 + $0x3248] sm:$0xff]
      %v4995 = vld [vmem:[%s11 + $0x3250] sm:$0xff]
      %v4996 = vld [vmem:[%s11 + $0x3258] sm:$0xff]
      %v4997 = vld [vmem:[%s11 + $0x3260] sm:$0xff]
      %v4998 = vld [vmem:[%s11 + $0x3268] sm:$0xff]
      %v4999 = vld [vmem:[%s11 + $0x3270] sm:$0xff]
      %v5000 = vld [vmem:[%s11 + $0x3278] sm:$0xff]
      %v5001 = vld [vmem:[%s11 + $0x3280] sm:$0xff]
      %v5002 = vld [vmem:[%s11 + $0x3288] sm:$0xff]
      %v5003 = vld [vmem:[%s11 + $0x3290] sm:$0xff]
      %v5004 = vld [vmem:[%s11 + $0x3298] sm:$0xff]
      %v5005 = vld [vmem:[%s11 + $0x32a0] sm:$0xff]
      %v5006 = vld [vmem:[%s11 + $0x32a8] sm:$0xff]
      %v5007 = vld [vmem:[%s11 + $0x32b0] sm:$0xff]
      %v5008 = vld [vmem:[%s11 + $0x32b8] sm:$0xff]
      %v5009 = vld [vmem:[%s11 + $0x32c0] sm:$0xff]
      %v5010 = vld [vmem:[%s11 + $0x32c8] sm:$0xff]
      %v5011 = vld [vmem:[%s11 + $0x32d0] sm:$0xff]
      %v5012 = vld [vmem:[%s11 + $0x32d8] sm:$0xff]
      %v5013 = vld [vmem:[%s11 + $0x32e0] sm:$0xff]
      %v5014 = vld [vmem:[%s11 + $0x32e8] sm:$0xff]
      %v5015 = vld [vmem:[%s11 + $0x32f0] sm:$0xff]
      %v5016 = vld [vmem:[%s11 + $0x32f8] sm:$0xff]
      %v5017 = vld [vmem:[%s11 + $0x3300] sm:$0xff]
      %v5018 = vld [vmem:[%s11 + $0x3308] sm:$0xff]
      %v5019 = vld [vmem:[%s11 + $0x3310] sm:$0xff]
      %v5020 = vld [vmem:[%s11 + $0x3318] sm:$0xff]
      %v5021 = vld [vmem:[%s11 + $0x3320] sm:$0xff]
      %v5022 = vld [vmem:[%s11 + $0x3328] sm:$0xff]
      %v5023 = vld [vmem:[%s11 + $0x3330] sm:$0xff]
      %v5024 = vld [vmem:[%s11 + $0x3338] sm:$0xff]
      %v5025 = vld [vmem:[%s11 + $0x3340] sm:$0xff]
      %v5026 = vld [vmem:[%s11 + $0x3348] sm:$0xff]
      %v5027 = vld [vmem:[%s11 + $0x3350] sm:$0xff]
      %v5028 = vld [vmem:[%s11 + $0x3358] sm:$0xff]
      %v5029 = vld [vmem:[%s11 + $0x3360] sm:$0xff]
      %v5030 = vld [vmem:[%s11 + $0x3368] sm:$0xff]
      %v5031 = vld [vmem:[%s11 + $0x3370] sm:$0xff]
      %v5032 = vld [vmem:[%s11 + $0x3378] sm:$0xff]
      %v5033 = vld [vmem:[%s11 + $0x3380] sm:$0xff]
      %v5034 = vld [vmem:[%s11 + $0x3388] sm:$0xff]
      %v5035 = vld [vmem:[%s11 + $0x3390] sm:$0xff]
      %v5036 = vld [vmem:[%s11 + $0x3398] sm:$0xff]
      %v5037 = vld [vmem:[%s11 + $0x33a0] sm:$0xff]
      %v5038 = vld [vmem:[%s11 + $0x33a8] sm:$0xff]
      %v5039 = vld [vmem:[%s11 + $0x33b0] sm:$0xff]
      %v5040 = vld [vmem:[%s11 + $0x33b8] sm:$0xff]
      %v5041 = vld [vmem:[%s11 + $0x33c0] sm:$0xff]
      %v5042 = vld [vmem:[%s11 + $0x33c8] sm:$0xff]
      %v5043 = vld [vmem:[%s11 + $0x33d0] sm:$0xff]
      %v5044 = vld [vmem:[%s11 + $0x33d8] sm:$0xff]
      %v5045 = vld [vmem:[%s11 + $0x33e0] sm:$0xff]
      %v5046 = vld [vmem:[%s11 + $0x33e8] sm:$0xff]
      %v5047 = vld [vmem:[%s11 + $0x33f0] sm:$0xff]
      %v5048 = vld [vmem:[%s11 + $0x33f8] sm:$0xff]
      %v5049 = vld [vmem:[%s11 + $0x3400] sm:$0xff]
      %v5050 = vld [vmem:[%s11 + $0x3408] sm:$0xff]
      %v5051 = vld [vmem:[%s11 + $0x3410] sm:$0xff]
      %v5052 = vld [vmem:[%s11 + $0x3418] sm:$0xff]
      %v5053 = vld [vmem:[%s11 + $0x3420] sm:$0xff]
      %v5054 = vld [vmem:[%s11 + $0x3428] sm:$0xff]
      %v5055 = vld [vmem:[%s11 + $0x3430] sm:$0xff]
      %v5056 = vld [vmem:[%s11 + $0x3438] sm:$0xff]
      %v5057 = vld [vmem:[%s11 + $0x3440] sm:$0xff]
      %v5058 = vld [vmem:[%s11 + $0x3448] sm:$0xff]
      %v5059 = vld [vmem:[%s11 + $0x3450] sm:$0xff]
      %v5060 = vld [vmem:[%s11 + $0x3458] sm:$0xff]
      %v5061 = vld [vmem:[%s11 + $0x3460] sm:$0xff]
      %v5062 = vld [vmem:[%s11 + $0x3468] sm:$0xff]
      %v5063 = vld [vmem:[%s11 + $0x3470] sm:$0xff]
      %v5064 = vld [vmem:[%s11 + $0x3478] sm:$0xff]
      %v5065 = vld [vmem:[%s11 + $0x3480] sm:$0xff]
      %v5066 = vld [vmem:[%s11 + $0x3488] sm:$0xff]
      %v5067 = vld [vmem:[%s11 + $0x3490] sm:$0xff]
      %v5068 = vld [vmem:[%s11 + $0x3498] sm:$0xff]
      %v5069 = vld [vmem:[%s11 + $0x34a0] sm:$0xff]
      %v5070 = vld [vmem:[%s11 + $0x34a8] sm:$0xff]
      %v5071 = vld [vmem:[%s11 + $0x34b0] sm:$0xff]
      %v5072 = vld [vmem:[%s11 + $0x34b8] sm:$0xff]
      %v5073 = vld [vmem:[%s11 + $0x34c0] sm:$0xff]
      %v5074 = vld [vmem:[%s11 + $0x34c8] sm:$0xff]
      %v5075 = vld [vmem:[%s11 + $0x34d0] sm:$0xff]
      %v5076 = vld [vmem:[%s11 + $0x34d8] sm:$0xff]
      %v5077 = vld [vmem:[%s11 + $0x34e0] sm:$0xff]
      %v5078 = vld [vmem:[%s11 + $0x34e8] sm:$0xff]
      %v5079 = vld [vmem:[%s11 + $0x34f0] sm:$0xff]
      %v5080 = vld [vmem:[%s11 + $0x34f8] sm:$0xff]
      %v5081 = vld [vmem:[%s11 + $0x3500] sm:$0xff]
      %v5082 = vld [vmem:[%s11 + $0x3508] sm:$0xff]
      %v5083 = vld [vmem:[%s11 + $0x3510] sm:$0xff]
      %v5084 = vld [vmem:[%s11 + $0x3518] sm:$0xff]
      %v5085 = vld [vmem:[%s11 + $0x3520] sm:$0xff]
      %v5086 = vld [vmem:[%s11 + $0x3528] sm:$0xff]
      %v5087 = vld [vmem:[%s11 + $0x3530] sm:$0xff]
      %v5088 = vld [vmem:[%s11 + $0x3538] sm:$0xff]
      %v5089 = vld [vmem:[%s11 + $0x3540] sm:$0xff]
      %v5090 = vld [vmem:[%s11 + $0x3548] sm:$0xff]
      %v5091 = vld [vmem:[%s11 + $0x3550] sm:$0xff]
      %v5092 = vld [vmem:[%s11 + $0x3558] sm:$0xff]
      %v5093 = vld [vmem:[%s11 + $0x3560] sm:$0xff]
      %v5094 = vld [vmem:[%s11 + $0x3568] sm:$0xff]
      %v5095 = vld [vmem:[%s11 + $0x3570] sm:$0xff]
      %v5096 = vld [vmem:[%s11 + $0x3578] sm:$0xff]
      %v5097 = vld [vmem:[%s11 + $0x3580] sm:$0xff]
      %v5098 = vld [vmem:[%s11 + $0x3588] sm:$0xff]
      %v5099 = vld [vmem:[%s11 + $0x3590] sm:$0xff]
      %v5100 = vld [vmem:[%s11 + $0x3598] sm:$0xff]
      %v5101 = vld [vmem:[%s11 + $0x35a0] sm:$0xff]
      %v5102 = vld [vmem:[%s11 + $0x35a8] sm:$0xff]
      %v5103 = vld [vmem:[%s11 + $0x35b0] sm:$0xff]
      %v5104 = vld [vmem:[%s11 + $0x35b8] sm:$0xff]
      %v5105 = vld [vmem:[%s11 + $0x35c0] sm:$0xff]
      %v5106 = vld [vmem:[%s11 + $0x35c8] sm:$0xff]
      %v5107 = vld [vmem:[%s11 + $0x35d0] sm:$0xff]
      %v5108 = vld [vmem:[%s11 + $0x35d8] sm:$0xff]
      %v5109 = vld [vmem:[%s11 + $0x35e0] sm:$0xff]
      %v5110 = vld [vmem:[%s11 + $0x35e8] sm:$0xff]
      %v5111 = vld [vmem:[%s11 + $0x35f0] sm:$0xff]
      %v5112 = vld [vmem:[%s11 + $0x35f8] sm:$0xff]
      %v5113 = vld [vmem:[%s11 + $0x3600] sm:$0xff]
      %v5114 = vld [vmem:[%s11 + $0x3608] sm:$0xff]
      %v5115 = vld [vmem:[%s11 + $0x3610] sm:$0xff]
      %v5116 = vld [vmem:[%s11 + $0x3618] sm:$0xff]
      %v5117 = vld [vmem:[%s11 + $0x3620] sm:$0xff]
      %v5118 = vld [vmem:[%s11 + $0x3628] sm:$0xff]
      %v5119 = vld [vmem:[%s11 + $0x3630] sm:$0xff]
      %v5120 = vld [vmem:[%s11 + $0x3638] sm:$0xff]
      %v5121 = vld [vmem:[%s11 + $0x3640] sm:$0xff]
      %v5122 = vld [vmem:[%s11 + $0x3648] sm:$0xff]
      %v5123 = vld [vmem:[%s11 + $0x3650] sm:$0xff]
      %v5124 = vld [vmem:[%s11 + $0x3658] sm:$0xff]
      %v5125 = vld [vmem:[%s11 + $0x3660] sm:$0xff]
      %v5126 = vld [vmem:[%s11 + $0x3668] sm:$0xff]
      %v5127 = vld [vmem:[%s11 + $0x3670] sm:$0xff]
      %v5128 = vld [vmem:[%s11 + $0x3678] sm:$0xff]
      %v5129 = vld [vmem:[%s11 + $0x3680] sm:$0xff]
      %v5130 = vld [vmem:[%s11 + $0x3688] sm:$0xff]
      %v5131 = vld [vmem:[%s11 + $0x3690] sm:$0xff]
      %v5132 = vld [vmem:[%s11 + $0x3698] sm:$0xff]
      %v5133 = vld [vmem:[%s11 + $0x36a0] sm:$0xff]
      %v5134 = vld [vmem:[%s11 + $0x36a8] sm:$0xff]
      %v5135 = vld [vmem:[%s11 + $0x36b0] sm:$0xff]
      %v5136 = vld [vmem:[%s11 + $0x36b8] sm:$0xff]
      %v5137 = vld [vmem:[%s11 + $0x36c0] sm:$0xff]
      %v5138 = vld [vmem:[%s11 + $0x36c8] sm:$0xff]
      %v5139 = vld [vmem:[%s11 + $0x36d0] sm:$0xff]
      %v5140 = vld [vmem:[%s11 + $0x36d8] sm:$0xff]
      %v5141 = vld [vmem:[%s11 + $0x36e0] sm:$0xff]
      %v5142 = vld [vmem:[%s11 + $0x36e8] sm:$0xff]
      %v5143 = vld [vmem:[%s11 + $0x36f0] sm:$0xff]
      %v5144 = vld [vmem:[%s11 + $0x36f8] sm:$0xff]
      %v5145 = vld [vmem:[%s11 + $0x3700] sm:$0xff]
      %v5146 = vld [vmem:[%s11 + $0x3708] sm:$0xff]
      %v5147 = vld [vmem:[%s11 + $0x3710] sm:$0xff]
      %v5148 = vld [vmem:[%s11 + $0x3718] sm:$0xff]
      %v5149 = vld [vmem:[%s11 + $0x3720] sm:$0xff]
      %v5150 = vld [vmem:[%s11 + $0x3728] sm:$0xff]
      %v5151 = vld [vmem:[%s11 + $0x3730] sm:$0xff]
      %v5152 = vld [vmem:[%s11 + $0x3738] sm:$0xff]
      %v5153 = vld [vmem:[%s11 + $0x3740] sm:$0xff]
      %v5154 = vld [vmem:[%s11 + $0x3748] sm:$0xff]
      %v5155 = vld [vmem:[%s11 + $0x3750] sm:$0xff]
      %v5156 = vld [vmem:[%s11 + $0x3758] sm:$0xff]
      %v5157 = vld [vmem:[%s11 + $0x3760] sm:$0xff]
      %v5158 = vld [vmem:[%s11 + $0x3768] sm:$0xff]
      %v5159 = vld [vmem:[%s11 + $0x3770] sm:$0xff]
      %v5160 = vld [vmem:[%s11 + $0x3778] sm:$0xff]
      %v5161 = vld [vmem:[%s11 + $0x3780] sm:$0xff]
      %v5162 = vld [vmem:[%s11 + $0x3788] sm:$0xff]
      %v5163 = vld [vmem:[%s11 + $0x3790] sm:$0xff]
      %v5164 = vld [vmem:[%s11 + $0x3798] sm:$0xff]
      %v5165 = vld [vmem:[%s11 + $0x37a0] sm:$0xff]
      %v5166 = vld [vmem:[%s11 + $0x37a8] sm:$0xff]
      %v5167 = vld [vmem:[%s11 + $0x37b0] sm:$0xff]
      %v5168 = vld [vmem:[%s11 + $0x37b8] sm:$0xff]
      %v5169 = vld [vmem:[%s11 + $0x37c0] sm:$0xff]
      %v5170 = vld [vmem:[%s11 + $0x37c8] sm:$0xff]
      %v5171 = vld [vmem:[%s11 + $0x37d0] sm:$0xff]
      %v5172 = vld [vmem:[%s11 + $0x37d8] sm:$0xff]
      %v5173 = vld [vmem:[%s11 + $0x37e0] sm:$0xff]
      %v5174 = vld [vmem:[%s11 + $0x37e8] sm:$0xff]
      %v5175 = vld [vmem:[%s11 + $0x37f0] sm:$0xff]
      %v5176 = vld [vmem:[%s11 + $0x37f8] sm:$0xff]
      %v5177 = vld [vmem:[%s11 + $0x3800] sm:$0xff]
      %v5178 = vld [vmem:[%s11 + $0x3808] sm:$0xff]
      %v5179 = vld [vmem:[%s11 + $0x3810] sm:$0xff]
      %v5180 = vld [vmem:[%s11 + $0x3818] sm:$0xff]
      %v5181 = vld [vmem:[%s11 + $0x3820] sm:$0xff]
      %v5182 = vld [vmem:[%s11 + $0x3828] sm:$0xff]
      %v5183 = vld [vmem:[%s11 + $0x3830] sm:$0xff]
      %v5184 = vld [vmem:[%s11 + $0x3838] sm:$0xff]
      %v5185 = vld [vmem:[%s11 + $0x3840] sm:$0xff]
      %v5186 = vld [vmem:[%s11 + $0x3848] sm:$0xff]
      %v5187 = vld [vmem:[%s11 + $0x3850] sm:$0xff]
      %v5188 = vld [vmem:[%s11 + $0x3858] sm:$0xff]
      %v5189 = vld [vmem:[%s11 + $0x3860] sm:$0xff]
      %v5190 = vld [vmem:[%s11 + $0x3868] sm:$0xff]
      %v5191 = vld [vmem:[%s11 + $0x3870] sm:$0xff]
      %v5192 = vld [vmem:[%s11 + $0x3878] sm:$0xff]
      %v5193 = vld [vmem:[%s11 + $0x3880] sm:$0xff]
      %v5194 = vld [vmem:[%s11 + $0x3888] sm:$0xff]
      %v5195 = vld [vmem:[%s11 + $0x3890] sm:$0xff]
      %v5196 = vld [vmem:[%s11 + $0x3898] sm:$0xff]
      %v5197 = vld [vmem:[%s11 + $0x38a0] sm:$0xff]
      %v5198 = vld [vmem:[%s11 + $0x38a8] sm:$0xff]
      %v5199 = vld [vmem:[%s11 + $0x38b0] sm:$0xff]
      %v5200 = vld [vmem:[%s11 + $0x38b8] sm:$0xff]
      %v5201 = vld [vmem:[%s11 + $0x38c0] sm:$0xff]
      %v5202 = vld [vmem:[%s11 + $0x38c8] sm:$0xff]
      %v5203 = vld [vmem:[%s11 + $0x38d0] sm:$0xff]
      %v5204 = vld [vmem:[%s11 + $0x38d8] sm:$0xff]
      %v5205 = vld [vmem:[%s11 + $0x38e0] sm:$0xff]
      %v5206 = vld [vmem:[%s11 + $0x38e8] sm:$0xff]
      %v5207 = vld [vmem:[%s11 + $0x38f0] sm:$0xff]
      %v5208 = vld [vmem:[%s11 + $0x38f8] sm:$0xff]
      %v5209 = vld [vmem:[%s11 + $0x3900] sm:$0xff]
      %v5210 = vld [vmem:[%s11 + $0x3908] sm:$0xff]
      %v5211 = vld [vmem:[%s11 + $0x3910] sm:$0xff]
      %v5212 = vld [vmem:[%s11 + $0x3918] sm:$0xff]
      %v5213 = vld [vmem:[%s11 + $0x3920] sm:$0xff]
      %v5214 = vld [vmem:[%s11 + $0x3928] sm:$0xff]
      %v5215 = vld [vmem:[%s11 + $0x3930] sm:$0xff]
      %v5216 = vld [vmem:[%s11 + $0x3938] sm:$0xff]
      %v5217 = vld [vmem:[%s11 + $0x3940] sm:$0xff]
      %v5218 = vld [vmem:[%s11 + $0x3948] sm:$0xff]
      %v5219 = vld [vmem:[%s11 + $0x3950] sm:$0xff]
      %v5220 = vld [vmem:[%s11 + $0x3958] sm:$0xff]
      %v5221 = vld [vmem:[%s11 + $0x3960] sm:$0xff]
      %v5222 = vld [vmem:[%s11 + $0x3968] sm:$0xff]
      %v5223 = vld [vmem:[%s11 + $0x3970] sm:$0xff]
      %v5224 = vld [vmem:[%s11 + $0x3978] sm:$0xff]
      %v5225 = vld [vmem:[%s11 + $0x3980] sm:$0xff]
      %v5226 = vld [vmem:[%s11 + $0x3988] sm:$0xff]
      %v5227 = vld [vmem:[%s11 + $0x3990] sm:$0xff]
      %v5228 = vld [vmem:[%s11 + $0x3998] sm:$0xff]
      %v5229 = vld [vmem:[%s11 + $0x39a0] sm:$0xff]
      %v5230 = vld [vmem:[%s11 + $0x39a8] sm:$0xff]
      %v5231 = vld [vmem:[%s11 + $0x39b0] sm:$0xff]
      %v5232 = vld [vmem:[%s11 + $0x39b8] sm:$0xff]
      %v5233 = vld [vmem:[%s11 + $0x39c0] sm:$0xff]
      %v5234 = vld [vmem:[%s11 + $0x39c8] sm:$0xff]
      %v5235 = vld [vmem:[%s11 + $0x39d0] sm:$0xff]
      %v5236 = vld [vmem:[%s11 + $0x39d8] sm:$0xff]
      %v5237 = vld [vmem:[%s11 + $0x39e0] sm:$0xff]
      %v5238 = vld [vmem:[%s11 + $0x39e8] sm:$0xff]
      %v5239 = vld [vmem:[%s11 + $0x39f0] sm:$0xff]
      %v5240 = vld [vmem:[%s11 + $0x39f8] sm:$0xff]
      %v5241 = vld [vmem:[%s11 + $0x3a00] sm:$0xff]
      %v5242 = vld [vmem:[%s11 + $0x3a08] sm:$0xff]
      %v5243 = vld [vmem:[%s11 + $0x3a10] sm:$0xff]
      %v5244 = vld [vmem:[%s11 + $0x3a18] sm:$0xff]
      %v5245 = vld [vmem:[%s11 + $0x3a20] sm:$0xff]
      %v5246 = vld [vmem:[%s11 + $0x3a28] sm:$0xff]
      %v5247 = vld [vmem:[%s11 + $0x3a30] sm:$0xff]
      %v5248 = vld [vmem:[%s11 + $0x3a38] sm:$0xff]
      %v5249 = vld [vmem:[%s11 + $0x3a40] sm:$0xff]
      %v5250 = vld [vmem:[%s11 + $0x3a48] sm:$0xff]
      %v5251 = vld [vmem:[%s11 + $0x3a50] sm:$0xff]
      %v5252 = vld [vmem:[%s11 + $0x3a58] sm:$0xff]
      %v5253 = vld [vmem:[%s11 + $0x3a60] sm:$0xff]
      %v5254 = vld [vmem:[%s11 + $0x3a68] sm:$0xff]
      %v5255 = vld [vmem:[%s11 + $0x3a70] sm:$0xff]
      %v5256 = vld [vmem:[%s11 + $0x3a78] sm:$0xff]
      %v5257 = vld [vmem:[%s11 + $0x3a80] sm:$0xff]
      %v5258 = vld [vmem:[%s11 + $0x3a88] sm:$0xff]
      %v5259 = vld [vmem:[%s11 + $0x3a90] sm:$0xff]
      %v5260 = vld [vmem:[%s11 + $0x3a98] sm:$0xff]
      %v5261 = vld [vmem:[%s11 + $0x3aa0] sm:$0xff]
      %v5262 = vld [vmem:[%s11 + $0x3aa8] sm:$0xff]
      %v5263 = vld [vmem:[%s11 + $0x3ab0] sm:$0xff]
      %v5264 = vld [vmem:[%s11 + $0x3ab8] sm:$0xff]
      %v5265 = vld [vmem:[%s11 + $0x3ac0] sm:$0xff]
      %v5266 = vld [vmem:[%s11 + $0x3ac8] sm:$0xff]
      %v5267 = vld [vmem:[%s11 + $0x3ad0] sm:$0xff]
      %v5268 = vld [vmem:[%s11 + $0x3ad8] sm:$0xff]
      %v5269 = vld [vmem:[%s11 + $0x3ae0] sm:$0xff]
      %v5270 = vld [vmem:[%s11 + $0x3ae8] sm:$0xff]
      %v5271 = vld [vmem:[%s11 + $0x3af0] sm:$0xff]
      %v5272 = vld [vmem:[%s11 + $0x3af8] sm:$0xff]
      %v5273 = vld [vmem:[%s11 + $0x3b00] sm:$0xff]
      %v5274 = vld [vmem:[%s11 + $0x3b08] sm:$0xff]
      %v5275 = vld [vmem:[%s11 + $0x3b10] sm:$0xff]
      %v5276 = vld [vmem:[%s11 + $0x3b18] sm:$0xff]
      %v5277 = vld [vmem:[%s11 + $0x3b20] sm:$0xff]
      %v5278 = vld [vmem:[%s11 + $0x3b28] sm:$0xff]
      %v5279 = vld [vmem:[%s11 + $0x3b30] sm:$0xff]
      %v5280 = vld [vmem:[%s11 + $0x3b38] sm:$0xff]
      %v5281 = vld [vmem:[%s11 + $0x3b40] sm:$0xff]
      %v5282 = vld [vmem:[%s11 + $0x3b48] sm:$0xff]
      %v5283 = vld [vmem:[%s11 + $0x3b50] sm:$0xff]
      %v5284 = vld [vmem:[%s11 + $0x3b58] sm:$0xff]
      %v5285 = vld [vmem:[%s11 + $0x3b60] sm:$0xff]
      %v5286 = vld [vmem:[%s11 + $0x3b68] sm:$0xff]
      %v5287 = vld [vmem:[%s11 + $0x3b70] sm:$0xff]
      %v5288 = vld [vmem:[%s11 + $0x3b78] sm:$0xff]
      %v5289 = vld [vmem:[%s11 + $0x3b80] sm:$0xff]
      %v5290 = vld [vmem:[%s11 + $0x3b88] sm:$0xff]
      %v5291 = vld [vmem:[%s11 + $0x3b90] sm:$0xff]
      %v5292 = vld [vmem:[%s11 + $0x3b98] sm:$0xff]
      %v5293 = vld [vmem:[%s11 + $0x3ba0] sm:$0xff]
      %v5294 = vld [vmem:[%s11 + $0x3ba8] sm:$0xff]
      %v5295 = vld [vmem:[%s11 + $0x3bb0] sm:$0xff]
      %v5296 = vld [vmem:[%s11 + $0x3bb8] sm:$0xff]
      %v5297 = vld [vmem:[%s11 + $0x3bc0] sm:$0xff]
      %v5298 = vld [vmem:[%s11 + $0x3bc8] sm:$0xff]
      %v5299 = vld [vmem:[%s11 + $0x3bd0] sm:$0xff]
      %v5300 = vld [vmem:[%s11 + $0x3bd8] sm:$0xff]
      %v5301 = vld [vmem:[%s11 + $0x3be0] sm:$0xff]
      %v5302 = vld [vmem:[%s11 + $0x3be8] sm:$0xff]
      %v5303 = vld [vmem:[%s11 + $0x3bf0] sm:$0xff]
      %v5304 = vld [vmem:[%s11 + $0x3bf8] sm:$0xff]
      %v5305 = vld [vmem:[%s11 + $0x3c00] sm:$0xff]
      %v5306 = vld [vmem:[%s11 + $0x3c08] sm:$0xff]
      %v5307 = vld [vmem:[%s11 + $0x3c10] sm:$0xff]
      %v5308 = vld [vmem:[%s11 + $0x3c18] sm:$0xff]
      %v5309 = vld [vmem:[%s11 + $0x3c20] sm:$0xff]
      %v5310 = vld [vmem:[%s11 + $0x3c28] sm:$0xff]
      %v5311 = vld [vmem:[%s11 + $0x3c30] sm:$0xff]
      %v5312 = vld [vmem:[%s11 + $0x3c38] sm:$0xff]
      %v5313 = vld [vmem:[%s11 + $0x3c40] sm:$0xff]
      %v5314 = vld [vmem:[%s11 + $0x3c48] sm:$0xff]
      %v5315 = vld [vmem:[%s11 + $0x3c50] sm:$0xff]
      %v5316 = vld [vmem:[%s11 + $0x3c58] sm:$0xff]
      %v5317 = vld [vmem:[%s11 + $0x3c60] sm:$0xff]
      %v5318 = vld [vmem:[%s11 + $0x3c68] sm:$0xff]
      %v5319 = vld [vmem:[%s11 + $0x3c70] sm:$0xff]
      %v5320 = vld [vmem:[%s11 + $0x3c78] sm:$0xff]
      %v5321 = vld [vmem:[%s11 + $0x3c80] sm:$0xff]
      %v5322 = vld [vmem:[%s11 + $0x3c88] sm:$0xff]
      %v5323 = vld [vmem:[%s11 + $0x3c90] sm:$0xff]
      %v5324 = vld [vmem:[%s11 + $0x3c98] sm:$0xff]
      %v5325 = vld [vmem:[%s11 + $0x3ca0] sm:$0xff]
      %v5326 = vld [vmem:[%s11 + $0x3ca8] sm:$0xff]
      %v5327 = vld [vmem:[%s11 + $0x3cb0] sm:$0xff]
      %v5328 = vld [vmem:[%s11 + $0x3cb8] sm:$0xff]
      %v5329 = vld [vmem:[%s11 + $0x3cc0] sm:$0xff]
      %v5330 = vld [vmem:[%s11 + $0x3cc8] sm:$0xff]
      %v5331 = vld [vmem:[%s11 + $0x3cd0] sm:$0xff]
      %v5332 = vld [vmem:[%s11 + $0x3cd8] sm:$0xff]
      %v5333 = vld [vmem:[%s11 + $0x3ce0] sm:$0xff]
      %v5334 = vld [vmem:[%s11 + $0x3ce8] sm:$0xff]
      %v5335 = vld [vmem:[%s11 + $0x3cf0] sm:$0xff]
      %v5336 = vld [vmem:[%s11 + $0x3cf8] sm:$0xff]
      %v5337 = vld [vmem:[%s11 + $0x3d00] sm:$0xff]
      %v5338 = vld [vmem:[%s11 + $0x3d08] sm:$0xff]
      %v5339 = vld [vmem:[%s11 + $0x3d10] sm:$0xff]
      %v5340 = vld [vmem:[%s11 + $0x3d18] sm:$0xff]
      %v5341 = vld [vmem:[%s11 + $0x3d20] sm:$0xff]
      %v5342 = vld [vmem:[%s11 + $0x3d28] sm:$0xff]
      %v5343 = vld [vmem:[%s11 + $0x3d30] sm:$0xff]
      %v5344 = vld [vmem:[%s11 + $0x3d38] sm:$0xff]
      %v5345 = vld [vmem:[%s11 + $0x3d40] sm:$0xff]
      %v5346 = vld [vmem:[%s11 + $0x3d48] sm:$0xff]
      %v5347 = vld [vmem:[%s11 + $0x3d50] sm:$0xff]
      %v5348 = vld [vmem:[%s11 + $0x3d58] sm:$0xff]
      %v5349 = vld [vmem:[%s11 + $0x3d60] sm:$0xff]
      %v5350 = vld [vmem:[%s11 + $0x3d68] sm:$0xff]
      %v5351 = vld [vmem:[%s11 + $0x3d70] sm:$0xff]
      %v5352 = vld [vmem:[%s11 + $0x3d78] sm:$0xff]
      %v5353 = vld [vmem:[%s11 + $0x3d80] sm:$0xff]
      %v5354 = vld [vmem:[%s11 + $0x3d88] sm:$0xff]
      %v5355 = vld [vmem:[%s11 + $0x3d90] sm:$0xff]
      %v5356 = vld [vmem:[%s11 + $0x3d98] sm:$0xff]
      %v5357 = vld [vmem:[%s11 + $0x3da0] sm:$0xff]
      %v5358 = vld [vmem:[%s11 + $0x3da8] sm:$0xff]
      %v5359 = vld [vmem:[%s11 + $0x3db0] sm:$0xff]
      %v5360 = vld [vmem:[%s11 + $0x3db8] sm:$0xff]
      %v5361 = vld [vmem:[%s11 + $0x3dc0] sm:$0xff]
      %v5362 = vld [vmem:[%s11 + $0x3dc8] sm:$0xff]
      %v5363 = vld [vmem:[%s11 + $0x3dd0] sm:$0xff]
      %v5364 = vld [vmem:[%s11 + $0x3dd8] sm:$0xff]
      %v5365 = vld [vmem:[%s11 + $0x3de0] sm:$0xff]
      %v5366 = vld [vmem:[%s11 + $0x3de8] sm:$0xff]
      %v5367 = vld [vmem:[%s11 + $0x3df0] sm:$0xff]
      %v5368 = vld [vmem:[%s11 + $0x3df8] sm:$0xff]
      %v5369 = vld [vmem:[%s11 + $0x3e00] sm:$0xff]
      %v5370 = vld [vmem:[%s11 + $0x3e08] sm:$0xff]
      %v5371 = vld [vmem:[%s11 + $0x3e10] sm:$0xff]
      %v5372 = vld [vmem:[%s11 + $0x3e18] sm:$0xff]
      %v5373 = vld [vmem:[%s11 + $0x3e20] sm:$0xff]
      %v5374 = vld [vmem:[%s11 + $0x3e28] sm:$0xff]
      %v5375 = vld [vmem:[%s11 + $0x3e30] sm:$0xff]
      %v5376 = vld [vmem:[%s11 + $0x3e38] sm:$0xff]
      %v5377 = vld [vmem:[%s11 + $0x3e40] sm:$0xff]
      %v5378 = vld [vmem:[%s11 + $0x3e48] sm:$0xff]
      %v5379 = vld [vmem:[%s11 + $0x3e50] sm:$0xff]
      %v5380 = vld [vmem:[%s11 + $0x3e58] sm:$0xff]
      %v5381 = vld [vmem:[%s11 + $0x3e60] sm:$0xff]
      %v5382 = vld [vmem:[%s11 + $0x3e68] sm:$0xff]
      %v5383 = vld [vmem:[%s11 + $0x3e70] sm:$0xff]
      %v5384 = vld [vmem:[%s11 + $0x3e78] sm:$0xff]
      %v5385 = vld [vmem:[%s11 + $0x3e80] sm:$0xff]
      %v5386 = vld [vmem:[%s11 + $0x3e88] sm:$0xff]
      %v5387 = vld [vmem:[%s11 + $0x3e90] sm:$0xff]
      %v5388 = vld [vmem:[%s11 + $0x3e98] sm:$0xff]
      %v5389 = vld [vmem:[%s11 + $0x3ea0] sm:$0xff]
      %v5390 = vld [vmem:[%s11 + $0x3ea8] sm:$0xff]
      %v5391 = vld [vmem:[%s11 + $0x3eb0] sm:$0xff]
      %v5392 = vld [vmem:[%s11 + $0x3eb8] sm:$0xff]
      %v5393 = vld [vmem:[%s11 + $0x3ec0] sm:$0xff]
      %v5394 = vld [vmem:[%s11 + $0x3ec8] sm:$0xff]
      %v5395 = vld [vmem:[%s11 + $0x3ed0] sm:$0xff]
      %v5396 = vld [vmem:[%s11 + $0x3ed8] sm:$0xff]
      %v5397 = vld [vmem:[%s11 + $0x3ee0] sm:$0xff]
      %v5398 = vld [vmem:[%s11 + $0x3ee8] sm:$0xff]
      %v5399 = vld [vmem:[%s11 + $0x3ef0] sm:$0xff]
      %v5400 = vld [vmem:[%s11 + $0x3ef8] sm:$0xff]
      %v5401 = vld [vmem:[%s11 + $0x3f00] sm:$0xff]
      %v5402 = vld [vmem:[%s11 + $0x3f08] sm:$0xff]
      %v5403 = vld [vmem:[%s11 + $0x3f10] sm:$0xff]
      %v5404 = vld [vmem:[%s11 + $0x3f18] sm:$0xff]
      %v5405 = vld [vmem:[%s11 + $0x3f20] sm:$0xff]
      %v5406 = vld [vmem:[%s11 + $0x3f28] sm:$0xff]
      %v5407 = vld [vmem:[%s11 + $0x3f30] sm:$0xff]
      %v5408 = vld [vmem:[%s11 + $0x3f38] sm:$0xff]
      %v5409 = vld [vmem:[%s11 + $0x3f40] sm:$0xff]
      %v5410 = vld [vmem:[%s11 + $0x3f48] sm:$0xff]
      %v5411 = vld [vmem:[%s11 + $0x3f50] sm:$0xff]
      %v5412 = vld [vmem:[%s11 + $0x3f58] sm:$0xff]
      %v5413 = vld [vmem:[%s11 + $0x3f60] sm:$0xff]
      %v5414 = vld [vmem:[%s11 + $0x3f68] sm:$0xff]
      %v5415 = vld [vmem:[%s11 + $0x3f70] sm:$0xff]
      %v5416 = vld [vmem:[%s11 + $0x3f78] sm:$0xff]
      %v5417 = vld [vmem:[%s11 + $0x3f80] sm:$0xff]
      %v5418 = vld [vmem:[%s11 + $0x3f88] sm:$0xff]
      %v5419 = vld [vmem:[%s11 + $0x3f90] sm:$0xff]
      %v5420 = vld [vmem:[%s11 + $0x3f98] sm:$0xff]
      %v5421 = vld [vmem:[%s11 + $0x3fa0] sm:$0xff]
      %v5422 = vld [vmem:[%s11 + $0x3fa8] sm:$0xff]
      %v5423 = vld [vmem:[%s11 + $0x3fb0] sm:$0xff]
      %v5424 = vld [vmem:[%s11 + $0x3fb8] sm:$0xff]
      %v5425 = vld [vmem:[%s11 + $0x3fc0] sm:$0xff]
      %v5426 = vld [vmem:[%s11 + $0x3fc8] sm:$0xff]
      %v5427 = vld [vmem:[%s11 + $0x3fd0] sm:$0xff]
      %v5428 = vld [vmem:[%s11 + $0x3fd8] sm:$0xff]
      %v5429 = vld [vmem:[%s11 + $0x3fe0] sm:$0xff]
      %v5430 = vld [vmem:[%s11 + $0x3fe8] sm:$0xff]
      %v5431 = vld [vmem:[%s11 + $0x3ff0] sm:$0xff]
      %v5432 = vld [vmem:[%s11 + $0x3ff8] sm:$0xff]
      %v5433 = vld [vmem:[%s11 + $0x4000] sm:$0xff]
      %v5434 = vld [vmem:[%s11 + $0x4008] sm:$0xff]
      %v5435 = vld [vmem:[%s11 + $0x4010] sm:$0xff]
      %v5436 = vld [vmem:[%s11 + $0x4018] sm:$0xff]
      %v5437 = vld [vmem:[%s11 + $0x4020] sm:$0xff]
      %v5438 = vld [vmem:[%s11 + $0x4028] sm:$0xff]
      %v5439 = vld [vmem:[%s11 + $0x4030] sm:$0xff]
      %v5440 = vld [vmem:[%s11 + $0x4038] sm:$0xff]
      %v5441 = vld [vmem:[%s11 + $0x4040] sm:$0xff]
      %v5442 = vld [vmem:[%s11 + $0x4048] sm:$0xff]
      %v5443 = vld [vmem:[%s11 + $0x4050] sm:$0xff]
      %v5444 = vld [vmem:[%s11 + $0x4058] sm:$0xff]
      %v5445 = vld [vmem:[%s11 + $0x4060] sm:$0xff]
      %v5446 = vld [vmem:[%s11 + $0x4068] sm:$0xff]
      %v5447 = vld [vmem:[%s11 + $0x4070] sm:$0xff]
      %v5448 = vld [vmem:[%s11 + $0x4078] sm:$0xff]
      %v5449 = vld [vmem:[%s11 + $0x4080] sm:$0xff]
      %v5450 = vld [vmem:[%s11 + $0x4088] sm:$0xff]
      %v5451 = vld [vmem:[%s11 + $0x4090] sm:$0xff]
      %v5452 = vld [vmem:[%s11 + $0x4098] sm:$0xff]
      %v5453 = vld [vmem:[%s11 + $0x40a0] sm:$0xff]
      %v5454 = vld [vmem:[%s11 + $0x40a8] sm:$0xff]
      %v5455 = vld [vmem:[%s11 + $0x40b0] sm:$0xff]
      %v5456 = vld [vmem:[%s11 + $0x40b8] sm:$0xff]
      %v5457 = vld [vmem:[%s11 + $0x40c0] sm:$0xff]
      %v5458 = vld [vmem:[%s11 + $0x40c8] sm:$0xff]
      %v5459 = vld [vmem:[%s11 + $0x40d0] sm:$0xff]
      %v5460 = vld [vmem:[%s11 + $0x40d8] sm:$0xff]
      %v5461 = vld [vmem:[%s11 + $0x40e0] sm:$0xff]
      %v5462 = vld [vmem:[%s11 + $0x40e8] sm:$0xff]
      %v5463 = vld [vmem:[%s11 + $0x40f0] sm:$0xff]
      %v5464 = vld [vmem:[%s11 + $0x40f8] sm:$0xff]
      %v5465 = vld [vmem:[%s11 + $0x4100] sm:$0xff]
      %v5466 = vld [vmem:[%s11 + $0x4108] sm:$0xff]
      %v5467 = vld [vmem:[%s11 + $0x4110] sm:$0xff]
      %v5468 = vld [vmem:[%s11 + $0x4118] sm:$0xff]
      %v5469 = vld [vmem:[%s11 + $0x4120] sm:$0xff]
      %v5470 = vld [vmem:[%s11 + $0x4128] sm:$0xff]
      %v5471 = vld [vmem:[%s11 + $0x4130] sm:$0xff]
      %v5472 = vld [vmem:[%s11 + $0x4138] sm:$0xff]
      %v5473 = vld [vmem:[%s11 + $0x4140] sm:$0xff]
      %v5474 = vld [vmem:[%s11 + $0x4148] sm:$0xff]
      %v5475 = vld [vmem:[%s11 + $0x4150] sm:$0xff]
      %v5476 = vld [vmem:[%s11 + $0x4158] sm:$0xff]
      %v5477 = vld [vmem:[%s11 + $0x4160] sm:$0xff]
      %v5478 = vld [vmem:[%s11 + $0x4168] sm:$0xff]
      %v5479 = vld [vmem:[%s11 + $0x4170] sm:$0xff]
      %v5480 = vld [vmem:[%s11 + $0x4178] sm:$0xff]
      %v5481 = vld [vmem:[%s11 + $0x4180] sm:$0xff]
      %v5482 = vld [vmem:[%s11 + $0x4188] sm:$0xff]
      %v5483 = vld [vmem:[%s11 + $0x4190] sm:$0xff]
      %v5484 = vld [vmem:[%s11 + $0x4198] sm:$0xff]
      %v5485 = vld [vmem:[%s11 + $0x41a0] sm:$0xff]
      %v5486 = vld [vmem:[%s11 + $0x41a8] sm:$0xff]
      %v5487 = vld [vmem:[%s11 + $0x41b0] sm:$0xff]
      %v5488 = vld [vmem:[%s11 + $0x41b8] sm:$0xff]
      %v5489 = vld [vmem:[%s11 + $0x41c0] sm:$0xff]
      %v5490 = vld [vmem:[%s11 + $0x41c8] sm:$0xff]
      %v5491 = vld [vmem:[%s11 + $0x41d0] sm:$0xff]
      %v5492 = vld [vmem:[%s11 + $0x41d8] sm:$0xff]
      %v5493 = vld [vmem:[%s11 + $0x41e0] sm:$0xff]
      %v5494 = vld [vmem:[%s11 + $0x41e8] sm:$0xff]
      %v5495 = vld [vmem:[%s11 + $0x41f0] sm:$0xff]
      %v5496 = vld [vmem:[%s11 + $0x41f8] sm:$0xff]
      %v5497 = vld [vmem:[%s11 + $0x4200] sm:$0xff]
      %v5498 = vld [vmem:[%s11 + $0x4208] sm:$0xff]
      %v5499 = vld [vmem:[%s11 + $0x4210] sm:$0xff]
      %v5500 = vld [vmem:[%s11 + $0x4218] sm:$0xff]
      %v5501 = vld [vmem:[%s11 + $0x4220] sm:$0xff]
      %v5502 = vld [vmem:[%s11 + $0x4228] sm:$0xff]
      %v5503 = vld [vmem:[%s11 + $0x4230] sm:$0xff]
      %v5504 = vld [vmem:[%s11 + $0x4238] sm:$0xff]
      %v5505 = vld [vmem:[%s11 + $0x4240] sm:$0xff]
      %v5506 = vld [vmem:[%s11 + $0x4248] sm:$0xff]
      %v5507 = vld [vmem:[%s11 + $0x4250] sm:$0xff]
      %v5508 = vld [vmem:[%s11 + $0x4258] sm:$0xff]
      %v5509 = vld [vmem:[%s11 + $0x4260] sm:$0xff]
      %v5510 = vld [vmem:[%s11 + $0x4268] sm:$0xff]
      %v5511 = vld [vmem:[%s11 + $0x4270] sm:$0xff]
      %v5512 = vld [vmem:[%s11 + $0x4278] sm:$0xff]
      %v5513 = vld [vmem:[%s11 + $0x4280] sm:$0xff]
      %v5514 = vld [vmem:[%s11 + $0x4288] sm:$0xff]
      %v5515 = vld [vmem:[%s11 + $0x4290] sm:$0xff]
      %v5516 = vld [vmem:[%s11 + $0x4298] sm:$0xff]
      %v5517 = vld [vmem:[%s11 + $0x42a0] sm:$0xff]
      %v5518 = vld [vmem:[%s11 + $0x42a8] sm:$0xff]
      %v5519 = vld [vmem:[%s11 + $0x42b0] sm:$0xff]
      %v5520 = vld [vmem:[%s11 + $0x42b8] sm:$0xff]
      %v5521 = vld [vmem:[%s11 + $0x42c0] sm:$0xff]
      %v5522 = vld [vmem:[%s11 + $0x42c8] sm:$0xff]
      %v5523 = vld [vmem:[%s11 + $0x42d0] sm:$0xff]
      %v5524 = vld [vmem:[%s11 + $0x42d8] sm:$0xff]
      %v5525 = vld [vmem:[%s11 + $0x42e0] sm:$0xff]
      %v5526 = vld [vmem:[%s11 + $0x42e8] sm:$0xff]
      %v5527 = vld [vmem:[%s11 + $0x42f0] sm:$0xff]
      %v5528 = vld [vmem:[%s11 + $0x42f8] sm:$0xff]
      %v5529 = vld [vmem:[%s11 + $0x4300] sm:$0xff]
      %v5530 = vld [vmem:[%s11 + $0x4308] sm:$0xff]
      %v5531 = vld [vmem:[%s11 + $0x4310] sm:$0xff]
      %v5532 = vld [vmem:[%s11 + $0x4318] sm:$0xff]
      %v5533 = vld [vmem:[%s11 + $0x4320] sm:$0xff]
      %v5534 = vld [vmem:[%s11 + $0x4328] sm:$0xff]
      %v5535 = vld [vmem:[%s11 + $0x4330] sm:$0xff]
      %v5536 = vld [vmem:[%s11 + $0x4338] sm:$0xff]
      %v5537 = vld [vmem:[%s11 + $0x4340] sm:$0xff]
      %v5538 = vld [vmem:[%s11 + $0x4348] sm:$0xff]
      %v5539 = vld [vmem:[%s11 + $0x4350] sm:$0xff]
      %v5540 = vld [vmem:[%s11 + $0x4358] sm:$0xff]
      %v5541 = vld [vmem:[%s11 + $0x4360] sm:$0xff]
      %v5542 = vld [vmem:[%s11 + $0x4368] sm:$0xff]
      %v5543 = vld [vmem:[%s11 + $0x4370] sm:$0xff]
      %v5544 = vld [vmem:[%s11 + $0x4378] sm:$0xff]
      %v5545 = vld [vmem:[%s11 + $0x4380] sm:$0xff]
      %v5546 = vld [vmem:[%s11 + $0x4388] sm:$0xff]
      %v5547 = vld [vmem:[%s11 + $0x4390] sm:$0xff]
      %v5548 = vld [vmem:[%s11 + $0x4398] sm:$0xff]
      %v5549 = vld [vmem:[%s11 + $0x43a0] sm:$0xff]
      %v5550 = vld [vmem:[%s11 + $0x43a8] sm:$0xff]
      %v5551 = vld [vmem:[%s11 + $0x43b0] sm:$0xff]
      %v5552 = vld [vmem:[%s11 + $0x43b8] sm:$0xff]
      %v5553 = vld [vmem:[%s11 + $0x43c0] sm:$0xff]
      %v5554 = vld [vmem:[%s11 + $0x43c8] sm:$0xff]
      %v5555 = vld [vmem:[%s11 + $0x43d0] sm:$0xff]
      %v5556 = vld [vmem:[%s11 + $0x43d8] sm:$0xff]
      %v5557 = vld [vmem:[%s11 + $0x43e0] sm:$0xff]
      %v5558 = vld [vmem:[%s11 + $0x43e8] sm:$0xff]
      %v5559 = vld [vmem:[%s11 + $0x43f0] sm:$0xff]
      %v5560 = vld [vmem:[%s11 + $0x43f8] sm:$0xff]
      %v5561 = vld [vmem:[%s11 + $0x4400] sm:$0xff]
      %v5562 = vld [vmem:[%s11 + $0x4408] sm:$0xff]
      %v5563 = vld [vmem:[%s11 + $0x4410] sm:$0xff]
      %v5564 = vld [vmem:[%s11 + $0x4418] sm:$0xff]
      %v5565 = vld [vmem:[%s11 + $0x4420] sm:$0xff]
      %v5566 = vld [vmem:[%s11 + $0x4428] sm:$0xff]
      %v5567 = vld [vmem:[%s11 + $0x4430] sm:$0xff]
      %v5568 = vld [vmem:[%s11 + $0x4438] sm:$0xff]
      %v5569 = vld [vmem:[%s11 + $0x4440] sm:$0xff]
      %v5570 = vld [vmem:[%s11 + $0x4448] sm:$0xff]
      %v5571 = vld [vmem:[%s11 + $0x4450] sm:$0xff]
      %v5572 = vld [vmem:[%s11 + $0x4458] sm:$0xff]
      %v5573 = vld [vmem:[%s11 + $0x4460] sm:$0xff]
      %v5574 = vld [vmem:[%s11 + $0x4468] sm:$0xff]
      %v5575 = vld [vmem:[%s11 + $0x4470] sm:$0xff]
      %v5576 = vld [vmem:[%s11 + $0x4478] sm:$0xff]
      %v5577 = vld [vmem:[%s11 + $0x4480] sm:$0xff]
      %v5578 = vld [vmem:[%s11 + $0x4488] sm:$0xff]
      %v5579 = vld [vmem:[%s11 + $0x4490] sm:$0xff]
      %v5580 = vld [vmem:[%s11 + $0x4498] sm:$0xff]
      %v5581 = vld [vmem:[%s11 + $0x44a0] sm:$0xff]
      %v5582 = vld [vmem:[%s11 + $0x44a8] sm:$0xff]
      %v5583 = vld [vmem:[%s11 + $0x44b0] sm:$0xff]
      %v5584 = vld [vmem:[%s11 + $0x44b8] sm:$0xff]
      %v5585 = vld [vmem:[%s11 + $0x44c0] sm:$0xff]
      %v5586 = vld [vmem:[%s11 + $0x44c8] sm:$0xff]
      %v5587 = vld [vmem:[%s11 + $0x44d0] sm:$0xff]
      %v5588 = vld [vmem:[%s11 + $0x44d8] sm:$0xff]
      %v5589 = vld [vmem:[%s11 + $0x44e0] sm:$0xff]
      %v5590 = vld [vmem:[%s11 + $0x44e8] sm:$0xff]
      %v5591 = vld [vmem:[%s11 + $0x44f0] sm:$0xff]
      %v5592 = vld [vmem:[%s11 + $0x44f8] sm:$0xff]
      %v5593 = vld [vmem:[%s11 + $0x4500] sm:$0xff]
      %v5594 = vld [vmem:[%s11 + $0x4508] sm:$0xff]
      %v5595 = vld [vmem:[%s11 + $0x4510] sm:$0xff]
      %v5596 = vld [vmem:[%s11 + $0x4518] sm:$0xff]
      %v5597 = vld [vmem:[%s11 + $0x4520] sm:$0xff]
      %v5598 = vld [vmem:[%s11 + $0x4528] sm:$0xff]
      %v5599 = vld [vmem:[%s11 + $0x4530] sm:$0xff]
      %v5600 = vld [vmem:[%s11 + $0x4538] sm:$0xff]
      %v5601 = vld [vmem:[%s11 + $0x4540] sm:$0xff]
      %v5602 = vld [vmem:[%s11 + $0x4548] sm:$0xff]
      %v5603 = vld [vmem:[%s11 + $0x4550] sm:$0xff]
      %v5604 = vld [vmem:[%s11 + $0x4558] sm:$0xff]
      %v5605 = vld [vmem:[%s11 + $0x4560] sm:$0xff]
      %v5606 = vld [vmem:[%s11 + $0x4568] sm:$0xff]
      %v5607 = vld [vmem:[%s11 + $0x4570] sm:$0xff]
      %v5608 = vld [vmem:[%s11 + $0x4578] sm:$0xff]
      %v5609 = vld [vmem:[%s11 + $0x4580] sm:$0xff]
      %v5610 = vld [vmem:[%s11 + $0x4588] sm:$0xff]
      %v5611 = vld [vmem:[%s11 + $0x4590] sm:$0xff]
      %v5612 = vld [vmem:[%s11 + $0x4598] sm:$0xff]
      %v5613 = vld [vmem:[%s11 + $0x45a0] sm:$0xff]
      %v5614 = vld [vmem:[%s11 + $0x45a8] sm:$0xff]
      %v5615 = vld [vmem:[%s11 + $0x45b0] sm:$0xff]
      %v5616 = vld [vmem:[%s11 + $0x45b8] sm:$0xff]
      %v5617 = vld [vmem:[%s11 + $0x45c0] sm:$0xff]
      %v5618 = vld [vmem:[%s11 + $0x45c8] sm:$0xff]
      %v5619 = vld [vmem:[%s11 + $0x45d0] sm:$0xff]
      %v5620 = vld [vmem:[%s11 + $0x45d8] sm:$0xff]
      %v5621 = vld [vmem:[%s11 + $0x45e0] sm:$0xff]
      %v5622 = vld [vmem:[%s11 + $0x45e8] sm:$0xff]
      %v5623 = vld [vmem:[%s11 + $0x45f0] sm:$0xff]
      %v5624 = vld [vmem:[%s11 + $0x45f8] sm:$0xff]
      %v5625 = vld [vmem:[%s11 + $0x4600] sm:$0xff]
      %v5626 = vld [vmem:[%s11 + $0x4608] sm:$0xff]
      %v5627 = vld [vmem:[%s11 + $0x4610] sm:$0xff]
      %v5628 = vld [vmem:[%s11 + $0x4618] sm:$0xff]
      %v5629 = vld [vmem:[%s11 + $0x4620] sm:$0xff]
      %v5630 = vld [vmem:[%s11 + $0x4628] sm:$0xff]
      %v5631 = vld [vmem:[%s11 + $0x4630] sm:$0xff]
      %v5632 = vld [vmem:[%s11 + $0x4638] sm:$0xff]
      %v5633 = vld [vmem:[%s11 + $0x4640] sm:$0xff]
      %v5634 = vld [vmem:[%s11 + $0x4648] sm:$0xff]
      %v5635 = vld [vmem:[%s11 + $0x4650] sm:$0xff]
      %v5636 = vld [vmem:[%s11 + $0x4658] sm:$0xff]
      %v5637 = vld [vmem:[%s11 + $0x4660] sm:$0xff]
      %v5638 = vld [vmem:[%s11 + $0x4668] sm:$0xff]
      %v5639 = vld [vmem:[%s11 + $0x4670] sm:$0xff]
      %v5640 = vld [vmem:[%s11 + $0x4678] sm:$0xff]
      %v5641 = vld [vmem:[%s11 + $0x4680] sm:$0xff]
      %v5642 = vld [vmem:[%s11 + $0x4688] sm:$0xff]
      %v5643 = vld [vmem:[%s11 + $0x4690] sm:$0xff]
      %v5644 = vld [vmem:[%s11 + $0x4698] sm:$0xff]
      %v5645 = vld [vmem:[%s11 + $0x46a0] sm:$0xff]
      %v5646 = vld [vmem:[%s11 + $0x46a8] sm:$0xff]
      %v5647 = vld [vmem:[%s11 + $0x46b0] sm:$0xff]
      %v5648 = vld [vmem:[%s11 + $0x46b8] sm:$0xff]
      %v5649 = vld [vmem:[%s11 + $0x46c0] sm:$0xff]
      %v5650 = vld [vmem:[%s11 + $0x46c8] sm:$0xff]
      %v5651 = vld [vmem:[%s11 + $0x46d0] sm:$0xff]
      %v5652 = vld [vmem:[%s11 + $0x46d8] sm:$0xff]
      %v5653 = vld [vmem:[%s11 + $0x46e0] sm:$0xff]
      %v5654 = vld [vmem:[%s11 + $0x46e8] sm:$0xff]
      %v5655 = vld [vmem:[%s11 + $0x46f0] sm:$0xff]
      %v5656 = vld [vmem:[%s11 + $0x46f8] sm:$0xff]
      %v5657 = vld [vmem:[%s11 + $0x4700] sm:$0xff]
      %v5658 = vld [vmem:[%s11 + $0x4708] sm:$0xff]
      %v5659 = vld [vmem:[%s11 + $0x4710] sm:$0xff]
      %v5660 = vld [vmem:[%s11 + $0x4718] sm:$0xff]
      %v5661 = vld [vmem:[%s11 + $0x4720] sm:$0xff]
      %v5662 = vld [vmem:[%s11 + $0x4728] sm:$0xff]
      %v5663 = vld [vmem:[%s11 + $0x4730] sm:$0xff]
      %v5664 = vld [vmem:[%s11 + $0x4738] sm:$0xff]
      %v5665 = vld [vmem:[%s11 + $0x4740] sm:$0xff]
      %v5666 = vld [vmem:[%s11 + $0x4748] sm:$0xff]
      %v5667 = vld [vmem:[%s11 + $0x4750] sm:$0xff]
      %v5668 = vld [vmem:[%s11 + $0x4758] sm:$0xff]
      %v5669 = vld [vmem:[%s11 + $0x4760] sm:$0xff]
      %v5670 = vld [vmem:[%s11 + $0x4768] sm:$0xff]
      %v5671 = vld [vmem:[%s11 + $0x4770] sm:$0xff]
      %v5672 = vld [vmem:[%s11 + $0x4778] sm:$0xff]
      %v5673 = vld [vmem:[%s11 + $0x4780] sm:$0xff]
      %v5674 = vld [vmem:[%s11 + $0x4788] sm:$0xff]
      %v5675 = vld [vmem:[%s11 + $0x4790] sm:$0xff]
      %v5676 = vld [vmem:[%s11 + $0x4798] sm:$0xff]
      %v5677 = vld [vmem:[%s11 + $0x47a0] sm:$0xff]
      %v5678 = vld [vmem:[%s11 + $0x47a8] sm:$0xff]
      %v5679 = vld [vmem:[%s11 + $0x47b0] sm:$0xff]
      %v5680 = vld [vmem:[%s11 + $0x47b8] sm:$0xff]
      %v5681 = vld [vmem:[%s11 + $0x47c0] sm:$0xff]
      %v5682 = vld [vmem:[%s11 + $0x47c8] sm:$0xff]
      %v5683 = vld [vmem:[%s11 + $0x47d0] sm:$0xff]
      %v5684 = vld [vmem:[%s11 + $0x47d8] sm:$0xff]
      %v5685 = vld [vmem:[%s11 + $0x47e0] sm:$0xff]
      %v5686 = vld [vmem:[%s11 + $0x47e8] sm:$0xff]
      %v5687 = vld [vmem:[%s11 + $0x47f0] sm:$0xff]
      %v5688 = vld [vmem:[%s11 + $0x47f8] sm:$0xff]
      %v5689 = vld [vmem:[%s12] sm:$0xff]
      %v5690 = vld [vmem:[%s12 + $0x8] sm:$0xff]
      %v5693 = vlaneseq
      %v5694 = vshrl.u32 %v5693, 7
      %v5695 = vsub.s32 0, %v5694
      %v5696 = vrot.slane %v5689, %v5695
      %v5697 = vlaneseq
      %v5698 = vshrl.u32 %v5697, 7
      %v5699 = vsub.s32 1, %v5698
      %v5700 = vrot.slane %v5689, %v5699
      %v5701 = vlaneseq
      %v5702 = vshrl.u32 %v5701, 7
      %v5703 = vsub.s32 2, %v5702
      %v5704 = vrot.slane %v5689, %v5703
      %v5705 = vlaneseq
      %v5706 = vshrl.u32 %v5705, 7
      %v5707 = vsub.s32 3, %v5706
      %v5708 = vrot.slane %v5689, %v5707
      %v5709 = vlaneseq
      %v5710 = vshrl.u32 %v5709, 7
      %v5711 = vsub.s32 4, %v5710
      %v5712 = vrot.slane %v5689, %v5711
      %v5713 = vlaneseq
      %v5714 = vshrl.u32 %v5713, 7
      %v5715 = vsub.s32 5, %v5714
      %v5716 = vrot.slane %v5689, %v5715
      %v5717 = vlaneseq
      %v5718 = vshrl.u32 %v5717, 7
      %v5719 = vsub.s32 6, %v5718
      %v5720 = vrot.slane %v5689, %v5719
      %v5721 = vlaneseq
      %v5722 = vshrl.u32 %v5721, 7
      %v5723 = vsub.s32 7, %v5722
      %v5724 = vrot.slane %v5689, %v5723
      %v5725 = vlaneseq
      %v5726 = vshrl.u32 %v5725, 7
      %v5727 = vsub.s32 0, %v5726
      %v5728 = vrot.slane %v5690, %v5727
      %v5729 = vlaneseq
      %v5730 = vshrl.u32 %v5729, 7
      %v5731 = vsub.s32 1, %v5730
      %v5732 = vrot.slane %v5690, %v5731
      %v5733 = vlaneseq
      %v5734 = vshrl.u32 %v5733, 7
      %v5735 = vsub.s32 2, %v5734
      %v5736 = vrot.slane %v5690, %v5735
      %v5737 = vlaneseq
      %v5738 = vshrl.u32 %v5737, 7
      %v5739 = vsub.s32 3, %v5738
      %v5740 = vrot.slane %v5690, %v5739
      %v5741 = vlaneseq
      %v5742 = vshrl.u32 %v5741, 7
      %v5743 = vsub.s32 4, %v5742
      %v5744 = vrot.slane %v5690, %v5743
      %v5745 = vlaneseq
      %v5746 = vshrl.u32 %v5745, 7
      %v5747 = vsub.s32 5, %v5746
      %v5748 = vrot.slane %v5690, %v5747
      %v5749 = vlaneseq
      %v5750 = vshrl.u32 %v5749, 7
      %v5751 = vsub.s32 6, %v5750
      %v5752 = vrot.slane %v5690, %v5751
      %v5753 = vlaneseq
      %v5754 = vshrl.u32 %v5753, 7
      %v5755 = vsub.s32 7, %v5754
      %v5756 = vrot.slane %v5690, %v5755
      %5773 = vmatprep.subr.mxu0 %v3626
      %5774 = vmatpush1.msra.mxu0 %v3625
      %5775 = vmatprep.subr.mxu0 %v3610
      %5776 = vmatpush1.msra.mxu0 %v3609
      %5777 = vmatprep.subr.mxu0 %v3594
      %5778 = vmatpush1.msra.mxu0 %v3593
      %5779 = vmatprep.subr.mxu0 %v3578
      %5780 = vmatpush1.msra.mxu0 %v3577
      %5781 = vmatprep.subr.mxu0 %v3562
      %5782 = vmatpush1.msra.mxu0 %v3561
      %5783 = vmatprep.subr.mxu0 %v3546
      %5784 = vmatpush1.msra.mxu0 %v3545
      %5785 = vmatprep.subr.mxu0 %v3530
      %5786 = vmatpush1.msra.mxu0 %v3529
      %5787 = vmatprep.subr.mxu0 %v3514
      %5788 = vmatpush1.msra.mxu0 %v3513
      %5789 = vmatprep.subr.mxu0 %v3498
      %5790 = vmatpush1.msra.mxu0 %v3497
      %5791 = vmatprep.subr.mxu0 %v3482
      %5792 = vmatpush1.msra.mxu0 %v3481
      %5793 = vmatprep.subr.mxu0 %v3466
      %5794 = vmatpush1.msra.mxu0 %v3465
      %5795 = vmatprep.subr.mxu0 %v3450
      %5796 = vmatpush1.msra.mxu0 %v3449
      %5797 = vmatprep.subr.mxu0 %v3434
      %5798 = vmatpush1.msra.mxu0 %v3433
      %5799 = vmatprep.subr.mxu0 %v3418
      %5800 = vmatpush1.msra.mxu0 %v3417
      %5801 = vmatprep.subr.mxu0 %v3402
      %5802 = vmatpush1.msra.mxu0 %v3401
      %5803 = vmatprep.subr.mxu0 %v3386
      %5804 = vmatpush1.msra.mxu0 %v3385
      %5805 = vmatprep.subr.mxu0 %v3882
      %5806 = vmatpush2.msra.mxu0 %v3881
      %5807 = vmatprep.subr.mxu0 %v3866
      %5808 = vmatpush2.msra.mxu0 %v3865
      %5809 = vmatprep.subr.mxu0 %v3850
      %5810 = vmatpush2.msra.mxu0 %v3849
      %5811 = vmatprep.subr.mxu0 %v3834
      %5812 = vmatpush2.msra.mxu0 %v3833
      %5813 = vmatprep.subr.mxu0 %v3818
      %5814 = vmatpush2.msra.mxu0 %v3817
      %5815 = vmatprep.subr.mxu0 %v3802
      %5816 = vmatpush2.msra.mxu0 %v3801
      %5817 = vmatprep.subr.mxu0 %v3786
      %5818 = vmatpush2.msra.mxu0 %v3785
      %5819 = vmatprep.subr.mxu0 %v3770
      %5820 = vmatpush2.msra.mxu0 %v3769
      %5821 = vmatprep.subr.mxu0 %v3754
      %5822 = vmatpush2.msra.mxu0 %v3753
      %5823 = vmatprep.subr.mxu0 %v3738
      %5824 = vmatpush2.msra.mxu0 %v3737
      %5825 = vmatprep.subr.mxu0 %v3722
      %5826 = vmatpush2.msra.mxu0 %v3721
      %5827 = vmatprep.subr.mxu0 %v3706
      %5828 = vmatpush2.msra.mxu0 %v3705
      %5829 = vmatprep.subr.mxu0 %v3690
      %5830 = vmatpush2.msra.mxu0 %v3689
      %5831 = vmatprep.subr.mxu0 %v3674
      %5832 = vmatpush2.msra.mxu0 %v3673
      %5833 = vmatprep.subr.mxu0 %v3658
      %5834 = vmatpush2.msra.mxu0 %v3657
      %5835 = vmatprep.subr.mxu0 %v3642
      %5836 = vmatpush2.msra.mxu0 %v3641
      %5837 = vmatprep.mubr.f32.mxu0 %v3382
      %5838 = vmatmul.mubr.f32.gmra.mxu0 %v3381
      %v5839 = vpop.f32.mrf.mxu0
      %v5840 = vadd.f32 %v5696, %v5839
      %v5841 = vpop.f32.mrf.mxu0
      %v5842 = vadd.f32 %v5700, %v5841
      %5843 = vdwg.mxu0
      %5844 = vmatprep.subr.mxu0 %v4138
      %5845 = vmatpush1.msra.mxu0 %v4137
      %5846 = vmatprep.subr.mxu0 %v4122
      %5847 = vmatpush1.msra.mxu0 %v4121
      %5848 = vmatprep.subr.mxu0 %v4106
      %5849 = vmatpush1.msra.mxu0 %v4105
      %5850 = vmatprep.subr.mxu0 %v4090
      %5851 = vmatpush1.msra.mxu0 %v4089
      %5852 = vmatprep.subr.mxu0 %v4074
      %5853 = vmatpush1.msra.mxu0 %v4073
      %5854 = vmatprep.subr.mxu0 %v4058
      %5855 = vmatpush1.msra.mxu0 %v4057
      %5856 = vmatprep.subr.mxu0 %v4042
      %5857 = vmatpush1.msra.mxu0 %v4041
      %5858 = vmatprep.subr.mxu0 %v4026
      %5859 = vmatpush1.msra.mxu0 %v4025
      %5860 = vmatprep.subr.mxu0 %v4010
      %5861 = vmatpush1.msra.mxu0 %v4009
      %5862 = vmatprep.subr.mxu0 %v3994
      %5863 = vmatpush1.msra.mxu0 %v3993
      %5864 = vmatprep.subr.mxu0 %v3978
      %5865 = vmatpush1.msra.mxu0 %v3977
      %5866 = vmatprep.subr.mxu0 %v3962
      %5867 = vmatpush1.msra.mxu0 %v3961
      %5868 = vmatprep.subr.mxu0 %v3946
      %5869 = vmatpush1.msra.mxu0 %v3945
      %5870 = vmatprep.subr.mxu0 %v3930
      %5871 = vmatpush1.msra.mxu0 %v3929
      %5872 = vmatprep.subr.mxu0 %v3914
      %5873 = vmatpush1.msra.mxu0 %v3913
      %5874 = vmatprep.subr.mxu0 %v3898
      %5875 = vmatpush1.msra.mxu0 %v3897
      %5876 = vmatprep.subr.mxu0 %v4394
      %5877 = vmatpush2.msra.mxu0 %v4393
      %5878 = vmatprep.subr.mxu0 %v4378
      %5879 = vmatpush2.msra.mxu0 %v4377
      %5880 = vmatprep.subr.mxu0 %v4362
      %5881 = vmatpush2.msra.mxu0 %v4361
      %5882 = vmatprep.subr.mxu0 %v4346
      %5883 = vmatpush2.msra.mxu0 %v4345
      %5884 = vmatprep.subr.mxu0 %v4330
      %5885 = vmatpush2.msra.mxu0 %v4329
      %5886 = vmatprep.subr.mxu0 %v4314
      %5887 = vmatpush2.msra.mxu0 %v4313
      %5888 = vmatprep.subr.mxu0 %v4298
      %5889 = vmatpush2.msra.mxu0 %v4297
      %5890 = vmatprep.subr.mxu0 %v4282
      %5891 = vmatpush2.msra.mxu0 %v4281
      %5892 = vmatprep.subr.mxu0 %v4266
      %5893 = vmatpush2.msra.mxu0 %v4265
      %5894 = vmatprep.subr.mxu0 %v4250
      %5895 = vmatpush2.msra.mxu0 %v4249
      %5896 = vmatprep.subr.mxu0 %v4234
      %5897 = vmatpush2.msra.mxu0 %v4233
      %5898 = vmatprep.subr.mxu0 %v4218
      %5899 = vmatpush2.msra.mxu0 %v4217
      %5900 = vmatprep.subr.mxu0 %v4202
      %5901 = vmatpush2.msra.mxu0 %v4201
      %5902 = vmatprep.subr.mxu0 %v4186
      %5903 = vmatpush2.msra.mxu0 %v4185
      %5904 = vmatprep.subr.mxu0 %v4170
      %5905 = vmatpush2.msra.mxu0 %v4169
      %5906 = vmatprep.subr.mxu0 %v4154
      %5907 = vmatpush2.msra.mxu0 %v4153
      %5908 = vmatprep.mubr.f32.mxu0 %v3384
      %5909 = vmatmul.mubr.f32.gmra.mxu0 %v3383
      %v5910 = vpop.f32.mrf.mxu0
      %v5911 = vadd.f32 %v5840, %v5910
      %v5912 = vpop.f32.mrf.mxu0
      %v5913 = vadd.f32 %v5842, %v5912
      %5914 = vdwg.mxu0
      %5915 = vmatprep.subr.mxu0 %v4650
      %5916 = vmatpush1.msra.mxu0 %v4649
      %5917 = vmatprep.subr.mxu0 %v4634
      %5918 = vmatpush1.msra.mxu0 %v4633
      %5919 = vmatprep.subr.mxu0 %v4618
      %5920 = vmatpush1.msra.mxu0 %v4617
      %5921 = vmatprep.subr.mxu0 %v4602
      %5922 = vmatpush1.msra.mxu0 %v4601
      %5923 = vmatprep.subr.mxu0 %v4586
      %5924 = vmatpush1.msra.mxu0 %v4585
      %5925 = vmatprep.subr.mxu0 %v4570
      %5926 = vmatpush1.msra.mxu0 %v4569
      %5927 = vmatprep.subr.mxu0 %v4554
      %5928 = vmatpush1.msra.mxu0 %v4553
      %5929 = vmatprep.subr.mxu0 %v4538
      %5930 = vmatpush1.msra.mxu0 %v4537
      %5931 = vmatprep.subr.mxu0 %v4522
      %5932 = vmatpush1.msra.mxu0 %v4521
      %5933 = vmatprep.subr.mxu0 %v4506
      %5934 = vmatpush1.msra.mxu0 %v4505
      %5935 = vmatprep.subr.mxu0 %v4490
      %5936 = vmatpush1.msra.mxu0 %v4489
      %5937 = vmatprep.subr.mxu0 %v4474
      %5938 = vmatpush1.msra.mxu0 %v4473
      %5939 = vmatprep.subr.mxu0 %v4458
      %5940 = vmatpush1.msra.mxu0 %v4457
      %5941 = vmatprep.subr.mxu0 %v4442
      %5942 = vmatpush1.msra.mxu0 %v4441
      %5943 = vmatprep.subr.mxu0 %v4426
      %5944 = vmatpush1.msra.mxu0 %v4425
      %5945 = vmatprep.subr.mxu0 %v4410
      %5946 = vmatpush1.msra.mxu0 %v4409
      %5947 = vmatprep.subr.mxu0 %v4906
      %5948 = vmatpush2.msra.mxu0 %v4905
      %5949 = vmatprep.subr.mxu0 %v4890
      %5950 = vmatpush2.msra.mxu0 %v4889
      %5951 = vmatprep.subr.mxu0 %v4874
      %5952 = vmatpush2.msra.mxu0 %v4873
      %5953 = vmatprep.subr.mxu0 %v4858
      %5954 = vmatpush2.msra.mxu0 %v4857
      %5955 = vmatprep.subr.mxu0 %v4842
      %5956 = vmatpush2.msra.mxu0 %v4841
      %5957 = vmatprep.subr.mxu0 %v4826
      %5958 = vmatpush2.msra.mxu0 %v4825
      %5959 = vmatprep.subr.mxu0 %v4810
      %5960 = vmatpush2.msra.mxu0 %v4809
      %5961 = vmatprep.subr.mxu0 %v4794
      %5962 = vmatpush2.msra.mxu0 %v4793
      %5963 = vmatprep.subr.mxu0 %v4778
      %5964 = vmatpush2.msra.mxu0 %v4777
      %5965 = vmatprep.subr.mxu0 %v4762
      %5966 = vmatpush2.msra.mxu0 %v4761
      %5967 = vmatprep.subr.mxu0 %v4746
      %5968 = vmatpush2.msra.mxu0 %v4745
      %5969 = vmatprep.subr.mxu0 %v4730
      %5970 = vmatpush2.msra.mxu0 %v4729
      %5971 = vmatprep.subr.mxu0 %v4714
      %5972 = vmatpush2.msra.mxu0 %v4713
      %5973 = vmatprep.subr.mxu0 %v4698
      %5974 = vmatpush2.msra.mxu0 %v4697
      %5975 = vmatprep.subr.mxu0 %v4682
      %5976 = vmatpush2.msra.mxu0 %v4681
      %5977 = vmatprep.subr.mxu0 %v4666
      %5978 = vmatpush2.msra.mxu0 %v4665
      %5979 = vmatprep.mubr.f32.mxu0 %v635
      %5980 = vmatmul.mubr.f32.gmra.mxu0 %v3380
      %v5981 = vpop.f32.mrf.mxu0
      %v5982 = vadd.f32 %v5911, %v5981
      %v5983 = vpop.f32.mrf.mxu0
      %v5984 = vadd.f32 %v5913, %v5983
      %5985 = vdwg.mxu0
      %5986 = vmatprep.subr.mxu0 %v5162
      %5987 = vmatpush1.msra.mxu0 %v5161
      %5988 = vmatprep.subr.mxu0 %v5146
      %5989 = vmatpush1.msra.mxu0 %v5145
      %5990 = vmatprep.subr.mxu0 %v5130
      %5991 = vmatpush1.msra.mxu0 %v5129
      %5992 = vmatprep.subr.mxu0 %v5114
      %5993 = vmatpush1.msra.mxu0 %v5113
      %5994 = vmatprep.subr.mxu0 %v5098
      %5995 = vmatpush1.msra.mxu0 %v5097
      %5996 = vmatprep.subr.mxu0 %v5082
      %5997 = vmatpush1.msra.mxu0 %v5081
      %5998 = vmatprep.subr.mxu0 %v5066
      %5999 = vmatpush1.msra.mxu0 %v5065
      %6000 = vmatprep.subr.mxu0 %v5050
      %6001 = vmatpush1.msra.mxu0 %v5049
      %6002 = vmatprep.subr.mxu0 %v5034
      %6003 = vmatpush1.msra.mxu0 %v5033
      %6004 = vmatprep.subr.mxu0 %v5018
      %6005 = vmatpush1.msra.mxu0 %v5017
      %6006 = vmatprep.subr.mxu0 %v5002
      %6007 = vmatpush1.msra.mxu0 %v5001
      %6008 = vmatprep.subr.mxu0 %v4986
      %6009 = vmatpush1.msra.mxu0 %v4985
      %6010 = vmatprep.subr.mxu0 %v4970
      %6011 = vmatpush1.msra.mxu0 %v4969
      %6012 = vmatprep.subr.mxu0 %v4954
      %6013 = vmatpush1.msra.mxu0 %v4953
      %6014 = vmatprep.subr.mxu0 %v4938
      %6015 = vmatpush1.msra.mxu0 %v4937
      %6016 = vmatprep.subr.mxu0 %v4922
      %6017 = vmatpush1.msra.mxu0 %v4921
      %6018 = vmatprep.subr.mxu0 %v5418
      %6019 = vmatpush2.msra.mxu0 %v5417
      %6020 = vmatprep.subr.mxu0 %v5402
      %6021 = vmatpush2.msra.mxu0 %v5401
      %6022 = vmatprep.subr.mxu0 %v5386
      %6023 = vmatpush2.msra.mxu0 %v5385
      %6024 = vmatprep.subr.mxu0 %v5370
      %6025 = vmatpush2.msra.mxu0 %v5369
      %6026 = vmatprep.subr.mxu0 %v5354
      %6027 = vmatpush2.msra.mxu0 %v5353
      %6028 = vmatprep.subr.mxu0 %v5338
      %6029 = vmatpush2.msra.mxu0 %v5337
      %6030 = vmatprep.subr.mxu0 %v5322
      %6031 = vmatpush2.msra.mxu0 %v5321
      %6032 = vmatprep.subr.mxu0 %v5306
      %6033 = vmatpush2.msra.mxu0 %v5305
      %6034 = vmatprep.subr.mxu0 %v5290
      %6035 = vmatpush2.msra.mxu0 %v5289
      %6036 = vmatprep.subr.mxu0 %v5274
      %6037 = vmatpush2.msra.mxu0 %v5273
      %6038 = vmatprep.subr.mxu0 %v5258
      %6039 = vmatpush2.msra.mxu0 %v5257
      %6040 = vmatprep.subr.mxu0 %v5242
      %6041 = vmatpush2.msra.mxu0 %v5241
      %6042 = vmatprep.subr.mxu0 %v5226
      %6043 = vmatpush2.msra.mxu0 %v5225
      %6044 = vmatprep.subr.mxu0 %v5210
      %6045 = vmatpush2.msra.mxu0 %v5209
      %6046 = vmatprep.subr.mxu0 %v5194
      %6047 = vmatpush2.msra.mxu0 %v5193
      %6048 = vmatprep.subr.mxu0 %v5178
      %6049 = vmatpush2.msra.mxu0 %v5177
      %6050 = vmatprep.mubr.f32.mxu0 %v637
      %6051 = vmatmul.mubr.f32.gmra.mxu0 %v636
      %v6052 = vpop.f32.mrf.mxu0
      %v6053 = vadd.f32 %v5982, %v6052
      %v6054 = vpop.f32.mrf.mxu0
      %v6055 = vadd.f32 %v5984, %v6054
      %6056 = vdwg.mxu0
      %6057 = vmatprep.subr.mxu0 %v5674
      %6058 = vmatpush1.msra.mxu0 %v5673
      %6059 = vmatprep.subr.mxu0 %v5658
      %6060 = vmatpush1.msra.mxu0 %v5657
      %6061 = vmatprep.subr.mxu0 %v5642
      %6062 = vmatpush1.msra.mxu0 %v5641
      %6063 = vmatprep.subr.mxu0 %v5626
      %6064 = vmatpush1.msra.mxu0 %v5625
      %6065 = vmatprep.subr.mxu0 %v5610
      %6066 = vmatpush1.msra.mxu0 %v5609
      %6067 = vmatprep.subr.mxu0 %v5594
      %6068 = vmatpush1.msra.mxu0 %v5593
      %6069 = vmatprep.subr.mxu0 %v5578
      %6070 = vmatpush1.msra.mxu0 %v5577
      %6071 = vmatprep.subr.mxu0 %v5562
      %6072 = vmatpush1.msra.mxu0 %v5561
      %6073 = vmatprep.subr.mxu0 %v5546
      %6074 = vmatpush1.msra.mxu0 %v5545
      %6075 = vmatprep.subr.mxu0 %v5530
      %6076 = vmatpush1.msra.mxu0 %v5529
      %6077 = vmatprep.subr.mxu0 %v5514
      %6078 = vmatpush1.msra.mxu0 %v5513
      %6079 = vmatprep.subr.mxu0 %v5498
      %6080 = vmatpush1.msra.mxu0 %v5497
      %6081 = vmatprep.subr.mxu0 %v5482
      %6082 = vmatpush1.msra.mxu0 %v5481
      %6083 = vmatprep.subr.mxu0 %v5466
      %6084 = vmatpush1.msra.mxu0 %v5465
      %6085 = vmatprep.subr.mxu0 %v5450
      %6086 = vmatpush1.msra.mxu0 %v5449
      %6087 = vmatprep.subr.mxu0 %v5434
      %6088 = vmatpush1.msra.mxu0 %v5433
      %6089 = vmatprep.subr.mxu0 0.0
      %6090 = vmatpush2.msra.mxu0 0.0
      %6091 = vmatprep.subr.mxu0 0.0
      %6092 = vmatpush2.msra.mxu0 0.0
      %6093 = vmatprep.subr.mxu0 0.0
      %6094 = vmatpush2.msra.mxu0 0.0
      %6095 = vmatprep.subr.mxu0 0.0
      %6096 = vmatpush2.msra.mxu0 0.0
      %6097 = vmatprep.subr.mxu0 0.0
      %6098 = vmatpush2.msra.mxu0 0.0
      %6099 = vmatprep.subr.mxu0 0.0
      %6100 = vmatpush2.msra.mxu0 0.0
      %6101 = vmatprep.subr.mxu0 0.0
      %6102 = vmatpush2.msra.mxu0 0.0
      %6103 = vmatprep.subr.mxu0 0.0
      %6104 = vmatpush2.msra.mxu0 0.0
      %6105 = vmatprep.subr.mxu0 0.0
      %6106 = vmatpush2.msra.mxu0 0.0
      %6107 = vmatprep.subr.mxu0 0.0
      %6108 = vmatpush2.msra.mxu0 0.0
      %6109 = vmatprep.subr.mxu0 0.0
      %6110 = vmatpush2.msra.mxu0 0.0
      %6111 = vmatprep.subr.mxu0 0.0
      %6112 = vmatpush2.msra.mxu0 0.0
      %6113 = vmatprep.subr.mxu0 0.0
      %6114 = vmatpush2.msra.mxu0 0.0
      %6115 = vmatprep.subr.mxu0 0.0
      %6116 = vmatpush2.msra.mxu0 0.0
      %6117 = vmatprep.subr.mxu0 0.0
      %6118 = vmatpush2.msra.mxu0 0.0
      %6119 = vmatprep.subr.mxu0 0.0
      %6120 = vmatpush2.msra.mxu0 0.0
      %6121 = vmatprep.mubr.f32.mxu0 0.0
      %6122 = vmatmul.mubr.f32.gmra.mxu0 %v638
      %v6123 = vpop.f32.mrf.mxu0
      %v6124 = vadd.f32 %v6053, %v6123
      %v6125 = vpop.f32.mrf.mxu0
      %v6126 = vadd.f32 %v6055, %v6125
      %6127 = vdwg.mxu0
      %6128 = vmatprep.subr.mxu0 %v3628
      %6129 = vmatpush1.msra.mxu0 %v3627
      %6130 = vmatprep.subr.mxu0 %v3612
      %6131 = vmatpush1.msra.mxu0 %v3611
      %6132 = vmatprep.subr.mxu0 %v3596
      %6133 = vmatpush1.msra.mxu0 %v3595
      %6134 = vmatprep.subr.mxu0 %v3580
      %6135 = vmatpush1.msra.mxu0 %v3579
      %6136 = vmatprep.subr.mxu0 %v3564
      %6137 = vmatpush1.msra.mxu0 %v3563
      %6138 = vmatprep.subr.mxu0 %v3548
      %6139 = vmatpush1.msra.mxu0 %v3547
      %6140 = vmatprep.subr.mxu0 %v3532
      %6141 = vmatpush1.msra.mxu0 %v3531
      %6142 = vmatprep.subr.mxu0 %v3516
      %6143 = vmatpush1.msra.mxu0 %v3515
      %6144 = vmatprep.subr.mxu0 %v3500
      %6145 = vmatpush1.msra.mxu0 %v3499
      %6146 = vmatprep.subr.mxu0 %v3484
      %6147 = vmatpush1.msra.mxu0 %v3483
      %6148 = vmatprep.subr.mxu0 %v3468
      %6149 = vmatpush1.msra.mxu0 %v3467
      %6150 = vmatprep.subr.mxu0 %v3452
      %6151 = vmatpush1.msra.mxu0 %v3451
      %6152 = vmatprep.subr.mxu0 %v3436
      %6153 = vmatpush1.msra.mxu0 %v3435
      %6154 = vmatprep.subr.mxu0 %v3420
      %6155 = vmatpush1.msra.mxu0 %v3419
      %6156 = vmatprep.subr.mxu0 %v3404
      %6157 = vmatpush1.msra.mxu0 %v3403
      %6158 = vmatprep.subr.mxu0 %v3388
      %6159 = vmatpush1.msra.mxu0 %v3387
      %6160 = vmatprep.subr.mxu0 %v3884
      %6161 = vmatpush2.msra.mxu0 %v3883
      %6162 = vmatprep.subr.mxu0 %v3868
      %6163 = vmatpush2.msra.mxu0 %v3867
      %6164 = vmatprep.subr.mxu0 %v3852
      %6165 = vmatpush2.msra.mxu0 %v3851
      %6166 = vmatprep.subr.mxu0 %v3836
      %6167 = vmatpush2.msra.mxu0 %v3835
      %6168 = vmatprep.subr.mxu0 %v3820
      %6169 = vmatpush2.msra.mxu0 %v3819
      %6170 = vmatprep.subr.mxu0 %v3804
      %6171 = vmatpush2.msra.mxu0 %v3803
      %6172 = vmatprep.subr.mxu0 %v3788
      %6173 = vmatpush2.msra.mxu0 %v3787
      %6174 = vmatprep.subr.mxu0 %v3772
      %6175 = vmatpush2.msra.mxu0 %v3771
      %6176 = vmatprep.subr.mxu0 %v3756
      %6177 = vmatpush2.msra.mxu0 %v3755
      %6178 = vmatprep.subr.mxu0 %v3740
      %6179 = vmatpush2.msra.mxu0 %v3739
      %6180 = vmatprep.subr.mxu0 %v3724
      %6181 = vmatpush2.msra.mxu0 %v3723
      %6182 = vmatprep.subr.mxu0 %v3708
      %6183 = vmatpush2.msra.mxu0 %v3707
      %6184 = vmatprep.subr.mxu0 %v3692
      %6185 = vmatpush2.msra.mxu0 %v3691
      %6186 = vmatprep.subr.mxu0 %v3676
      %6187 = vmatpush2.msra.mxu0 %v3675
      %6188 = vmatprep.subr.mxu0 %v3660
      %6189 = vmatpush2.msra.mxu0 %v3659
      %6190 = vmatprep.subr.mxu0 %v3644
      %6191 = vmatpush2.msra.mxu0 %v3643
      %6192 = vmatprep.mubr.f32.mxu0 %v3382
      %6193 = vmatmul.mubr.f32.gmra.mxu0 %v3381
      %v6194 = vpop.f32.mrf.mxu0
      %v6195 = vadd.f32 %v5704, %v6194
      %v6196 = vpop.f32.mrf.mxu0
      %v6197 = vadd.f32 %v5708, %v6196
      %6198 = vdwg.mxu0
      %6199 = vmatprep.subr.mxu0 %v4140
      %6200 = vmatpush1.msra.mxu0 %v4139
      %6201 = vmatprep.subr.mxu0 %v4124
      %6202 = vmatpush1.msra.mxu0 %v4123
      %6203 = vmatprep.subr.mxu0 %v4108
      %6204 = vmatpush1.msra.mxu0 %v4107
      %6205 = vmatprep.subr.mxu0 %v4092
      %6206 = vmatpush1.msra.mxu0 %v4091
      %6207 = vmatprep.subr.mxu0 %v4076
      %6208 = vmatpush1.msra.mxu0 %v4075
      %6209 = vmatprep.subr.mxu0 %v4060
      %6210 = vmatpush1.msra.mxu0 %v4059
      %6211 = vmatprep.subr.mxu0 %v4044
      %6212 = vmatpush1.msra.mxu0 %v4043
      %6213 = vmatprep.subr.mxu0 %v4028
      %6214 = vmatpush1.msra.mxu0 %v4027
      %6215 = vmatprep.subr.mxu0 %v4012
      %6216 = vmatpush1.msra.mxu0 %v4011
      %6217 = vmatprep.subr.mxu0 %v3996
      %6218 = vmatpush1.msra.mxu0 %v3995
      %6219 = vmatprep.subr.mxu0 %v3980
      %6220 = vmatpush1.msra.mxu0 %v3979
      %6221 = vmatprep.subr.mxu0 %v3964
      %6222 = vmatpush1.msra.mxu0 %v3963
      %6223 = vmatprep.subr.mxu0 %v3948
      %6224 = vmatpush1.msra.mxu0 %v3947
      %6225 = vmatprep.subr.mxu0 %v3932
      %6226 = vmatpush1.msra.mxu0 %v3931
      %6227 = vmatprep.subr.mxu0 %v3916
      %6228 = vmatpush1.msra.mxu0 %v3915
      %6229 = vmatprep.subr.mxu0 %v3900
      %6230 = vmatpush1.msra.mxu0 %v3899
      %6231 = vmatprep.subr.mxu0 %v4396
      %6232 = vmatpush2.msra.mxu0 %v4395
      %6233 = vmatprep.subr.mxu0 %v4380
      %6234 = vmatpush2.msra.mxu0 %v4379
      %6235 = vmatprep.subr.mxu0 %v4364
      %6236 = vmatpush2.msra.mxu0 %v4363
      %6237 = vmatprep.subr.mxu0 %v4348
      %6238 = vmatpush2.msra.mxu0 %v4347
      %6239 = vmatprep.subr.mxu0 %v4332
      %6240 = vmatpush2.msra.mxu0 %v4331
      %6241 = vmatprep.subr.mxu0 %v4316
      %6242 = vmatpush2.msra.mxu0 %v4315
      %6243 = vmatprep.subr.mxu0 %v4300
      %6244 = vmatpush2.msra.mxu0 %v4299
      %6245 = vmatprep.subr.mxu0 %v4284
      %6246 = vmatpush2.msra.mxu0 %v4283
      %6247 = vmatprep.subr.mxu0 %v4268
      %6248 = vmatpush2.msra.mxu0 %v4267
      %6249 = vmatprep.subr.mxu0 %v4252
      %6250 = vmatpush2.msra.mxu0 %v4251
      %6251 = vmatprep.subr.mxu0 %v4236
      %6252 = vmatpush2.msra.mxu0 %v4235
      %6253 = vmatprep.subr.mxu0 %v4220
      %6254 = vmatpush2.msra.mxu0 %v4219
      %6255 = vmatprep.subr.mxu0 %v4204
      %6256 = vmatpush2.msra.mxu0 %v4203
      %6257 = vmatprep.subr.mxu0 %v4188
      %6258 = vmatpush2.msra.mxu0 %v4187
      %6259 = vmatprep.subr.mxu0 %v4172
      %6260 = vmatpush2.msra.mxu0 %v4171
      %6261 = vmatprep.subr.mxu0 %v4156
      %6262 = vmatpush2.msra.mxu0 %v4155
      %6263 = vmatprep.mubr.f32.mxu0 %v3384
      %6264 = vmatmul.mubr.f32.gmra.mxu0 %v3383
      %v6265 = vpop.f32.mrf.mxu0
      %v6266 = vadd.f32 %v6195, %v6265
      %v6267 = vpop.f32.mrf.mxu0
      %v6268 = vadd.f32 %v6197, %v6267
      %6269 = vdwg.mxu0
      %6270 = vmatprep.subr.mxu0 %v4652
      %6271 = vmatpush1.msra.mxu0 %v4651
      %6272 = vmatprep.subr.mxu0 %v4636
      %6273 = vmatpush1.msra.mxu0 %v4635
      %6274 = vmatprep.subr.mxu0 %v4620
      %6275 = vmatpush1.msra.mxu0 %v4619
      %6276 = vmatprep.subr.mxu0 %v4604
      %6277 = vmatpush1.msra.mxu0 %v4603
      %6278 = vmatprep.subr.mxu0 %v4588
      %6279 = vmatpush1.msra.mxu0 %v4587
      %6280 = vmatprep.subr.mxu0 %v4572
      %6281 = vmatpush1.msra.mxu0 %v4571
      %6282 = vmatprep.subr.mxu0 %v4556
      %6283 = vmatpush1.msra.mxu0 %v4555
      %6284 = vmatprep.subr.mxu0 %v4540
      %6285 = vmatpush1.msra.mxu0 %v4539
      %6286 = vmatprep.subr.mxu0 %v4524
      %6287 = vmatpush1.msra.mxu0 %v4523
      %6288 = vmatprep.subr.mxu0 %v4508
      %6289 = vmatpush1.msra.mxu0 %v4507
      %6290 = vmatprep.subr.mxu0 %v4492
      %6291 = vmatpush1.msra.mxu0 %v4491
      %6292 = vmatprep.subr.mxu0 %v4476
      %6293 = vmatpush1.msra.mxu0 %v4475
      %6294 = vmatprep.subr.mxu0 %v4460
      %6295 = vmatpush1.msra.mxu0 %v4459
      %6296 = vmatprep.subr.mxu0 %v4444
      %6297 = vmatpush1.msra.mxu0 %v4443
      %6298 = vmatprep.subr.mxu0 %v4428
      %6299 = vmatpush1.msra.mxu0 %v4427
      %6300 = vmatprep.subr.mxu0 %v4412
      %6301 = vmatpush1.msra.mxu0 %v4411
      %6302 = vmatprep.subr.mxu0 %v4908
      %6303 = vmatpush2.msra.mxu0 %v4907
      %6304 = vmatprep.subr.mxu0 %v4892
      %6305 = vmatpush2.msra.mxu0 %v4891
      %6306 = vmatprep.subr.mxu0 %v4876
      %6307 = vmatpush2.msra.mxu0 %v4875
      %6308 = vmatprep.subr.mxu0 %v4860
      %6309 = vmatpush2.msra.mxu0 %v4859
      %6310 = vmatprep.subr.mxu0 %v4844
      %6311 = vmatpush2.msra.mxu0 %v4843
      %6312 = vmatprep.subr.mxu0 %v4828
      %6313 = vmatpush2.msra.mxu0 %v4827
      %6314 = vmatprep.subr.mxu0 %v4812
      %6315 = vmatpush2.msra.mxu0 %v4811
      %6316 = vmatprep.subr.mxu0 %v4796
      %6317 = vmatpush2.msra.mxu0 %v4795
      %6318 = vmatprep.subr.mxu0 %v4780
      %6319 = vmatpush2.msra.mxu0 %v4779
      %6320 = vmatprep.subr.mxu0 %v4764
      %6321 = vmatpush2.msra.mxu0 %v4763
      %6322 = vmatprep.subr.mxu0 %v4748
      %6323 = vmatpush2.msra.mxu0 %v4747
      %6324 = vmatprep.subr.mxu0 %v4732
      %6325 = vmatpush2.msra.mxu0 %v4731
      %6326 = vmatprep.subr.mxu0 %v4716
      %6327 = vmatpush2.msra.mxu0 %v4715
      %6328 = vmatprep.subr.mxu0 %v4700
      %6329 = vmatpush2.msra.mxu0 %v4699
      %6330 = vmatprep.subr.mxu0 %v4684
      %6331 = vmatpush2.msra.mxu0 %v4683
      %6332 = vmatprep.subr.mxu0 %v4668
      %6333 = vmatpush2.msra.mxu0 %v4667
      %6334 = vmatprep.mubr.f32.mxu0 %v635
      %6335 = vmatmul.mubr.f32.gmra.mxu0 %v3380
      %v6336 = vpop.f32.mrf.mxu0
      %v6337 = vadd.f32 %v6266, %v6336
      %v6338 = vpop.f32.mrf.mxu0
      %v6339 = vadd.f32 %v6268, %v6338
      %6340 = vdwg.mxu0
      %6341 = vmatprep.subr.mxu0 %v5164
      %6342 = vmatpush1.msra.mxu0 %v5163
      %6343 = vmatprep.subr.mxu0 %v5148
      %6344 = vmatpush1.msra.mxu0 %v5147
      %6345 = vmatprep.subr.mxu0 %v5132
      %6346 = vmatpush1.msra.mxu0 %v5131
      %6347 = vmatprep.subr.mxu0 %v5116
      %6348 = vmatpush1.msra.mxu0 %v5115
      %6349 = vmatprep.subr.mxu0 %v5100
      %6350 = vmatpush1.msra.mxu0 %v5099
      %6351 = vmatprep.subr.mxu0 %v5084
      %6352 = vmatpush1.msra.mxu0 %v5083
      %6353 = vmatprep.subr.mxu0 %v5068
      %6354 = vmatpush1.msra.mxu0 %v5067
      %6355 = vmatprep.subr.mxu0 %v5052
      %6356 = vmatpush1.msra.mxu0 %v5051
      %6357 = vmatprep.subr.mxu0 %v5036
      %6358 = vmatpush1.msra.mxu0 %v5035
      %6359 = vmatprep.subr.mxu0 %v5020
      %6360 = vmatpush1.msra.mxu0 %v5019
      %6361 = vmatprep.subr.mxu0 %v5004
      %6362 = vmatpush1.msra.mxu0 %v5003
      %6363 = vmatprep.subr.mxu0 %v4988
      %6364 = vmatpush1.msra.mxu0 %v4987
      %6365 = vmatprep.subr.mxu0 %v4972
      %6366 = vmatpush1.msra.mxu0 %v4971
      %6367 = vmatprep.subr.mxu0 %v4956
      %6368 = vmatpush1.msra.mxu0 %v4955
      %6369 = vmatprep.subr.mxu0 %v4940
      %6370 = vmatpush1.msra.mxu0 %v4939
      %6371 = vmatprep.subr.mxu0 %v4924
      %6372 = vmatpush1.msra.mxu0 %v4923
      %6373 = vmatprep.subr.mxu0 %v5420
      %6374 = vmatpush2.msra.mxu0 %v5419
      %6375 = vmatprep.subr.mxu0 %v5404
      %6376 = vmatpush2.msra.mxu0 %v5403
      %6377 = vmatprep.subr.mxu0 %v5388
      %6378 = vmatpush2.msra.mxu0 %v5387
      %6379 = vmatprep.subr.mxu0 %v5372
      %6380 = vmatpush2.msra.mxu0 %v5371
      %6381 = vmatprep.subr.mxu0 %v5356
      %6382 = vmatpush2.msra.mxu0 %v5355
      %6383 = vmatprep.subr.mxu0 %v5340
      %6384 = vmatpush2.msra.mxu0 %v5339
      %6385 = vmatprep.subr.mxu0 %v5324
      %6386 = vmatpush2.msra.mxu0 %v5323
      %6387 = vmatprep.subr.mxu0 %v5308
      %6388 = vmatpush2.msra.mxu0 %v5307
      %6389 = vmatprep.subr.mxu0 %v5292
      %6390 = vmatpush2.msra.mxu0 %v5291
      %6391 = vmatprep.subr.mxu0 %v5276
      %6392 = vmatpush2.msra.mxu0 %v5275
      %6393 = vmatprep.subr.mxu0 %v5260
      %6394 = vmatpush2.msra.mxu0 %v5259
      %6395 = vmatprep.subr.mxu0 %v5244
      %6396 = vmatpush2.msra.mxu0 %v5243
      %6397 = vmatprep.subr.mxu0 %v5228
      %6398 = vmatpush2.msra.mxu0 %v5227
      %6399 = vmatprep.subr.mxu0 %v5212
      %6400 = vmatpush2.msra.mxu0 %v5211
      %6401 = vmatprep.subr.mxu0 %v5196
      %6402 = vmatpush2.msra.mxu0 %v5195
      %6403 = vmatprep.subr.mxu0 %v5180
      %6404 = vmatpush2.msra.mxu0 %v5179
      %6405 = vmatprep.mubr.f32.mxu0 %v637
      %6406 = vmatmul.mubr.f32.gmra.mxu0 %v636
      %v6407 = vpop.f32.mrf.mxu0
      %v6408 = vadd.f32 %v6337, %v6407
      %v6409 = vpop.f32.mrf.mxu0
      %v6410 = vadd.f32 %v6339, %v6409
      %6411 = vdwg.mxu0
      %6412 = vmatprep.subr.mxu0 %v5676
      %6413 = vmatpush1.msra.mxu0 %v5675
      %6414 = vmatprep.subr.mxu0 %v5660
      %6415 = vmatpush1.msra.mxu0 %v5659
      %6416 = vmatprep.subr.mxu0 %v5644
      %6417 = vmatpush1.msra.mxu0 %v5643
      %6418 = vmatprep.subr.mxu0 %v5628
      %6419 = vmatpush1.msra.mxu0 %v5627
      %6420 = vmatprep.subr.mxu0 %v5612
      %6421 = vmatpush1.msra.mxu0 %v5611
      %6422 = vmatprep.subr.mxu0 %v5596
      %6423 = vmatpush1.msra.mxu0 %v5595
      %6424 = vmatprep.subr.mxu0 %v5580
      %6425 = vmatpush1.msra.mxu0 %v5579
      %6426 = vmatprep.subr.mxu0 %v5564
      %6427 = vmatpush1.msra.mxu0 %v5563
      %6428 = vmatprep.subr.mxu0 %v5548
      %6429 = vmatpush1.msra.mxu0 %v5547
      %6430 = vmatprep.subr.mxu0 %v5532
      %6431 = vmatpush1.msra.mxu0 %v5531
      %6432 = vmatprep.subr.mxu0 %v5516
      %6433 = vmatpush1.msra.mxu0 %v5515
      %6434 = vmatprep.subr.mxu0 %v5500
      %6435 = vmatpush1.msra.mxu0 %v5499
      %6436 = vmatprep.subr.mxu0 %v5484
      %6437 = vmatpush1.msra.mxu0 %v5483
      %6438 = vmatprep.subr.mxu0 %v5468
      %6439 = vmatpush1.msra.mxu0 %v5467
      %6440 = vmatprep.subr.mxu0 %v5452
      %6441 = vmatpush1.msra.mxu0 %v5451
      %6442 = vmatprep.subr.mxu0 %v5436
      %6443 = vmatpush1.msra.mxu0 %v5435
      %6444 = vmatprep.subr.mxu0 0.0
      %6445 = vmatpush2.msra.mxu0 0.0
      %6446 = vmatprep.subr.mxu0 0.0
      %6447 = vmatpush2.msra.mxu0 0.0
      %6448 = vmatprep.subr.mxu0 0.0
      %6449 = vmatpush2.msra.mxu0 0.0
      %6450 = vmatprep.subr.mxu0 0.0
      %6451 = vmatpush2.msra.mxu0 0.0
      %6452 = vmatprep.subr.mxu0 0.0
      %6453 = vmatpush2.msra.mxu0 0.0
      %6454 = vmatprep.subr.mxu0 0.0
      %6455 = vmatpush2.msra.mxu0 0.0
      %6456 = vmatprep.subr.mxu0 0.0
      %6457 = vmatpush2.msra.mxu0 0.0
      %6458 = vmatprep.subr.mxu0 0.0
      %6459 = vmatpush2.msra.mxu0 0.0
      %6460 = vmatprep.subr.mxu0 0.0
      %6461 = vmatpush2.msra.mxu0 0.0
      %6462 = vmatprep.subr.mxu0 0.0
      %6463 = vmatpush2.msra.mxu0 0.0
      %6464 = vmatprep.subr.mxu0 0.0
      %6465 = vmatpush2.msra.mxu0 0.0
      %6466 = vmatprep.subr.mxu0 0.0
      %6467 = vmatpush2.msra.mxu0 0.0
      %6468 = vmatprep.subr.mxu0 0.0
      %6469 = vmatpush2.msra.mxu0 0.0
      %6470 = vmatprep.subr.mxu0 0.0
      %6471 = vmatpush2.msra.mxu0 0.0
      %6472 = vmatprep.subr.mxu0 0.0
      %6473 = vmatpush2.msra.mxu0 0.0
      %6474 = vmatprep.subr.mxu0 0.0
      %6475 = vmatpush2.msra.mxu0 0.0
      %6476 = vmatprep.mubr.f32.mxu0 0.0
      %6477 = vmatmul.mubr.f32.gmra.mxu0 %v638
      %v6478 = vpop.f32.mrf.mxu0
      %v6479 = vadd.f32 %v6408, %v6478
      %v6480 = vpop.f32.mrf.mxu0
      %v6481 = vadd.f32 %v6410, %v6480
      %6482 = vdwg.mxu0
      %6483 = vmatprep.subr.mxu0 %v3630
      %6484 = vmatpush1.msra.mxu0 %v3629
      %6485 = vmatprep.subr.mxu0 %v3614
      %6486 = vmatpush1.msra.mxu0 %v3613
      %6487 = vmatprep.subr.mxu0 %v3598
      %6488 = vmatpush1.msra.mxu0 %v3597
      %6489 = vmatprep.subr.mxu0 %v3582
      %6490 = vmatpush1.msra.mxu0 %v3581
      %6491 = vmatprep.subr.mxu0 %v3566
      %6492 = vmatpush1.msra.mxu0 %v3565
      %6493 = vmatprep.subr.mxu0 %v3550
      %6494 = vmatpush1.msra.mxu0 %v3549
      %6495 = vmatprep.subr.mxu0 %v3534
      %6496 = vmatpush1.msra.mxu0 %v3533
      %6497 = vmatprep.subr.mxu0 %v3518
      %6498 = vmatpush1.msra.mxu0 %v3517
      %6499 = vmatprep.subr.mxu0 %v3502
      %6500 = vmatpush1.msra.mxu0 %v3501
      %6501 = vmatprep.subr.mxu0 %v3486
      %6502 = vmatpush1.msra.mxu0 %v3485
      %6503 = vmatprep.subr.mxu0 %v3470
      %6504 = vmatpush1.msra.mxu0 %v3469
      %6505 = vmatprep.subr.mxu0 %v3454
      %6506 = vmatpush1.msra.mxu0 %v3453
      %6507 = vmatprep.subr.mxu0 %v3438
      %6508 = vmatpush1.msra.mxu0 %v3437
      %6509 = vmatprep.subr.mxu0 %v3422
      %6510 = vmatpush1.msra.mxu0 %v3421
      %6511 = vmatprep.subr.mxu0 %v3406
      %6512 = vmatpush1.msra.mxu0 %v3405
      %6513 = vmatprep.subr.mxu0 %v3390
      %6514 = vmatpush1.msra.mxu0 %v3389
      %6515 = vmatprep.subr.mxu0 %v3886
      %6516 = vmatpush2.msra.mxu0 %v3885
      %6517 = vmatprep.subr.mxu0 %v3870
      %6518 = vmatpush2.msra.mxu0 %v3869
      %6519 = vmatprep.subr.mxu0 %v3854
      %6520 = vmatpush2.msra.mxu0 %v3853
      %6521 = vmatprep.subr.mxu0 %v3838
      %6522 = vmatpush2.msra.mxu0 %v3837
      %6523 = vmatprep.subr.mxu0 %v3822
      %6524 = vmatpush2.msra.mxu0 %v3821
      %6525 = vmatprep.subr.mxu0 %v3806
      %6526 = vmatpush2.msra.mxu0 %v3805
      %6527 = vmatprep.subr.mxu0 %v3790
      %6528 = vmatpush2.msra.mxu0 %v3789
      %6529 = vmatprep.subr.mxu0 %v3774
      %6530 = vmatpush2.msra.mxu0 %v3773
      %6531 = vmatprep.subr.mxu0 %v3758
      %6532 = vmatpush2.msra.mxu0 %v3757
      %6533 = vmatprep.subr.mxu0 %v3742
      %6534 = vmatpush2.msra.mxu0 %v3741
      %6535 = vmatprep.subr.mxu0 %v3726
      %6536 = vmatpush2.msra.mxu0 %v3725
      %6537 = vmatprep.subr.mxu0 %v3710
      %6538 = vmatpush2.msra.mxu0 %v3709
      %6539 = vmatprep.subr.mxu0 %v3694
      %6540 = vmatpush2.msra.mxu0 %v3693
      %6541 = vmatprep.subr.mxu0 %v3678
      %6542 = vmatpush2.msra.mxu0 %v3677
      %6543 = vmatprep.subr.mxu0 %v3662
      %6544 = vmatpush2.msra.mxu0 %v3661
      %6545 = vmatprep.subr.mxu0 %v3646
      %6546 = vmatpush2.msra.mxu0 %v3645
      %6547 = vmatprep.mubr.f32.mxu0 %v3382
      %6548 = vmatmul.mubr.f32.gmra.mxu0 %v3381
      %v6549 = vpop.f32.mrf.mxu0
      %v6550 = vadd.f32 %v5712, %v6549
      %v6551 = vpop.f32.mrf.mxu0
      %v6552 = vadd.f32 %v5716, %v6551
      %6553 = vdwg.mxu0
      %6554 = vmatprep.subr.mxu0 %v4142
      %6555 = vmatpush1.msra.mxu0 %v4141
      %6556 = vmatprep.subr.mxu0 %v4126
      %6557 = vmatpush1.msra.mxu0 %v4125
      %6558 = vmatprep.subr.mxu0 %v4110
      %6559 = vmatpush1.msra.mxu0 %v4109
      %6560 = vmatprep.subr.mxu0 %v4094
      %6561 = vmatpush1.msra.mxu0 %v4093
      %6562 = vmatprep.subr.mxu0 %v4078
      %6563 = vmatpush1.msra.mxu0 %v4077
      %6564 = vmatprep.subr.mxu0 %v4062
      %6565 = vmatpush1.msra.mxu0 %v4061
      %6566 = vmatprep.subr.mxu0 %v4046
      %6567 = vmatpush1.msra.mxu0 %v4045
      %6568 = vmatprep.subr.mxu0 %v4030
      %6569 = vmatpush1.msra.mxu0 %v4029
      %6570 = vmatprep.subr.mxu0 %v4014
      %6571 = vmatpush1.msra.mxu0 %v4013
      %6572 = vmatprep.subr.mxu0 %v3998
      %6573 = vmatpush1.msra.mxu0 %v3997
      %6574 = vmatprep.subr.mxu0 %v3982
      %6575 = vmatpush1.msra.mxu0 %v3981
      %6576 = vmatprep.subr.mxu0 %v3966
      %6577 = vmatpush1.msra.mxu0 %v3965
      %6578 = vmatprep.subr.mxu0 %v3950
      %6579 = vmatpush1.msra.mxu0 %v3949
      %6580 = vmatprep.subr.mxu0 %v3934
      %6581 = vmatpush1.msra.mxu0 %v3933
      %6582 = vmatprep.subr.mxu0 %v3918
      %6583 = vmatpush1.msra.mxu0 %v3917
      %6584 = vmatprep.subr.mxu0 %v3902
      %6585 = vmatpush1.msra.mxu0 %v3901
      %6586 = vmatprep.subr.mxu0 %v4398
      %6587 = vmatpush2.msra.mxu0 %v4397
      %6588 = vmatprep.subr.mxu0 %v4382
      %6589 = vmatpush2.msra.mxu0 %v4381
      %6590 = vmatprep.subr.mxu0 %v4366
      %6591 = vmatpush2.msra.mxu0 %v4365
      %6592 = vmatprep.subr.mxu0 %v4350
      %6593 = vmatpush2.msra.mxu0 %v4349
      %6594 = vmatprep.subr.mxu0 %v4334
      %6595 = vmatpush2.msra.mxu0 %v4333
      %6596 = vmatprep.subr.mxu0 %v4318
      %6597 = vmatpush2.msra.mxu0 %v4317
      %6598 = vmatprep.subr.mxu0 %v4302
      %6599 = vmatpush2.msra.mxu0 %v4301
      %6600 = vmatprep.subr.mxu0 %v4286
      %6601 = vmatpush2.msra.mxu0 %v4285
      %6602 = vmatprep.subr.mxu0 %v4270
      %6603 = vmatpush2.msra.mxu0 %v4269
      %6604 = vmatprep.subr.mxu0 %v4254
      %6605 = vmatpush2.msra.mxu0 %v4253
      %6606 = vmatprep.subr.mxu0 %v4238
      %6607 = vmatpush2.msra.mxu0 %v4237
      %6608 = vmatprep.subr.mxu0 %v4222
      %6609 = vmatpush2.msra.mxu0 %v4221
      %6610 = vmatprep.subr.mxu0 %v4206
      %6611 = vmatpush2.msra.mxu0 %v4205
      %6612 = vmatprep.subr.mxu0 %v4190
      %6613 = vmatpush2.msra.mxu0 %v4189
      %6614 = vmatprep.subr.mxu0 %v4174
      %6615 = vmatpush2.msra.mxu0 %v4173
      %6616 = vmatprep.subr.mxu0 %v4158
      %6617 = vmatpush2.msra.mxu0 %v4157
      %6618 = vmatprep.mubr.f32.mxu0 %v3384
      %6619 = vmatmul.mubr.f32.gmra.mxu0 %v3383
      %v6620 = vpop.f32.mrf.mxu0
      %v6621 = vadd.f32 %v6550, %v6620
      %v6622 = vpop.f32.mrf.mxu0
      %v6623 = vadd.f32 %v6552, %v6622
      %6624 = vdwg.mxu0
      %6625 = vmatprep.subr.mxu0 %v4654
      %6626 = vmatpush1.msra.mxu0 %v4653
      %6627 = vmatprep.subr.mxu0 %v4638
      %6628 = vmatpush1.msra.mxu0 %v4637
      %6629 = vmatprep.subr.mxu0 %v4622
      %6630 = vmatpush1.msra.mxu0 %v4621
      %6631 = vmatprep.subr.mxu0 %v4606
      %6632 = vmatpush1.msra.mxu0 %v4605
      %6633 = vmatprep.subr.mxu0 %v4590
      %6634 = vmatpush1.msra.mxu0 %v4589
      %6635 = vmatprep.subr.mxu0 %v4574
      %6636 = vmatpush1.msra.mxu0 %v4573
      %6637 = vmatprep.subr.mxu0 %v4558
      %6638 = vmatpush1.msra.mxu0 %v4557
      %6639 = vmatprep.subr.mxu0 %v4542
      %6640 = vmatpush1.msra.mxu0 %v4541
      %6641 = vmatprep.subr.mxu0 %v4526
      %6642 = vmatpush1.msra.mxu0 %v4525
      %6643 = vmatprep.subr.mxu0 %v4510
      %6644 = vmatpush1.msra.mxu0 %v4509
      %6645 = vmatprep.subr.mxu0 %v4494
      %6646 = vmatpush1.msra.mxu0 %v4493
      %6647 = vmatprep.subr.mxu0 %v4478
      %6648 = vmatpush1.msra.mxu0 %v4477
      %6649 = vmatprep.subr.mxu0 %v4462
      %6650 = vmatpush1.msra.mxu0 %v4461
      %6651 = vmatprep.subr.mxu0 %v4446
      %6652 = vmatpush1.msra.mxu0 %v4445
      %6653 = vmatprep.subr.mxu0 %v4430
      %6654 = vmatpush1.msra.mxu0 %v4429
      %6655 = vmatprep.subr.mxu0 %v4414
      %6656 = vmatpush1.msra.mxu0 %v4413
      %6657 = vmatprep.subr.mxu0 %v4910
      %6658 = vmatpush2.msra.mxu0 %v4909
      %6659 = vmatprep.subr.mxu0 %v4894
      %6660 = vmatpush2.msra.mxu0 %v4893
      %6661 = vmatprep.subr.mxu0 %v4878
      %6662 = vmatpush2.msra.mxu0 %v4877
      %6663 = vmatprep.subr.mxu0 %v4862
      %6664 = vmatpush2.msra.mxu0 %v4861
      %6665 = vmatprep.subr.mxu0 %v4846
      %6666 = vmatpush2.msra.mxu0 %v4845
      %6667 = vmatprep.subr.mxu0 %v4830
      %6668 = vmatpush2.msra.mxu0 %v4829
      %6669 = vmatprep.subr.mxu0 %v4814
      %6670 = vmatpush2.msra.mxu0 %v4813
      %6671 = vmatprep.subr.mxu0 %v4798
      %6672 = vmatpush2.msra.mxu0 %v4797
      %6673 = vmatprep.subr.mxu0 %v4782
      %6674 = vmatpush2.msra.mxu0 %v4781
      %6675 = vmatprep.subr.mxu0 %v4766
      %6676 = vmatpush2.msra.mxu0 %v4765
      %6677 = vmatprep.subr.mxu0 %v4750
      %6678 = vmatpush2.msra.mxu0 %v4749
      %6679 = vmatprep.subr.mxu0 %v4734
      %6680 = vmatpush2.msra.mxu0 %v4733
      %6681 = vmatprep.subr.mxu0 %v4718
      %6682 = vmatpush2.msra.mxu0 %v4717
      %6683 = vmatprep.subr.mxu0 %v4702
      %6684 = vmatpush2.msra.mxu0 %v4701
      %6685 = vmatprep.subr.mxu0 %v4686
      %6686 = vmatpush2.msra.mxu0 %v4685
      %6687 = vmatprep.subr.mxu0 %v4670
      %6688 = vmatpush2.msra.mxu0 %v4669
      %6689 = vmatprep.mubr.f32.mxu0 %v635
      %6690 = vmatmul.mubr.f32.gmra.mxu0 %v3380
      %v6691 = vpop.f32.mrf.mxu0
      %v6692 = vadd.f32 %v6621, %v6691
      %v6693 = vpop.f32.mrf.mxu0
      %v6694 = vadd.f32 %v6623, %v6693
      %6695 = vdwg.mxu0
      %6696 = vmatprep.subr.mxu0 %v5166
      %6697 = vmatpush1.msra.mxu0 %v5165
      %6698 = vmatprep.subr.mxu0 %v5150
      %6699 = vmatpush1.msra.mxu0 %v5149
      %6700 = vmatprep.subr.mxu0 %v5134
      %6701 = vmatpush1.msra.mxu0 %v5133
      %6702 = vmatprep.subr.mxu0 %v5118
      %6703 = vmatpush1.msra.mxu0 %v5117
      %6704 = vmatprep.subr.mxu0 %v5102
      %6705 = vmatpush1.msra.mxu0 %v5101
      %6706 = vmatprep.subr.mxu0 %v5086
      %6707 = vmatpush1.msra.mxu0 %v5085
      %6708 = vmatprep.subr.mxu0 %v5070
      %6709 = vmatpush1.msra.mxu0 %v5069
      %6710 = vmatprep.subr.mxu0 %v5054
      %6711 = vmatpush1.msra.mxu0 %v5053
      %6712 = vmatprep.subr.mxu0 %v5038
      %6713 = vmatpush1.msra.mxu0 %v5037
      %6714 = vmatprep.subr.mxu0 %v5022
      %6715 = vmatpush1.msra.mxu0 %v5021
      %6716 = vmatprep.subr.mxu0 %v5006
      %6717 = vmatpush1.msra.mxu0 %v5005
      %6718 = vmatprep.subr.mxu0 %v4990
      %6719 = vmatpush1.msra.mxu0 %v4989
      %6720 = vmatprep.subr.mxu0 %v4974
      %6721 = vmatpush1.msra.mxu0 %v4973
      %6722 = vmatprep.subr.mxu0 %v4958
      %6723 = vmatpush1.msra.mxu0 %v4957
      %6724 = vmatprep.subr.mxu0 %v4942
      %6725 = vmatpush1.msra.mxu0 %v4941
      %6726 = vmatprep.subr.mxu0 %v4926
      %6727 = vmatpush1.msra.mxu0 %v4925
      %6728 = vmatprep.subr.mxu0 %v5422
      %6729 = vmatpush2.msra.mxu0 %v5421
      %6730 = vmatprep.subr.mxu0 %v5406
      %6731 = vmatpush2.msra.mxu0 %v5405
      %6732 = vmatprep.subr.mxu0 %v5390
      %6733 = vmatpush2.msra.mxu0 %v5389
      %6734 = vmatprep.subr.mxu0 %v5374
      %6735 = vmatpush2.msra.mxu0 %v5373
      %6736 = vmatprep.subr.mxu0 %v5358
      %6737 = vmatpush2.msra.mxu0 %v5357
      %6738 = vmatprep.subr.mxu0 %v5342
      %6739 = vmatpush2.msra.mxu0 %v5341
      %6740 = vmatprep.subr.mxu0 %v5326
      %6741 = vmatpush2.msra.mxu0 %v5325
      %6742 = vmatprep.subr.mxu0 %v5310
      %6743 = vmatpush2.msra.mxu0 %v5309
      %6744 = vmatprep.subr.mxu0 %v5294
      %6745 = vmatpush2.msra.mxu0 %v5293
      %6746 = vmatprep.subr.mxu0 %v5278
      %6747 = vmatpush2.msra.mxu0 %v5277
      %6748 = vmatprep.subr.mxu0 %v5262
      %6749 = vmatpush2.msra.mxu0 %v5261
      %6750 = vmatprep.subr.mxu0 %v5246
      %6751 = vmatpush2.msra.mxu0 %v5245
      %6752 = vmatprep.subr.mxu0 %v5230
      %6753 = vmatpush2.msra.mxu0 %v5229
      %6754 = vmatprep.subr.mxu0 %v5214
      %6755 = vmatpush2.msra.mxu0 %v5213
      %6756 = vmatprep.subr.mxu0 %v5198
      %6757 = vmatpush2.msra.mxu0 %v5197
      %6758 = vmatprep.subr.mxu0 %v5182
      %6759 = vmatpush2.msra.mxu0 %v5181
      %6760 = vmatprep.mubr.f32.mxu0 %v637
      %6761 = vmatmul.mubr.f32.gmra.mxu0 %v636
      %v6762 = vpop.f32.mrf.mxu0
      %v6763 = vadd.f32 %v6692, %v6762
      %v6764 = vpop.f32.mrf.mxu0
      %v6765 = vadd.f32 %v6694, %v6764
      %6766 = vdwg.mxu0
      %6767 = vmatprep.subr.mxu0 %v5678
      %6768 = vmatpush1.msra.mxu0 %v5677
      %6769 = vmatprep.subr.mxu0 %v5662
      %6770 = vmatpush1.msra.mxu0 %v5661
      %6771 = vmatprep.subr.mxu0 %v5646
      %6772 = vmatpush1.msra.mxu0 %v5645
      %6773 = vmatprep.subr.mxu0 %v5630
      %6774 = vmatpush1.msra.mxu0 %v5629
      %6775 = vmatprep.subr.mxu0 %v5614
      %6776 = vmatpush1.msra.mxu0 %v5613
      %6777 = vmatprep.subr.mxu0 %v5598
      %6778 = vmatpush1.msra.mxu0 %v5597
      %6779 = vmatprep.subr.mxu0 %v5582
      %6780 = vmatpush1.msra.mxu0 %v5581
      %6781 = vmatprep.subr.mxu0 %v5566
      %6782 = vmatpush1.msra.mxu0 %v5565
      %6783 = vmatprep.subr.mxu0 %v5550
      %6784 = vmatpush1.msra.mxu0 %v5549
      %6785 = vmatprep.subr.mxu0 %v5534
      %6786 = vmatpush1.msra.mxu0 %v5533
      %6787 = vmatprep.subr.mxu0 %v5518
      %6788 = vmatpush1.msra.mxu0 %v5517
      %6789 = vmatprep.subr.mxu0 %v5502
      %6790 = vmatpush1.msra.mxu0 %v5501
      %6791 = vmatprep.subr.mxu0 %v5486
      %6792 = vmatpush1.msra.mxu0 %v5485
      %6793 = vmatprep.subr.mxu0 %v5470
      %6794 = vmatpush1.msra.mxu0 %v5469
      %6795 = vmatprep.subr.mxu0 %v5454
      %6796 = vmatpush1.msra.mxu0 %v5453
      %6797 = vmatprep.subr.mxu0 %v5438
      %6798 = vmatpush1.msra.mxu0 %v5437
      %6799 = vmatprep.subr.mxu0 0.0
      %6800 = vmatpush2.msra.mxu0 0.0
      %6801 = vmatprep.subr.mxu0 0.0
      %6802 = vmatpush2.msra.mxu0 0.0
      %6803 = vmatprep.subr.mxu0 0.0
      %6804 = vmatpush2.msra.mxu0 0.0
      %6805 = vmatprep.subr.mxu0 0.0
      %6806 = vmatpush2.msra.mxu0 0.0
      %6807 = vmatprep.subr.mxu0 0.0
      %6808 = vmatpush2.msra.mxu0 0.0
      %6809 = vmatprep.subr.mxu0 0.0
      %6810 = vmatpush2.msra.mxu0 0.0
      %6811 = vmatprep.subr.mxu0 0.0
      %6812 = vmatpush2.msra.mxu0 0.0
      %6813 = vmatprep.subr.mxu0 0.0
      %6814 = vmatpush2.msra.mxu0 0.0
      %6815 = vmatprep.subr.mxu0 0.0
      %6816 = vmatpush2.msra.mxu0 0.0
      %6817 = vmatprep.subr.mxu0 0.0
      %6818 = vmatpush2.msra.mxu0 0.0
      %6819 = vmatprep.subr.mxu0 0.0
      %6820 = vmatpush2.msra.mxu0 0.0
      %6821 = vmatprep.subr.mxu0 0.0
      %6822 = vmatpush2.msra.mxu0 0.0
      %6823 = vmatprep.subr.mxu0 0.0
      %6824 = vmatpush2.msra.mxu0 0.0
      %6825 = vmatprep.subr.mxu0 0.0
      %6826 = vmatpush2.msra.mxu0 0.0
      %6827 = vmatprep.subr.mxu0 0.0
      %6828 = vmatpush2.msra.mxu0 0.0
      %6829 = vmatprep.subr.mxu0 0.0
      %6830 = vmatpush2.msra.mxu0 0.0
      %6831 = vmatprep.mubr.f32.mxu0 0.0
      %6832 = vmatmul.mubr.f32.gmra.mxu0 %v638
      %v6833 = vpop.f32.mrf.mxu0
      %v6834 = vadd.f32 %v6763, %v6833
      %v6835 = vpop.f32.mrf.mxu0
      %v6836 = vadd.f32 %v6765, %v6835
      %6837 = vdwg.mxu0
      %6838 = vmatprep.subr.mxu0 %v3632
      %6839 = vmatpush1.msra.mxu0 %v3631
      %6840 = vmatprep.subr.mxu0 %v3616
      %6841 = vmatpush1.msra.mxu0 %v3615
      %6842 = vmatprep.subr.mxu0 %v3600
      %6843 = vmatpush1.msra.mxu0 %v3599
      %6844 = vmatprep.subr.mxu0 %v3584
      %6845 = vmatpush1.msra.mxu0 %v3583
      %6846 = vmatprep.subr.mxu0 %v3568
      %6847 = vmatpush1.msra.mxu0 %v3567
      %6848 = vmatprep.subr.mxu0 %v3552
      %6849 = vmatpush1.msra.mxu0 %v3551
      %6850 = vmatprep.subr.mxu0 %v3536
      %6851 = vmatpush1.msra.mxu0 %v3535
      %6852 = vmatprep.subr.mxu0 %v3520
      %6853 = vmatpush1.msra.mxu0 %v3519
      %6854 = vmatprep.subr.mxu0 %v3504
      %6855 = vmatpush1.msra.mxu0 %v3503
      %6856 = vmatprep.subr.mxu0 %v3488
      %6857 = vmatpush1.msra.mxu0 %v3487
      %6858 = vmatprep.subr.mxu0 %v3472
      %6859 = vmatpush1.msra.mxu0 %v3471
      %6860 = vmatprep.subr.mxu0 %v3456
      %6861 = vmatpush1.msra.mxu0 %v3455
      %6862 = vmatprep.subr.mxu0 %v3440
      %6863 = vmatpush1.msra.mxu0 %v3439
      %6864 = vmatprep.subr.mxu0 %v3424
      %6865 = vmatpush1.msra.mxu0 %v3423
      %6866 = vmatprep.subr.mxu0 %v3408
      %6867 = vmatpush1.msra.mxu0 %v3407
      %6868 = vmatprep.subr.mxu0 %v3392
      %6869 = vmatpush1.msra.mxu0 %v3391
      %6870 = vmatprep.subr.mxu0 %v3888
      %6871 = vmatpush2.msra.mxu0 %v3887
      %6872 = vmatprep.subr.mxu0 %v3872
      %6873 = vmatpush2.msra.mxu0 %v3871
      %6874 = vmatprep.subr.mxu0 %v3856
      %6875 = vmatpush2.msra.mxu0 %v3855
      %6876 = vmatprep.subr.mxu0 %v3840
      %6877 = vmatpush2.msra.mxu0 %v3839
      %6878 = vmatprep.subr.mxu0 %v3824
      %6879 = vmatpush2.msra.mxu0 %v3823
      %6880 = vmatprep.subr.mxu0 %v3808
      %6881 = vmatpush2.msra.mxu0 %v3807
      %6882 = vmatprep.subr.mxu0 %v3792
      %6883 = vmatpush2.msra.mxu0 %v3791
      %6884 = vmatprep.subr.mxu0 %v3776
      %6885 = vmatpush2.msra.mxu0 %v3775
      %6886 = vmatprep.subr.mxu0 %v3760
      %6887 = vmatpush2.msra.mxu0 %v3759
      %6888 = vmatprep.subr.mxu0 %v3744
      %6889 = vmatpush2.msra.mxu0 %v3743
      %6890 = vmatprep.subr.mxu0 %v3728
      %6891 = vmatpush2.msra.mxu0 %v3727
      %6892 = vmatprep.subr.mxu0 %v3712
      %6893 = vmatpush2.msra.mxu0 %v3711
      %6894 = vmatprep.subr.mxu0 %v3696
      %6895 = vmatpush2.msra.mxu0 %v3695
      %6896 = vmatprep.subr.mxu0 %v3680
      %6897 = vmatpush2.msra.mxu0 %v3679
      %6898 = vmatprep.subr.mxu0 %v3664
      %6899 = vmatpush2.msra.mxu0 %v3663
      %6900 = vmatprep.subr.mxu0 %v3648
      %6901 = vmatpush2.msra.mxu0 %v3647
      %6902 = vmatprep.mubr.f32.mxu0 %v3382
      %6903 = vmatmul.mubr.f32.gmra.mxu0 %v3381
      %v6904 = vpop.f32.mrf.mxu0
      %v6905 = vadd.f32 %v5720, %v6904
      %v6906 = vpop.f32.mrf.mxu0
      %v6907 = vadd.f32 %v5724, %v6906
      %6908 = vdwg.mxu0
      %6909 = vmatprep.subr.mxu0 %v4144
      %6910 = vmatpush1.msra.mxu0 %v4143
      %6911 = vmatprep.subr.mxu0 %v4128
      %6912 = vmatpush1.msra.mxu0 %v4127
      %6913 = vmatprep.subr.mxu0 %v4112
      %6914 = vmatpush1.msra.mxu0 %v4111
      %6915 = vmatprep.subr.mxu0 %v4096
      %6916 = vmatpush1.msra.mxu0 %v4095
      %6917 = vmatprep.subr.mxu0 %v4080
      %6918 = vmatpush1.msra.mxu0 %v4079
      %6919 = vmatprep.subr.mxu0 %v4064
      %6920 = vmatpush1.msra.mxu0 %v4063
      %6921 = vmatprep.subr.mxu0 %v4048
      %6922 = vmatpush1.msra.mxu0 %v4047
      %6923 = vmatprep.subr.mxu0 %v4032
      %6924 = vmatpush1.msra.mxu0 %v4031
      %6925 = vmatprep.subr.mxu0 %v4016
      %6926 = vmatpush1.msra.mxu0 %v4015
      %6927 = vmatprep.subr.mxu0 %v4000
      %6928 = vmatpush1.msra.mxu0 %v3999
      %6929 = vmatprep.subr.mxu0 %v3984
      %6930 = vmatpush1.msra.mxu0 %v3983
      %6931 = vmatprep.subr.mxu0 %v3968
      %6932 = vmatpush1.msra.mxu0 %v3967
      %6933 = vmatprep.subr.mxu0 %v3952
      %6934 = vmatpush1.msra.mxu0 %v3951
      %6935 = vmatprep.subr.mxu0 %v3936
      %6936 = vmatpush1.msra.mxu0 %v3935
      %6937 = vmatprep.subr.mxu0 %v3920
      %6938 = vmatpush1.msra.mxu0 %v3919
      %6939 = vmatprep.subr.mxu0 %v3904
      %6940 = vmatpush1.msra.mxu0 %v3903
      %6941 = vmatprep.subr.mxu0 %v4400
      %6942 = vmatpush2.msra.mxu0 %v4399
      %6943 = vmatprep.subr.mxu0 %v4384
      %6944 = vmatpush2.msra.mxu0 %v4383
      %6945 = vmatprep.subr.mxu0 %v4368
      %6946 = vmatpush2.msra.mxu0 %v4367
      %6947 = vmatprep.subr.mxu0 %v4352
      %6948 = vmatpush2.msra.mxu0 %v4351
      %6949 = vmatprep.subr.mxu0 %v4336
      %6950 = vmatpush2.msra.mxu0 %v4335
      %6951 = vmatprep.subr.mxu0 %v4320
      %6952 = vmatpush2.msra.mxu0 %v4319
      %6953 = vmatprep.subr.mxu0 %v4304
      %6954 = vmatpush2.msra.mxu0 %v4303
      %6955 = vmatprep.subr.mxu0 %v4288
      %6956 = vmatpush2.msra.mxu0 %v4287
      %6957 = vmatprep.subr.mxu0 %v4272
      %6958 = vmatpush2.msra.mxu0 %v4271
      %6959 = vmatprep.subr.mxu0 %v4256
      %6960 = vmatpush2.msra.mxu0 %v4255
      %6961 = vmatprep.subr.mxu0 %v4240
      %6962 = vmatpush2.msra.mxu0 %v4239
      %6963 = vmatprep.subr.mxu0 %v4224
      %6964 = vmatpush2.msra.mxu0 %v4223
      %6965 = vmatprep.subr.mxu0 %v4208
      %6966 = vmatpush2.msra.mxu0 %v4207
      %6967 = vmatprep.subr.mxu0 %v4192
      %6968 = vmatpush2.msra.mxu0 %v4191
      %6969 = vmatprep.subr.mxu0 %v4176
      %6970 = vmatpush2.msra.mxu0 %v4175
      %6971 = vmatprep.subr.mxu0 %v4160
      %6972 = vmatpush2.msra.mxu0 %v4159
      %6973 = vmatprep.mubr.f32.mxu0 %v3384
      %6974 = vmatmul.mubr.f32.gmra.mxu0 %v3383
      %v6975 = vpop.f32.mrf.mxu0
      %v6976 = vadd.f32 %v6905, %v6975
      %v6977 = vpop.f32.mrf.mxu0
      %v6978 = vadd.f32 %v6907, %v6977
      %6979 = vdwg.mxu0
      %6980 = vmatprep.subr.mxu0 %v4656
      %6981 = vmatpush1.msra.mxu0 %v4655
      %6982 = vmatprep.subr.mxu0 %v4640
      %6983 = vmatpush1.msra.mxu0 %v4639
      %6984 = vmatprep.subr.mxu0 %v4624
      %6985 = vmatpush1.msra.mxu0 %v4623
      %6986 = vmatprep.subr.mxu0 %v4608
      %6987 = vmatpush1.msra.mxu0 %v4607
      %6988 = vmatprep.subr.mxu0 %v4592
      %6989 = vmatpush1.msra.mxu0 %v4591
      %6990 = vmatprep.subr.mxu0 %v4576
      %6991 = vmatpush1.msra.mxu0 %v4575
      %6992 = vmatprep.subr.mxu0 %v4560
      %6993 = vmatpush1.msra.mxu0 %v4559
      %6994 = vmatprep.subr.mxu0 %v4544
      %6995 = vmatpush1.msra.mxu0 %v4543
      %6996 = vmatprep.subr.mxu0 %v4528
      %6997 = vmatpush1.msra.mxu0 %v4527
      %6998 = vmatprep.subr.mxu0 %v4512
      %6999 = vmatpush1.msra.mxu0 %v4511
      %7000 = vmatprep.subr.mxu0 %v4496
      %7001 = vmatpush1.msra.mxu0 %v4495
      %7002 = vmatprep.subr.mxu0 %v4480
      %7003 = vmatpush1.msra.mxu0 %v4479
      %7004 = vmatprep.subr.mxu0 %v4464
      %7005 = vmatpush1.msra.mxu0 %v4463
      %7006 = vmatprep.subr.mxu0 %v4448
      %7007 = vmatpush1.msra.mxu0 %v4447
      %7008 = vmatprep.subr.mxu0 %v4432
      %7009 = vmatpush1.msra.mxu0 %v4431
      %7010 = vmatprep.subr.mxu0 %v4416
      %7011 = vmatpush1.msra.mxu0 %v4415
      %7012 = vmatprep.subr.mxu0 %v4912
      %7013 = vmatpush2.msra.mxu0 %v4911
      %7014 = vmatprep.subr.mxu0 %v4896
      %7015 = vmatpush2.msra.mxu0 %v4895
      %7016 = vmatprep.subr.mxu0 %v4880
      %7017 = vmatpush2.msra.mxu0 %v4879
      %7018 = vmatprep.subr.mxu0 %v4864
      %7019 = vmatpush2.msra.mxu0 %v4863
      %7020 = vmatprep.subr.mxu0 %v4848
      %7021 = vmatpush2.msra.mxu0 %v4847
      %7022 = vmatprep.subr.mxu0 %v4832
      %7023 = vmatpush2.msra.mxu0 %v4831
      %7024 = vmatprep.subr.mxu0 %v4816
      %7025 = vmatpush2.msra.mxu0 %v4815
      %7026 = vmatprep.subr.mxu0 %v4800
      %7027 = vmatpush2.msra.mxu0 %v4799
      %7028 = vmatprep.subr.mxu0 %v4784
      %7029 = vmatpush2.msra.mxu0 %v4783
      %7030 = vmatprep.subr.mxu0 %v4768
      %7031 = vmatpush2.msra.mxu0 %v4767
      %7032 = vmatprep.subr.mxu0 %v4752
      %7033 = vmatpush2.msra.mxu0 %v4751
      %7034 = vmatprep.subr.mxu0 %v4736
      %7035 = vmatpush2.msra.mxu0 %v4735
      %7036 = vmatprep.subr.mxu0 %v4720
      %7037 = vmatpush2.msra.mxu0 %v4719
      %7038 = vmatprep.subr.mxu0 %v4704
      %7039 = vmatpush2.msra.mxu0 %v4703
      %7040 = vmatprep.subr.mxu0 %v4688
      %7041 = vmatpush2.msra.mxu0 %v4687
      %7042 = vmatprep.subr.mxu0 %v4672
      %7043 = vmatpush2.msra.mxu0 %v4671
      %7044 = vmatprep.mubr.f32.mxu0 %v635
      %7045 = vmatmul.mubr.f32.gmra.mxu0 %v3380
      %v7046 = vpop.f32.mrf.mxu0
      %v7047 = vadd.f32 %v6976, %v7046
      %v7048 = vpop.f32.mrf.mxu0
      %v7049 = vadd.f32 %v6978, %v7048
      %7050 = vdwg.mxu0
      %7051 = vmatprep.subr.mxu0 %v5168
      %7052 = vmatpush1.msra.mxu0 %v5167
      %7053 = vmatprep.subr.mxu0 %v5152
      %7054 = vmatpush1.msra.mxu0 %v5151
      %7055 = vmatprep.subr.mxu0 %v5136
      %7056 = vmatpush1.msra.mxu0 %v5135
      %7057 = vmatprep.subr.mxu0 %v5120
      %7058 = vmatpush1.msra.mxu0 %v5119
      %7059 = vmatprep.subr.mxu0 %v5104
      %7060 = vmatpush1.msra.mxu0 %v5103
      %7061 = vmatprep.subr.mxu0 %v5088
      %7062 = vmatpush1.msra.mxu0 %v5087
      %7063 = vmatprep.subr.mxu0 %v5072
      %7064 = vmatpush1.msra.mxu0 %v5071
      %7065 = vmatprep.subr.mxu0 %v5056
      %7066 = vmatpush1.msra.mxu0 %v5055
      %7067 = vmatprep.subr.mxu0 %v5040
      %7068 = vmatpush1.msra.mxu0 %v5039
      %7069 = vmatprep.subr.mxu0 %v5024
      %7070 = vmatpush1.msra.mxu0 %v5023
      %7071 = vmatprep.subr.mxu0 %v5008
      %7072 = vmatpush1.msra.mxu0 %v5007
      %7073 = vmatprep.subr.mxu0 %v4992
      %7074 = vmatpush1.msra.mxu0 %v4991
      %7075 = vmatprep.subr.mxu0 %v4976
      %7076 = vmatpush1.msra.mxu0 %v4975
      %7077 = vmatprep.subr.mxu0 %v4960
      %7078 = vmatpush1.msra.mxu0 %v4959
      %7079 = vmatprep.subr.mxu0 %v4944
      %7080 = vmatpush1.msra.mxu0 %v4943
      %7081 = vmatprep.subr.mxu0 %v4928
      %7082 = vmatpush1.msra.mxu0 %v4927
      %7083 = vmatprep.subr.mxu0 %v5424
      %7084 = vmatpush2.msra.mxu0 %v5423
      %7085 = vmatprep.subr.mxu0 %v5408
      %7086 = vmatpush2.msra.mxu0 %v5407
      %7087 = vmatprep.subr.mxu0 %v5392
      %7088 = vmatpush2.msra.mxu0 %v5391
      %7089 = vmatprep.subr.mxu0 %v5376
      %7090 = vmatpush2.msra.mxu0 %v5375
      %7091 = vmatprep.subr.mxu0 %v5360
      %7092 = vmatpush2.msra.mxu0 %v5359
      %7093 = vmatprep.subr.mxu0 %v5344
      %7094 = vmatpush2.msra.mxu0 %v5343
      %7095 = vmatprep.subr.mxu0 %v5328
      %7096 = vmatpush2.msra.mxu0 %v5327
      %7097 = vmatprep.subr.mxu0 %v5312
      %7098 = vmatpush2.msra.mxu0 %v5311
      %7099 = vmatprep.subr.mxu0 %v5296
      %7100 = vmatpush2.msra.mxu0 %v5295
      %7101 = vmatprep.subr.mxu0 %v5280
      %7102 = vmatpush2.msra.mxu0 %v5279
      %7103 = vmatprep.subr.mxu0 %v5264
      %7104 = vmatpush2.msra.mxu0 %v5263
      %7105 = vmatprep.subr.mxu0 %v5248
      %7106 = vmatpush2.msra.mxu0 %v5247
      %7107 = vmatprep.subr.mxu0 %v5232
      %7108 = vmatpush2.msra.mxu0 %v5231
      %7109 = vmatprep.subr.mxu0 %v5216
      %7110 = vmatpush2.msra.mxu0 %v5215
      %7111 = vmatprep.subr.mxu0 %v5200
      %7112 = vmatpush2.msra.mxu0 %v5199
      %7113 = vmatprep.subr.mxu0 %v5184
      %7114 = vmatpush2.msra.mxu0 %v5183
      %7115 = vmatprep.mubr.f32.mxu0 %v637
      %7116 = vmatmul.mubr.f32.gmra.mxu0 %v636
      %v7117 = vpop.f32.mrf.mxu0
      %v7118 = vadd.f32 %v7047, %v7117
      %v7119 = vpop.f32.mrf.mxu0
      %v7120 = vadd.f32 %v7049, %v7119
      %7121 = vdwg.mxu0
      %7122 = vmatprep.subr.mxu0 %v5680
      %7123 = vmatpush1.msra.mxu0 %v5679
      %7124 = vmatprep.subr.mxu0 %v5664
      %7125 = vmatpush1.msra.mxu0 %v5663
      %7126 = vmatprep.subr.mxu0 %v5648
      %7127 = vmatpush1.msra.mxu0 %v5647
      %7128 = vmatprep.subr.mxu0 %v5632
      %7129 = vmatpush1.msra.mxu0 %v5631
      %7130 = vmatprep.subr.mxu0 %v5616
      %7131 = vmatpush1.msra.mxu0 %v5615
      %7132 = vmatprep.subr.mxu0 %v5600
      %7133 = vmatpush1.msra.mxu0 %v5599
      %7134 = vmatprep.subr.mxu0 %v5584
      %7135 = vmatpush1.msra.mxu0 %v5583
      %7136 = vmatprep.subr.mxu0 %v5568
      %7137 = vmatpush1.msra.mxu0 %v5567
      %7138 = vmatprep.subr.mxu0 %v5552
      %7139 = vmatpush1.msra.mxu0 %v5551
      %7140 = vmatprep.subr.mxu0 %v5536
      %7141 = vmatpush1.msra.mxu0 %v5535
      %7142 = vmatprep.subr.mxu0 %v5520
      %7143 = vmatpush1.msra.mxu0 %v5519
      %7144 = vmatprep.subr.mxu0 %v5504
      %7145 = vmatpush1.msra.mxu0 %v5503
      %7146 = vmatprep.subr.mxu0 %v5488
      %7147 = vmatpush1.msra.mxu0 %v5487
      %7148 = vmatprep.subr.mxu0 %v5472
      %7149 = vmatpush1.msra.mxu0 %v5471
      %7150 = vmatprep.subr.mxu0 %v5456
      %7151 = vmatpush1.msra.mxu0 %v5455
      %7152 = vmatprep.subr.mxu0 %v5440
      %7153 = vmatpush1.msra.mxu0 %v5439
      %7154 = vmatprep.subr.mxu0 0.0
      %7155 = vmatpush2.msra.mxu0 0.0
      %7156 = vmatprep.subr.mxu0 0.0
      %7157 = vmatpush2.msra.mxu0 0.0
      %7158 = vmatprep.subr.mxu0 0.0
      %7159 = vmatpush2.msra.mxu0 0.0
      %7160 = vmatprep.subr.mxu0 0.0
      %7161 = vmatpush2.msra.mxu0 0.0
      %7162 = vmatprep.subr.mxu0 0.0
      %7163 = vmatpush2.msra.mxu0 0.0
      %7164 = vmatprep.subr.mxu0 0.0
      %7165 = vmatpush2.msra.mxu0 0.0
      %7166 = vmatprep.subr.mxu0 0.0
      %7167 = vmatpush2.msra.mxu0 0.0
      %7168 = vmatprep.subr.mxu0 0.0
      %7169 = vmatpush2.msra.mxu0 0.0
      %7170 = vmatprep.subr.mxu0 0.0
      %7171 = vmatpush2.msra.mxu0 0.0
      %7172 = vmatprep.subr.mxu0 0.0
      %7173 = vmatpush2.msra.mxu0 0.0
      %7174 = vmatprep.subr.mxu0 0.0
      %7175 = vmatpush2.msra.mxu0 0.0
      %7176 = vmatprep.subr.mxu0 0.0
      %7177 = vmatpush2.msra.mxu0 0.0
      %7178 = vmatprep.subr.mxu0 0.0
      %7179 = vmatpush2.msra.mxu0 0.0
      %7180 = vmatprep.subr.mxu0 0.0
      %7181 = vmatpush2.msra.mxu0 0.0
      %7182 = vmatprep.subr.mxu0 0.0
      %7183 = vmatpush2.msra.mxu0 0.0
      %7184 = vmatprep.subr.mxu0 0.0
      %7185 = vmatpush2.msra.mxu0 0.0
      %7186 = vmatprep.mubr.f32.mxu0 0.0
      %7187 = vmatmul.mubr.f32.gmra.mxu0 %v638
      %v7188 = vpop.f32.mrf.mxu0
      %v7189 = vadd.f32 %v7118, %v7188
      %v7190 = vpop.f32.mrf.mxu0
      %v7191 = vadd.f32 %v7120, %v7190
      %7192 = vdwg.mxu0
      %7193 = vmatprep.subr.mxu0 %v3634
      %7194 = vmatpush1.msra.mxu0 %v3633
      %7195 = vmatprep.subr.mxu0 %v3618
      %7196 = vmatpush1.msra.mxu0 %v3617
      %7197 = vmatprep.subr.mxu0 %v3602
      %7198 = vmatpush1.msra.mxu0 %v3601
      %7199 = vmatprep.subr.mxu0 %v3586
      %7200 = vmatpush1.msra.mxu0 %v3585
      %7201 = vmatprep.subr.mxu0 %v3570
      %7202 = vmatpush1.msra.mxu0 %v3569
      %7203 = vmatprep.subr.mxu0 %v3554
      %7204 = vmatpush1.msra.mxu0 %v3553
      %7205 = vmatprep.subr.mxu0 %v3538
      %7206 = vmatpush1.msra.mxu0 %v3537
      %7207 = vmatprep.subr.mxu0 %v3522
      %7208 = vmatpush1.msra.mxu0 %v3521
      %7209 = vmatprep.subr.mxu0 %v3506
      %7210 = vmatpush1.msra.mxu0 %v3505
      %7211 = vmatprep.subr.mxu0 %v3490
      %7212 = vmatpush1.msra.mxu0 %v3489
      %7213 = vmatprep.subr.mxu0 %v3474
      %7214 = vmatpush1.msra.mxu0 %v3473
      %7215 = vmatprep.subr.mxu0 %v3458
      %7216 = vmatpush1.msra.mxu0 %v3457
      %7217 = vmatprep.subr.mxu0 %v3442
      %7218 = vmatpush1.msra.mxu0 %v3441
      %7219 = vmatprep.subr.mxu0 %v3426
      %7220 = vmatpush1.msra.mxu0 %v3425
      %7221 = vmatprep.subr.mxu0 %v3410
      %7222 = vmatpush1.msra.mxu0 %v3409
      %7223 = vmatprep.subr.mxu0 %v3394
      %7224 = vmatpush1.msra.mxu0 %v3393
      %7225 = vmatprep.subr.mxu0 %v3890
      %7226 = vmatpush2.msra.mxu0 %v3889
      %7227 = vmatprep.subr.mxu0 %v3874
      %7228 = vmatpush2.msra.mxu0 %v3873
      %7229 = vmatprep.subr.mxu0 %v3858
      %7230 = vmatpush2.msra.mxu0 %v3857
      %7231 = vmatprep.subr.mxu0 %v3842
      %7232 = vmatpush2.msra.mxu0 %v3841
      %7233 = vmatprep.subr.mxu0 %v3826
      %7234 = vmatpush2.msra.mxu0 %v3825
      %7235 = vmatprep.subr.mxu0 %v3810
      %7236 = vmatpush2.msra.mxu0 %v3809
      %7237 = vmatprep.subr.mxu0 %v3794
      %7238 = vmatpush2.msra.mxu0 %v3793
      %7239 = vmatprep.subr.mxu0 %v3778
      %7240 = vmatpush2.msra.mxu0 %v3777
      %7241 = vmatprep.subr.mxu0 %v3762
      %7242 = vmatpush2.msra.mxu0 %v3761
      %7243 = vmatprep.subr.mxu0 %v3746
      %7244 = vmatpush2.msra.mxu0 %v3745
      %7245 = vmatprep.subr.mxu0 %v3730
      %7246 = vmatpush2.msra.mxu0 %v3729
      %7247 = vmatprep.subr.mxu0 %v3714
      %7248 = vmatpush2.msra.mxu0 %v3713
      %7249 = vmatprep.subr.mxu0 %v3698
      %7250 = vmatpush2.msra.mxu0 %v3697
      %7251 = vmatprep.subr.mxu0 %v3682
      %7252 = vmatpush2.msra.mxu0 %v3681
      %7253 = vmatprep.subr.mxu0 %v3666
      %7254 = vmatpush2.msra.mxu0 %v3665
      %7255 = vmatprep.subr.mxu0 %v3650
      %7256 = vmatpush2.msra.mxu0 %v3649
      %7257 = vmatprep.mubr.f32.mxu0 %v3382
      %7258 = vmatmul.mubr.f32.gmra.mxu0 %v3381
      %v7259 = vpop.f32.mrf.mxu0
      %v7260 = vadd.f32 %v5728, %v7259
      %v7261 = vpop.f32.mrf.mxu0
      %v7262 = vadd.f32 %v5732, %v7261
      %7263 = vdwg.mxu0
      %7264 = vmatprep.subr.mxu0 %v4146
      %7265 = vmatpush1.msra.mxu0 %v4145
      %7266 = vmatprep.subr.mxu0 %v4130
      %7267 = vmatpush1.msra.mxu0 %v4129
      %7268 = vmatprep.subr.mxu0 %v4114
      %7269 = vmatpush1.msra.mxu0 %v4113
      %7270 = vmatprep.subr.mxu0 %v4098
      %7271 = vmatpush1.msra.mxu0 %v4097
      %7272 = vmatprep.subr.mxu0 %v4082
      %7273 = vmatpush1.msra.mxu0 %v4081
      %7274 = vmatprep.subr.mxu0 %v4066
      %7275 = vmatpush1.msra.mxu0 %v4065
      %7276 = vmatprep.subr.mxu0 %v4050
      %7277 = vmatpush1.msra.mxu0 %v4049
      %7278 = vmatprep.subr.mxu0 %v4034
      %7279 = vmatpush1.msra.mxu0 %v4033
      %7280 = vmatprep.subr.mxu0 %v4018
      %7281 = vmatpush1.msra.mxu0 %v4017
      %7282 = vmatprep.subr.mxu0 %v4002
      %7283 = vmatpush1.msra.mxu0 %v4001
      %7284 = vmatprep.subr.mxu0 %v3986
      %7285 = vmatpush1.msra.mxu0 %v3985
      %7286 = vmatprep.subr.mxu0 %v3970
      %7287 = vmatpush1.msra.mxu0 %v3969
      %7288 = vmatprep.subr.mxu0 %v3954
      %7289 = vmatpush1.msra.mxu0 %v3953
      %7290 = vmatprep.subr.mxu0 %v3938
      %7291 = vmatpush1.msra.mxu0 %v3937
      %7292 = vmatprep.subr.mxu0 %v3922
      %7293 = vmatpush1.msra.mxu0 %v3921
      %7294 = vmatprep.subr.mxu0 %v3906
      %7295 = vmatpush1.msra.mxu0 %v3905
      %7296 = vmatprep.subr.mxu0 %v4402
      %7297 = vmatpush2.msra.mxu0 %v4401
      %7298 = vmatprep.subr.mxu0 %v4386
      %7299 = vmatpush2.msra.mxu0 %v4385
      %7300 = vmatprep.subr.mxu0 %v4370
      %7301 = vmatpush2.msra.mxu0 %v4369
      %7302 = vmatprep.subr.mxu0 %v4354
      %7303 = vmatpush2.msra.mxu0 %v4353
      %7304 = vmatprep.subr.mxu0 %v4338
      %7305 = vmatpush2.msra.mxu0 %v4337
      %7306 = vmatprep.subr.mxu0 %v4322
      %7307 = vmatpush2.msra.mxu0 %v4321
      %7308 = vmatprep.subr.mxu0 %v4306
      %7309 = vmatpush2.msra.mxu0 %v4305
      %7310 = vmatprep.subr.mxu0 %v4290
      %7311 = vmatpush2.msra.mxu0 %v4289
      %7312 = vmatprep.subr.mxu0 %v4274
      %7313 = vmatpush2.msra.mxu0 %v4273
      %7314 = vmatprep.subr.mxu0 %v4258
      %7315 = vmatpush2.msra.mxu0 %v4257
      %7316 = vmatprep.subr.mxu0 %v4242
      %7317 = vmatpush2.msra.mxu0 %v4241
      %7318 = vmatprep.subr.mxu0 %v4226
      %7319 = vmatpush2.msra.mxu0 %v4225
      %7320 = vmatprep.subr.mxu0 %v4210
      %7321 = vmatpush2.msra.mxu0 %v4209
      %7322 = vmatprep.subr.mxu0 %v4194
      %7323 = vmatpush2.msra.mxu0 %v4193
      %7324 = vmatprep.subr.mxu0 %v4178
      %7325 = vmatpush2.msra.mxu0 %v4177
      %7326 = vmatprep.subr.mxu0 %v4162
      %7327 = vmatpush2.msra.mxu0 %v4161
      %7328 = vmatprep.mubr.f32.mxu0 %v3384
      %7329 = vmatmul.mubr.f32.gmra.mxu0 %v3383
      %v7330 = vpop.f32.mrf.mxu0
      %v7331 = vadd.f32 %v7260, %v7330
      %v7332 = vpop.f32.mrf.mxu0
      %v7333 = vadd.f32 %v7262, %v7332
      %7334 = vdwg.mxu0
      %7335 = vmatprep.subr.mxu0 %v4658
      %7336 = vmatpush1.msra.mxu0 %v4657
      %7337 = vmatprep.subr.mxu0 %v4642
      %7338 = vmatpush1.msra.mxu0 %v4641
      %7339 = vmatprep.subr.mxu0 %v4626
      %7340 = vmatpush1.msra.mxu0 %v4625
      %7341 = vmatprep.subr.mxu0 %v4610
      %7342 = vmatpush1.msra.mxu0 %v4609
      %7343 = vmatprep.subr.mxu0 %v4594
      %7344 = vmatpush1.msra.mxu0 %v4593
      %7345 = vmatprep.subr.mxu0 %v4578
      %7346 = vmatpush1.msra.mxu0 %v4577
      %7347 = vmatprep.subr.mxu0 %v4562
      %7348 = vmatpush1.msra.mxu0 %v4561
      %7349 = vmatprep.subr.mxu0 %v4546
      %7350 = vmatpush1.msra.mxu0 %v4545
      %7351 = vmatprep.subr.mxu0 %v4530
      %7352 = vmatpush1.msra.mxu0 %v4529
      %7353 = vmatprep.subr.mxu0 %v4514
      %7354 = vmatpush1.msra.mxu0 %v4513
      %7355 = vmatprep.subr.mxu0 %v4498
      %7356 = vmatpush1.msra.mxu0 %v4497
      %7357 = vmatprep.subr.mxu0 %v4482
      %7358 = vmatpush1.msra.mxu0 %v4481
      %7359 = vmatprep.subr.mxu0 %v4466
      %7360 = vmatpush1.msra.mxu0 %v4465
      %7361 = vmatprep.subr.mxu0 %v4450
      %7362 = vmatpush1.msra.mxu0 %v4449
      %7363 = vmatprep.subr.mxu0 %v4434
      %7364 = vmatpush1.msra.mxu0 %v4433
      %7365 = vmatprep.subr.mxu0 %v4418
      %7366 = vmatpush1.msra.mxu0 %v4417
      %7367 = vmatprep.subr.mxu0 %v4914
      %7368 = vmatpush2.msra.mxu0 %v4913
      %7369 = vmatprep.subr.mxu0 %v4898
      %7370 = vmatpush2.msra.mxu0 %v4897
      %7371 = vmatprep.subr.mxu0 %v4882
      %7372 = vmatpush2.msra.mxu0 %v4881
      %7373 = vmatprep.subr.mxu0 %v4866
      %7374 = vmatpush2.msra.mxu0 %v4865
      %7375 = vmatprep.subr.mxu0 %v4850
      %7376 = vmatpush2.msra.mxu0 %v4849
      %7377 = vmatprep.subr.mxu0 %v4834
      %7378 = vmatpush2.msra.mxu0 %v4833
      %7379 = vmatprep.subr.mxu0 %v4818
      %7380 = vmatpush2.msra.mxu0 %v4817
      %7381 = vmatprep.subr.mxu0 %v4802
      %7382 = vmatpush2.msra.mxu0 %v4801
      %7383 = vmatprep.subr.mxu0 %v4786
      %7384 = vmatpush2.msra.mxu0 %v4785
      %7385 = vmatprep.subr.mxu0 %v4770
      %7386 = vmatpush2.msra.mxu0 %v4769
      %7387 = vmatprep.subr.mxu0 %v4754
      %7388 = vmatpush2.msra.mxu0 %v4753
      %7389 = vmatprep.subr.mxu0 %v4738
      %7390 = vmatpush2.msra.mxu0 %v4737
      %7391 = vmatprep.subr.mxu0 %v4722
      %7392 = vmatpush2.msra.mxu0 %v4721
      %7393 = vmatprep.subr.mxu0 %v4706
      %7394 = vmatpush2.msra.mxu0 %v4705
      %7395 = vmatprep.subr.mxu0 %v4690
      %7396 = vmatpush2.msra.mxu0 %v4689
      %7397 = vmatprep.subr.mxu0 %v4674
      %7398 = vmatpush2.msra.mxu0 %v4673
      %7399 = vmatprep.mubr.f32.mxu0 %v635
      %7400 = vmatmul.mubr.f32.gmra.mxu0 %v3380
      %v7401 = vpop.f32.mrf.mxu0
      %v7402 = vadd.f32 %v7331, %v7401
      %v7403 = vpop.f32.mrf.mxu0
      %v7404 = vadd.f32 %v7333, %v7403
      %7405 = vdwg.mxu0
      %7406 = vmatprep.subr.mxu0 %v5170
      %7407 = vmatpush1.msra.mxu0 %v5169
      %7408 = vmatprep.subr.mxu0 %v5154
      %7409 = vmatpush1.msra.mxu0 %v5153
      %7410 = vmatprep.subr.mxu0 %v5138
      %7411 = vmatpush1.msra.mxu0 %v5137
      %7412 = vmatprep.subr.mxu0 %v5122
      %7413 = vmatpush1.msra.mxu0 %v5121
      %7414 = vmatprep.subr.mxu0 %v5106
      %7415 = vmatpush1.msra.mxu0 %v5105
      %7416 = vmatprep.subr.mxu0 %v5090
      %7417 = vmatpush1.msra.mxu0 %v5089
      %7418 = vmatprep.subr.mxu0 %v5074
      %7419 = vmatpush1.msra.mxu0 %v5073
      %7420 = vmatprep.subr.mxu0 %v5058
      %7421 = vmatpush1.msra.mxu0 %v5057
      %7422 = vmatprep.subr.mxu0 %v5042
      %7423 = vmatpush1.msra.mxu0 %v5041
      %7424 = vmatprep.subr.mxu0 %v5026
      %7425 = vmatpush1.msra.mxu0 %v5025
      %7426 = vmatprep.subr.mxu0 %v5010
      %7427 = vmatpush1.msra.mxu0 %v5009
      %7428 = vmatprep.subr.mxu0 %v4994
      %7429 = vmatpush1.msra.mxu0 %v4993
      %7430 = vmatprep.subr.mxu0 %v4978
      %7431 = vmatpush1.msra.mxu0 %v4977
      %7432 = vmatprep.subr.mxu0 %v4962
      %7433 = vmatpush1.msra.mxu0 %v4961
      %7434 = vmatprep.subr.mxu0 %v4946
      %7435 = vmatpush1.msra.mxu0 %v4945
      %7436 = vmatprep.subr.mxu0 %v4930
      %7437 = vmatpush1.msra.mxu0 %v4929
      %7438 = vmatprep.subr.mxu0 %v5426
      %7439 = vmatpush2.msra.mxu0 %v5425
      %7440 = vmatprep.subr.mxu0 %v5410
      %7441 = vmatpush2.msra.mxu0 %v5409
      %7442 = vmatprep.subr.mxu0 %v5394
      %7443 = vmatpush2.msra.mxu0 %v5393
      %7444 = vmatprep.subr.mxu0 %v5378
      %7445 = vmatpush2.msra.mxu0 %v5377
      %7446 = vmatprep.subr.mxu0 %v5362
      %7447 = vmatpush2.msra.mxu0 %v5361
      %7448 = vmatprep.subr.mxu0 %v5346
      %7449 = vmatpush2.msra.mxu0 %v5345
      %7450 = vmatprep.subr.mxu0 %v5330
      %7451 = vmatpush2.msra.mxu0 %v5329
      %7452 = vmatprep.subr.mxu0 %v5314
      %7453 = vmatpush2.msra.mxu0 %v5313
      %7454 = vmatprep.subr.mxu0 %v5298
      %7455 = vmatpush2.msra.mxu0 %v5297
      %7456 = vmatprep.subr.mxu0 %v5282
      %7457 = vmatpush2.msra.mxu0 %v5281
      %7458 = vmatprep.subr.mxu0 %v5266
      %7459 = vmatpush2.msra.mxu0 %v5265
      %7460 = vmatprep.subr.mxu0 %v5250
      %7461 = vmatpush2.msra.mxu0 %v5249
      %7462 = vmatprep.subr.mxu0 %v5234
      %7463 = vmatpush2.msra.mxu0 %v5233
      %7464 = vmatprep.subr.mxu0 %v5218
      %7465 = vmatpush2.msra.mxu0 %v5217
      %7466 = vmatprep.subr.mxu0 %v5202
      %7467 = vmatpush2.msra.mxu0 %v5201
      %7468 = vmatprep.subr.mxu0 %v5186
      %7469 = vmatpush2.msra.mxu0 %v5185
      %7470 = vmatprep.mubr.f32.mxu0 %v637
      %7471 = vmatmul.mubr.f32.gmra.mxu0 %v636
      %v7472 = vpop.f32.mrf.mxu0
      %v7473 = vadd.f32 %v7402, %v7472
      %v7474 = vpop.f32.mrf.mxu0
      %v7475 = vadd.f32 %v7404, %v7474
      %7476 = vdwg.mxu0
      %7477 = vmatprep.subr.mxu0 %v5682
      %7478 = vmatpush1.msra.mxu0 %v5681
      %7479 = vmatprep.subr.mxu0 %v5666
      %7480 = vmatpush1.msra.mxu0 %v5665
      %7481 = vmatprep.subr.mxu0 %v5650
      %7482 = vmatpush1.msra.mxu0 %v5649
      %7483 = vmatprep.subr.mxu0 %v5634
      %7484 = vmatpush1.msra.mxu0 %v5633
      %7485 = vmatprep.subr.mxu0 %v5618
      %7486 = vmatpush1.msra.mxu0 %v5617
      %7487 = vmatprep.subr.mxu0 %v5602
      %7488 = vmatpush1.msra.mxu0 %v5601
      %7489 = vmatprep.subr.mxu0 %v5586
      %7490 = vmatpush1.msra.mxu0 %v5585
      %7491 = vmatprep.subr.mxu0 %v5570
      %7492 = vmatpush1.msra.mxu0 %v5569
      %7493 = vmatprep.subr.mxu0 %v5554
      %7494 = vmatpush1.msra.mxu0 %v5553
      %7495 = vmatprep.subr.mxu0 %v5538
      %7496 = vmatpush1.msra.mxu0 %v5537
      %7497 = vmatprep.subr.mxu0 %v5522
      %7498 = vmatpush1.msra.mxu0 %v5521
      %7499 = vmatprep.subr.mxu0 %v5506
      %7500 = vmatpush1.msra.mxu0 %v5505
      %7501 = vmatprep.subr.mxu0 %v5490
      %7502 = vmatpush1.msra.mxu0 %v5489
      %7503 = vmatprep.subr.mxu0 %v5474
      %7504 = vmatpush1.msra.mxu0 %v5473
      %7505 = vmatprep.subr.mxu0 %v5458
      %7506 = vmatpush1.msra.mxu0 %v5457
      %7507 = vmatprep.subr.mxu0 %v5442
      %7508 = vmatpush1.msra.mxu0 %v5441
      %7509 = vmatprep.subr.mxu0 0.0
      %7510 = vmatpush2.msra.mxu0 0.0
      %7511 = vmatprep.subr.mxu0 0.0
      %7512 = vmatpush2.msra.mxu0 0.0
      %7513 = vmatprep.subr.mxu0 0.0
      %7514 = vmatpush2.msra.mxu0 0.0
      %7515 = vmatprep.subr.mxu0 0.0
      %7516 = vmatpush2.msra.mxu0 0.0
      %7517 = vmatprep.subr.mxu0 0.0
      %7518 = vmatpush2.msra.mxu0 0.0
      %7519 = vmatprep.subr.mxu0 0.0
      %7520 = vmatpush2.msra.mxu0 0.0
      %7521 = vmatprep.subr.mxu0 0.0
      %7522 = vmatpush2.msra.mxu0 0.0
      %7523 = vmatprep.subr.mxu0 0.0
      %7524 = vmatpush2.msra.mxu0 0.0
      %7525 = vmatprep.subr.mxu0 0.0
      %7526 = vmatpush2.msra.mxu0 0.0
      %7527 = vmatprep.subr.mxu0 0.0
      %7528 = vmatpush2.msra.mxu0 0.0
      %7529 = vmatprep.subr.mxu0 0.0
      %7530 = vmatpush2.msra.mxu0 0.0
      %7531 = vmatprep.subr.mxu0 0.0
      %7532 = vmatpush2.msra.mxu0 0.0
      %7533 = vmatprep.subr.mxu0 0.0
      %7534 = vmatpush2.msra.mxu0 0.0
      %7535 = vmatprep.subr.mxu0 0.0
      %7536 = vmatpush2.msra.mxu0 0.0
      %7537 = vmatprep.subr.mxu0 0.0
      %7538 = vmatpush2.msra.mxu0 0.0
      %7539 = vmatprep.subr.mxu0 0.0
      %7540 = vmatpush2.msra.mxu0 0.0
      %7541 = vmatprep.mubr.f32.mxu0 0.0
      %7542 = vmatmul.mubr.f32.gmra.mxu0 %v638
      %v7543 = vpop.f32.mrf.mxu0
      %v7544 = vadd.f32 %v7473, %v7543
      %v7545 = vpop.f32.mrf.mxu0
      %v7546 = vadd.f32 %v7475, %v7545
      %7547 = vdwg.mxu0
      %7548 = vmatprep.subr.mxu0 %v3636
      %7549 = vmatpush1.msra.mxu0 %v3635
      %7550 = vmatprep.subr.mxu0 %v3620
      %7551 = vmatpush1.msra.mxu0 %v3619
      %7552 = vmatprep.subr.mxu0 %v3604
      %7553 = vmatpush1.msra.mxu0 %v3603
      %7554 = vmatprep.subr.mxu0 %v3588
      %7555 = vmatpush1.msra.mxu0 %v3587
      %7556 = vmatprep.subr.mxu0 %v3572
      %7557 = vmatpush1.msra.mxu0 %v3571
      %7558 = vmatprep.subr.mxu0 %v3556
      %7559 = vmatpush1.msra.mxu0 %v3555
      %7560 = vmatprep.subr.mxu0 %v3540
      %7561 = vmatpush1.msra.mxu0 %v3539
      %7562 = vmatprep.subr.mxu0 %v3524
      %7563 = vmatpush1.msra.mxu0 %v3523
      %7564 = vmatprep.subr.mxu0 %v3508
      %7565 = vmatpush1.msra.mxu0 %v3507
      %7566 = vmatprep.subr.mxu0 %v3492
      %7567 = vmatpush1.msra.mxu0 %v3491
      %7568 = vmatprep.subr.mxu0 %v3476
      %7569 = vmatpush1.msra.mxu0 %v3475
      %7570 = vmatprep.subr.mxu0 %v3460
      %7571 = vmatpush1.msra.mxu0 %v3459
      %7572 = vmatprep.subr.mxu0 %v3444
      %7573 = vmatpush1.msra.mxu0 %v3443
      %7574 = vmatprep.subr.mxu0 %v3428
      %7575 = vmatpush1.msra.mxu0 %v3427
      %7576 = vmatprep.subr.mxu0 %v3412
      %7577 = vmatpush1.msra.mxu0 %v3411
      %7578 = vmatprep.subr.mxu0 %v3396
      %7579 = vmatpush1.msra.mxu0 %v3395
      %7580 = vmatprep.subr.mxu0 %v3892
      %7581 = vmatpush2.msra.mxu0 %v3891
      %7582 = vmatprep.subr.mxu0 %v3876
      %7583 = vmatpush2.msra.mxu0 %v3875
      %7584 = vmatprep.subr.mxu0 %v3860
      %7585 = vmatpush2.msra.mxu0 %v3859
      %7586 = vmatprep.subr.mxu0 %v3844
      %7587 = vmatpush2.msra.mxu0 %v3843
      %7588 = vmatprep.subr.mxu0 %v3828
      %7589 = vmatpush2.msra.mxu0 %v3827
      %7590 = vmatprep.subr.mxu0 %v3812
      %7591 = vmatpush2.msra.mxu0 %v3811
      %7592 = vmatprep.subr.mxu0 %v3796
      %7593 = vmatpush2.msra.mxu0 %v3795
      %7594 = vmatprep.subr.mxu0 %v3780
      %7595 = vmatpush2.msra.mxu0 %v3779
      %7596 = vmatprep.subr.mxu0 %v3764
      %7597 = vmatpush2.msra.mxu0 %v3763
      %7598 = vmatprep.subr.mxu0 %v3748
      %7599 = vmatpush2.msra.mxu0 %v3747
      %7600 = vmatprep.subr.mxu0 %v3732
      %7601 = vmatpush2.msra.mxu0 %v3731
      %7602 = vmatprep.subr.mxu0 %v3716
      %7603 = vmatpush2.msra.mxu0 %v3715
      %7604 = vmatprep.subr.mxu0 %v3700
      %7605 = vmatpush2.msra.mxu0 %v3699
      %7606 = vmatprep.subr.mxu0 %v3684
      %7607 = vmatpush2.msra.mxu0 %v3683
      %7608 = vmatprep.subr.mxu0 %v3668
      %7609 = vmatpush2.msra.mxu0 %v3667
      %7610 = vmatprep.subr.mxu0 %v3652
      %7611 = vmatpush2.msra.mxu0 %v3651
      %7612 = vmatprep.mubr.f32.mxu0 %v3382
      %7613 = vmatmul.mubr.f32.gmra.mxu0 %v3381
      %v7614 = vpop.f32.mrf.mxu0
      %v7615 = vadd.f32 %v5736, %v7614
      %v7616 = vpop.f32.mrf.mxu0
      %v7617 = vadd.f32 %v5740, %v7616
      %7618 = vdwg.mxu0
      %7619 = vmatprep.subr.mxu0 %v4148
      %7620 = vmatpush1.msra.mxu0 %v4147
      %7621 = vmatprep.subr.mxu0 %v4132
      %7622 = vmatpush1.msra.mxu0 %v4131
      %7623 = vmatprep.subr.mxu0 %v4116
      %7624 = vmatpush1.msra.mxu0 %v4115
      %7625 = vmatprep.subr.mxu0 %v4100
      %7626 = vmatpush1.msra.mxu0 %v4099
      %7627 = vmatprep.subr.mxu0 %v4084
      %7628 = vmatpush1.msra.mxu0 %v4083
      %7629 = vmatprep.subr.mxu0 %v4068
      %7630 = vmatpush1.msra.mxu0 %v4067
      %7631 = vmatprep.subr.mxu0 %v4052
      %7632 = vmatpush1.msra.mxu0 %v4051
      %7633 = vmatprep.subr.mxu0 %v4036
      %7634 = vmatpush1.msra.mxu0 %v4035
      %7635 = vmatprep.subr.mxu0 %v4020
      %7636 = vmatpush1.msra.mxu0 %v4019
      %7637 = vmatprep.subr.mxu0 %v4004
      %7638 = vmatpush1.msra.mxu0 %v4003
      %7639 = vmatprep.subr.mxu0 %v3988
      %7640 = vmatpush1.msra.mxu0 %v3987
      %7641 = vmatprep.subr.mxu0 %v3972
      %7642 = vmatpush1.msra.mxu0 %v3971
      %7643 = vmatprep.subr.mxu0 %v3956
      %7644 = vmatpush1.msra.mxu0 %v3955
      %7645 = vmatprep.subr.mxu0 %v3940
      %7646 = vmatpush1.msra.mxu0 %v3939
      %7647 = vmatprep.subr.mxu0 %v3924
      %7648 = vmatpush1.msra.mxu0 %v3923
      %7649 = vmatprep.subr.mxu0 %v3908
      %7650 = vmatpush1.msra.mxu0 %v3907
      %7651 = vmatprep.subr.mxu0 %v4404
      %7652 = vmatpush2.msra.mxu0 %v4403
      %7653 = vmatprep.subr.mxu0 %v4388
      %7654 = vmatpush2.msra.mxu0 %v4387
      %7655 = vmatprep.subr.mxu0 %v4372
      %7656 = vmatpush2.msra.mxu0 %v4371
      %7657 = vmatprep.subr.mxu0 %v4356
      %7658 = vmatpush2.msra.mxu0 %v4355
      %7659 = vmatprep.subr.mxu0 %v4340
      %7660 = vmatpush2.msra.mxu0 %v4339
      %7661 = vmatprep.subr.mxu0 %v4324
      %7662 = vmatpush2.msra.mxu0 %v4323
      %7663 = vmatprep.subr.mxu0 %v4308
      %7664 = vmatpush2.msra.mxu0 %v4307
      %7665 = vmatprep.subr.mxu0 %v4292
      %7666 = vmatpush2.msra.mxu0 %v4291
      %7667 = vmatprep.subr.mxu0 %v4276
      %7668 = vmatpush2.msra.mxu0 %v4275
      %7669 = vmatprep.subr.mxu0 %v4260
      %7670 = vmatpush2.msra.mxu0 %v4259
      %7671 = vmatprep.subr.mxu0 %v4244
      %7672 = vmatpush2.msra.mxu0 %v4243
      %7673 = vmatprep.subr.mxu0 %v4228
      %7674 = vmatpush2.msra.mxu0 %v4227
      %7675 = vmatprep.subr.mxu0 %v4212
      %7676 = vmatpush2.msra.mxu0 %v4211
      %7677 = vmatprep.subr.mxu0 %v4196
      %7678 = vmatpush2.msra.mxu0 %v4195
      %7679 = vmatprep.subr.mxu0 %v4180
      %7680 = vmatpush2.msra.mxu0 %v4179
      %7681 = vmatprep.subr.mxu0 %v4164
      %7682 = vmatpush2.msra.mxu0 %v4163
      %7683 = vmatprep.mubr.f32.mxu0 %v3384
      %7684 = vmatmul.mubr.f32.gmra.mxu0 %v3383
      %v7685 = vpop.f32.mrf.mxu0
      %v7686 = vadd.f32 %v7615, %v7685
      %v7687 = vpop.f32.mrf.mxu0
      %v7688 = vadd.f32 %v7617, %v7687
      %7689 = vdwg.mxu0
      %7690 = vmatprep.subr.mxu0 %v4660
      %7691 = vmatpush1.msra.mxu0 %v4659
      %7692 = vmatprep.subr.mxu0 %v4644
      %7693 = vmatpush1.msra.mxu0 %v4643
      %7694 = vmatprep.subr.mxu0 %v4628
      %7695 = vmatpush1.msra.mxu0 %v4627
      %7696 = vmatprep.subr.mxu0 %v4612
      %7697 = vmatpush1.msra.mxu0 %v4611
      %7698 = vmatprep.subr.mxu0 %v4596
      %7699 = vmatpush1.msra.mxu0 %v4595
      %7700 = vmatprep.subr.mxu0 %v4580
      %7701 = vmatpush1.msra.mxu0 %v4579
      %7702 = vmatprep.subr.mxu0 %v4564
      %7703 = vmatpush1.msra.mxu0 %v4563
      %7704 = vmatprep.subr.mxu0 %v4548
      %7705 = vmatpush1.msra.mxu0 %v4547
      %7706 = vmatprep.subr.mxu0 %v4532
      %7707 = vmatpush1.msra.mxu0 %v4531
      %7708 = vmatprep.subr.mxu0 %v4516
      %7709 = vmatpush1.msra.mxu0 %v4515
      %7710 = vmatprep.subr.mxu0 %v4500
      %7711 = vmatpush1.msra.mxu0 %v4499
      %7712 = vmatprep.subr.mxu0 %v4484
      %7713 = vmatpush1.msra.mxu0 %v4483
      %7714 = vmatprep.subr.mxu0 %v4468
      %7715 = vmatpush1.msra.mxu0 %v4467
      %7716 = vmatprep.subr.mxu0 %v4452
      %7717 = vmatpush1.msra.mxu0 %v4451
      %7718 = vmatprep.subr.mxu0 %v4436
      %7719 = vmatpush1.msra.mxu0 %v4435
      %7720 = vmatprep.subr.mxu0 %v4420
      %7721 = vmatpush1.msra.mxu0 %v4419
      %7722 = vmatprep.subr.mxu0 %v4916
      %7723 = vmatpush2.msra.mxu0 %v4915
      %7724 = vmatprep.subr.mxu0 %v4900
      %7725 = vmatpush2.msra.mxu0 %v4899
      %7726 = vmatprep.subr.mxu0 %v4884
      %7727 = vmatpush2.msra.mxu0 %v4883
      %7728 = vmatprep.subr.mxu0 %v4868
      %7729 = vmatpush2.msra.mxu0 %v4867
      %7730 = vmatprep.subr.mxu0 %v4852
      %7731 = vmatpush2.msra.mxu0 %v4851
      %7732 = vmatprep.subr.mxu0 %v4836
      %7733 = vmatpush2.msra.mxu0 %v4835
      %7734 = vmatprep.subr.mxu0 %v4820
      %7735 = vmatpush2.msra.mxu0 %v4819
      %7736 = vmatprep.subr.mxu0 %v4804
      %7737 = vmatpush2.msra.mxu0 %v4803
      %7738 = vmatprep.subr.mxu0 %v4788
      %7739 = vmatpush2.msra.mxu0 %v4787
      %7740 = vmatprep.subr.mxu0 %v4772
      %7741 = vmatpush2.msra.mxu0 %v4771
      %7742 = vmatprep.subr.mxu0 %v4756
      %7743 = vmatpush2.msra.mxu0 %v4755
      %7744 = vmatprep.subr.mxu0 %v4740
      %7745 = vmatpush2.msra.mxu0 %v4739
      %7746 = vmatprep.subr.mxu0 %v4724
      %7747 = vmatpush2.msra.mxu0 %v4723
      %7748 = vmatprep.subr.mxu0 %v4708
      %7749 = vmatpush2.msra.mxu0 %v4707
      %7750 = vmatprep.subr.mxu0 %v4692
      %7751 = vmatpush2.msra.mxu0 %v4691
      %7752 = vmatprep.subr.mxu0 %v4676
      %7753 = vmatpush2.msra.mxu0 %v4675
      %7754 = vmatprep.mubr.f32.mxu0 %v635
      %7755 = vmatmul.mubr.f32.gmra.mxu0 %v3380
      %v7756 = vpop.f32.mrf.mxu0
      %v7757 = vadd.f32 %v7686, %v7756
      %v7758 = vpop.f32.mrf.mxu0
      %v7759 = vadd.f32 %v7688, %v7758
      %7760 = vdwg.mxu0
      %7761 = vmatprep.subr.mxu0 %v5172
      %7762 = vmatpush1.msra.mxu0 %v5171
      %7763 = vmatprep.subr.mxu0 %v5156
      %7764 = vmatpush1.msra.mxu0 %v5155
      %7765 = vmatprep.subr.mxu0 %v5140
      %7766 = vmatpush1.msra.mxu0 %v5139
      %7767 = vmatprep.subr.mxu0 %v5124
      %7768 = vmatpush1.msra.mxu0 %v5123
      %7769 = vmatprep.subr.mxu0 %v5108
      %7770 = vmatpush1.msra.mxu0 %v5107
      %7771 = vmatprep.subr.mxu0 %v5092
      %7772 = vmatpush1.msra.mxu0 %v5091
      %7773 = vmatprep.subr.mxu0 %v5076
      %7774 = vmatpush1.msra.mxu0 %v5075
      %7775 = vmatprep.subr.mxu0 %v5060
      %7776 = vmatpush1.msra.mxu0 %v5059
      %7777 = vmatprep.subr.mxu0 %v5044
      %7778 = vmatpush1.msra.mxu0 %v5043
      %7779 = vmatprep.subr.mxu0 %v5028
      %7780 = vmatpush1.msra.mxu0 %v5027
      %7781 = vmatprep.subr.mxu0 %v5012
      %7782 = vmatpush1.msra.mxu0 %v5011
      %7783 = vmatprep.subr.mxu0 %v4996
      %7784 = vmatpush1.msra.mxu0 %v4995
      %7785 = vmatprep.subr.mxu0 %v4980
      %7786 = vmatpush1.msra.mxu0 %v4979
      %7787 = vmatprep.subr.mxu0 %v4964
      %7788 = vmatpush1.msra.mxu0 %v4963
      %7789 = vmatprep.subr.mxu0 %v4948
      %7790 = vmatpush1.msra.mxu0 %v4947
      %7791 = vmatprep.subr.mxu0 %v4932
      %7792 = vmatpush1.msra.mxu0 %v4931
      %7793 = vmatprep.subr.mxu0 %v5428
      %7794 = vmatpush2.msra.mxu0 %v5427
      %7795 = vmatprep.subr.mxu0 %v5412
      %7796 = vmatpush2.msra.mxu0 %v5411
      %7797 = vmatprep.subr.mxu0 %v5396
      %7798 = vmatpush2.msra.mxu0 %v5395
      %7799 = vmatprep.subr.mxu0 %v5380
      %7800 = vmatpush2.msra.mxu0 %v5379
      %7801 = vmatprep.subr.mxu0 %v5364
      %7802 = vmatpush2.msra.mxu0 %v5363
      %7803 = vmatprep.subr.mxu0 %v5348
      %7804 = vmatpush2.msra.mxu0 %v5347
      %7805 = vmatprep.subr.mxu0 %v5332
      %7806 = vmatpush2.msra.mxu0 %v5331
      %7807 = vmatprep.subr.mxu0 %v5316
      %7808 = vmatpush2.msra.mxu0 %v5315
      %7809 = vmatprep.subr.mxu0 %v5300
      %7810 = vmatpush2.msra.mxu0 %v5299
      %7811 = vmatprep.subr.mxu0 %v5284
      %7812 = vmatpush2.msra.mxu0 %v5283
      %7813 = vmatprep.subr.mxu0 %v5268
      %7814 = vmatpush2.msra.mxu0 %v5267
      %7815 = vmatprep.subr.mxu0 %v5252
      %7816 = vmatpush2.msra.mxu0 %v5251
      %7817 = vmatprep.subr.mxu0 %v5236
      %7818 = vmatpush2.msra.mxu0 %v5235
      %7819 = vmatprep.subr.mxu0 %v5220
      %7820 = vmatpush2.msra.mxu0 %v5219
      %7821 = vmatprep.subr.mxu0 %v5204
      %7822 = vmatpush2.msra.mxu0 %v5203
      %7823 = vmatprep.subr.mxu0 %v5188
      %7824 = vmatpush2.msra.mxu0 %v5187
      %7825 = vmatprep.mubr.f32.mxu0 %v637
      %7826 = vmatmul.mubr.f32.gmra.mxu0 %v636
      %v7827 = vpop.f32.mrf.mxu0
      %v7828 = vadd.f32 %v7757, %v7827
      %v7829 = vpop.f32.mrf.mxu0
      %v7830 = vadd.f32 %v7759, %v7829
      %7831 = vdwg.mxu0
      %7832 = vmatprep.subr.mxu0 %v5684
      %7833 = vmatpush1.msra.mxu0 %v5683
      %7834 = vmatprep.subr.mxu0 %v5668
      %7835 = vmatpush1.msra.mxu0 %v5667
      %7836 = vmatprep.subr.mxu0 %v5652
      %7837 = vmatpush1.msra.mxu0 %v5651
      %7838 = vmatprep.subr.mxu0 %v5636
      %7839 = vmatpush1.msra.mxu0 %v5635
      %7840 = vmatprep.subr.mxu0 %v5620
      %7841 = vmatpush1.msra.mxu0 %v5619
      %7842 = vmatprep.subr.mxu0 %v5604
      %7843 = vmatpush1.msra.mxu0 %v5603
      %7844 = vmatprep.subr.mxu0 %v5588
      %7845 = vmatpush1.msra.mxu0 %v5587
      %7846 = vmatprep.subr.mxu0 %v5572
      %7847 = vmatpush1.msra.mxu0 %v5571
      %7848 = vmatprep.subr.mxu0 %v5556
      %7849 = vmatpush1.msra.mxu0 %v5555
      %7850 = vmatprep.subr.mxu0 %v5540
      %7851 = vmatpush1.msra.mxu0 %v5539
      %7852 = vmatprep.subr.mxu0 %v5524
      %7853 = vmatpush1.msra.mxu0 %v5523
      %7854 = vmatprep.subr.mxu0 %v5508
      %7855 = vmatpush1.msra.mxu0 %v5507
      %7856 = vmatprep.subr.mxu0 %v5492
      %7857 = vmatpush1.msra.mxu0 %v5491
      %7858 = vmatprep.subr.mxu0 %v5476
      %7859 = vmatpush1.msra.mxu0 %v5475
      %7860 = vmatprep.subr.mxu0 %v5460
      %7861 = vmatpush1.msra.mxu0 %v5459
      %7862 = vmatprep.subr.mxu0 %v5444
      %7863 = vmatpush1.msra.mxu0 %v5443
      %7864 = vmatprep.subr.mxu0 0.0
      %7865 = vmatpush2.msra.mxu0 0.0
      %7866 = vmatprep.subr.mxu0 0.0
      %7867 = vmatpush2.msra.mxu0 0.0
      %7868 = vmatprep.subr.mxu0 0.0
      %7869 = vmatpush2.msra.mxu0 0.0
      %7870 = vmatprep.subr.mxu0 0.0
      %7871 = vmatpush2.msra.mxu0 0.0
      %7872 = vmatprep.subr.mxu0 0.0
      %7873 = vmatpush2.msra.mxu0 0.0
      %7874 = vmatprep.subr.mxu0 0.0
      %7875 = vmatpush2.msra.mxu0 0.0
      %7876 = vmatprep.subr.mxu0 0.0
      %7877 = vmatpush2.msra.mxu0 0.0
      %7878 = vmatprep.subr.mxu0 0.0
      %7879 = vmatpush2.msra.mxu0 0.0
      %7880 = vmatprep.subr.mxu0 0.0
      %7881 = vmatpush2.msra.mxu0 0.0
      %7882 = vmatprep.subr.mxu0 0.0
      %7883 = vmatpush2.msra.mxu0 0.0
      %7884 = vmatprep.subr.mxu0 0.0
      %7885 = vmatpush2.msra.mxu0 0.0
      %7886 = vmatprep.subr.mxu0 0.0
      %7887 = vmatpush2.msra.mxu0 0.0
      %7888 = vmatprep.subr.mxu0 0.0
      %7889 = vmatpush2.msra.mxu0 0.0
      %7890 = vmatprep.subr.mxu0 0.0
      %7891 = vmatpush2.msra.mxu0 0.0
      %7892 = vmatprep.subr.mxu0 0.0
      %7893 = vmatpush2.msra.mxu0 0.0
      %7894 = vmatprep.subr.mxu0 0.0
      %7895 = vmatpush2.msra.mxu0 0.0
      %7896 = vmatprep.mubr.f32.mxu0 0.0
      %7897 = vmatmul.mubr.f32.gmra.mxu0 %v638
      %v7898 = vpop.f32.mrf.mxu0
      %v7899 = vadd.f32 %v7828, %v7898
      %v7900 = vpop.f32.mrf.mxu0
      %v7901 = vadd.f32 %v7830, %v7900
      %7902 = vdwg.mxu0
      %7903 = vmatprep.subr.mxu0 %v3638
      %7904 = vmatpush1.msra.mxu0 %v3637
      %7905 = vmatprep.subr.mxu0 %v3622
      %7906 = vmatpush1.msra.mxu0 %v3621
      %7907 = vmatprep.subr.mxu0 %v3606
      %7908 = vmatpush1.msra.mxu0 %v3605
      %7909 = vmatprep.subr.mxu0 %v3590
      %7910 = vmatpush1.msra.mxu0 %v3589
      %7911 = vmatprep.subr.mxu0 %v3574
      %7912 = vmatpush1.msra.mxu0 %v3573
      %7913 = vmatprep.subr.mxu0 %v3558
      %7914 = vmatpush1.msra.mxu0 %v3557
      %7915 = vmatprep.subr.mxu0 %v3542
      %7916 = vmatpush1.msra.mxu0 %v3541
      %7917 = vmatprep.subr.mxu0 %v3526
      %7918 = vmatpush1.msra.mxu0 %v3525
      %7919 = vmatprep.subr.mxu0 %v3510
      %7920 = vmatpush1.msra.mxu0 %v3509
      %7921 = vmatprep.subr.mxu0 %v3494
      %7922 = vmatpush1.msra.mxu0 %v3493
      %7923 = vmatprep.subr.mxu0 %v3478
      %7924 = vmatpush1.msra.mxu0 %v3477
      %7925 = vmatprep.subr.mxu0 %v3462
      %7926 = vmatpush1.msra.mxu0 %v3461
      %7927 = vmatprep.subr.mxu0 %v3446
      %7928 = vmatpush1.msra.mxu0 %v3445
      %7929 = vmatprep.subr.mxu0 %v3430
      %7930 = vmatpush1.msra.mxu0 %v3429
      %7931 = vmatprep.subr.mxu0 %v3414
      %7932 = vmatpush1.msra.mxu0 %v3413
      %7933 = vmatprep.subr.mxu0 %v3398
      %7934 = vmatpush1.msra.mxu0 %v3397
      %7935 = vmatprep.subr.mxu0 %v3894
      %7936 = vmatpush2.msra.mxu0 %v3893
      %7937 = vmatprep.subr.mxu0 %v3878
      %7938 = vmatpush2.msra.mxu0 %v3877
      %7939 = vmatprep.subr.mxu0 %v3862
      %7940 = vmatpush2.msra.mxu0 %v3861
      %7941 = vmatprep.subr.mxu0 %v3846
      %7942 = vmatpush2.msra.mxu0 %v3845
      %7943 = vmatprep.subr.mxu0 %v3830
      %7944 = vmatpush2.msra.mxu0 %v3829
      %7945 = vmatprep.subr.mxu0 %v3814
      %7946 = vmatpush2.msra.mxu0 %v3813
      %7947 = vmatprep.subr.mxu0 %v3798
      %7948 = vmatpush2.msra.mxu0 %v3797
      %7949 = vmatprep.subr.mxu0 %v3782
      %7950 = vmatpush2.msra.mxu0 %v3781
      %7951 = vmatprep.subr.mxu0 %v3766
      %7952 = vmatpush2.msra.mxu0 %v3765
      %7953 = vmatprep.subr.mxu0 %v3750
      %7954 = vmatpush2.msra.mxu0 %v3749
      %7955 = vmatprep.subr.mxu0 %v3734
      %7956 = vmatpush2.msra.mxu0 %v3733
      %7957 = vmatprep.subr.mxu0 %v3718
      %7958 = vmatpush2.msra.mxu0 %v3717
      %7959 = vmatprep.subr.mxu0 %v3702
      %7960 = vmatpush2.msra.mxu0 %v3701
      %7961 = vmatprep.subr.mxu0 %v3686
      %7962 = vmatpush2.msra.mxu0 %v3685
      %7963 = vmatprep.subr.mxu0 %v3670
      %7964 = vmatpush2.msra.mxu0 %v3669
      %7965 = vmatprep.subr.mxu0 %v3654
      %7966 = vmatpush2.msra.mxu0 %v3653
      %7967 = vmatprep.mubr.f32.mxu0 %v3382
      %7968 = vmatmul.mubr.f32.gmra.mxu0 %v3381
      %v7969 = vpop.f32.mrf.mxu0
      %v7970 = vadd.f32 %v5744, %v7969
      %v7971 = vpop.f32.mrf.mxu0
      %v7972 = vadd.f32 %v5748, %v7971
      %7973 = vdwg.mxu0
      %7974 = vmatprep.subr.mxu0 %v4150
      %7975 = vmatpush1.msra.mxu0 %v4149
      %7976 = vmatprep.subr.mxu0 %v4134
      %7977 = vmatpush1.msra.mxu0 %v4133
      %7978 = vmatprep.subr.mxu0 %v4118
      %7979 = vmatpush1.msra.mxu0 %v4117
      %7980 = vmatprep.subr.mxu0 %v4102
      %7981 = vmatpush1.msra.mxu0 %v4101
      %7982 = vmatprep.subr.mxu0 %v4086
      %7983 = vmatpush1.msra.mxu0 %v4085
      %7984 = vmatprep.subr.mxu0 %v4070
      %7985 = vmatpush1.msra.mxu0 %v4069
      %7986 = vmatprep.subr.mxu0 %v4054
      %7987 = vmatpush1.msra.mxu0 %v4053
      %7988 = vmatprep.subr.mxu0 %v4038
      %7989 = vmatpush1.msra.mxu0 %v4037
      %7990 = vmatprep.subr.mxu0 %v4022
      %7991 = vmatpush1.msra.mxu0 %v4021
      %7992 = vmatprep.subr.mxu0 %v4006
      %7993 = vmatpush1.msra.mxu0 %v4005
      %7994 = vmatprep.subr.mxu0 %v3990
      %7995 = vmatpush1.msra.mxu0 %v3989
      %7996 = vmatprep.subr.mxu0 %v3974
      %7997 = vmatpush1.msra.mxu0 %v3973
      %7998 = vmatprep.subr.mxu0 %v3958
      %7999 = vmatpush1.msra.mxu0 %v3957
      %8000 = vmatprep.subr.mxu0 %v3942
      %8001 = vmatpush1.msra.mxu0 %v3941
      %8002 = vmatprep.subr.mxu0 %v3926
      %8003 = vmatpush1.msra.mxu0 %v3925
      %8004 = vmatprep.subr.mxu0 %v3910
      %8005 = vmatpush1.msra.mxu0 %v3909
      %8006 = vmatprep.subr.mxu0 %v4406
      %8007 = vmatpush2.msra.mxu0 %v4405
      %8008 = vmatprep.subr.mxu0 %v4390
      %8009 = vmatpush2.msra.mxu0 %v4389
      %8010 = vmatprep.subr.mxu0 %v4374
      %8011 = vmatpush2.msra.mxu0 %v4373
      %8012 = vmatprep.subr.mxu0 %v4358
      %8013 = vmatpush2.msra.mxu0 %v4357
      %8014 = vmatprep.subr.mxu0 %v4342
      %8015 = vmatpush2.msra.mxu0 %v4341
      %8016 = vmatprep.subr.mxu0 %v4326
      %8017 = vmatpush2.msra.mxu0 %v4325
      %8018 = vmatprep.subr.mxu0 %v4310
      %8019 = vmatpush2.msra.mxu0 %v4309
      %8020 = vmatprep.subr.mxu0 %v4294
      %8021 = vmatpush2.msra.mxu0 %v4293
      %8022 = vmatprep.subr.mxu0 %v4278
      %8023 = vmatpush2.msra.mxu0 %v4277
      %8024 = vmatprep.subr.mxu0 %v4262
      %8025 = vmatpush2.msra.mxu0 %v4261
      %8026 = vmatprep.subr.mxu0 %v4246
      %8027 = vmatpush2.msra.mxu0 %v4245
      %8028 = vmatprep.subr.mxu0 %v4230
      %8029 = vmatpush2.msra.mxu0 %v4229
      %8030 = vmatprep.subr.mxu0 %v4214
      %8031 = vmatpush2.msra.mxu0 %v4213
      %8032 = vmatprep.subr.mxu0 %v4198
      %8033 = vmatpush2.msra.mxu0 %v4197
      %8034 = vmatprep.subr.mxu0 %v4182
      %8035 = vmatpush2.msra.mxu0 %v4181
      %8036 = vmatprep.subr.mxu0 %v4166
      %8037 = vmatpush2.msra.mxu0 %v4165
      %8038 = vmatprep.mubr.f32.mxu0 %v3384
      %8039 = vmatmul.mubr.f32.gmra.mxu0 %v3383
      %v8040 = vpop.f32.mrf.mxu0
      %v8041 = vadd.f32 %v7970, %v8040
      %v8042 = vpop.f32.mrf.mxu0
      %v8043 = vadd.f32 %v7972, %v8042
      %8044 = vdwg.mxu0
      %8045 = vmatprep.subr.mxu0 %v4662
      %8046 = vmatpush1.msra.mxu0 %v4661
      %8047 = vmatprep.subr.mxu0 %v4646
      %8048 = vmatpush1.msra.mxu0 %v4645
      %8049 = vmatprep.subr.mxu0 %v4630
      %8050 = vmatpush1.msra.mxu0 %v4629
      %8051 = vmatprep.subr.mxu0 %v4614
      %8052 = vmatpush1.msra.mxu0 %v4613
      %8053 = vmatprep.subr.mxu0 %v4598
      %8054 = vmatpush1.msra.mxu0 %v4597
      %8055 = vmatprep.subr.mxu0 %v4582
      %8056 = vmatpush1.msra.mxu0 %v4581
      %8057 = vmatprep.subr.mxu0 %v4566
      %8058 = vmatpush1.msra.mxu0 %v4565
      %8059 = vmatprep.subr.mxu0 %v4550
      %8060 = vmatpush1.msra.mxu0 %v4549
      %8061 = vmatprep.subr.mxu0 %v4534
      %8062 = vmatpush1.msra.mxu0 %v4533
      %8063 = vmatprep.subr.mxu0 %v4518
      %8064 = vmatpush1.msra.mxu0 %v4517
      %8065 = vmatprep.subr.mxu0 %v4502
      %8066 = vmatpush1.msra.mxu0 %v4501
      %8067 = vmatprep.subr.mxu0 %v4486
      %8068 = vmatpush1.msra.mxu0 %v4485
      %8069 = vmatprep.subr.mxu0 %v4470
      %8070 = vmatpush1.msra.mxu0 %v4469
      %8071 = vmatprep.subr.mxu0 %v4454
      %8072 = vmatpush1.msra.mxu0 %v4453
      %8073 = vmatprep.subr.mxu0 %v4438
      %8074 = vmatpush1.msra.mxu0 %v4437
      %8075 = vmatprep.subr.mxu0 %v4422
      %8076 = vmatpush1.msra.mxu0 %v4421
      %8077 = vmatprep.subr.mxu0 %v4918
      %8078 = vmatpush2.msra.mxu0 %v4917
      %8079 = vmatprep.subr.mxu0 %v4902
      %8080 = vmatpush2.msra.mxu0 %v4901
      %8081 = vmatprep.subr.mxu0 %v4886
      %8082 = vmatpush2.msra.mxu0 %v4885
      %8083 = vmatprep.subr.mxu0 %v4870
      %8084 = vmatpush2.msra.mxu0 %v4869
      %8085 = vmatprep.subr.mxu0 %v4854
      %8086 = vmatpush2.msra.mxu0 %v4853
      %8087 = vmatprep.subr.mxu0 %v4838
      %8088 = vmatpush2.msra.mxu0 %v4837
      %8089 = vmatprep.subr.mxu0 %v4822
      %8090 = vmatpush2.msra.mxu0 %v4821
      %8091 = vmatprep.subr.mxu0 %v4806
      %8092 = vmatpush2.msra.mxu0 %v4805
      %8093 = vmatprep.subr.mxu0 %v4790
      %8094 = vmatpush2.msra.mxu0 %v4789
      %8095 = vmatprep.subr.mxu0 %v4774
      %8096 = vmatpush2.msra.mxu0 %v4773
      %8097 = vmatprep.subr.mxu0 %v4758
      %8098 = vmatpush2.msra.mxu0 %v4757
      %8099 = vmatprep.subr.mxu0 %v4742
      %8100 = vmatpush2.msra.mxu0 %v4741
      %8101 = vmatprep.subr.mxu0 %v4726
      %8102 = vmatpush2.msra.mxu0 %v4725
      %8103 = vmatprep.subr.mxu0 %v4710
      %8104 = vmatpush2.msra.mxu0 %v4709
      %8105 = vmatprep.subr.mxu0 %v4694
      %8106 = vmatpush2.msra.mxu0 %v4693
      %8107 = vmatprep.subr.mxu0 %v4678
      %8108 = vmatpush2.msra.mxu0 %v4677
      %8109 = vmatprep.mubr.f32.mxu0 %v635
      %8110 = vmatmul.mubr.f32.gmra.mxu0 %v3380
      %v8111 = vpop.f32.mrf.mxu0
      %v8112 = vadd.f32 %v8041, %v8111
      %v8113 = vpop.f32.mrf.mxu0
      %v8114 = vadd.f32 %v8043, %v8113
      %8115 = vdwg.mxu0
      %8116 = vmatprep.subr.mxu0 %v5174
      %8117 = vmatpush1.msra.mxu0 %v5173
      %8118 = vmatprep.subr.mxu0 %v5158
      %8119 = vmatpush1.msra.mxu0 %v5157
      %8120 = vmatprep.subr.mxu0 %v5142
      %8121 = vmatpush1.msra.mxu0 %v5141
      %8122 = vmatprep.subr.mxu0 %v5126
      %8123 = vmatpush1.msra.mxu0 %v5125
      %8124 = vmatprep.subr.mxu0 %v5110
      %8125 = vmatpush1.msra.mxu0 %v5109
      %8126 = vmatprep.subr.mxu0 %v5094
      %8127 = vmatpush1.msra.mxu0 %v5093
      %8128 = vmatprep.subr.mxu0 %v5078
      %8129 = vmatpush1.msra.mxu0 %v5077
      %8130 = vmatprep.subr.mxu0 %v5062
      %8131 = vmatpush1.msra.mxu0 %v5061
      %8132 = vmatprep.subr.mxu0 %v5046
      %8133 = vmatpush1.msra.mxu0 %v5045
      %8134 = vmatprep.subr.mxu0 %v5030
      %8135 = vmatpush1.msra.mxu0 %v5029
      %8136 = vmatprep.subr.mxu0 %v5014
      %8137 = vmatpush1.msra.mxu0 %v5013
      %8138 = vmatprep.subr.mxu0 %v4998
      %8139 = vmatpush1.msra.mxu0 %v4997
      %8140 = vmatprep.subr.mxu0 %v4982
      %8141 = vmatpush1.msra.mxu0 %v4981
      %8142 = vmatprep.subr.mxu0 %v4966
      %8143 = vmatpush1.msra.mxu0 %v4965
      %8144 = vmatprep.subr.mxu0 %v4950
      %8145 = vmatpush1.msra.mxu0 %v4949
      %8146 = vmatprep.subr.mxu0 %v4934
      %8147 = vmatpush1.msra.mxu0 %v4933
      %8148 = vmatprep.subr.mxu0 %v5430
      %8149 = vmatpush2.msra.mxu0 %v5429
      %8150 = vmatprep.subr.mxu0 %v5414
      %8151 = vmatpush2.msra.mxu0 %v5413
      %8152 = vmatprep.subr.mxu0 %v5398
      %8153 = vmatpush2.msra.mxu0 %v5397
      %8154 = vmatprep.subr.mxu0 %v5382
      %8155 = vmatpush2.msra.mxu0 %v5381
      %8156 = vmatprep.subr.mxu0 %v5366
      %8157 = vmatpush2.msra.mxu0 %v5365
      %8158 = vmatprep.subr.mxu0 %v5350
      %8159 = vmatpush2.msra.mxu0 %v5349
      %8160 = vmatprep.subr.mxu0 %v5334
      %8161 = vmatpush2.msra.mxu0 %v5333
      %8162 = vmatprep.subr.mxu0 %v5318
      %8163 = vmatpush2.msra.mxu0 %v5317
      %8164 = vmatprep.subr.mxu0 %v5302
      %8165 = vmatpush2.msra.mxu0 %v5301
      %8166 = vmatprep.subr.mxu0 %v5286
      %8167 = vmatpush2.msra.mxu0 %v5285
      %8168 = vmatprep.subr.mxu0 %v5270
      %8169 = vmatpush2.msra.mxu0 %v5269
      %8170 = vmatprep.subr.mxu0 %v5254
      %8171 = vmatpush2.msra.mxu0 %v5253
      %8172 = vmatprep.subr.mxu0 %v5238
      %8173 = vmatpush2.msra.mxu0 %v5237
      %8174 = vmatprep.subr.mxu0 %v5222
      %8175 = vmatpush2.msra.mxu0 %v5221
      %8176 = vmatprep.subr.mxu0 %v5206
      %8177 = vmatpush2.msra.mxu0 %v5205
      %8178 = vmatprep.subr.mxu0 %v5190
      %8179 = vmatpush2.msra.mxu0 %v5189
      %8180 = vmatprep.mubr.f32.mxu0 %v637
      %8181 = vmatmul.mubr.f32.gmra.mxu0 %v636
      %v8182 = vpop.f32.mrf.mxu0
      %v8183 = vadd.f32 %v8112, %v8182
      %v8184 = vpop.f32.mrf.mxu0
      %v8185 = vadd.f32 %v8114, %v8184
      %8186 = vdwg.mxu0
      %8187 = vmatprep.subr.mxu0 %v5686
      %8188 = vmatpush1.msra.mxu0 %v5685
      %8189 = vmatprep.subr.mxu0 %v5670
      %8190 = vmatpush1.msra.mxu0 %v5669
      %8191 = vmatprep.subr.mxu0 %v5654
      %8192 = vmatpush1.msra.mxu0 %v5653
      %8193 = vmatprep.subr.mxu0 %v5638
      %8194 = vmatpush1.msra.mxu0 %v5637
      %8195 = vmatprep.subr.mxu0 %v5622
      %8196 = vmatpush1.msra.mxu0 %v5621
      %8197 = vmatprep.subr.mxu0 %v5606
      %8198 = vmatpush1.msra.mxu0 %v5605
      %8199 = vmatprep.subr.mxu0 %v5590
      %8200 = vmatpush1.msra.mxu0 %v5589
      %8201 = vmatprep.subr.mxu0 %v5574
      %8202 = vmatpush1.msra.mxu0 %v5573
      %8203 = vmatprep.subr.mxu0 %v5558
      %8204 = vmatpush1.msra.mxu0 %v5557
      %8205 = vmatprep.subr.mxu0 %v5542
      %8206 = vmatpush1.msra.mxu0 %v5541
      %8207 = vmatprep.subr.mxu0 %v5526
      %8208 = vmatpush1.msra.mxu0 %v5525
      %8209 = vmatprep.subr.mxu0 %v5510
      %8210 = vmatpush1.msra.mxu0 %v5509
      %8211 = vmatprep.subr.mxu0 %v5494
      %8212 = vmatpush1.msra.mxu0 %v5493
      %8213 = vmatprep.subr.mxu0 %v5478
      %8214 = vmatpush1.msra.mxu0 %v5477
      %8215 = vmatprep.subr.mxu0 %v5462
      %8216 = vmatpush1.msra.mxu0 %v5461
      %8217 = vmatprep.subr.mxu0 %v5446
      %8218 = vmatpush1.msra.mxu0 %v5445
      %8219 = vmatprep.subr.mxu0 0.0
      %8220 = vmatpush2.msra.mxu0 0.0
      %8221 = vmatprep.subr.mxu0 0.0
      %8222 = vmatpush2.msra.mxu0 0.0
      %8223 = vmatprep.subr.mxu0 0.0
      %8224 = vmatpush2.msra.mxu0 0.0
      %8225 = vmatprep.subr.mxu0 0.0
      %8226 = vmatpush2.msra.mxu0 0.0
      %8227 = vmatprep.subr.mxu0 0.0
      %8228 = vmatpush2.msra.mxu0 0.0
      %8229 = vmatprep.subr.mxu0 0.0
      %8230 = vmatpush2.msra.mxu0 0.0
      %8231 = vmatprep.subr.mxu0 0.0
      %8232 = vmatpush2.msra.mxu0 0.0
      %8233 = vmatprep.subr.mxu0 0.0
      %8234 = vmatpush2.msra.mxu0 0.0
      %8235 = vmatprep.subr.mxu0 0.0
      %8236 = vmatpush2.msra.mxu0 0.0
      %8237 = vmatprep.subr.mxu0 0.0
      %8238 = vmatpush2.msra.mxu0 0.0
      %8239 = vmatprep.subr.mxu0 0.0
      %8240 = vmatpush2.msra.mxu0 0.0
      %8241 = vmatprep.subr.mxu0 0.0
      %8242 = vmatpush2.msra.mxu0 0.0
      %8243 = vmatprep.subr.mxu0 0.0
      %8244 = vmatpush2.msra.mxu0 0.0
      %8245 = vmatprep.subr.mxu0 0.0
      %8246 = vmatpush2.msra.mxu0 0.0
      %8247 = vmatprep.subr.mxu0 0.0
      %8248 = vmatpush2.msra.mxu0 0.0
      %8249 = vmatprep.subr.mxu0 0.0
      %8250 = vmatpush2.msra.mxu0 0.0
      %8251 = vmatprep.mubr.f32.mxu0 0.0
      %8252 = vmatmul.mubr.f32.gmra.mxu0 %v638
      %v8253 = vpop.f32.mrf.mxu0
      %v8254 = vadd.f32 %v8183, %v8253
      %v8255 = vpop.f32.mrf.mxu0
      %v8256 = vadd.f32 %v8185, %v8255
      %8257 = vdwg.mxu0
      %8258 = vmatprep.subr.mxu0 %v3640
      %8259 = vmatpush1.msra.mxu0 %v3639
      %8260 = vmatprep.subr.mxu0 %v3624
      %8261 = vmatpush1.msra.mxu0 %v3623
      %8262 = vmatprep.subr.mxu0 %v3608
      %8263 = vmatpush1.msra.mxu0 %v3607
      %8264 = vmatprep.subr.mxu0 %v3592
      %8265 = vmatpush1.msra.mxu0 %v3591
      %8266 = vmatprep.subr.mxu0 %v3576
      %8267 = vmatpush1.msra.mxu0 %v3575
      %8268 = vmatprep.subr.mxu0 %v3560
      %8269 = vmatpush1.msra.mxu0 %v3559
      %8270 = vmatprep.subr.mxu0 %v3544
      %8271 = vmatpush1.msra.mxu0 %v3543
      %8272 = vmatprep.subr.mxu0 %v3528
      %8273 = vmatpush1.msra.mxu0 %v3527
      %8274 = vmatprep.subr.mxu0 %v3512
      %8275 = vmatpush1.msra.mxu0 %v3511
      %8276 = vmatprep.subr.mxu0 %v3496
      %8277 = vmatpush1.msra.mxu0 %v3495
      %8278 = vmatprep.subr.mxu0 %v3480
      %8279 = vmatpush1.msra.mxu0 %v3479
      %8280 = vmatprep.subr.mxu0 %v3464
      %8281 = vmatpush1.msra.mxu0 %v3463
      %8282 = vmatprep.subr.mxu0 %v3448
      %8283 = vmatpush1.msra.mxu0 %v3447
      %8284 = vmatprep.subr.mxu0 %v3432
      %8285 = vmatpush1.msra.mxu0 %v3431
      %8286 = vmatprep.subr.mxu0 %v3416
      %8287 = vmatpush1.msra.mxu0 %v3415
      %8288 = vmatprep.subr.mxu0 %v3400
      %8289 = vmatpush1.msra.mxu0 %v3399
      %8290 = vmatprep.subr.mxu0 %v3896
      %8291 = vmatpush2.msra.mxu0 %v3895
      %8292 = vmatprep.subr.mxu0 %v3880
      %8293 = vmatpush2.msra.mxu0 %v3879
      %8294 = vmatprep.subr.mxu0 %v3864
      %8295 = vmatpush2.msra.mxu0 %v3863
      %8296 = vmatprep.subr.mxu0 %v3848
      %8297 = vmatpush2.msra.mxu0 %v3847
      %8298 = vmatprep.subr.mxu0 %v3832
      %8299 = vmatpush2.msra.mxu0 %v3831
      %8300 = vmatprep.subr.mxu0 %v3816
      %8301 = vmatpush2.msra.mxu0 %v3815
      %8302 = vmatprep.subr.mxu0 %v3800
      %8303 = vmatpush2.msra.mxu0 %v3799
      %8304 = vmatprep.subr.mxu0 %v3784
      %8305 = vmatpush2.msra.mxu0 %v3783
      %8306 = vmatprep.subr.mxu0 %v3768
      %8307 = vmatpush2.msra.mxu0 %v3767
      %8308 = vmatprep.subr.mxu0 %v3752
      %8309 = vmatpush2.msra.mxu0 %v3751
      %8310 = vmatprep.subr.mxu0 %v3736
      %8311 = vmatpush2.msra.mxu0 %v3735
      %8312 = vmatprep.subr.mxu0 %v3720
      %8313 = vmatpush2.msra.mxu0 %v3719
      %8314 = vmatprep.subr.mxu0 %v3704
      %8315 = vmatpush2.msra.mxu0 %v3703
      %8316 = vmatprep.subr.mxu0 %v3688
      %8317 = vmatpush2.msra.mxu0 %v3687
      %8318 = vmatprep.subr.mxu0 %v3672
      %8319 = vmatpush2.msra.mxu0 %v3671
      %8320 = vmatprep.subr.mxu0 %v3656
      %8321 = vmatpush2.msra.mxu0 %v3655
      %8322 = vmatprep.mubr.f32.mxu0 %v3382
      %8323 = vmatmul.mubr.f32.gmra.mxu0 %v3381
      %v8324 = vpop.f32.mrf.mxu0
      %v8325 = vadd.f32 %v5752, %v8324
      %v8326 = vpop.f32.mrf.mxu0
      %v8327 = vadd.f32 %v5756, %v8326
      %8328 = vdwg.mxu0
      %8329 = vmatprep.subr.mxu0 %v4152
      %8330 = vmatpush1.msra.mxu0 %v4151
      %8331 = vmatprep.subr.mxu0 %v4136
      %8332 = vmatpush1.msra.mxu0 %v4135
      %8333 = vmatprep.subr.mxu0 %v4120
      %8334 = vmatpush1.msra.mxu0 %v4119
      %8335 = vmatprep.subr.mxu0 %v4104
      %8336 = vmatpush1.msra.mxu0 %v4103
      %8337 = vmatprep.subr.mxu0 %v4088
      %8338 = vmatpush1.msra.mxu0 %v4087
      %8339 = vmatprep.subr.mxu0 %v4072
      %8340 = vmatpush1.msra.mxu0 %v4071
      %8341 = vmatprep.subr.mxu0 %v4056
      %8342 = vmatpush1.msra.mxu0 %v4055
      %8343 = vmatprep.subr.mxu0 %v4040
      %8344 = vmatpush1.msra.mxu0 %v4039
      %8345 = vmatprep.subr.mxu0 %v4024
      %8346 = vmatpush1.msra.mxu0 %v4023
      %8347 = vmatprep.subr.mxu0 %v4008
      %8348 = vmatpush1.msra.mxu0 %v4007
      %8349 = vmatprep.subr.mxu0 %v3992
      %8350 = vmatpush1.msra.mxu0 %v3991
      %8351 = vmatprep.subr.mxu0 %v3976
      %8352 = vmatpush1.msra.mxu0 %v3975
      %8353 = vmatprep.subr.mxu0 %v3960
      %8354 = vmatpush1.msra.mxu0 %v3959
      %8355 = vmatprep.subr.mxu0 %v3944
      %8356 = vmatpush1.msra.mxu0 %v3943
      %8357 = vmatprep.subr.mxu0 %v3928
      %8358 = vmatpush1.msra.mxu0 %v3927
      %8359 = vmatprep.subr.mxu0 %v3912
      %8360 = vmatpush1.msra.mxu0 %v3911
      %8361 = vmatprep.subr.mxu0 %v4408
      %8362 = vmatpush2.msra.mxu0 %v4407
      %8363 = vmatprep.subr.mxu0 %v4392
      %8364 = vmatpush2.msra.mxu0 %v4391
      %8365 = vmatprep.subr.mxu0 %v4376
      %8366 = vmatpush2.msra.mxu0 %v4375
      %8367 = vmatprep.subr.mxu0 %v4360
      %8368 = vmatpush2.msra.mxu0 %v4359
      %8369 = vmatprep.subr.mxu0 %v4344
      %8370 = vmatpush2.msra.mxu0 %v4343
      %8371 = vmatprep.subr.mxu0 %v4328
      %8372 = vmatpush2.msra.mxu0 %v4327
      %8373 = vmatprep.subr.mxu0 %v4312
      %8374 = vmatpush2.msra.mxu0 %v4311
      %8375 = vmatprep.subr.mxu0 %v4296
      %8376 = vmatpush2.msra.mxu0 %v4295
      %8377 = vmatprep.subr.mxu0 %v4280
      %8378 = vmatpush2.msra.mxu0 %v4279
      %8379 = vmatprep.subr.mxu0 %v4264
      %8380 = vmatpush2.msra.mxu0 %v4263
      %8381 = vmatprep.subr.mxu0 %v4248
      %8382 = vmatpush2.msra.mxu0 %v4247
      %8383 = vmatprep.subr.mxu0 %v4232
      %8384 = vmatpush2.msra.mxu0 %v4231
      %8385 = vmatprep.subr.mxu0 %v4216
      %8386 = vmatpush2.msra.mxu0 %v4215
      %8387 = vmatprep.subr.mxu0 %v4200
      %8388 = vmatpush2.msra.mxu0 %v4199
      %8389 = vmatprep.subr.mxu0 %v4184
      %8390 = vmatpush2.msra.mxu0 %v4183
      %8391 = vmatprep.subr.mxu0 %v4168
      %8392 = vmatpush2.msra.mxu0 %v4167
      %8393 = vmatprep.mubr.f32.mxu0 %v3384
      %8394 = vmatmul.mubr.f32.gmra.mxu0 %v3383
      %v8395 = vpop.f32.mrf.mxu0
      %v8396 = vadd.f32 %v8325, %v8395
      %v8397 = vpop.f32.mrf.mxu0
      %v8398 = vadd.f32 %v8327, %v8397
      %8399 = vdwg.mxu0
      %8400 = vmatprep.subr.mxu0 %v4664
      %8401 = vmatpush1.msra.mxu0 %v4663
      %8402 = vmatprep.subr.mxu0 %v4648
      %8403 = vmatpush1.msra.mxu0 %v4647
      %8404 = vmatprep.subr.mxu0 %v4632
      %8405 = vmatpush1.msra.mxu0 %v4631
      %8406 = vmatprep.subr.mxu0 %v4616
      %8407 = vmatpush1.msra.mxu0 %v4615
      %8408 = vmatprep.subr.mxu0 %v4600
      %8409 = vmatpush1.msra.mxu0 %v4599
      %8410 = vmatprep.subr.mxu0 %v4584
      %8411 = vmatpush1.msra.mxu0 %v4583
      %8412 = vmatprep.subr.mxu0 %v4568
      %8413 = vmatpush1.msra.mxu0 %v4567
      %8414 = vmatprep.subr.mxu0 %v4552
      %8415 = vmatpush1.msra.mxu0 %v4551
      %8416 = vmatprep.subr.mxu0 %v4536
      %8417 = vmatpush1.msra.mxu0 %v4535
      %8418 = vmatprep.subr.mxu0 %v4520
      %8419 = vmatpush1.msra.mxu0 %v4519
      %8420 = vmatprep.subr.mxu0 %v4504
      %8421 = vmatpush1.msra.mxu0 %v4503
      %8422 = vmatprep.subr.mxu0 %v4488
      %8423 = vmatpush1.msra.mxu0 %v4487
      %8424 = vmatprep.subr.mxu0 %v4472
      %8425 = vmatpush1.msra.mxu0 %v4471
      %8426 = vmatprep.subr.mxu0 %v4456
      %8427 = vmatpush1.msra.mxu0 %v4455
      %8428 = vmatprep.subr.mxu0 %v4440
      %8429 = vmatpush1.msra.mxu0 %v4439
      %8430 = vmatprep.subr.mxu0 %v4424
      %8431 = vmatpush1.msra.mxu0 %v4423
      %8432 = vmatprep.subr.mxu0 %v4920
      %8433 = vmatpush2.msra.mxu0 %v4919
      %8434 = vmatprep.subr.mxu0 %v4904
      %8435 = vmatpush2.msra.mxu0 %v4903
      %8436 = vmatprep.subr.mxu0 %v4888
      %8437 = vmatpush2.msra.mxu0 %v4887
      %8438 = vmatprep.subr.mxu0 %v4872
      %8439 = vmatpush2.msra.mxu0 %v4871
      %8440 = vmatprep.subr.mxu0 %v4856
      %8441 = vmatpush2.msra.mxu0 %v4855
      %8442 = vmatprep.subr.mxu0 %v4840
      %8443 = vmatpush2.msra.mxu0 %v4839
      %8444 = vmatprep.subr.mxu0 %v4824
      %8445 = vmatpush2.msra.mxu0 %v4823
      %8446 = vmatprep.subr.mxu0 %v4808
      %8447 = vmatpush2.msra.mxu0 %v4807
      %8448 = vmatprep.subr.mxu0 %v4792
      %8449 = vmatpush2.msra.mxu0 %v4791
      %8450 = vmatprep.subr.mxu0 %v4776
      %8451 = vmatpush2.msra.mxu0 %v4775
      %8452 = vmatprep.subr.mxu0 %v4760
      %8453 = vmatpush2.msra.mxu0 %v4759
      %8454 = vmatprep.subr.mxu0 %v4744
      %8455 = vmatpush2.msra.mxu0 %v4743
      %8456 = vmatprep.subr.mxu0 %v4728
      %8457 = vmatpush2.msra.mxu0 %v4727
      %8458 = vmatprep.subr.mxu0 %v4712
      %8459 = vmatpush2.msra.mxu0 %v4711
      %8460 = vmatprep.subr.mxu0 %v4696
      %8461 = vmatpush2.msra.mxu0 %v4695
      %8462 = vmatprep.subr.mxu0 %v4680
      %8463 = vmatpush2.msra.mxu0 %v4679
      %8464 = vmatprep.mubr.f32.mxu0 %v635
      %8465 = vmatmul.mubr.f32.gmra.mxu0 %v3380
      %v8466 = vpop.f32.mrf.mxu0
      %v8467 = vadd.f32 %v8396, %v8466
      %v8468 = vpop.f32.mrf.mxu0
      %v8469 = vadd.f32 %v8398, %v8468
      %8470 = vdwg.mxu0
      %8471 = vmatprep.subr.mxu0 %v5176
      %8472 = vmatpush1.msra.mxu0 %v5175
      %8473 = vmatprep.subr.mxu0 %v5160
      %8474 = vmatpush1.msra.mxu0 %v5159
      %8475 = vmatprep.subr.mxu0 %v5144
      %8476 = vmatpush1.msra.mxu0 %v5143
      %8477 = vmatprep.subr.mxu0 %v5128
      %8478 = vmatpush1.msra.mxu0 %v5127
      %8479 = vmatprep.subr.mxu0 %v5112
      %8480 = vmatpush1.msra.mxu0 %v5111
      %8481 = vmatprep.subr.mxu0 %v5096
      %8482 = vmatpush1.msra.mxu0 %v5095
      %8483 = vmatprep.subr.mxu0 %v5080
      %8484 = vmatpush1.msra.mxu0 %v5079
      %8485 = vmatprep.subr.mxu0 %v5064
      %8486 = vmatpush1.msra.mxu0 %v5063
      %8487 = vmatprep.subr.mxu0 %v5048
      %8488 = vmatpush1.msra.mxu0 %v5047
      %8489 = vmatprep.subr.mxu0 %v5032
      %8490 = vmatpush1.msra.mxu0 %v5031
      %8491 = vmatprep.subr.mxu0 %v5016
      %8492 = vmatpush1.msra.mxu0 %v5015
      %8493 = vmatprep.subr.mxu0 %v5000
      %8494 = vmatpush1.msra.mxu0 %v4999
      %8495 = vmatprep.subr.mxu0 %v4984
      %8496 = vmatpush1.msra.mxu0 %v4983
      %8497 = vmatprep.subr.mxu0 %v4968
      %8498 = vmatpush1.msra.mxu0 %v4967
      %8499 = vmatprep.subr.mxu0 %v4952
      %8500 = vmatpush1.msra.mxu0 %v4951
      %8501 = vmatprep.subr.mxu0 %v4936
      %8502 = vmatpush1.msra.mxu0 %v4935
      %8503 = vmatprep.subr.mxu0 %v5432
      %8504 = vmatpush2.msra.mxu0 %v5431
      %8505 = vmatprep.subr.mxu0 %v5416
      %8506 = vmatpush2.msra.mxu0 %v5415
      %8507 = vmatprep.subr.mxu0 %v5400
      %8508 = vmatpush2.msra.mxu0 %v5399
      %8509 = vmatprep.subr.mxu0 %v5384
      %8510 = vmatpush2.msra.mxu0 %v5383
      %8511 = vmatprep.subr.mxu0 %v5368
      %8512 = vmatpush2.msra.mxu0 %v5367
      %8513 = vmatprep.subr.mxu0 %v5352
      %8514 = vmatpush2.msra.mxu0 %v5351
      %8515 = vmatprep.subr.mxu0 %v5336
      %8516 = vmatpush2.msra.mxu0 %v5335
      %8517 = vmatprep.subr.mxu0 %v5320
      %8518 = vmatpush2.msra.mxu0 %v5319
      %8519 = vmatprep.subr.mxu0 %v5304
      %8520 = vmatpush2.msra.mxu0 %v5303
      %8521 = vmatprep.subr.mxu0 %v5288
      %8522 = vmatpush2.msra.mxu0 %v5287
      %8523 = vmatprep.subr.mxu0 %v5272
      %8524 = vmatpush2.msra.mxu0 %v5271
      %8525 = vmatprep.subr.mxu0 %v5256
      %8526 = vmatpush2.msra.mxu0 %v5255
      %8527 = vmatprep.subr.mxu0 %v5240
      %8528 = vmatpush2.msra.mxu0 %v5239
      %8529 = vmatprep.subr.mxu0 %v5224
      %8530 = vmatpush2.msra.mxu0 %v5223
      %8531 = vmatprep.subr.mxu0 %v5208
      %8532 = vmatpush2.msra.mxu0 %v5207
      %8533 = vmatprep.subr.mxu0 %v5192
      %8534 = vmatpush2.msra.mxu0 %v5191
      %8535 = vmatprep.mubr.f32.mxu0 %v637
      %8536 = vmatmul.mubr.f32.gmra.mxu0 %v636
      %v8537 = vpop.f32.mrf.mxu0
      %v8538 = vadd.f32 %v8467, %v8537
      %v8539 = vpop.f32.mrf.mxu0
      %v8540 = vadd.f32 %v8469, %v8539
      %8541 = vdwg.mxu0
      %8542 = vmatprep.subr.mxu0 %v5688
      %8543 = vmatpush1.msra.mxu0 %v5687
      %8544 = vmatprep.subr.mxu0 %v5672
      %8545 = vmatpush1.msra.mxu0 %v5671
      %8546 = vmatprep.subr.mxu0 %v5656
      %8547 = vmatpush1.msra.mxu0 %v5655
      %8548 = vmatprep.subr.mxu0 %v5640
      %8549 = vmatpush1.msra.mxu0 %v5639
      %8550 = vmatprep.subr.mxu0 %v5624
      %8551 = vmatpush1.msra.mxu0 %v5623
      %8552 = vmatprep.subr.mxu0 %v5608
      %8553 = vmatpush1.msra.mxu0 %v5607
      %8554 = vmatprep.subr.mxu0 %v5592
      %8555 = vmatpush1.msra.mxu0 %v5591
      %8556 = vmatprep.subr.mxu0 %v5576
      %8557 = vmatpush1.msra.mxu0 %v5575
      %8558 = vmatprep.subr.mxu0 %v5560
      %8559 = vmatpush1.msra.mxu0 %v5559
      %8560 = vmatprep.subr.mxu0 %v5544
      %8561 = vmatpush1.msra.mxu0 %v5543
      %8562 = vmatprep.subr.mxu0 %v5528
      %8563 = vmatpush1.msra.mxu0 %v5527
      %8564 = vmatprep.subr.mxu0 %v5512
      %8565 = vmatpush1.msra.mxu0 %v5511
      %8566 = vmatprep.subr.mxu0 %v5496
      %8567 = vmatpush1.msra.mxu0 %v5495
      %8568 = vmatprep.subr.mxu0 %v5480
      %8569 = vmatpush1.msra.mxu0 %v5479
      %8570 = vmatprep.subr.mxu0 %v5464
      %8571 = vmatpush1.msra.mxu0 %v5463
      %8572 = vmatprep.subr.mxu0 %v5448
      %8573 = vmatpush1.msra.mxu0 %v5447
      %8574 = vmatprep.subr.mxu0 0.0
      %8575 = vmatpush2.msra.mxu0 0.0
      %8576 = vmatprep.subr.mxu0 0.0
      %8577 = vmatpush2.msra.mxu0 0.0
      %8578 = vmatprep.subr.mxu0 0.0
      %8579 = vmatpush2.msra.mxu0 0.0
      %8580 = vmatprep.subr.mxu0 0.0
      %8581 = vmatpush2.msra.mxu0 0.0
      %8582 = vmatprep.subr.mxu0 0.0
      %8583 = vmatpush2.msra.mxu0 0.0
      %8584 = vmatprep.subr.mxu0 0.0
      %8585 = vmatpush2.msra.mxu0 0.0
      %8586 = vmatprep.subr.mxu0 0.0
      %8587 = vmatpush2.msra.mxu0 0.0
      %8588 = vmatprep.subr.mxu0 0.0
      %8589 = vmatpush2.msra.mxu0 0.0
      %8590 = vmatprep.subr.mxu0 0.0
      %8591 = vmatpush2.msra.mxu0 0.0
      %8592 = vmatprep.subr.mxu0 0.0
      %8593 = vmatpush2.msra.mxu0 0.0
      %8594 = vmatprep.subr.mxu0 0.0
      %8595 = vmatpush2.msra.mxu0 0.0
      %8596 = vmatprep.subr.mxu0 0.0
      %8597 = vmatpush2.msra.mxu0 0.0
      %8598 = vmatprep.subr.mxu0 0.0
      %8599 = vmatpush2.msra.mxu0 0.0
      %8600 = vmatprep.subr.mxu0 0.0
      %8601 = vmatpush2.msra.mxu0 0.0
      %8602 = vmatprep.subr.mxu0 0.0
      %8603 = vmatpush2.msra.mxu0 0.0
      %8604 = vmatprep.subr.mxu0 0.0
      %8605 = vmatpush2.msra.mxu0 0.0
      %8606 = vmatprep.mubr.f32.mxu0 0.0
      %8607 = vmatmul.mubr.f32.gmra.mxu0 %v638
      %v8608 = vpop.f32.mrf.mxu0
      %v8609 = vadd.f32 %v8538, %v8608
      %v8610 = vpop.f32.mrf.mxu0
      %v8611 = vadd.f32 %v8540, %v8610
      %8612 = vdwg.mxu0
      %v8613 = vxor.u32 %v6124, 2147483648
      %v8614 = vxor.u32 %v6126, 2147483648
      %v8615 = vxor.u32 %v6479, 2147483648
      %v8616 = vxor.u32 %v6481, 2147483648
      %v8617 = vmul.f32 %v8613, 1.442695
      %v8618 = vpow.pop %v8617
      %v8619 = vmul.f32 %v8614, 1.442695
      %v8620 = vpow.pop %v8619
      %v8621 = vmul.f32 %v8615, 1.442695
      %v8622 = vpow.pop %v8621
      %v8623 = vmul.f32 %v8616, 1.442695
      %v8624 = vpow.pop %v8623
      %v8625 = vadd.f32 %v8618, 1.0
      %v8626 = vadd.f32 %v8620, 1.0
      %v8627 = vadd.f32 %v8622, 1.0
      %v8628 = vadd.f32 %v8624, 1.0
      %v8629 = vrcp.pop %v8625
      %v8630 = vmul.f32 1.0, %v8629
      %v8631 = vrcp.pop %v8626
      %v8632 = vmul.f32 1.0, %v8631
      %v8633 = vrcp.pop %v8627
      %v8634 = vmul.f32 1.0, %v8633
      %v8635 = vrcp.pop %v8628
      %v8636 = vmul.f32 1.0, %v8635
      %v8637 = vxor.u32 %v6834, 2147483648
      %v8638 = vxor.u32 %v6836, 2147483648
      %v8639 = vxor.u32 %v7189, 2147483648
      %v8640 = vxor.u32 %v7191, 2147483648
      %v8641 = vmul.f32 %v8637, 1.442695
      %v8642 = vpow.pop %v8641
      %v8643 = vmul.f32 %v8638, 1.442695
      %v8644 = vpow.pop %v8643
      %v8645 = vmul.f32 %v8639, 1.442695
      %v8646 = vpow.pop %v8645
      %v8647 = vmul.f32 %v8640, 1.442695
      %v8648 = vpow.pop %v8647
      %v8649 = vadd.f32 %v8642, 1.0
      %v8650 = vadd.f32 %v8644, 1.0
      %v8651 = vadd.f32 %v8646, 1.0
      %v8652 = vadd.f32 %v8648, 1.0
      %v8653 = vrcp.pop %v8649
      %v8654 = vmul.f32 1.0, %v8653
      %v8655 = vrcp.pop %v8650
      %v8656 = vmul.f32 1.0, %v8655
      %v8657 = vrcp.pop %v8651
      %v8658 = vmul.f32 1.0, %v8657
      %v8659 = vrcp.pop %v8652
      %v8660 = vmul.f32 1.0, %v8659
      %v8661 = vtanh.pop %v7544
      %v8662 = vtanh.pop %v7546
      %v8663 = vtanh.pop %v7899
      %v8664 = vtanh.pop %v7901
      %v8665 = vxor.u32 %v8254, 2147483648
      %v8666 = vxor.u32 %v8256, 2147483648
      %v8667 = vxor.u32 %v8609, 2147483648
      %v8668 = vxor.u32 %v8611, 2147483648
      %v8669 = vmul.f32 %v8665, 1.442695
      %v8670 = vpow.pop %v8669
      %v8671 = vmul.f32 %v8666, 1.442695
      %v8672 = vpow.pop %v8671
      %v8673 = vmul.f32 %v8667, 1.442695
      %v8674 = vpow.pop %v8673
      %v8675 = vmul.f32 %v8668, 1.442695
      %v8676 = vpow.pop %v8675
      %v8677 = vadd.f32 %v8670, 1.0
      %v8678 = vadd.f32 %v8672, 1.0
      %v8679 = vadd.f32 %v8674, 1.0
      %v8680 = vadd.f32 %v8676, 1.0
      %v8681 = vrcp.pop %v8677
      %v8682 = vmul.f32 1.0, %v8681
      %v8683 = vrcp.pop %v8678
      %v8684 = vmul.f32 1.0, %v8683
      %v8685 = vrcp.pop %v8679
      %v8686 = vmul.f32 1.0, %v8685
      %v8687 = vrcp.pop %v8680
      %v8688 = vmul.f32 1.0, %v8687
      %v8689 = vmul.f32 %v8654, %v639
      %v8690 = vmul.f32 %v8656, %v640
      %v8691 = vmul.f32 %v8658, %v641
      %v8692 = vmul.f32 %v8660, %v642
      %v8693 = vmul.f32 %v8630, %v8661
      %v8694 = vmul.f32 %v8632, %v8662
      %v8695 = vmul.f32 %v8634, %v8663
      %v8696 = vmul.f32 %v8636, %v8664
      %v8697 = vadd.f32 %v8689, %v8693
      %v8698 = vadd.f32 %v8690, %v8694
      %v8699 = vadd.f32 %v8691, %v8695
      %v8700 = vadd.f32 %v8692, %v8696
      %v8701 = vtanh.pop %v8697
      %v8702 = vtanh.pop %v8698
      %v8703 = vtanh.pop %v8699
      %v8704 = vtanh.pop %v8700
      %v8705 = vmul.f32 %v8682, %v8701
      %v8706 = vmul.f32 %v8684, %v8702
      %v8707 = vmul.f32 %v8686, %v8703
      %v8708 = vmul.f32 %v8688, %v8704
      %8709 = vst [vmem:[#allocation2] sm:$0xff] %v8705
      %8710 = vst [vmem:[#allocation2 + $0x8] sm:$0xff] %v8706
      %8711 = vst [vmem:[#allocation2 + $0x10] sm:$0xff] %v8707
      %8712 = vst [vmem:[#allocation2 + $0x18] sm:$0xff] %v8708
      %8713 = vst [vmem:[#allocation3] sm:$0xff] %v8697
      %8714 = vst [vmem:[#allocation3 + $0x8] sm:$0xff] %v8698
      %8715 = vst [vmem:[#allocation3 + $0x10] sm:$0xff] %v8699
      %8716 = vst [vmem:[#allocation3 + $0x18] sm:$0xff] %v8700
      %8717 = vst [vmem:[%s607] sm:$0xff] %v8705
      %8718 = vst [vmem:[%s607 + $0x8] sm:$0xff] %v8706
      %8719 = vst [vmem:[%s607 + $0x10] sm:$0xff] %v8707
      %8720 = vst [vmem:[%s607 + $0x18] sm:$0xff] %v8708
      %8721 = vst [vmem:[%s614] sm:$0xff] 0.0
      %v8722 = vsel %vm2115, %v2533, %v2444
      %v8723 = vsel %vm2117, %v2622, %v8722
      %v8724 = vsel %vm2119, %v2711, %v8723
      %v8725 = vsel %vm2121, %v2800, %v8724
      %v8726 = vsel %vm2123, %v2889, %v8725
      %v8727 = vsel %vm2125, %v2978, %v8726
      %v8728 = vsel %vm2127, %v3067, %v8727
      %8730 = vst.msk [vmem:[%s614] sm:$0xff] %vm2130, %v8728
      %p8731 = scmp.lt.s32.totalorder %s33, 6
      %s8732 = scalar_select %p8731, %s33, 6
      %p8733 = scmp.lt.s32.totalorder %s32, 0
      %s8734 = scalar_select %p8733, %s32, 0
      %s8735 = smul.addr %s8734, 4
      %s8736 = smul.addr %s8732, 4
      %s8737 = sadd.s32 %s8735, %s8736
      %s8738 = smul.addr %s8737, 8
      %s8739 = scalar_lea.vmem %s13, %s8738
      %p8740 = scmp.lt.s32.totalorder %s33, 6
      %s8741 = scalar_select %p8740, %s33, 6
      %p8742 = scmp.lt.s32.totalorder %s32, 0
      %s8743 = scalar_select %p8742, %s32, 0
      %s8744 = sadd.s32 %s8743, %s8741
      %s8745 = smul.addr %s8744, 8
      %s8746 = scalar_lea.vmem %s14, %s8745
      // Predicated region
      $region77: #{decoder_forward.1} parent=71 // pred_check
        %p8747 = pneg %p360
      $region78: #{decoder_forward.1} parent=71 // pred_check_branch
        %8749 = sbr.rel (%p8747) target = $region80
      $region79: #{decoder_forward.1} parent=71 // pred_region
        _
      $region80: #{decoder_forward.1} parent=71 // pred_fallthru
        _
      // Predicated region
      $region81: #{decoder_forward.1} parent=71 // pred_check
        %p8750 = pneg %p388
      $region82: #{decoder_forward.1} parent=71 // pred_check_branch
        %8752 = sbr.rel (%p8750) target = $region84
      $region83: #{decoder_forward.1} parent=71 // pred_region
        _
      $region84: #{decoder_forward.1} parent=71 // pred_fallthru
        _
    $region72: #{decoder_forward.1} parent=5 // pred_fallthru
      _
    %p8753 = scmp.le.s32.totalorder 2, %s23
    // Predicated region
    $region85: #{decoder_forward.1} parent=5 // pred_check
      %p8754 = pneg %p8753
    $region86: #{decoder_forward.1} parent=5 // pred_check_branch
      %8756 = sbr.rel (%p8754) target = $region88
    $region87: #{decoder_forward.1} parent=5 // pred_region
      %s8757 = ssub.s32 %s23, 2
      // Predicated region
      $region89: #{decoder_forward.1} parent=87 // pred_check
        %p8758 = pneg %p366
      $region90: #{decoder_forward.1} parent=87 // pred_check_branch
        %8760 = sbr.rel (%p8758) target = $region92
      $region91: #{decoder_forward.1} parent=87 // pred_region
        %p8761 = scmp.lt.s32.totalorder %s35, 6
        %s8762 = scalar_select %p8761, %s35, 6
        %p8763 = scmp.lt.s32.totalorder %s34, 0
        %s8764 = scalar_select %p8763, %s34, 0
        %s8765 = smul.addr %s8764, 4
        %s8766 = smul.addr %s8762, 4
        %s8767 = sadd.s32 %s8765, %s8766
        %s8768 = smul.addr %s8767, 8
        %s8769 = scalar_lea.vmem %s13, %s8768
      $region92: #{decoder_forward.1} parent=87 // pred_fallthru
        _
      // Predicated region
      $region93: #{decoder_forward.1} parent=87 // pred_check
        %p8770 = pneg %p394
      $region94: #{decoder_forward.1} parent=87 // pred_check_branch
        %8772 = sbr.rel (%p8770) target = $region96
      $region95: #{decoder_forward.1} parent=87 // pred_region
        %p8773 = scmp.lt.s32.totalorder %s35, 6
        %s8774 = scalar_select %p8773, %s35, 6
        %p8775 = scmp.lt.s32.totalorder %s34, 0
        %s8776 = scalar_select %p8775, %s34, 0
        %s8777 = sadd.s32 %s8776, %s8774
        %s8778 = smul.addr %s8777, 8
        %s8779 = scalar_lea.vmem %s14, %s8778
      $region96: #{decoder_forward.1} parent=87 // pred_fallthru
        _
    $region88: #{decoder_forward.1} parent=5 // pred_fallthru
      _
  $region6: #{decoder_forward.1} parent=0 // loop_footer
    %s27 = sadd.s32 1, %s23
  $region7: #{decoder_forward.1} parent=0 // loop_footer_branch
    %22 = sbr.rel target = $region3
  $region8: #{decoder_forward.1} parent=0 // loop_exit
    _

</llo_original>
